<compile_context>
chip_gen: v6e
topology: v6e:2x2x1
jax: 0.10.0
libtpu: 0.0.40
codegen_flags: <defaults>
</compile_context>

<pallas_src>
import functools

import numpy as np
import jax
import jax.numpy as jnp
from jax.experimental import pallas as pl
from jax.experimental.pallas import tpu as pltpu


# ----------------------------------------------------------------------------
# The single fused kernel
# ----------------------------------------------------------------------------
def _net_kernel(p1_ref, w1_ref, b1_ref,
                w2_ref, b2_ref, s2_ref,
                w3_ref, b3_ref, s3_ref,
                w4_ref, b4_ref, s4_ref,
                avg_ref, wfc_ref, bfc_ref,
                out_ref):
    """Whole Net forward.  All activations stay in VMEM / vregs.

    Layout: activations are (C, B*L)  (channels x flattened batch*length).
    """

    def mm(a, b):
        return jnp.dot(a, b, preferred_element_type=jnp.float32)

    # ---- conv1(1->16, k=80, s=4, pad=38) + BN + ReLU, fused with MaxPool1d(4).
    # p1_ref[j] holds the im2col patches of pooling phase j: (80, B*200).
    b1 = b1_ref[...]                                   # (16, 1)
    h = None
    for j in range(4):
        c = jnp.maximum(mm(w1_ref[...], p1_ref[j]) + b1, 0.0)   # (16, B*200)
        h = c if h is None else jnp.maximum(h, c)

    # ---- conv(k=3, pad=1) + BN + ReLU fused with MaxPool1d(4).
    # s_ref[s+1] selects input columns at per-sample position 4*l'+s (s=-1..4),
    # with zero columns for conv padding / truncated tail / batch seams.
    def conv3_pool(h, w_ref, b_ref, s_ref):
        b = b_ref[...]                                 # (C_out, 1)
        g = [mm(h, s_ref[i]) for i in range(6)]        # each (C_in, B*L_out)
        out = None
        for j in range(4):                             # pooling phases
            c = (mm(w_ref[0], g[j]) + mm(w_ref[1], g[j + 1])
                 + mm(w_ref[2], g[j + 2]) + b)
            c = jnp.maximum(c, 0.0)
            out = c if out is None else jnp.maximum(out, c)
        return out

    h = conv3_pool(h, w2_ref, b2_ref, s2_ref)          # (16, B*50)
    h = conv3_pool(h, w3_ref, b3_ref, s3_ref)          # (32, B*12)
    h = conv3_pool(h, w4_ref, b4_ref, s4_ref)          # (64, B*3)

    # ---- AvgPool1d(3) (a (B*3, B) matrix of 1/3) + fc0(64 -> 6).
    feat = mm(h, avg_ref[...])                         # (64, B)
    out = mm(wfc_ref[...], feat) + bfc_ref[...]        # (6, B)
    out_ref[...] = out.astype(out_ref.dtype)


# ----------------------------------------------------------------------------
# Trace-time constant builders (numpy; folded into the compiled program)
# ----------------------------------------------------------------------------
def _fold_bn(w, b, gamma, beta, mean, var, eps=1e-5):
    """Fold eval-mode BatchNorm into the conv weight / bias."""
    scale = gamma / jnp.sqrt(var + eps)
    return w * scale[:, None, None], scale * (b - mean) + beta


def _pool_phase_selectors(batch, l_in):
    """sel[s+1][b*l_in + 4*l' + s, b*l_out + l'] = 1  for s in -1..4.

    Out-of-range positions (conv zero padding, pool floor truncation) and batch
    seams are simply absent -> zero columns.
    """
    l_out = l_in // 4
    sel = np.zeros((6, batch * l_in, batch * l_out), np.float32)
    for i, s in enumerate(range(-1, 5)):
        for b in range(batch):
            for l in range(l_out):
                p = 4 * l + s
                if 0 <= p < l_in:
                    sel[i, b * l_in + p, b * l_out + l] = 1.0
    return jnp.asarray(sel)


def _avg_matrix(batch, k=3):
    a = np.zeros((batch * k, batch), np.float32)
    for b in range(batch):
        a[b * k:(b + 1) * k, b] = 1.0 / k
    return jnp.asarray(a)


def _conv1_phase_patches(x, batch):
    """(4, 80, batch*200): im2col patches of conv1 (k=80, stride=4, pad=38),
    pre-grouped by MaxPool1d(4) phase for the fused conv1+pool1 stage."""
    x_pad = jnp.pad(x.reshape(batch, 3200), ((0, 0), (38, 38)))   # (B, 3276)
    idx = (16 * jnp.arange(200)[None, :, None]                    # pooled pos l'
           + 4 * jnp.arange(4)[:, None, None]                     # phase j
           + jnp.arange(80)[None, None, :])                       # tap k
    pat = x_pad[:, idx]                                           # (B, 4, 200, 80)
    return pat.transpose(1, 3, 0, 2).reshape(4, 80, batch * 200)  # (4, 80, B*200)


# ----------------------------------------------------------------------------
# Net forward
# ----------------------------------------------------------------------------
def net_forward(x, params, batch_size):
    B = batch_size
    p1 = _conv1_phase_patches(x, B)

    w1, b1 = _fold_bn(*params["c1"])
    w2, b2 = _fold_bn(*params["c2"])
    w3, b3 = _fold_bn(*params["c3"])
    w4, b4 = _fold_bn(*params["c4"])
    w1 = w1.reshape(16, 80)                      # (C_out, C_in*K), C_in=1
    w2 = w2.transpose(2, 0, 1)                   # (3, C_out, C_in) per-tap mats
    w3 = w3.transpose(2, 0, 1)
    w4 = w4.transpose(2, 0, 1)
    wfc, bfc = params["fc0"]

    s2 = _pool_phase_selectors(B, 200)           # (6, B*200, B*50)
    s3 = _pool_phase_selectors(B, 50)            # (6, B*50,  B*12)
    s4 = _pool_phase_selectors(B, 12)            # (6, B*12,  B*3)
    avg = _avg_matrix(B, 3)                      # (B*3, B)

    vmem = pl.BlockSpec(memory_space=pltpu.MemorySpace.VMEM)
    out_t = pl.pallas_call(
        _net_kernel,
        out_shape=jax.ShapeDtypeStruct((6, B), jnp.float32),
        in_specs=[vmem] * 15,
        out_specs=vmem,
    )(p1, w1, b1[:, None],
      w2, b2[:, None], s2,
      w3, b3[:, None], s3,
      w4, b4[:, None], s4,
      avg, wfc, bfc[:, None])
    return out_t.T                               # (B, 6)
    # TODO(synk): unused submodules in __init__ (lstm, pool5, lrelu) are never
    # called in forward(), so they are intentionally not implemented.


# ----------------------------------------------------------------------------
# Deterministic parameter init (PyTorch-like uniform fan-in bounds)
# ----------------------------------------------------------------------------
def init_params(key):
    def conv_params(k, c_out, c_in, ksz):
        kw, kb = jax.random.split(k)
        bound = 1.0 / ((c_in * ksz) ** 0.5)
        w = jax.random.uniform(kw, (c_out, c_in, ksz), jnp.float32, -bound, bound)
        b = jax.random.uniform(kb, (c_out,), jnp.float32, -bound, bound)
        gamma = jnp.ones((c_out,), jnp.float32)
        beta = jnp.zeros((c_out,), jnp.float32)
        mean = jnp.zeros((c_out,), jnp.float32)
        var = jnp.ones((c_out,), jnp.float32)
        return (w, b, gamma, beta, mean, var)

    keys = jax.random.split(key, 5)
    params = {
        "c1": conv_params(keys[0], 16, 1, 80),
        "c2": conv_params(keys[1], 16, 16, 3),
        "c3": conv_params(keys[2], 32, 16, 3),
        "c4": conv_params(keys[3], 64, 32, 3),
    }
    kw, kb = jax.random.split(keys[4])
    bound = 1.0 / (64 ** 0.5)
    w_fc = jax.random.uniform(kw, (6, 64), jnp.float32, -bound, bound)
    b_fc = jax.random.uniform(kb, (6,), jnp.float32, -bound, bound)
    params["fc0"] = (w_fc, b_fc)
    return params


if __name__ == "__main__":
    batch_size = 2
    key = jax.random.PRNGKey(0)
    k_param, k_x = jax.random.split(key)
    params = init_params(k_param)
    # Input: the module views its input as (batch, 1, 3200).
    x = jax.random.normal(k_x, (batch_size, 3200), dtype=jnp.float32)

    fwd = jax.jit(functools.partial(net_forward, batch_size=batch_size))
    out = jax.block_until_ready(fwd(x, params))
    assert out.shape == (batch_size, 6), out.shape
    assert bool(jnp.all(jnp.isfinite(out)))
    print("KERNEL_OK")
</pallas_src>

<mosaic_0001>
module attributes {stable_mosaic.version = 11 : i64} {
  func.func @_net_kernel(%arg0: memref<4x80x400xf32, #tpu.memory_space<vmem>>, %arg1: memref<16x80xf32, #tpu.memory_space<vmem>>, %arg2: memref<16x1xf32, #tpu.memory_space<vmem>>, %arg3: memref<3x16x16xf32, #tpu.memory_space<vmem>>, %arg4: memref<16x1xf32, #tpu.memory_space<vmem>>, %arg5: memref<6x400x100xf32, #tpu.memory_space<vmem>>, %arg6: memref<3x32x16xf32, #tpu.memory_space<vmem>>, %arg7: memref<32x1xf32, #tpu.memory_space<vmem>>, %arg8: memref<6x100x24xf32, #tpu.memory_space<vmem>>, %arg9: memref<3x64x32xf32, #tpu.memory_space<vmem>>, %arg10: memref<64x1xf32, #tpu.memory_space<vmem>>, %arg11: memref<6x24x6xf32, #tpu.memory_space<vmem>>, %arg12: memref<6x2xf32, #tpu.memory_space<vmem>>, %arg13: memref<6x64xf32, #tpu.memory_space<vmem>>, %arg14: memref<6x1xf32, #tpu.memory_space<vmem>>, %arg15: memref<6x2xf32, #tpu.memory_space<vmem>>) attributes {dimension_semantics = [], scalar_prefetch = 0 : i64, scratch_operands = 0 : i64, tpu.core_type = #tpu.core_type<tc>} {
    %c0 = arith.constant 0 : index
    %c0_0 = arith.constant 0 : index
    %0 = vector.load %arg2[%c0, %c0_0] : memref<16x1xf32, #tpu.memory_space<vmem>>, vector<16x1xf32>
    %c0_1 = arith.constant 0 : index
    %c0_2 = arith.constant 0 : index
    %1 = vector.load %arg1[%c0_1, %c0_2] : memref<16x80xf32, #tpu.memory_space<vmem>>, vector<16x80xf32>
    %c0_3 = arith.constant 0 : index
    %c0_4 = arith.constant 0 : index
    %c0_5 = arith.constant 0 : index
    %2 = vector.load %arg0[%c0_3, %c0_4, %c0_5] : memref<4x80x400xf32, #tpu.memory_space<vmem>>, vector<1x80x400xf32>
    %3 = vector.shape_cast %2 : vector<1x80x400xf32> to vector<80x400xf32>
    %cst = arith.constant dense<0.000000e+00> : vector<16x400xf32>
    %4 = tpu.matmul %1, %3, %cst {dimension_numbers = #tpu.dot_dimension_numbers<[1], [0], [0], [1], [0, 0, 1, 1], [], []>} : vector<16x80xf32>, vector<80x400xf32>, vector<16x400xf32> -> vector<16x400xf32>
    %5 = vector.broadcast %0 : vector<16x1xf32> to vector<16x400xf32>
    %6 = arith.addf %4, %5 : vector<16x400xf32>
    %cst_6 = arith.constant 0.000000e+00 : f32
    %7 = vector.broadcast %cst_6 : f32 to vector<16x400xf32>
    %8 = arith.maximumf %6, %7 : vector<16x400xf32>
    %c0_7 = arith.constant 0 : index
    %c0_8 = arith.constant 0 : index
    %9 = vector.load %arg1[%c0_7, %c0_8] : memref<16x80xf32, #tpu.memory_space<vmem>>, vector<16x80xf32>
    %c1 = arith.constant 1 : index
    %c0_9 = arith.constant 0 : index
    %c0_10 = arith.constant 0 : index
    %10 = vector.load %arg0[%c1, %c0_9, %c0_10] : memref<4x80x400xf32, #tpu.memory_space<vmem>>, vector<1x80x400xf32>
    %11 = vector.shape_cast %10 : vector<1x80x400xf32> to vector<80x400xf32>
    %cst_11 = arith.constant dense<0.000000e+00> : vector<16x400xf32>
    %12 = tpu.matmul %9, %11, %cst_11 {dimension_numbers = #tpu.dot_dimension_numbers<[1], [0], [0], [1], [0, 0, 1, 1], [], []>} : vector<16x80xf32>, vector<80x400xf32>, vector<16x400xf32> -> vector<16x400xf32>
    %13 = vector.broadcast %0 : vector<16x1xf32> to vector<16x400xf32>
    %14 = arith.addf %12, %13 : vector<16x400xf32>
    %cst_12 = arith.constant 0.000000e+00 : f32
    %15 = vector.broadcast %cst_12 : f32 to vector<16x400xf32>
    %16 = arith.maximumf %14, %15 : vector<16x400xf32>
    %17 = arith.maximumf %8, %16 : vector<16x400xf32>
    %c0_13 = arith.constant 0 : index
    %c0_14 = arith.constant 0 : index
    %18 = vector.load %arg1[%c0_13, %c0_14] : memref<16x80xf32, #tpu.memory_space<vmem>>, vector<16x80xf32>
    %c2 = arith.constant 2 : index
    %c0_15 = arith.constant 0 : index
    %c0_16 = arith.constant 0 : index
    %19 = vector.load %arg0[%c2, %c0_15, %c0_16] : memref<4x80x400xf32, #tpu.memory_space<vmem>>, vector<1x80x400xf32>
    %20 = vector.shape_cast %19 : vector<1x80x400xf32> to vector<80x400xf32>
    %cst_17 = arith.constant dense<0.000000e+00> : vector<16x400xf32>
    %21 = tpu.matmul %18, %20, %cst_17 {dimension_numbers = #tpu.dot_dimension_numbers<[1], [0], [0], [1], [0, 0, 1, 1], [], []>} : vector<16x80xf32>, vector<80x400xf32>, vector<16x400xf32> -> vector<16x400xf32>
    %22 = vector.broadcast %0 : vector<16x1xf32> to vector<16x400xf32>
    %23 = arith.addf %21, %22 : vector<16x400xf32>
    %cst_18 = arith.constant 0.000000e+00 : f32
    %24 = vector.broadcast %cst_18 : f32 to vector<16x400xf32>
    %25 = arith.maximumf %23, %24 : vector<16x400xf32>
    %26 = arith.maximumf %17, %25 : vector<16x400xf32>
    %c0_19 = arith.constant 0 : index
    %c0_20 = arith.constant 0 : index
    %27 = vector.load %arg1[%c0_19, %c0_20] : memref<16x80xf32, #tpu.memory_space<vmem>>, vector<16x80xf32>
    %c3 = arith.constant 3 : index
    %c0_21 = arith.constant 0 : index
    %c0_22 = arith.constant 0 : index
    %28 = vector.load %arg0[%c3, %c0_21, %c0_22] : memref<4x80x400xf32, #tpu.memory_space<vmem>>, vector<1x80x400xf32>
    %29 = vector.shape_cast %28 : vector<1x80x400xf32> to vector<80x400xf32>
    %cst_23 = arith.constant dense<0.000000e+00> : vector<16x400xf32>
    %30 = tpu.matmul %27, %29, %cst_23 {dimension_numbers = #tpu.dot_dimension_numbers<[1], [0], [0], [1], [0, 0, 1, 1], [], []>} : vector<16x80xf32>, vector<80x400xf32>, vector<16x400xf32> -> vector<16x400xf32>
    %31 = vector.broadcast %0 : vector<16x1xf32> to vector<16x400xf32>
    %32 = arith.addf %30, %31 : vector<16x400xf32>
    %cst_24 = arith.constant 0.000000e+00 : f32
    %33 = vector.broadcast %cst_24 : f32 to vector<16x400xf32>
    %34 = arith.maximumf %32, %33 : vector<16x400xf32>
    %35 = arith.maximumf %26, %34 : vector<16x400xf32>
    %c0_25 = arith.constant 0 : index
    %c0_26 = arith.constant 0 : index
    %36 = vector.load %arg4[%c0_25, %c0_26] : memref<16x1xf32, #tpu.memory_space<vmem>>, vector<16x1xf32>
    %c0_27 = arith.constant 0 : index
    %c0_28 = arith.constant 0 : index
    %c0_29 = arith.constant 0 : index
    %37 = vector.load %arg5[%c0_27, %c0_28, %c0_29] : memref<6x400x100xf32, #tpu.memory_space<vmem>>, vector<1x400x100xf32>
    %38 = vector.shape_cast %37 : vector<1x400x100xf32> to vector<400x100xf32>
    %cst_30 = arith.constant dense<0.000000e+00> : vector<16x100xf32>
    %39 = tpu.matmul %35, %38, %cst_30 {dimension_numbers = #tpu.dot_dimension_numbers<[1], [0], [0], [1], [0, 0, 1, 1], [], []>} : vector<16x400xf32>, vector<400x100xf32>, vector<16x100xf32> -> vector<16x100xf32>
    %c1_31 = arith.constant 1 : index
    %c0_32 = arith.constant 0 : index
    %c0_33 = arith.constant 0 : index
    %40 = vector.load %arg5[%c1_31, %c0_32, %c0_33] : memref<6x400x100xf32, #tpu.memory_space<vmem>>, vector<1x400x100xf32>
    %41 = vector.shape_cast %40 : vector<1x400x100xf32> to vector<400x100xf32>
    %cst_34 = arith.constant dense<0.000000e+00> : vector<16x100xf32>
    %42 = tpu.matmul %35, %41, %cst_34 {dimension_numbers = #tpu.dot_dimension_numbers<[1], [0], [0], [1], [0, 0, 1, 1], [], []>} : vector<16x400xf32>, vector<400x100xf32>, vector<16x100xf32> -> vector<16x100xf32>
    %c2_35 = arith.constant 2 : index
    %c0_36 = arith.constant 0 : index
    %c0_37 = arith.constant 0 : index
    %43 = vector.load %arg5[%c2_35, %c0_36, %c0_37] : memref<6x400x100xf32, #tpu.memory_space<vmem>>, vector<1x400x100xf32>
    %44 = vector.shape_cast %43 : vector<1x400x100xf32> to vector<400x100xf32>
    %cst_38 = arith.constant dense<0.000000e+00> : vector<16x100xf32>
    %45 = tpu.matmul %35, %44, %cst_38 {dimension_numbers = #tpu.dot_dimension_numbers<[1], [0], [0], [1], [0, 0, 1, 1], [], []>} : vector<16x400xf32>, vector<400x100xf32>, vector<16x100xf32> -> vector<16x100xf32>
    %c3_39 = arith.constant 3 : index
    %c0_40 = arith.constant 0 : index
    %c0_41 = arith.constant 0 : index
    %46 = vector.load %arg5[%c3_39, %c0_40, %c0_41] : memref<6x400x100xf32, #tpu.memory_space<vmem>>, vector<1x400x100xf32>
    %47 = vector.shape_cast %46 : vector<1x400x100xf32> to vector<400x100xf32>
    %cst_42 = arith.constant dense<0.000000e+00> : vector<16x100xf32>
    %48 = tpu.matmul %35, %47, %cst_42 {dimension_numbers = #tpu.dot_dimension_numbers<[1], [0], [0], [1], [0, 0, 1, 1], [], []>} : vector<16x400xf32>, vector<400x100xf32>, vector<16x100xf32> -> vector<16x100xf32>
    %c4 = arith.constant 4 : index
    %c0_43 = arith.constant 0 : index
    %c0_44 = arith.constant 0 : index
    %49 = vector.load %arg5[%c4, %c0_43, %c0_44] : memref<6x400x100xf32, #tpu.memory_space<vmem>>, vector<1x400x100xf32>
    %50 = vector.shape_cast %49 : vector<1x400x100xf32> to vector<400x100xf32>
    %cst_45 = arith.constant dense<0.000000e+00> : vector<16x100xf32>
    %51 = tpu.matmul %35, %50, %cst_45 {dimension_numbers = #tpu.dot_dimension_numbers<[1], [0], [0], [1], [0, 0, 1, 1], [], []>} : vector<16x400xf32>, vector<400x100xf32>, vector<16x100xf32> -> vector<16x100xf32>
    %c5 = arith.constant 5 : index
    %c0_46 = arith.constant 0 : index
    %c0_47 = arith.constant 0 : index
    %52 = vector.load %arg5[%c5, %c0_46, %c0_47] : memref<6x400x100xf32, #tpu.memory_space<vmem>>, vector<1x400x100xf32>
    %53 = vector.shape_cast %52 : vector<1x400x100xf32> to vector<400x100xf32>
    %cst_48 = arith.constant dense<0.000000e+00> : vector<16x100xf32>
    %54 = tpu.matmul %35, %53, %cst_48 {dimension_numbers = #tpu.dot_dimension_numbers<[1], [0], [0], [1], [0, 0, 1, 1], [], []>} : vector<16x400xf32>, vector<400x100xf32>, vector<16x100xf32> -> vector<16x100xf32>
    %c0_49 = arith.constant 0 : index
    %c0_50 = arith.constant 0 : index
    %c0_51 = arith.constant 0 : index
    %55 = vector.load %arg3[%c0_49, %c0_50, %c0_51] : memref<3x16x16xf32, #tpu.memory_space<vmem>>, vector<1x16x16xf32>
    %56 = vector.shape_cast %55 : vector<1x16x16xf32> to vector<16x16xf32>
    %cst_52 = arith.constant dense<0.000000e+00> : vector<16x100xf32>
    %57 = tpu.matmul %56, %39, %cst_52 {dimension_numbers = #tpu.dot_dimension_numbers<[1], [0], [0], [1], [0, 0, 1, 1], [], []>} : vector<16x16xf32>, vector<16x100xf32>, vector<16x100xf32> -> vector<16x100xf32>
    %c1_53 = arith.constant 1 : index
    %c0_54 = arith.constant 0 : index
    %c0_55 = arith.constant 0 : index
    %58 = vector.load %arg3[%c1_53, %c0_54, %c0_55] : memref<3x16x16xf32, #tpu.memory_space<vmem>>, vector<1x16x16xf32>
    %59 = vector.shape_cast %58 : vector<1x16x16xf32> to vector<16x16xf32>
    %cst_56 = arith.constant dense<0.000000e+00> : vector<16x100xf32>
    %60 = tpu.matmul %59, %42, %cst_56 {dimension_numbers = #tpu.dot_dimension_numbers<[1], [0], [0], [1], [0, 0, 1, 1], [], []>} : vector<16x16xf32>, vector<16x100xf32>, vector<16x100xf32> -> vector<16x100xf32>
    %61 = arith.addf %57, %60 : vector<16x100xf32>
    %c2_57 = arith.constant 2 : index
    %c0_58 = arith.constant 0 : index
    %c0_59 = arith.constant 0 : index
    %62 = vector.load %arg3[%c2_57, %c0_58, %c0_59] : memref<3x16x16xf32, #tpu.memory_space<vmem>>, vector<1x16x16xf32>
    %63 = vector.shape_cast %62 : vector<1x16x16xf32> to vector<16x16xf32>
    %cst_60 = arith.constant dense<0.000000e+00> : vector<16x100xf32>
    %64 = tpu.matmul %63, %45, %cst_60 {dimension_numbers = #tpu.dot_dimension_numbers<[1], [0], [0], [1], [0, 0, 1, 1], [], []>} : vector<16x16xf32>, vector<16x100xf32>, vector<16x100xf32> -> vector<16x100xf32>
    %65 = arith.addf %61, %64 : vector<16x100xf32>
    %66 = vector.broadcast %36 : vector<16x1xf32> to vector<16x100xf32>
    %67 = arith.addf %65, %66 : vector<16x100xf32>
    %cst_61 = arith.constant 0.000000e+00 : f32
    %68 = vector.broadcast %cst_61 : f32 to vector<16x100xf32>
    %69 = arith.maximumf %67, %68 : vector<16x100xf32>
    %c0_62 = arith.constant 0 : index
    %c0_63 = arith.constant 0 : index
    %c0_64 = arith.constant 0 : index
    %70 = vector.load %arg3[%c0_62, %c0_63, %c0_64] : memref<3x16x16xf32, #tpu.memory_space<vmem>>, vector<1x16x16xf32>
    %71 = vector.shape_cast %70 : vector<1x16x16xf32> to vector<16x16xf32>
    %cst_65 = arith.constant dense<0.000000e+00> : vector<16x100xf32>
    %72 = tpu.matmul %71, %42, %cst_65 {dimension_numbers = #tpu.dot_dimension_numbers<[1], [0], [0], [1], [0, 0, 1, 1], [], []>} : vector<16x16xf32>, vector<16x100xf32>, vector<16x100xf32> -> vector<16x100xf32>
    %c1_66 = arith.constant 1 : index
    %c0_67 = arith.constant 0 : index
    %c0_68 = arith.constant 0 : index
    %73 = vector.load %arg3[%c1_66, %c0_67, %c0_68] : memref<3x16x16xf32, #tpu.memory_space<vmem>>, vector<1x16x16xf32>
    %74 = vector.shape_cast %73 : vector<1x16x16xf32> to vector<16x16xf32>
    %cst_69 = arith.constant dense<0.000000e+00> : vector<16x100xf32>
    %75 = tpu.matmul %74, %45, %cst_69 {dimension_numbers = #tpu.dot_dimension_numbers<[1], [0], [0], [1], [0, 0, 1, 1], [], []>} : vector<16x16xf32>, vector<16x100xf32>, vector<16x100xf32> -> vector<16x100xf32>
    %76 = arith.addf %72, %75 : vector<16x100xf32>
    %c2_70 = arith.constant 2 : index
    %c0_71 = arith.constant 0 : index
    %c0_72 = arith.constant 0 : index
    %77 = vector.load %arg3[%c2_70, %c0_71, %c0_72] : memref<3x16x16xf32, #tpu.memory_space<vmem>>, vector<1x16x16xf32>
    %78 = vector.shape_cast %77 : vector<1x16x16xf32> to vector<16x16xf32>
    %cst_73 = arith.constant dense<0.000000e+00> : vector<16x100xf32>
    %79 = tpu.matmul %78, %48, %cst_73 {dimension_numbers = #tpu.dot_dimension_numbers<[1], [0], [0], [1], [0, 0, 1, 1], [], []>} : vector<16x16xf32>, vector<16x100xf32>, vector<16x100xf32> -> vector<16x100xf32>
    %80 = arith.addf %76, %79 : vector<16x100xf32>
    %81 = vector.broadcast %36 : vector<16x1xf32> to vector<16x100xf32>
    %82 = arith.addf %80, %81 : vector<16x100xf32>
    %cst_74 = arith.constant 0.000000e+00 : f32
    %83 = vector.broadcast %cst_74 : f32 to vector<16x100xf32>
    %84 = arith.maximumf %82, %83 : vector<16x100xf32>
    %85 = arith.maximumf %69, %84 : vector<16x100xf32>
    %c0_75 = arith.constant 0 : index
    %c0_76 = arith.constant 0 : index
    %c0_77 = arith.constant 0 : index
    %86 = vector.load %arg3[%c0_75, %c0_76, %c0_77] : memref<3x16x16xf32, #tpu.memory_space<vmem>>, vector<1x16x16xf32>
    %87 = vector.shape_cast %86 : vector<1x16x16xf32> to vector<16x16xf32>
    %cst_78 = arith.constant dense<0.000000e+00> : vector<16x100xf32>
    %88 = tpu.matmul %87, %45, %cst_78 {dimension_numbers = #tpu.dot_dimension_numbers<[1], [0], [0], [1], [0, 0, 1, 1], [], []>} : vector<16x16xf32>, vector<16x100xf32>, vector<16x100xf32> -> vector<16x100xf32>
    %c1_79 = arith.constant 1 : index
    %c0_80 = arith.constant 0 : index
    %c0_81 = arith.constant 0 : index
    %89 = vector.load %arg3[%c1_79, %c0_80, %c0_81] : memref<3x16x16xf32, #tpu.memory_space<vmem>>, vector<1x16x16xf32>
    %90 = vector.shape_cast %89 : vector<1x16x16xf32> to vector<16x16xf32>
    %cst_82 = arith.constant dense<0.000000e+00> : vector<16x100xf32>
    %91 = tpu.matmul %90, %48, %cst_82 {dimension_numbers = #tpu.dot_dimension_numbers<[1], [0], [0], [1], [0, 0, 1, 1], [], []>} : vector<16x16xf32>, vector<16x100xf32>, vector<16x100xf32> -> vector<16x100xf32>
    %92 = arith.addf %88, %91 : vector<16x100xf32>
    %c2_83 = arith.constant 2 : index
    %c0_84 = arith.constant 0 : index
    %c0_85 = arith.constant 0 : index
    %93 = vector.load %arg3[%c2_83, %c0_84, %c0_85] : memref<3x16x16xf32, #tpu.memory_space<vmem>>, vector<1x16x16xf32>
    %94 = vector.shape_cast %93 : vector<1x16x16xf32> to vector<16x16xf32>
    %cst_86 = arith.constant dense<0.000000e+00> : vector<16x100xf32>
    %95 = tpu.matmul %94, %51, %cst_86 {dimension_numbers = #tpu.dot_dimension_numbers<[1], [0], [0], [1], [0, 0, 1, 1], [], []>} : vector<16x16xf32>, vector<16x100xf32>, vector<16x100xf32> -> vector<16x100xf32>
    %96 = arith.addf %92, %95 : vector<16x100xf32>
    %97 = vector.broadcast %36 : vector<16x1xf32> to vector<16x100xf32>
    %98 = arith.addf %96, %97 : vector<16x100xf32>
    %cst_87 = arith.constant 0.000000e+00 : f32
    %99 = vector.broadcast %cst_87 : f32 to vector<16x100xf32>
    %100 = arith.maximumf %98, %99 : vector<16x100xf32>
    %101 = arith.maximumf %85, %100 : vector<16x100xf32>
    %c0_88 = arith.constant 0 : index
    %c0_89 = arith.constant 0 : index
    %c0_90 = arith.constant 0 : index
    %102 = vector.load %arg3[%c0_88, %c0_89, %c0_90] : memref<3x16x16xf32, #tpu.memory_space<vmem>>, vector<1x16x16xf32>
    %103 = vector.shape_cast %102 : vector<1x16x16xf32> to vector<16x16xf32>
    %cst_91 = arith.constant dense<0.000000e+00> : vector<16x100xf32>
    %104 = tpu.matmul %103, %48, %cst_91 {dimension_numbers = #tpu.dot_dimension_numbers<[1], [0], [0], [1], [0, 0, 1, 1], [], []>} : vector<16x16xf32>, vector<16x100xf32>, vector<16x100xf32> -> vector<16x100xf32>
    %c1_92 = arith.constant 1 : index
    %c0_93 = arith.constant 0 : index
    %c0_94 = arith.constant 0 : index
    %105 = vector.load %arg3[%c1_92, %c0_93, %c0_94] : memref<3x16x16xf32, #tpu.memory_space<vmem>>, vector<1x16x16xf32>
    %106 = vector.shape_cast %105 : vector<1x16x16xf32> to vector<16x16xf32>
    %cst_95 = arith.constant dense<0.000000e+00> : vector<16x100xf32>
    %107 = tpu.matmul %106, %51, %cst_95 {dimension_numbers = #tpu.dot_dimension_numbers<[1], [0], [0], [1], [0, 0, 1, 1], [], []>} : vector<16x16xf32>, vector<16x100xf32>, vector<16x100xf32> -> vector<16x100xf32>
    %108 = arith.addf %104, %107 : vector<16x100xf32>
    %c2_96 = arith.constant 2 : index
    %c0_97 = arith.constant 0 : index
    %c0_98 = arith.constant 0 : index
    %109 = vector.load %arg3[%c2_96, %c0_97, %c0_98] : memref<3x16x16xf32, #tpu.memory_space<vmem>>, vector<1x16x16xf32>
    %110 = vector.shape_cast %109 : vector<1x16x16xf32> to vector<16x16xf32>
    %cst_99 = arith.constant dense<0.000000e+00> : vector<16x100xf32>
    %111 = tpu.matmul %110, %54, %cst_99 {dimension_numbers = #tpu.dot_dimension_numbers<[1], [0], [0], [1], [0, 0, 1, 1], [], []>} : vector<16x16xf32>, vector<16x100xf32>, vector<16x100xf32> -> vector<16x100xf32>
    %112 = arith.addf %108, %111 : vector<16x100xf32>
    %113 = vector.broadcast %36 : vector<16x1xf32> to vector<16x100xf32>
    %114 = arith.addf %112, %113 : vector<16x100xf32>
    %cst_100 = arith.constant 0.000000e+00 : f32
    %115 = vector.broadcast %cst_100 : f32 to vector<16x100xf32>
    %116 = arith.maximumf %114, %115 : vector<16x100xf32>
    %117 = arith.maximumf %101, %116 : vector<16x100xf32>
    %c0_101 = arith.constant 0 : index
    %c0_102 = arith.constant 0 : index
    %118 = vector.load %arg7[%c0_101, %c0_102] : memref<32x1xf32, #tpu.memory_space<vmem>>, vector<32x1xf32>
    %c0_103 = arith.constant 0 : index
    %c0_104 = arith.constant 0 : index
    %c0_105 = arith.constant 0 : index
    %119 = vector.load %arg8[%c0_103, %c0_104, %c0_105] : memref<6x100x24xf32, #tpu.memory_space<vmem>>, vector<1x100x24xf32>
    %120 = vector.shape_cast %119 : vector<1x100x24xf32> to vector<100x24xf32>
    %cst_106 = arith.constant dense<0.000000e+00> : vector<16x24xf32>
    %121 = tpu.matmul %117, %120, %cst_106 {dimension_numbers = #tpu.dot_dimension_numbers<[1], [0], [0], [1], [0, 0, 1, 1], [], []>} : vector<16x100xf32>, vector<100x24xf32>, vector<16x24xf32> -> vector<16x24xf32>
    %c1_107 = arith.constant 1 : index
    %c0_108 = arith.constant 0 : index
    %c0_109 = arith.constant 0 : index
    %122 = vector.load %arg8[%c1_107, %c0_108, %c0_109] : memref<6x100x24xf32, #tpu.memory_space<vmem>>, vector<1x100x24xf32>
    %123 = vector.shape_cast %122 : vector<1x100x24xf32> to vector<100x24xf32>
    %cst_110 = arith.constant dense<0.000000e+00> : vector<16x24xf32>
    %124 = tpu.matmul %117, %123, %cst_110 {dimension_numbers = #tpu.dot_dimension_numbers<[1], [0], [0], [1], [0, 0, 1, 1], [], []>} : vector<16x100xf32>, vector<100x24xf32>, vector<16x24xf32> -> vector<16x24xf32>
    %c2_111 = arith.constant 2 : index
    %c0_112 = arith.constant 0 : index
    %c0_113 = arith.constant 0 : index
    %125 = vector.load %arg8[%c2_111, %c0_112, %c0_113] : memref<6x100x24xf32, #tpu.memory_space<vmem>>, vector<1x100x24xf32>
    %126 = vector.shape_cast %125 : vector<1x100x24xf32> to vector<100x24xf32>
    %cst_114 = arith.constant dense<0.000000e+00> : vector<16x24xf32>
    %127 = tpu.matmul %117, %126, %cst_114 {dimension_numbers = #tpu.dot_dimension_numbers<[1], [0], [0], [1], [0, 0, 1, 1], [], []>} : vector<16x100xf32>, vector<100x24xf32>, vector<16x24xf32> -> vector<16x24xf32>
    %c3_115 = arith.constant 3 : index
    %c0_116 = arith.constant 0 : index
    %c0_117 = arith.constant 0 : index
    %128 = vector.load %arg8[%c3_115, %c0_116, %c0_117] : memref<6x100x24xf32, #tpu.memory_space<vmem>>, vector<1x100x24xf32>
    %129 = vector.shape_cast %128 : vector<1x100x24xf32> to vector<100x24xf32>
    %cst_118 = arith.constant dense<0.000000e+00> : vector<16x24xf32>
    %130 = tpu.matmul %117, %129, %cst_118 {dimension_numbers = #tpu.dot_dimension_numbers<[1], [0], [0], [1], [0, 0, 1, 1], [], []>} : vector<16x100xf32>, vector<100x24xf32>, vector<16x24xf32> -> vector<16x24xf32>
    %c4_119 = arith.constant 4 : index
    %c0_120 = arith.constant 0 : index
    %c0_121 = arith.constant 0 : index
    %131 = vector.load %arg8[%c4_119, %c0_120, %c0_121] : memref<6x100x24xf32, #tpu.memory_space<vmem>>, vector<1x100x24xf32>
    %132 = vector.shape_cast %131 : vector<1x100x24xf32> to vector<100x24xf32>
    %cst_122 = arith.constant dense<0.000000e+00> : vector<16x24xf32>
    %133 = tpu.matmul %117, %132, %cst_122 {dimension_numbers = #tpu.dot_dimension_numbers<[1], [0], [0], [1], [0, 0, 1, 1], [], []>} : vector<16x100xf32>, vector<100x24xf32>, vector<16x24xf32> -> vector<16x24xf32>
    %c5_123 = arith.constant 5 : index
    %c0_124 = arith.constant 0 : index
    %c0_125 = arith.constant 0 : index
    %134 = vector.load %arg8[%c5_123, %c0_124, %c0_125] : memref<6x100x24xf32, #tpu.memory_space<vmem>>, vector<1x100x24xf32>
    %135 = vector.shape_cast %134 : vector<1x100x24xf32> to vector<100x24xf32>
    %cst_126 = arith.constant dense<0.000000e+00> : vector<16x24xf32>
    %136 = tpu.matmul %117, %135, %cst_126 {dimension_numbers = #tpu.dot_dimension_numbers<[1], [0], [0], [1], [0, 0, 1, 1], [], []>} : vector<16x100xf32>, vector<100x24xf32>, vector<16x24xf32> -> vector<16x24xf32>
    %c0_127 = arith.constant 0 : index
    %c0_128 = arith.constant 0 : index
    %c0_129 = arith.constant 0 : index
    %137 = vector.load %arg6[%c0_127, %c0_128, %c0_129] : memref<3x32x16xf32, #tpu.memory_space<vmem>>, vector<1x32x16xf32>
    %138 = vector.shape_cast %137 : vector<1x32x16xf32> to vector<32x16xf32>
    %cst_130 = arith.constant dense<0.000000e+00> : vector<32x24xf32>
    %139 = tpu.matmul %138, %121, %cst_130 {dimension_numbers = #tpu.dot_dimension_numbers<[1], [0], [0], [1], [0, 0, 1, 1], [], []>} : vector<32x16xf32>, vector<16x24xf32>, vector<32x24xf32> -> vector<32x24xf32>
    %c1_131 = arith.constant 1 : index
    %c0_132 = arith.constant 0 : index
    %c0_133 = arith.constant 0 : index
    %140 = vector.load %arg6[%c1_131, %c0_132, %c0_133] : memref<3x32x16xf32, #tpu.memory_space<vmem>>, vector<1x32x16xf32>
    %141 = vector.shape_cast %140 : vector<1x32x16xf32> to vector<32x16xf32>
    %cst_134 = arith.constant dense<0.000000e+00> : vector<32x24xf32>
    %142 = tpu.matmul %141, %124, %cst_134 {dimension_numbers = #tpu.dot_dimension_numbers<[1], [0], [0], [1], [0, 0, 1, 1], [], []>} : vector<32x16xf32>, vector<16x24xf32>, vector<32x24xf32> -> vector<32x24xf32>
    %143 = arith.addf %139, %142 : vector<32x24xf32>
    %c2_135 = arith.constant 2 : index
    %c0_136 = arith.constant 0 : index
    %c0_137 = arith.constant 0 : index
    %144 = vector.load %arg6[%c2_135, %c0_136, %c0_137] : memref<3x32x16xf32, #tpu.memory_space<vmem>>, vector<1x32x16xf32>
    %145 = vector.shape_cast %144 : vector<1x32x16xf32> to vector<32x16xf32>
    %cst_138 = arith.constant dense<0.000000e+00> : vector<32x24xf32>
    %146 = tpu.matmul %145, %127, %cst_138 {dimension_numbers = #tpu.dot_dimension_numbers<[1], [0], [0], [1], [0, 0, 1, 1], [], []>} : vector<32x16xf32>, vector<16x24xf32>, vector<32x24xf32> -> vector<32x24xf32>
    %147 = arith.addf %143, %146 : vector<32x24xf32>
    %148 = vector.broadcast %118 : vector<32x1xf32> to vector<32x24xf32>
    %149 = arith.addf %147, %148 : vector<32x24xf32>
    %cst_139 = arith.constant 0.000000e+00 : f32
    %150 = vector.broadcast %cst_139 : f32 to vector<32x24xf32>
    %151 = arith.maximumf %149, %150 : vector<32x24xf32>
    %c0_140 = arith.constant 0 : index
    %c0_141 = arith.constant 0 : index
    %c0_142 = arith.constant 0 : index
    %152 = vector.load %arg6[%c0_140, %c0_141, %c0_142] : memref<3x32x16xf32, #tpu.memory_space<vmem>>, vector<1x32x16xf32>
    %153 = vector.shape_cast %152 : vector<1x32x16xf32> to vector<32x16xf32>
    %cst_143 = arith.constant dense<0.000000e+00> : vector<32x24xf32>
    %154 = tpu.matmul %153, %124, %cst_143 {dimension_numbers = #tpu.dot_dimension_numbers<[1], [0], [0], [1], [0, 0, 1, 1], [], []>} : vector<32x16xf32>, vector<16x24xf32>, vector<32x24xf32> -> vector<32x24xf32>
    %c1_144 = arith.constant 1 : index
    %c0_145 = arith.constant 0 : index
    %c0_146 = arith.constant 0 : index
    %155 = vector.load %arg6[%c1_144, %c0_145, %c0_146] : memref<3x32x16xf32, #tpu.memory_space<vmem>>, vector<1x32x16xf32>
    %156 = vector.shape_cast %155 : vector<1x32x16xf32> to vector<32x16xf32>
    %cst_147 = arith.constant dense<0.000000e+00> : vector<32x24xf32>
    %157 = tpu.matmul %156, %127, %cst_147 {dimension_numbers = #tpu.dot_dimension_numbers<[1], [0], [0], [1], [0, 0, 1, 1], [], []>} : vector<32x16xf32>, vector<16x24xf32>, vector<32x24xf32> -> vector<32x24xf32>
    %158 = arith.addf %154, %157 : vector<32x24xf32>
    %c2_148 = arith.constant 2 : index
    %c0_149 = arith.constant 0 : index
    %c0_150 = arith.constant 0 : index
    %159 = vector.load %arg6[%c2_148, %c0_149, %c0_150] : memref<3x32x16xf32, #tpu.memory_space<vmem>>, vector<1x32x16xf32>
    %160 = vector.shape_cast %159 : vector<1x32x16xf32> to vector<32x16xf32>
    %cst_151 = arith.constant dense<0.000000e+00> : vector<32x24xf32>
    %161 = tpu.matmul %160, %130, %cst_151 {dimension_numbers = #tpu.dot_dimension_numbers<[1], [0], [0], [1], [0, 0, 1, 1], [], []>} : vector<32x16xf32>, vector<16x24xf32>, vector<32x24xf32> -> vector<32x24xf32>
    %162 = arith.addf %158, %161 : vector<32x24xf32>
    %163 = vector.broadcast %118 : vector<32x1xf32> to vector<32x24xf32>
    %164 = arith.addf %162, %163 : vector<32x24xf32>
    %cst_152 = arith.constant 0.000000e+00 : f32
    %165 = vector.broadcast %cst_152 : f32 to vector<32x24xf32>
    %166 = arith.maximumf %164, %165 : vector<32x24xf32>
    %167 = arith.maximumf %151, %166 : vector<32x24xf32>
    %c0_153 = arith.constant 0 : index
    %c0_154 = arith.constant 0 : index
    %c0_155 = arith.constant 0 : index
    %168 = vector.load %arg6[%c0_153, %c0_154, %c0_155] : memref<3x32x16xf32, #tpu.memory_space<vmem>>, vector<1x32x16xf32>
    %169 = vector.shape_cast %168 : vector<1x32x16xf32> to vector<32x16xf32>
    %cst_156 = arith.constant dense<0.000000e+00> : vector<32x24xf32>
    %170 = tpu.matmul %169, %127, %cst_156 {dimension_numbers = #tpu.dot_dimension_numbers<[1], [0], [0], [1], [0, 0, 1, 1], [], []>} : vector<32x16xf32>, vector<16x24xf32>, vector<32x24xf32> -> vector<32x24xf32>
    %c1_157 = arith.constant 1 : index
    %c0_158 = arith.constant 0 : index
    %c0_159 = arith.constant 0 : index
    %171 = vector.load %arg6[%c1_157, %c0_158, %c0_159] : memref<3x32x16xf32, #tpu.memory_space<vmem>>, vector<1x32x16xf32>
    %172 = vector.shape_cast %171 : vector<1x32x16xf32> to vector<32x16xf32>
    %cst_160 = arith.constant dense<0.000000e+00> : vector<32x24xf32>
    %173 = tpu.matmul %172, %130, %cst_160 {dimension_numbers = #tpu.dot_dimension_numbers<[1], [0], [0], [1], [0, 0, 1, 1], [], []>} : vector<32x16xf32>, vector<16x24xf32>, vector<32x24xf32> -> vector<32x24xf32>
    %174 = arith.addf %170, %173 : vector<32x24xf32>
    %c2_161 = arith.constant 2 : index
    %c0_162 = arith.constant 0 : index
    %c0_163 = arith.constant 0 : index
    %175 = vector.load %arg6[%c2_161, %c0_162, %c0_163] : memref<3x32x16xf32, #tpu.memory_space<vmem>>, vector<1x32x16xf32>
    %176 = vector.shape_cast %175 : vector<1x32x16xf32> to vector<32x16xf32>
    %cst_164 = arith.constant dense<0.000000e+00> : vector<32x24xf32>
    %177 = tpu.matmul %176, %133, %cst_164 {dimension_numbers = #tpu.dot_dimension_numbers<[1], [0], [0], [1], [0, 0, 1, 1], [], []>} : vector<32x16xf32>, vector<16x24xf32>, vector<32x24xf32> -> vector<32x24xf32>
    %178 = arith.addf %174, %177 : vector<32x24xf32>
    %179 = vector.broadcast %118 : vector<32x1xf32> to vector<32x24xf32>
    %180 = arith.addf %178, %179 : vector<32x24xf32>
    %cst_165 = arith.constant 0.000000e+00 : f32
    %181 = vector.broadcast %cst_165 : f32 to vector<32x24xf32>
    %182 = arith.maximumf %180, %181 : vector<32x24xf32>
    %183 = arith.maximumf %167, %182 : vector<32x24xf32>
    %c0_166 = arith.constant 0 : index
    %c0_167 = arith.constant 0 : index
    %c0_168 = arith.constant 0 : index
    %184 = vector.load %arg6[%c0_166, %c0_167, %c0_168] : memref<3x32x16xf32, #tpu.memory_space<vmem>>, vector<1x32x16xf32>
    %185 = vector.shape_cast %184 : vector<1x32x16xf32> to vector<32x16xf32>
    %cst_169 = arith.constant dense<0.000000e+00> : vector<32x24xf32>
    %186 = tpu.matmul %185, %130, %cst_169 {dimension_numbers = #tpu.dot_dimension_numbers<[1], [0], [0], [1], [0, 0, 1, 1], [], []>} : vector<32x16xf32>, vector<16x24xf32>, vector<32x24xf32> -> vector<32x24xf32>
    %c1_170 = arith.constant 1 : index
    %c0_171 = arith.constant 0 : index
    %c0_172 = arith.constant 0 : index
    %187 = vector.load %arg6[%c1_170, %c0_171, %c0_172] : memref<3x32x16xf32, #tpu.memory_space<vmem>>, vector<1x32x16xf32>
    %188 = vector.shape_cast %187 : vector<1x32x16xf32> to vector<32x16xf32>
    %cst_173 = arith.constant dense<0.000000e+00> : vector<32x24xf32>
    %189 = tpu.matmul %188, %133, %cst_173 {dimension_numbers = #tpu.dot_dimension_numbers<[1], [0], [0], [1], [0, 0, 1, 1], [], []>} : vector<32x16xf32>, vector<16x24xf32>, vector<32x24xf32> -> vector<32x24xf32>
    %190 = arith.addf %186, %189 : vector<32x24xf32>
    %c2_174 = arith.constant 2 : index
    %c0_175 = arith.constant 0 : index
    %c0_176 = arith.constant 0 : index
    %191 = vector.load %arg6[%c2_174, %c0_175, %c0_176] : memref<3x32x16xf32, #tpu.memory_space<vmem>>, vector<1x32x16xf32>
    %192 = vector.shape_cast %191 : vector<1x32x16xf32> to vector<32x16xf32>
    %cst_177 = arith.constant dense<0.000000e+00> : vector<32x24xf32>
    %193 = tpu.matmul %192, %136, %cst_177 {dimension_numbers = #tpu.dot_dimension_numbers<[1], [0], [0], [1], [0, 0, 1, 1], [], []>} : vector<32x16xf32>, vector<16x24xf32>, vector<32x24xf32> -> vector<32x24xf32>
    %194 = arith.addf %190, %193 : vector<32x24xf32>
    %195 = vector.broadcast %118 : vector<32x1xf32> to vector<32x24xf32>
    %196 = arith.addf %194, %195 : vector<32x24xf32>
    %cst_178 = arith.constant 0.000000e+00 : f32
    %197 = vector.broadcast %cst_178 : f32 to vector<32x24xf32>
    %198 = arith.maximumf %196, %197 : vector<32x24xf32>
    %199 = arith.maximumf %183, %198 : vector<32x24xf32>
    %c0_179 = arith.constant 0 : index
    %c0_180 = arith.constant 0 : index
    %200 = vector.load %arg10[%c0_179, %c0_180] : memref<64x1xf32, #tpu.memory_space<vmem>>, vector<64x1xf32>
    %c0_181 = arith.constant 0 : index
    %c0_182 = arith.constant 0 : index
    %c0_183 = arith.constant 0 : index
    %201 = vector.load %arg11[%c0_181, %c0_182, %c0_183] : memref<6x24x6xf32, #tpu.memory_space<vmem>>, vector<1x24x6xf32>
    %202 = vector.shape_cast %201 : vector<1x24x6xf32> to vector<24x6xf32>
    %cst_184 = arith.constant dense<0.000000e+00> : vector<32x6xf32>
    %203 = tpu.matmul %199, %202, %cst_184 {dimension_numbers = #tpu.dot_dimension_numbers<[1], [0], [0], [1], [0, 0, 1, 1], [], []>} : vector<32x24xf32>, vector<24x6xf32>, vector<32x6xf32> -> vector<32x6xf32>
    %c1_185 = arith.constant 1 : index
    %c0_186 = arith.constant 0 : index
    %c0_187 = arith.constant 0 : index
    %204 = vector.load %arg11[%c1_185, %c0_186, %c0_187] : memref<6x24x6xf32, #tpu.memory_space<vmem>>, vector<1x24x6xf32>
    %205 = vector.shape_cast %204 : vector<1x24x6xf32> to vector<24x6xf32>
    %cst_188 = arith.constant dense<0.000000e+00> : vector<32x6xf32>
    %206 = tpu.matmul %199, %205, %cst_188 {dimension_numbers = #tpu.dot_dimension_numbers<[1], [0], [0], [1], [0, 0, 1, 1], [], []>} : vector<32x24xf32>, vector<24x6xf32>, vector<32x6xf32> -> vector<32x6xf32>
    %c2_189 = arith.constant 2 : index
    %c0_190 = arith.constant 0 : index
    %c0_191 = arith.constant 0 : index
    %207 = vector.load %arg11[%c2_189, %c0_190, %c0_191] : memref<6x24x6xf32, #tpu.memory_space<vmem>>, vector<1x24x6xf32>
    %208 = vector.shape_cast %207 : vector<1x24x6xf32> to vector<24x6xf32>
    %cst_192 = arith.constant dense<0.000000e+00> : vector<32x6xf32>
    %209 = tpu.matmul %199, %208, %cst_192 {dimension_numbers = #tpu.dot_dimension_numbers<[1], [0], [0], [1], [0, 0, 1, 1], [], []>} : vector<32x24xf32>, vector<24x6xf32>, vector<32x6xf32> -> vector<32x6xf32>
    %c3_193 = arith.constant 3 : index
    %c0_194 = arith.constant 0 : index
    %c0_195 = arith.constant 0 : index
    %210 = vector.load %arg11[%c3_193, %c0_194, %c0_195] : memref<6x24x6xf32, #tpu.memory_space<vmem>>, vector<1x24x6xf32>
    %211 = vector.shape_cast %210 : vector<1x24x6xf32> to vector<24x6xf32>
    %cst_196 = arith.constant dense<0.000000e+00> : vector<32x6xf32>
    %212 = tpu.matmul %199, %211, %cst_196 {dimension_numbers = #tpu.dot_dimension_numbers<[1], [0], [0], [1], [0, 0, 1, 1], [], []>} : vector<32x24xf32>, vector<24x6xf32>, vector<32x6xf32> -> vector<32x6xf32>
    %c4_197 = arith.constant 4 : index
    %c0_198 = arith.constant 0 : index
    %c0_199 = arith.constant 0 : index
    %213 = vector.load %arg11[%c4_197, %c0_198, %c0_199] : memref<6x24x6xf32, #tpu.memory_space<vmem>>, vector<1x24x6xf32>
    %214 = vector.shape_cast %213 : vector<1x24x6xf32> to vector<24x6xf32>
    %cst_200 = arith.constant dense<0.000000e+00> : vector<32x6xf32>
    %215 = tpu.matmul %199, %214, %cst_200 {dimension_numbers = #tpu.dot_dimension_numbers<[1], [0], [0], [1], [0, 0, 1, 1], [], []>} : vector<32x24xf32>, vector<24x6xf32>, vector<32x6xf32> -> vector<32x6xf32>
    %c5_201 = arith.constant 5 : index
    %c0_202 = arith.constant 0 : index
    %c0_203 = arith.constant 0 : index
    %216 = vector.load %arg11[%c5_201, %c0_202, %c0_203] : memref<6x24x6xf32, #tpu.memory_space<vmem>>, vector<1x24x6xf32>
    %217 = vector.shape_cast %216 : vector<1x24x6xf32> to vector<24x6xf32>
    %cst_204 = arith.constant dense<0.000000e+00> : vector<32x6xf32>
    %218 = tpu.matmul %199, %217, %cst_204 {dimension_numbers = #tpu.dot_dimension_numbers<[1], [0], [0], [1], [0, 0, 1, 1], [], []>} : vector<32x24xf32>, vector<24x6xf32>, vector<32x6xf32> -> vector<32x6xf32>
    %c0_205 = arith.constant 0 : index
    %c0_206 = arith.constant 0 : index
    %c0_207 = arith.constant 0 : index
    %219 = vector.load %arg9[%c0_205, %c0_206, %c0_207] : memref<3x64x32xf32, #tpu.memory_space<vmem>>, vector<1x64x32xf32>
    %220 = vector.shape_cast %219 : vector<1x64x32xf32> to vector<64x32xf32>
    %cst_208 = arith.constant dense<0.000000e+00> : vector<64x6xf32>
    %221 = tpu.matmul %220, %203, %cst_208 {dimension_numbers = #tpu.dot_dimension_numbers<[1], [0], [0], [1], [0, 0, 1, 1], [], []>} : vector<64x32xf32>, vector<32x6xf32>, vector<64x6xf32> -> vector<64x6xf32>
    %c1_209 = arith.constant 1 : index
    %c0_210 = arith.constant 0 : index
    %c0_211 = arith.constant 0 : index
    %222 = vector.load %arg9[%c1_209, %c0_210, %c0_211] : memref<3x64x32xf32, #tpu.memory_space<vmem>>, vector<1x64x32xf32>
    %223 = vector.shape_cast %222 : vector<1x64x32xf32> to vector<64x32xf32>
    %cst_212 = arith.constant dense<0.000000e+00> : vector<64x6xf32>
    %224 = tpu.matmul %223, %206, %cst_212 {dimension_numbers = #tpu.dot_dimension_numbers<[1], [0], [0], [1], [0, 0, 1, 1], [], []>} : vector<64x32xf32>, vector<32x6xf32>, vector<64x6xf32> -> vector<64x6xf32>
    %225 = arith.addf %221, %224 : vector<64x6xf32>
    %c2_213 = arith.constant 2 : index
    %c0_214 = arith.constant 0 : index
    %c0_215 = arith.constant 0 : index
    %226 = vector.load %arg9[%c2_213, %c0_214, %c0_215] : memref<3x64x32xf32, #tpu.memory_space<vmem>>, vector<1x64x32xf32>
    %227 = vector.shape_cast %226 : vector<1x64x32xf32> to vector<64x32xf32>
    %cst_216 = arith.constant dense<0.000000e+00> : vector<64x6xf32>
    %228 = tpu.matmul %227, %209, %cst_216 {dimension_numbers = #tpu.dot_dimension_numbers<[1], [0], [0], [1], [0, 0, 1, 1], [], []>} : vector<64x32xf32>, vector<32x6xf32>, vector<64x6xf32> -> vector<64x6xf32>
    %229 = arith.addf %225, %228 : vector<64x6xf32>
    %230 = vector.broadcast %200 : vector<64x1xf32> to vector<64x6xf32>
    %231 = arith.addf %229, %230 : vector<64x6xf32>
    %cst_217 = arith.constant 0.000000e+00 : f32
    %232 = vector.broadcast %cst_217 : f32 to vector<64x6xf32>
    %233 = arith.maximumf %231, %232 : vector<64x6xf32>
    %c0_218 = arith.constant 0 : index
    %c0_219 = arith.constant 0 : index
    %c0_220 = arith.constant 0 : index
    %234 = vector.load %arg9[%c0_218, %c0_219, %c0_220] : memref<3x64x32xf32, #tpu.memory_space<vmem>>, vector<1x64x32xf32>
    %235 = vector.shape_cast %234 : vector<1x64x32xf32> to vector<64x32xf32>
    %cst_221 = arith.constant dense<0.000000e+00> : vector<64x6xf32>
    %236 = tpu.matmul %235, %206, %cst_221 {dimension_numbers = #tpu.dot_dimension_numbers<[1], [0], [0], [1], [0, 0, 1, 1], [], []>} : vector<64x32xf32>, vector<32x6xf32>, vector<64x6xf32> -> vector<64x6xf32>
    %c1_222 = arith.constant 1 : index
    %c0_223 = arith.constant 0 : index
    %c0_224 = arith.constant 0 : index
    %237 = vector.load %arg9[%c1_222, %c0_223, %c0_224] : memref<3x64x32xf32, #tpu.memory_space<vmem>>, vector<1x64x32xf32>
    %238 = vector.shape_cast %237 : vector<1x64x32xf32> to vector<64x32xf32>
    %cst_225 = arith.constant dense<0.000000e+00> : vector<64x6xf32>
    %239 = tpu.matmul %238, %209, %cst_225 {dimension_numbers = #tpu.dot_dimension_numbers<[1], [0], [0], [1], [0, 0, 1, 1], [], []>} : vector<64x32xf32>, vector<32x6xf32>, vector<64x6xf32> -> vector<64x6xf32>
    %240 = arith.addf %236, %239 : vector<64x6xf32>
    %c2_226 = arith.constant 2 : index
    %c0_227 = arith.constant 0 : index
    %c0_228 = arith.constant 0 : index
    %241 = vector.load %arg9[%c2_226, %c0_227, %c0_228] : memref<3x64x32xf32, #tpu.memory_space<vmem>>, vector<1x64x32xf32>
    %242 = vector.shape_cast %241 : vector<1x64x32xf32> to vector<64x32xf32>
    %cst_229 = arith.constant dense<0.000000e+00> : vector<64x6xf32>
    %243 = tpu.matmul %242, %212, %cst_229 {dimension_numbers = #tpu.dot_dimension_numbers<[1], [0], [0], [1], [0, 0, 1, 1], [], []>} : vector<64x32xf32>, vector<32x6xf32>, vector<64x6xf32> -> vector<64x6xf32>
    %244 = arith.addf %240, %243 : vector<64x6xf32>
    %245 = vector.broadcast %200 : vector<64x1xf32> to vector<64x6xf32>
    %246 = arith.addf %244, %245 : vector<64x6xf32>
    %cst_230 = arith.constant 0.000000e+00 : f32
    %247 = vector.broadcast %cst_230 : f32 to vector<64x6xf32>
    %248 = arith.maximumf %246, %247 : vector<64x6xf32>
    %249 = arith.maximumf %233, %248 : vector<64x6xf32>
    %c0_231 = arith.constant 0 : index
    %c0_232 = arith.constant 0 : index
    %c0_233 = arith.constant 0 : index
    %250 = vector.load %arg9[%c0_231, %c0_232, %c0_233] : memref<3x64x32xf32, #tpu.memory_space<vmem>>, vector<1x64x32xf32>
    %251 = vector.shape_cast %250 : vector<1x64x32xf32> to vector<64x32xf32>
    %cst_234 = arith.constant dense<0.000000e+00> : vector<64x6xf32>
    %252 = tpu.matmul %251, %209, %cst_234 {dimension_numbers = #tpu.dot_dimension_numbers<[1], [0], [0], [1], [0, 0, 1, 1], [], []>} : vector<64x32xf32>, vector<32x6xf32>, vector<64x6xf32> -> vector<64x6xf32>
    %c1_235 = arith.constant 1 : index
    %c0_236 = arith.constant 0 : index
    %c0_237 = arith.constant 0 : index
    %253 = vector.load %arg9[%c1_235, %c0_236, %c0_237] : memref<3x64x32xf32, #tpu.memory_space<vmem>>, vector<1x64x32xf32>
    %254 = vector.shape_cast %253 : vector<1x64x32xf32> to vector<64x32xf32>
    %cst_238 = arith.constant dense<0.000000e+00> : vector<64x6xf32>
    %255 = tpu.matmul %254, %212, %cst_238 {dimension_numbers = #tpu.dot_dimension_numbers<[1], [0], [0], [1], [0, 0, 1, 1], [], []>} : vector<64x32xf32>, vector<32x6xf32>, vector<64x6xf32> -> vector<64x6xf32>
    %256 = arith.addf %252, %255 : vector<64x6xf32>
    %c2_239 = arith.constant 2 : index
    %c0_240 = arith.constant 0 : index
    %c0_241 = arith.constant 0 : index
    %257 = vector.load %arg9[%c2_239, %c0_240, %c0_241] : memref<3x64x32xf32, #tpu.memory_space<vmem>>, vector<1x64x32xf32>
    %258 = vector.shape_cast %257 : vector<1x64x32xf32> to vector<64x32xf32>
    %cst_242 = arith.constant dense<0.000000e+00> : vector<64x6xf32>
    %259 = tpu.matmul %258, %215, %cst_242 {dimension_numbers = #tpu.dot_dimension_numbers<[1], [0], [0], [1], [0, 0, 1, 1], [], []>} : vector<64x32xf32>, vector<32x6xf32>, vector<64x6xf32> -> vector<64x6xf32>
    %260 = arith.addf %256, %259 : vector<64x6xf32>
    %261 = vector.broadcast %200 : vector<64x1xf32> to vector<64x6xf32>
    %262 = arith.addf %260, %261 : vector<64x6xf32>
    %cst_243 = arith.constant 0.000000e+00 : f32
    %263 = vector.broadcast %cst_243 : f32 to vector<64x6xf32>
    %264 = arith.maximumf %262, %263 : vector<64x6xf32>
    %265 = arith.maximumf %249, %264 : vector<64x6xf32>
    %c0_244 = arith.constant 0 : index
    %c0_245 = arith.constant 0 : index
    %c0_246 = arith.constant 0 : index
    %266 = vector.load %arg9[%c0_244, %c0_245, %c0_246] : memref<3x64x32xf32, #tpu.memory_space<vmem>>, vector<1x64x32xf32>
    %267 = vector.shape_cast %266 : vector<1x64x32xf32> to vector<64x32xf32>
    %cst_247 = arith.constant dense<0.000000e+00> : vector<64x6xf32>
    %268 = tpu.matmul %267, %212, %cst_247 {dimension_numbers = #tpu.dot_dimension_numbers<[1], [0], [0], [1], [0, 0, 1, 1], [], []>} : vector<64x32xf32>, vector<32x6xf32>, vector<64x6xf32> -> vector<64x6xf32>
    %c1_248 = arith.constant 1 : index
    %c0_249 = arith.constant 0 : index
    %c0_250 = arith.constant 0 : index
    %269 = vector.load %arg9[%c1_248, %c0_249, %c0_250] : memref<3x64x32xf32, #tpu.memory_space<vmem>>, vector<1x64x32xf32>
    %270 = vector.shape_cast %269 : vector<1x64x32xf32> to vector<64x32xf32>
    %cst_251 = arith.constant dense<0.000000e+00> : vector<64x6xf32>
    %271 = tpu.matmul %270, %215, %cst_251 {dimension_numbers = #tpu.dot_dimension_numbers<[1], [0], [0], [1], [0, 0, 1, 1], [], []>} : vector<64x32xf32>, vector<32x6xf32>, vector<64x6xf32> -> vector<64x6xf32>
    %272 = arith.addf %268, %271 : vector<64x6xf32>
    %c2_252 = arith.constant 2 : index
    %c0_253 = arith.constant 0 : index
    %c0_254 = arith.constant 0 : index
    %273 = vector.load %arg9[%c2_252, %c0_253, %c0_254] : memref<3x64x32xf32, #tpu.memory_space<vmem>>, vector<1x64x32xf32>
    %274 = vector.shape_cast %273 : vector<1x64x32xf32> to vector<64x32xf32>
    %cst_255 = arith.constant dense<0.000000e+00> : vector<64x6xf32>
    %275 = tpu.matmul %274, %218, %cst_255 {dimension_numbers = #tpu.dot_dimension_numbers<[1], [0], [0], [1], [0, 0, 1, 1], [], []>} : vector<64x32xf32>, vector<32x6xf32>, vector<64x6xf32> -> vector<64x6xf32>
    %276 = arith.addf %272, %275 : vector<64x6xf32>
    %277 = vector.broadcast %200 : vector<64x1xf32> to vector<64x6xf32>
    %278 = arith.addf %276, %277 : vector<64x6xf32>
    %cst_256 = arith.constant 0.000000e+00 : f32
    %279 = vector.broadcast %cst_256 : f32 to vector<64x6xf32>
    %280 = arith.maximumf %278, %279 : vector<64x6xf32>
    %281 = arith.maximumf %265, %280 : vector<64x6xf32>
    %c0_257 = arith.constant 0 : index
    %c0_258 = arith.constant 0 : index
    %282 = vector.load %arg12[%c0_257, %c0_258] : memref<6x2xf32, #tpu.memory_space<vmem>>, vector<6x2xf32>
    %cst_259 = arith.constant dense<0.000000e+00> : vector<64x2xf32>
    %283 = tpu.matmul %281, %282, %cst_259 {dimension_numbers = #tpu.dot_dimension_numbers<[1], [0], [0], [1], [0, 0, 1, 1], [], []>} : vector<64x6xf32>, vector<6x2xf32>, vector<64x2xf32> -> vector<64x2xf32>
    %c0_260 = arith.constant 0 : index
    %c0_261 = arith.constant 0 : index
    %284 = vector.load %arg13[%c0_260, %c0_261] : memref<6x64xf32, #tpu.memory_space<vmem>>, vector<6x64xf32>
    %cst_262 = arith.constant dense<0.000000e+00> : vector<6x2xf32>
    %285 = tpu.matmul %284, %283, %cst_262 {dimension_numbers = #tpu.dot_dimension_numbers<[1], [0], [0], [1], [0, 0, 1, 1], [], []>} : vector<6x64xf32>, vector<64x2xf32>, vector<6x2xf32> -> vector<6x2xf32>
    %c0_263 = arith.constant 0 : index
    %c0_264 = arith.constant 0 : index
    %286 = vector.load %arg14[%c0_263, %c0_264] : memref<6x1xf32, #tpu.memory_space<vmem>>, vector<6x1xf32>
    %287 = vector.broadcast %286 : vector<6x1xf32> to vector<6x2xf32>
    %288 = arith.addf %285, %287 : vector<6x2xf32>
    %c0_265 = arith.constant 0 : index
    %c0_266 = arith.constant 0 : index
    %289 = vector.load %arg15[%c0_265, %c0_266] : memref<6x2xf32, #tpu.memory_space<vmem>>, vector<6x2xf32>
    tpu.vector_store %arg15[%c0_265, %c0_266], %288 {strides = array<i32>} : memref<6x2xf32, #tpu.memory_space<vmem>>, vector<6x2xf32>,
    return
  }
}

</mosaic_0001>

<llo_original>
// kernel: net_forward.1
$region0: #{net_forward.1}
  #allocation0 [shape = 'u32[]', space=smem, size = 0x4, offset = 0x4, fixed_abs, tag = 'smem constant byte address 0x4 - core index']
  #allocation1 [shape = 'u32[144,128]{1,0:T(1,128)}', space=vmem, size = 0x12000, scoped, tag = 'internal scratch']
  %s0 = inlined_call_operand.vmem [shape: f32[4,80,400], index: 0, kind: input, shape index: {}]
  %s1 = inlined_call_operand.vmem [shape: f32[16,80], index: 1, kind: input, shape index: {}]
  %s2 = inlined_call_operand.vmem [shape: f32[16,1], index: 2, kind: input, shape index: {}]
  %s3 = inlined_call_operand.vmem [shape: f32[3,16,16], index: 3, kind: input, shape index: {}]
  %s4 = inlined_call_operand.vmem [shape: f32[16,1], index: 4, kind: input, shape index: {}]
  %s5 = inlined_call_operand.vmem [shape: f32[6,400,100], index: 5, kind: input, shape index: {}]
  %s6 = inlined_call_operand.vmem [shape: f32[3,32,16], index: 6, kind: input, shape index: {}]
  %s7 = inlined_call_operand.vmem [shape: f32[32,1], index: 7, kind: input, shape index: {}]
  %s8 = inlined_call_operand.vmem [shape: f32[6,100,24], index: 8, kind: input, shape index: {}]
  %s9 = inlined_call_operand.vmem [shape: f32[3,64,32], index: 9, kind: input, shape index: {}]
  %s10 = inlined_call_operand.vmem [shape: f32[64,1], index: 10, kind: input, shape index: {}]
  %s11 = inlined_call_operand.vmem [shape: f32[6,24,6], index: 11, kind: input, shape index: {}]
  %s12 = inlined_call_operand.vmem [shape: f32[6,2], index: 12, kind: input, shape index: {}]
  %s13 = inlined_call_operand.vmem [shape: f32[6,64], index: 13, kind: input, shape index: {}]
  %s14 = inlined_call_operand.vmem [shape: f32[6,1], index: 14, kind: input, shape index: {}]
  %s15 = inlined_call_operand.vmem [shape: f32[6,2], index: 15, kind: output, shape index: {}]
  %s16 = sld [smem:[#allocation0]]
  $region70: #{net_forward.1} parent=0
    _
  %s18 = ssub.s32 1, %s16
  %s19 = scalar_select 0, %s18, %s16
  // Predicated region
  $region2: #{net_forward.1} parent=0 // pred_check
    _
  $region3: #{net_forward.1} parent=0 // pred_check_branch
    %21 = sbr.rel (0) target = $region5
  $region4: #{net_forward.1} parent=0 // pred_region
    _
  $region5: #{net_forward.1} parent=0 // pred_fallthru
    _
  // Predicated region
  $region6: #{net_forward.1} parent=0 // pred_check
    _
  $region7: #{net_forward.1} parent=0 // pred_check_branch
    %23 = sbr.rel (0) target = $region9
  $region8: #{net_forward.1} parent=0 // pred_region
    _
  $region9: #{net_forward.1} parent=0 // pred_fallthru
    _
  // Predicated region
  $region10: #{net_forward.1} parent=0 // pred_check
    _
  $region11: #{net_forward.1} parent=0 // pred_check_branch
    %25 = sbr.rel (0) target = $region13
  $region12: #{net_forward.1} parent=0 // pred_region
    _
  $region13: #{net_forward.1} parent=0 // pred_fallthru
    _
  // Predicated region
  $region14: #{net_forward.1} parent=0 // pred_check
    _
  $region15: #{net_forward.1} parent=0 // pred_check_branch
    %27 = sbr.rel (0) target = $region17
  $region16: #{net_forward.1} parent=0 // pred_region
    _
  $region17: #{net_forward.1} parent=0 // pred_fallthru
    _
  // Predicated region
  $region18: #{net_forward.1} parent=0 // pred_check
    _
  $region19: #{net_forward.1} parent=0 // pred_check_branch
    %29 = sbr.rel (0) target = $region21
  $region20: #{net_forward.1} parent=0 // pred_region
    _
  $region21: #{net_forward.1} parent=0 // pred_fallthru
    _
  // Predicated region
  $region22: #{net_forward.1} parent=0 // pred_check
    _
  $region23: #{net_forward.1} parent=0 // pred_check_branch
    %31 = sbr.rel (0) target = $region25
  $region24: #{net_forward.1} parent=0 // pred_region
    _
  $region25: #{net_forward.1} parent=0 // pred_fallthru
    _
  // Predicated region
  $region26: #{net_forward.1} parent=0 // pred_check
    _
  $region27: #{net_forward.1} parent=0 // pred_check_branch
    %33 = sbr.rel (0) target = $region29
  $region28: #{net_forward.1} parent=0 // pred_region
    _
  $region29: #{net_forward.1} parent=0 // pred_fallthru
    _
  // Predicated region
  $region30: #{net_forward.1} parent=0 // pred_check
    _
  $region31: #{net_forward.1} parent=0 // pred_check_branch
    %35 = sbr.rel (0) target = $region33
  $region32: #{net_forward.1} parent=0 // pred_region
    _
  $region33: #{net_forward.1} parent=0 // pred_fallthru
    _
  // Predicated region
  $region34: #{net_forward.1} parent=0 // pred_check
    _
  $region35: #{net_forward.1} parent=0 // pred_check_branch
    %37 = sbr.rel (0) target = $region37
  $region36: #{net_forward.1} parent=0 // pred_region
    _
  $region37: #{net_forward.1} parent=0 // pred_fallthru
    _
  // Predicated region
  $region38: #{net_forward.1} parent=0 // pred_check
    _
  $region39: #{net_forward.1} parent=0 // pred_check_branch
    %39 = sbr.rel (0) target = $region41
  $region40: #{net_forward.1} parent=0 // pred_region
    _
  $region41: #{net_forward.1} parent=0 // pred_fallthru
    _
  // Predicated region
  $region42: #{net_forward.1} parent=0 // pred_check
    _
  $region43: #{net_forward.1} parent=0 // pred_check_branch
    %41 = sbr.rel (0) target = $region45
  $region44: #{net_forward.1} parent=0 // pred_region
    _
  $region45: #{net_forward.1} parent=0 // pred_fallthru
    _
  // Predicated region
  $region46: #{net_forward.1} parent=0 // pred_check
    _
  $region47: #{net_forward.1} parent=0 // pred_check_branch
    %43 = sbr.rel (0) target = $region49
  $region48: #{net_forward.1} parent=0 // pred_region
    _
  $region49: #{net_forward.1} parent=0 // pred_fallthru
    _
  // Predicated region
  $region50: #{net_forward.1} parent=0 // pred_check
    _
  $region51: #{net_forward.1} parent=0 // pred_check_branch
    %45 = sbr.rel (0) target = $region53
  $region52: #{net_forward.1} parent=0 // pred_region
    _
  $region53: #{net_forward.1} parent=0 // pred_fallthru
    _
  // Predicated region
  $region54: #{net_forward.1} parent=0 // pred_check
    _
  $region55: #{net_forward.1} parent=0 // pred_check_branch
    %47 = sbr.rel (0) target = $region57
  $region56: #{net_forward.1} parent=0 // pred_region
    _
  $region57: #{net_forward.1} parent=0 // pred_fallthru
    _
  // Predicated region
  $region58: #{net_forward.1} parent=0 // pred_check
    _
  $region59: #{net_forward.1} parent=0 // pred_check_branch
    %49 = sbr.rel (0) target = $region61
  $region60: #{net_forward.1} parent=0 // pred_region
    _
  $region61: #{net_forward.1} parent=0 // pred_fallthru
    _
  %v50 = vld [vmem:[%s2] sm:$0xff]
  %v51 = vld [vmem:[%s2 + $0x8] sm:$0xff]
  %v52 = vld [vmem:[%s1] sm:$0xff]
  %v53 = vld [vmem:[%s1 + $0x8] sm:$0xff]
  %v54 = vld [vmem:[%s0] sm:$0xff]
  %v55 = vld [vmem:[%s0 + $0x8] sm:$0xff]
  %v56 = vld [vmem:[%s0 + $0x10] sm:$0xff]
  %v57 = vld [vmem:[%s0 + $0x18] sm:$0xff]
  %v58 = vld [vmem:[%s0 + $0x20] sm:$0xff]
  %v59 = vld [vmem:[%s0 + $0x28] sm:$0xff]
  %v60 = vld [vmem:[%s0 + $0x30] sm:$0xff]
  %v61 = vld [vmem:[%s0 + $0x38] sm:$0xff]
  %v62 = vld [vmem:[%s0 + $0x40] sm:$0xff]
  %v63 = vld [vmem:[%s0 + $0x48] sm:$0xff]
  %v64 = vld [vmem:[%s0 + $0x50] sm:$0xff]
  %v65 = vld [vmem:[%s0 + $0x58] sm:$0xff]
  %v66 = vld [vmem:[%s0 + $0x60] sm:$0xff]
  %v67 = vld [vmem:[%s0 + $0x68] sm:$0xff]
  %v68 = vld [vmem:[%s0 + $0x70] sm:$0xff]
  %v69 = vld [vmem:[%s0 + $0x78] sm:$0xff]
  %v70 = vld [vmem:[%s0 + $0x80] sm:$0xff]
  %v71 = vld [vmem:[%s0 + $0x88] sm:$0xff]
  %v72 = vld [vmem:[%s0 + $0x90] sm:$0xff]
  %v73 = vld [vmem:[%s0 + $0x98] sm:$0xff]
  %v74 = vld [vmem:[%s0 + $0xa0] sm:$0xff]
  %v75 = vld [vmem:[%s0 + $0xa8] sm:$0xff]
  %v76 = vld [vmem:[%s0 + $0xb0] sm:$0xff]
  %v77 = vld [vmem:[%s0 + $0xb8] sm:$0xff]
  %v78 = vld [vmem:[%s0 + $0xc0] sm:$0xff]
  %v79 = vld [vmem:[%s0 + $0xc8] sm:$0xff]
  %v80 = vld [vmem:[%s0 + $0xd0] sm:$0xff]
  %v81 = vld [vmem:[%s0 + $0xd8] sm:$0xff]
  %v82 = vld [vmem:[%s0 + $0xe0] sm:$0xff]
  %v83 = vld [vmem:[%s0 + $0xe8] sm:$0xff]
  %v84 = vld [vmem:[%s0 + $0xf0] sm:$0xff]
  %v85 = vld [vmem:[%s0 + $0xf8] sm:$0xff]
  %v86 = vld [vmem:[%s0 + $0x100] sm:$0xff]
  %v87 = vld [vmem:[%s0 + $0x108] sm:$0xff]
  %v88 = vld [vmem:[%s0 + $0x110] sm:$0xff]
  %v89 = vld [vmem:[%s0 + $0x118] sm:$0xff]
  %v90 = vld [vmem:[%s0 + $0x120] sm:$0xff]
  %v91 = vld [vmem:[%s0 + $0x128] sm:$0xff]
  %v92 = vld [vmem:[%s0 + $0x130] sm:$0xff]
  %v93 = vld [vmem:[%s0 + $0x138] sm:$0xff]
  %95 = vset.pattern.permute.xlu0 0
  %96 = vperm.xlu0 %95, %v50
  %v97 = vpop.permute.xlu0 %96
  %100 = vset.pattern.permute.xlu0 0
  %101 = vperm.xlu0 %100, %v51
  %v102 = vpop.permute.xlu0 %101
  %vm104 = vcmask 654336
  %v106 = vsel %vm104, %v52, 0
  %v109 = vsel %vm104, %v53, 0
  %111 = vmatprep.subr.mxu0 0.0
  %112 = vmatpush1.msra.mxu0 0.0
  %113 = vmatprep.subr.mxu0 0.0
  %114 = vmatpush1.msra.mxu0 0.0
  %115 = vmatprep.subr.mxu0 0.0
  %116 = vmatpush1.msra.mxu0 0.0
  %117 = vmatprep.subr.mxu0 0.0
  %118 = vmatpush1.msra.mxu0 0.0
  %119 = vmatprep.subr.mxu0 0.0
  %120 = vmatpush1.msra.mxu0 0.0
  %121 = vmatprep.subr.mxu0 0.0
  %122 = vmatpush1.msra.mxu0 0.0
  %123 = vmatprep.subr.mxu0 %v91
  %124 = vmatpush1.msra.mxu0 %v90
  %125 = vmatprep.subr.mxu0 %v87
  %126 = vmatpush1.msra.mxu0 %v86
  %127 = vmatprep.subr.mxu0 %v83
  %128 = vmatpush1.msra.mxu0 %v82
  %129 = vmatprep.subr.mxu0 %v79
  %130 = vmatpush1.msra.mxu0 %v78
  %131 = vmatprep.subr.mxu0 %v75
  %132 = vmatpush1.msra.mxu0 %v74
  %133 = vmatprep.subr.mxu0 %v71
  %134 = vmatpush1.msra.mxu0 %v70
  %135 = vmatprep.subr.mxu0 %v67
  %136 = vmatpush1.msra.mxu0 %v66
  %137 = vmatprep.subr.mxu0 %v63
  %138 = vmatpush1.msra.mxu0 %v62
  %139 = vmatprep.subr.mxu0 %v59
  %140 = vmatpush1.msra.mxu0 %v58
  %141 = vmatprep.subr.mxu0 %v55
  %142 = vmatpush1.msra.mxu0 %v54
  %143 = vmatprep.subr.mxu0 0.0
  %144 = vmatpush2.msra.mxu0 0.0
  %145 = vmatprep.subr.mxu0 0.0
  %146 = vmatpush2.msra.mxu0 0.0
  %147 = vmatprep.subr.mxu0 0.0
  %148 = vmatpush2.msra.mxu0 0.0
  %149 = vmatprep.subr.mxu0 0.0
  %150 = vmatpush2.msra.mxu0 0.0
  %151 = vmatprep.subr.mxu0 0.0
  %152 = vmatpush2.msra.mxu0 0.0
  %153 = vmatprep.subr.mxu0 0.0
  %154 = vmatpush2.msra.mxu0 0.0
  %155 = vmatprep.subr.mxu0 0.0
  %156 = vmatpush2.msra.mxu0 0.0
  %157 = vmatprep.subr.mxu0 0.0
  %158 = vmatpush2.msra.mxu0 0.0
  %159 = vmatprep.subr.mxu0 0.0
  %160 = vmatpush2.msra.mxu0 0.0
  %161 = vmatprep.subr.mxu0 0.0
  %162 = vmatpush2.msra.mxu0 0.0
  %163 = vmatprep.subr.mxu0 0.0
  %164 = vmatpush2.msra.mxu0 0.0
  %165 = vmatprep.subr.mxu0 0.0
  %166 = vmatpush2.msra.mxu0 0.0
  %167 = vmatprep.subr.mxu0 0.0
  %168 = vmatpush2.msra.mxu0 0.0
  %169 = vmatprep.subr.mxu0 0.0
  %170 = vmatpush2.msra.mxu0 0.0
  %171 = vmatprep.subr.mxu0 0.0
  %172 = vmatpush2.msra.mxu0 0.0
  %173 = vmatprep.subr.mxu0 0.0
  %174 = vmatpush2.msra.mxu0 0.0
  %175 = vmatprep.mubr.f32.mxu0 0.0
  %176 = vmatmul.mubr.f32.gmra.mxu0 %v106
  %v177 = vpop.f32.mrf.mxu0
  %v178 = vadd.f32 %v97, %v177
  %v179 = vpop.f32.mrf.mxu0
  %v180 = vadd.f32 %v97, %v179
  %181 = vmatprep.mubr.f32.mxu0 0.0
  %182 = vmatmul.mubr.f32.gmra.mxu0 %v109
  %v183 = vpop.f32.mrf.mxu0
  %v184 = vadd.f32 %v102, %v183
  %v185 = vpop.f32.mrf.mxu0
  %v186 = vadd.f32 %v102, %v185
  %187 = vdwg.mxu0
  %188 = vmatprep.subr.mxu0 0.0
  %189 = vmatpush1.msra.mxu0 0.0
  %190 = vmatprep.subr.mxu0 0.0
  %191 = vmatpush1.msra.mxu0 0.0
  %192 = vmatprep.subr.mxu0 0.0
  %193 = vmatpush1.msra.mxu0 0.0
  %194 = vmatprep.subr.mxu0 0.0
  %195 = vmatpush1.msra.mxu0 0.0
  %196 = vmatprep.subr.mxu0 0.0
  %197 = vmatpush1.msra.mxu0 0.0
  %198 = vmatprep.subr.mxu0 0.0
  %199 = vmatpush1.msra.mxu0 0.0
  %200 = vmatprep.subr.mxu0 %v93
  %201 = vmatpush1.msra.mxu0 %v92
  %202 = vmatprep.subr.mxu0 %v89
  %203 = vmatpush1.msra.mxu0 %v88
  %204 = vmatprep.subr.mxu0 %v85
  %205 = vmatpush1.msra.mxu0 %v84
  %206 = vmatprep.subr.mxu0 %v81
  %207 = vmatpush1.msra.mxu0 %v80
  %208 = vmatprep.subr.mxu0 %v77
  %209 = vmatpush1.msra.mxu0 %v76
  %210 = vmatprep.subr.mxu0 %v73
  %211 = vmatpush1.msra.mxu0 %v72
  %212 = vmatprep.subr.mxu0 %v69
  %213 = vmatpush1.msra.mxu0 %v68
  %214 = vmatprep.subr.mxu0 %v65
  %215 = vmatpush1.msra.mxu0 %v64
  %216 = vmatprep.subr.mxu0 %v61
  %217 = vmatpush1.msra.mxu0 %v60
  %218 = vmatprep.subr.mxu0 %v57
  %219 = vmatpush1.msra.mxu0 %v56
  %220 = vmatprep.subr.mxu0 0.0
  %221 = vmatpush2.msra.mxu0 0.0
  %222 = vmatprep.subr.mxu0 0.0
  %223 = vmatpush2.msra.mxu0 0.0
  %224 = vmatprep.subr.mxu0 0.0
  %225 = vmatpush2.msra.mxu0 0.0
  %226 = vmatprep.subr.mxu0 0.0
  %227 = vmatpush2.msra.mxu0 0.0
  %228 = vmatprep.subr.mxu0 0.0
  %229 = vmatpush2.msra.mxu0 0.0
  %230 = vmatprep.subr.mxu0 0.0
  %231 = vmatpush2.msra.mxu0 0.0
  %232 = vmatprep.subr.mxu0 0.0
  %233 = vmatpush2.msra.mxu0 0.0
  %234 = vmatprep.subr.mxu0 0.0
  %235 = vmatpush2.msra.mxu0 0.0
  %236 = vmatprep.subr.mxu0 0.0
  %237 = vmatpush2.msra.mxu0 0.0
  %238 = vmatprep.subr.mxu0 0.0
  %239 = vmatpush2.msra.mxu0 0.0
  %240 = vmatprep.subr.mxu0 0.0
  %241 = vmatpush2.msra.mxu0 0.0
  %242 = vmatprep.subr.mxu0 0.0
  %243 = vmatpush2.msra.mxu0 0.0
  %244 = vmatprep.subr.mxu0 0.0
  %245 = vmatpush2.msra.mxu0 0.0
  %246 = vmatprep.subr.mxu0 0.0
  %247 = vmatpush2.msra.mxu0 0.0
  %248 = vmatprep.subr.mxu0 0.0
  %249 = vmatpush2.msra.mxu0 0.0
  %250 = vmatprep.subr.mxu0 0.0
  %251 = vmatpush2.msra.mxu0 0.0
  %252 = vmatprep.mubr.f32.mxu0 0.0
  %253 = vmatmul.mubr.f32.gmra.mxu0 %v106
  %v254 = vpop.f32.mrf.mxu0
  %v255 = vadd.f32 %v97, %v254
  %v256 = vpop.f32.mrf.mxu0
  %v257 = vadd.f32 %v97, %v256
  %258 = vmatprep.mubr.f32.mxu0 0.0
  %259 = vmatmul.mubr.f32.gmra.mxu0 %v109
  %v260 = vpop.f32.mrf.mxu0
  %v261 = vadd.f32 %v102, %v260
  %v262 = vpop.f32.mrf.mxu0
  %v263 = vadd.f32 %v102, %v262
  %264 = vdwg.mxu0
  %v265 = vmax.f32 %v178, 0.0
  %v266 = vmax.f32 %v180, 0.0
  %v267 = vmax.f32 %v255, 0.0
  %v268 = vmax.f32 %v257, 0.0
  %v269 = vmax.f32 %v184, 0.0
  %v270 = vmax.f32 %v186, 0.0
  %v271 = vmax.f32 %v261, 0.0
  %v272 = vmax.f32 %v263, 0.0
  %s273 = scalar_lea.vmem %s0, 320
  %v274 = vld [vmem:[%s273] sm:$0xff]
  %v275 = vld [vmem:[%s273 + $0x8] sm:$0xff]
  %v276 = vld [vmem:[%s273 + $0x10] sm:$0xff]
  %v277 = vld [vmem:[%s273 + $0x18] sm:$0xff]
  %v278 = vld [vmem:[%s273 + $0x20] sm:$0xff]
  %v279 = vld [vmem:[%s273 + $0x28] sm:$0xff]
  %v280 = vld [vmem:[%s273 + $0x30] sm:$0xff]
  %v281 = vld [vmem:[%s273 + $0x38] sm:$0xff]
  %v282 = vld [vmem:[%s273 + $0x40] sm:$0xff]
  %v283 = vld [vmem:[%s273 + $0x48] sm:$0xff]
  %v284 = vld [vmem:[%s273 + $0x50] sm:$0xff]
  %v285 = vld [vmem:[%s273 + $0x58] sm:$0xff]
  %v286 = vld [vmem:[%s273 + $0x60] sm:$0xff]
  %v287 = vld [vmem:[%s273 + $0x68] sm:$0xff]
  %v288 = vld [vmem:[%s273 + $0x70] sm:$0xff]
  %v289 = vld [vmem:[%s273 + $0x78] sm:$0xff]
  %v290 = vld [vmem:[%s273 + $0x80] sm:$0xff]
  %v291 = vld [vmem:[%s273 + $0x88] sm:$0xff]
  %v292 = vld [vmem:[%s273 + $0x90] sm:$0xff]
  %v293 = vld [vmem:[%s273 + $0x98] sm:$0xff]
  %v294 = vld [vmem:[%s273 + $0xa0] sm:$0xff]
  %v295 = vld [vmem:[%s273 + $0xa8] sm:$0xff]
  %v296 = vld [vmem:[%s273 + $0xb0] sm:$0xff]
  %v297 = vld [vmem:[%s273 + $0xb8] sm:$0xff]
  %v298 = vld [vmem:[%s273 + $0xc0] sm:$0xff]
  %v299 = vld [vmem:[%s273 + $0xc8] sm:$0xff]
  %v300 = vld [vmem:[%s273 + $0xd0] sm:$0xff]
  %v301 = vld [vmem:[%s273 + $0xd8] sm:$0xff]
  %v302 = vld [vmem:[%s273 + $0xe0] sm:$0xff]
  %v303 = vld [vmem:[%s273 + $0xe8] sm:$0xff]
  %v304 = vld [vmem:[%s273 + $0xf0] sm:$0xff]
  %v305 = vld [vmem:[%s273 + $0xf8] sm:$0xff]
  %v306 = vld [vmem:[%s273 + $0x100] sm:$0xff]
  %v307 = vld [vmem:[%s273 + $0x108] sm:$0xff]
  %v308 = vld [vmem:[%s273 + $0x110] sm:$0xff]
  %v309 = vld [vmem:[%s273 + $0x118] sm:$0xff]
  %v310 = vld [vmem:[%s273 + $0x120] sm:$0xff]
  %v311 = vld [vmem:[%s273 + $0x128] sm:$0xff]
  %v312 = vld [vmem:[%s273 + $0x130] sm:$0xff]
  %v313 = vld [vmem:[%s273 + $0x138] sm:$0xff]
  %314 = vmatprep.subr.mxu0 0.0
  %315 = vmatpush1.msra.mxu0 0.0
  %316 = vmatprep.subr.mxu0 0.0
  %317 = vmatpush1.msra.mxu0 0.0
  %318 = vmatprep.subr.mxu0 0.0
  %319 = vmatpush1.msra.mxu0 0.0
  %320 = vmatprep.subr.mxu0 0.0
  %321 = vmatpush1.msra.mxu0 0.0
  %322 = vmatprep.subr.mxu0 0.0
  %323 = vmatpush1.msra.mxu0 0.0
  %324 = vmatprep.subr.mxu0 0.0
  %325 = vmatpush1.msra.mxu0 0.0
  %326 = vmatprep.subr.mxu0 %v311
  %327 = vmatpush1.msra.mxu0 %v310
  %328 = vmatprep.subr.mxu0 %v307
  %329 = vmatpush1.msra.mxu0 %v306
  %330 = vmatprep.subr.mxu0 %v303
  %331 = vmatpush1.msra.mxu0 %v302
  %332 = vmatprep.subr.mxu0 %v299
  %333 = vmatpush1.msra.mxu0 %v298
  %334 = vmatprep.subr.mxu0 %v295
  %335 = vmatpush1.msra.mxu0 %v294
  %336 = vmatprep.subr.mxu0 %v291
  %337 = vmatpush1.msra.mxu0 %v290
  %338 = vmatprep.subr.mxu0 %v287
  %339 = vmatpush1.msra.mxu0 %v286
  %340 = vmatprep.subr.mxu0 %v283
  %341 = vmatpush1.msra.mxu0 %v282
  %342 = vmatprep.subr.mxu0 %v279
  %343 = vmatpush1.msra.mxu0 %v278
  %344 = vmatprep.subr.mxu0 %v275
  %345 = vmatpush1.msra.mxu0 %v274
  %346 = vmatprep.subr.mxu0 0.0
  %347 = vmatpush2.msra.mxu0 0.0
  %348 = vmatprep.subr.mxu0 0.0
  %349 = vmatpush2.msra.mxu0 0.0
  %350 = vmatprep.subr.mxu0 0.0
  %351 = vmatpush2.msra.mxu0 0.0
  %352 = vmatprep.subr.mxu0 0.0
  %353 = vmatpush2.msra.mxu0 0.0
  %354 = vmatprep.subr.mxu0 0.0
  %355 = vmatpush2.msra.mxu0 0.0
  %356 = vmatprep.subr.mxu0 0.0
  %357 = vmatpush2.msra.mxu0 0.0
  %358 = vmatprep.subr.mxu0 0.0
  %359 = vmatpush2.msra.mxu0 0.0
  %360 = vmatprep.subr.mxu0 0.0
  %361 = vmatpush2.msra.mxu0 0.0
  %362 = vmatprep.subr.mxu0 0.0
  %363 = vmatpush2.msra.mxu0 0.0
  %364 = vmatprep.subr.mxu0 0.0
  %365 = vmatpush2.msra.mxu0 0.0
  %366 = vmatprep.subr.mxu0 0.0
  %367 = vmatpush2.msra.mxu0 0.0
  %368 = vmatprep.subr.mxu0 0.0
  %369 = vmatpush2.msra.mxu0 0.0
  %370 = vmatprep.subr.mxu0 0.0
  %371 = vmatpush2.msra.mxu0 0.0
  %372 = vmatprep.subr.mxu0 0.0
  %373 = vmatpush2.msra.mxu0 0.0
  %374 = vmatprep.subr.mxu0 0.0
  %375 = vmatpush2.msra.mxu0 0.0
  %376 = vmatprep.subr.mxu0 0.0
  %377 = vmatpush2.msra.mxu0 0.0
  %378 = vmatprep.mubr.f32.mxu0 0.0
  %379 = vmatmul.mubr.f32.gmra.mxu0 %v106
  %v380 = vpop.f32.mrf.mxu0
  %v381 = vadd.f32 %v97, %v380
  %v382 = vpop.f32.mrf.mxu0
  %v383 = vadd.f32 %v97, %v382
  %384 = vmatprep.mubr.f32.mxu0 0.0
  %385 = vmatmul.mubr.f32.gmra.mxu0 %v109
  %v386 = vpop.f32.mrf.mxu0
  %v387 = vadd.f32 %v102, %v386
  %v388 = vpop.f32.mrf.mxu0
  %v389 = vadd.f32 %v102, %v388
  %390 = vdwg.mxu0
  %391 = vmatprep.subr.mxu0 0.0
  %392 = vmatpush1.msra.mxu0 0.0
  %393 = vmatprep.subr.mxu0 0.0
  %394 = vmatpush1.msra.mxu0 0.0
  %395 = vmatprep.subr.mxu0 0.0
  %396 = vmatpush1.msra.mxu0 0.0
  %397 = vmatprep.subr.mxu0 0.0
  %398 = vmatpush1.msra.mxu0 0.0
  %399 = vmatprep.subr.mxu0 0.0
  %400 = vmatpush1.msra.mxu0 0.0
  %401 = vmatprep.subr.mxu0 0.0
  %402 = vmatpush1.msra.mxu0 0.0
  %403 = vmatprep.subr.mxu0 %v313
  %404 = vmatpush1.msra.mxu0 %v312
  %405 = vmatprep.subr.mxu0 %v309
  %406 = vmatpush1.msra.mxu0 %v308
  %407 = vmatprep.subr.mxu0 %v305
  %408 = vmatpush1.msra.mxu0 %v304
  %409 = vmatprep.subr.mxu0 %v301
  %410 = vmatpush1.msra.mxu0 %v300
  %411 = vmatprep.subr.mxu0 %v297
  %412 = vmatpush1.msra.mxu0 %v296
  %413 = vmatprep.subr.mxu0 %v293
  %414 = vmatpush1.msra.mxu0 %v292
  %415 = vmatprep.subr.mxu0 %v289
  %416 = vmatpush1.msra.mxu0 %v288
  %417 = vmatprep.subr.mxu0 %v285
  %418 = vmatpush1.msra.mxu0 %v284
  %419 = vmatprep.subr.mxu0 %v281
  %420 = vmatpush1.msra.mxu0 %v280
  %421 = vmatprep.subr.mxu0 %v277
  %422 = vmatpush1.msra.mxu0 %v276
  %423 = vmatprep.subr.mxu0 0.0
  %424 = vmatpush2.msra.mxu0 0.0
  %425 = vmatprep.subr.mxu0 0.0
  %426 = vmatpush2.msra.mxu0 0.0
  %427 = vmatprep.subr.mxu0 0.0
  %428 = vmatpush2.msra.mxu0 0.0
  %429 = vmatprep.subr.mxu0 0.0
  %430 = vmatpush2.msra.mxu0 0.0
  %431 = vmatprep.subr.mxu0 0.0
  %432 = vmatpush2.msra.mxu0 0.0
  %433 = vmatprep.subr.mxu0 0.0
  %434 = vmatpush2.msra.mxu0 0.0
  %435 = vmatprep.subr.mxu0 0.0
  %436 = vmatpush2.msra.mxu0 0.0
  %437 = vmatprep.subr.mxu0 0.0
  %438 = vmatpush2.msra.mxu0 0.0
  %439 = vmatprep.subr.mxu0 0.0
  %440 = vmatpush2.msra.mxu0 0.0
  %441 = vmatprep.subr.mxu0 0.0
  %442 = vmatpush2.msra.mxu0 0.0
  %443 = vmatprep.subr.mxu0 0.0
  %444 = vmatpush2.msra.mxu0 0.0
  %445 = vmatprep.subr.mxu0 0.0
  %446 = vmatpush2.msra.mxu0 0.0
  %447 = vmatprep.subr.mxu0 0.0
  %448 = vmatpush2.msra.mxu0 0.0
  %449 = vmatprep.subr.mxu0 0.0
  %450 = vmatpush2.msra.mxu0 0.0
  %451 = vmatprep.subr.mxu0 0.0
  %452 = vmatpush2.msra.mxu0 0.0
  %453 = vmatprep.subr.mxu0 0.0
  %454 = vmatpush2.msra.mxu0 0.0
  %455 = vmatprep.mubr.f32.mxu0 0.0
  %456 = vmatmul.mubr.f32.gmra.mxu0 %v106
  %v457 = vpop.f32.mrf.mxu0
  %v458 = vadd.f32 %v97, %v457
  %v459 = vpop.f32.mrf.mxu0
  %v460 = vadd.f32 %v97, %v459
  %461 = vmatprep.mubr.f32.mxu0 0.0
  %462 = vmatmul.mubr.f32.gmra.mxu0 %v109
  %v463 = vpop.f32.mrf.mxu0
  %v464 = vadd.f32 %v102, %v463
  %v465 = vpop.f32.mrf.mxu0
  %v466 = vadd.f32 %v102, %v465
  %467 = vdwg.mxu0
  %v468 = vmax.f32 %v381, 0.0
  %v469 = vmax.f32 %v383, 0.0
  %v470 = vmax.f32 %v458, 0.0
  %v471 = vmax.f32 %v460, 0.0
  %v472 = vmax.f32 %v387, 0.0
  %v473 = vmax.f32 %v389, 0.0
  %v474 = vmax.f32 %v464, 0.0
  %v475 = vmax.f32 %v466, 0.0
  %v476 = vmax.f32 %v265, %v468
  %v477 = vmax.f32 %v266, %v469
  %v478 = vmax.f32 %v267, %v470
  %v479 = vmax.f32 %v268, %v471
  %v480 = vmax.f32 %v269, %v472
  %v481 = vmax.f32 %v270, %v473
  %v482 = vmax.f32 %v271, %v474
  %v483 = vmax.f32 %v272, %v475
  %s484 = scalar_lea.vmem %s0, 640
  %v485 = vld [vmem:[%s484] sm:$0xff]
  %v486 = vld [vmem:[%s484 + $0x8] sm:$0xff]
  %v487 = vld [vmem:[%s484 + $0x10] sm:$0xff]
  %v488 = vld [vmem:[%s484 + $0x18] sm:$0xff]
  %v489 = vld [vmem:[%s484 + $0x20] sm:$0xff]
  %v490 = vld [vmem:[%s484 + $0x28] sm:$0xff]
  %v491 = vld [vmem:[%s484 + $0x30] sm:$0xff]
  %v492 = vld [vmem:[%s484 + $0x38] sm:$0xff]
  %v493 = vld [vmem:[%s484 + $0x40] sm:$0xff]
  %v494 = vld [vmem:[%s484 + $0x48] sm:$0xff]
  %v495 = vld [vmem:[%s484 + $0x50] sm:$0xff]
  %v496 = vld [vmem:[%s484 + $0x58] sm:$0xff]
  %v497 = vld [vmem:[%s484 + $0x60] sm:$0xff]
  %v498 = vld [vmem:[%s484 + $0x68] sm:$0xff]
  %v499 = vld [vmem:[%s484 + $0x70] sm:$0xff]
  %v500 = vld [vmem:[%s484 + $0x78] sm:$0xff]
  %v501 = vld [vmem:[%s484 + $0x80] sm:$0xff]
  %v502 = vld [vmem:[%s484 + $0x88] sm:$0xff]
  %v503 = vld [vmem:[%s484 + $0x90] sm:$0xff]
  %v504 = vld [vmem:[%s484 + $0x98] sm:$0xff]
  %v505 = vld [vmem:[%s484 + $0xa0] sm:$0xff]
  %v506 = vld [vmem:[%s484 + $0xa8] sm:$0xff]
  %v507 = vld [vmem:[%s484 + $0xb0] sm:$0xff]
  %v508 = vld [vmem:[%s484 + $0xb8] sm:$0xff]
  %v509 = vld [vmem:[%s484 + $0xc0] sm:$0xff]
  %v510 = vld [vmem:[%s484 + $0xc8] sm:$0xff]
  %v511 = vld [vmem:[%s484 + $0xd0] sm:$0xff]
  %v512 = vld [vmem:[%s484 + $0xd8] sm:$0xff]
  %v513 = vld [vmem:[%s484 + $0xe0] sm:$0xff]
  %v514 = vld [vmem:[%s484 + $0xe8] sm:$0xff]
  %v515 = vld [vmem:[%s484 + $0xf0] sm:$0xff]
  %v516 = vld [vmem:[%s484 + $0xf8] sm:$0xff]
  %v517 = vld [vmem:[%s484 + $0x100] sm:$0xff]
  %v518 = vld [vmem:[%s484 + $0x108] sm:$0xff]
  %v519 = vld [vmem:[%s484 + $0x110] sm:$0xff]
  %v520 = vld [vmem:[%s484 + $0x118] sm:$0xff]
  %v521 = vld [vmem:[%s484 + $0x120] sm:$0xff]
  %v522 = vld [vmem:[%s484 + $0x128] sm:$0xff]
  %v523 = vld [vmem:[%s484 + $0x130] sm:$0xff]
  %v524 = vld [vmem:[%s484 + $0x138] sm:$0xff]
  %525 = vmatprep.subr.mxu0 0.0
  %526 = vmatpush1.msra.mxu0 0.0
  %527 = vmatprep.subr.mxu0 0.0
  %528 = vmatpush1.msra.mxu0 0.0
  %529 = vmatprep.subr.mxu0 0.0
  %530 = vmatpush1.msra.mxu0 0.0
  %531 = vmatprep.subr.mxu0 0.0
  %532 = vmatpush1.msra.mxu0 0.0
  %533 = vmatprep.subr.mxu0 0.0
  %534 = vmatpush1.msra.mxu0 0.0
  %535 = vmatprep.subr.mxu0 0.0
  %536 = vmatpush1.msra.mxu0 0.0
  %537 = vmatprep.subr.mxu0 %v522
  %538 = vmatpush1.msra.mxu0 %v521
  %539 = vmatprep.subr.mxu0 %v518
  %540 = vmatpush1.msra.mxu0 %v517
  %541 = vmatprep.subr.mxu0 %v514
  %542 = vmatpush1.msra.mxu0 %v513
  %543 = vmatprep.subr.mxu0 %v510
  %544 = vmatpush1.msra.mxu0 %v509
  %545 = vmatprep.subr.mxu0 %v506
  %546 = vmatpush1.msra.mxu0 %v505
  %547 = vmatprep.subr.mxu0 %v502
  %548 = vmatpush1.msra.mxu0 %v501
  %549 = vmatprep.subr.mxu0 %v498
  %550 = vmatpush1.msra.mxu0 %v497
  %551 = vmatprep.subr.mxu0 %v494
  %552 = vmatpush1.msra.mxu0 %v493
  %553 = vmatprep.subr.mxu0 %v490
  %554 = vmatpush1.msra.mxu0 %v489
  %555 = vmatprep.subr.mxu0 %v486
  %556 = vmatpush1.msra.mxu0 %v485
  %557 = vmatprep.subr.mxu0 0.0
  %558 = vmatpush2.msra.mxu0 0.0
  %559 = vmatprep.subr.mxu0 0.0
  %560 = vmatpush2.msra.mxu0 0.0
  %561 = vmatprep.subr.mxu0 0.0
  %562 = vmatpush2.msra.mxu0 0.0
  %563 = vmatprep.subr.mxu0 0.0
  %564 = vmatpush2.msra.mxu0 0.0
  %565 = vmatprep.subr.mxu0 0.0
  %566 = vmatpush2.msra.mxu0 0.0
  %567 = vmatprep.subr.mxu0 0.0
  %568 = vmatpush2.msra.mxu0 0.0
  %569 = vmatprep.subr.mxu0 0.0
  %570 = vmatpush2.msra.mxu0 0.0
  %571 = vmatprep.subr.mxu0 0.0
  %572 = vmatpush2.msra.mxu0 0.0
  %573 = vmatprep.subr.mxu0 0.0
  %574 = vmatpush2.msra.mxu0 0.0
  %575 = vmatprep.subr.mxu0 0.0
  %576 = vmatpush2.msra.mxu0 0.0
  %577 = vmatprep.subr.mxu0 0.0
  %578 = vmatpush2.msra.mxu0 0.0
  %579 = vmatprep.subr.mxu0 0.0
  %580 = vmatpush2.msra.mxu0 0.0
  %581 = vmatprep.subr.mxu0 0.0
  %582 = vmatpush2.msra.mxu0 0.0
  %583 = vmatprep.subr.mxu0 0.0
  %584 = vmatpush2.msra.mxu0 0.0
  %585 = vmatprep.subr.mxu0 0.0
  %586 = vmatpush2.msra.mxu0 0.0
  %587 = vmatprep.subr.mxu0 0.0
  %588 = vmatpush2.msra.mxu0 0.0
  %589 = vmatprep.mubr.f32.mxu0 0.0
  %590 = vmatmul.mubr.f32.gmra.mxu0 %v106
  %v591 = vpop.f32.mrf.mxu0
  %v592 = vadd.f32 %v97, %v591
  %v593 = vpop.f32.mrf.mxu0
  %v594 = vadd.f32 %v97, %v593
  %595 = vmatprep.mubr.f32.mxu0 0.0
  %596 = vmatmul.mubr.f32.gmra.mxu0 %v109
  %v597 = vpop.f32.mrf.mxu0
  %v598 = vadd.f32 %v102, %v597
  %v599 = vpop.f32.mrf.mxu0
  %v600 = vadd.f32 %v102, %v599
  %601 = vdwg.mxu0
  %602 = vmatprep.subr.mxu0 0.0
  %603 = vmatpush1.msra.mxu0 0.0
  %604 = vmatprep.subr.mxu0 0.0
  %605 = vmatpush1.msra.mxu0 0.0
  %606 = vmatprep.subr.mxu0 0.0
  %607 = vmatpush1.msra.mxu0 0.0
  %608 = vmatprep.subr.mxu0 0.0
  %609 = vmatpush1.msra.mxu0 0.0
  %610 = vmatprep.subr.mxu0 0.0
  %611 = vmatpush1.msra.mxu0 0.0
  %612 = vmatprep.subr.mxu0 0.0
  %613 = vmatpush1.msra.mxu0 0.0
  %614 = vmatprep.subr.mxu0 %v524
  %615 = vmatpush1.msra.mxu0 %v523
  %616 = vmatprep.subr.mxu0 %v520
  %617 = vmatpush1.msra.mxu0 %v519
  %618 = vmatprep.subr.mxu0 %v516
  %619 = vmatpush1.msra.mxu0 %v515
  %620 = vmatprep.subr.mxu0 %v512
  %621 = vmatpush1.msra.mxu0 %v511
  %622 = vmatprep.subr.mxu0 %v508
  %623 = vmatpush1.msra.mxu0 %v507
  %624 = vmatprep.subr.mxu0 %v504
  %625 = vmatpush1.msra.mxu0 %v503
  %626 = vmatprep.subr.mxu0 %v500
  %627 = vmatpush1.msra.mxu0 %v499
  %628 = vmatprep.subr.mxu0 %v496
  %629 = vmatpush1.msra.mxu0 %v495
  %630 = vmatprep.subr.mxu0 %v492
  %631 = vmatpush1.msra.mxu0 %v491
  %632 = vmatprep.subr.mxu0 %v488
  %633 = vmatpush1.msra.mxu0 %v487
  %634 = vmatprep.subr.mxu0 0.0
  %635 = vmatpush2.msra.mxu0 0.0
  %636 = vmatprep.subr.mxu0 0.0
  %637 = vmatpush2.msra.mxu0 0.0
  %638 = vmatprep.subr.mxu0 0.0
  %639 = vmatpush2.msra.mxu0 0.0
  %640 = vmatprep.subr.mxu0 0.0
  %641 = vmatpush2.msra.mxu0 0.0
  %642 = vmatprep.subr.mxu0 0.0
  %643 = vmatpush2.msra.mxu0 0.0
  %644 = vmatprep.subr.mxu0 0.0
  %645 = vmatpush2.msra.mxu0 0.0
  %646 = vmatprep.subr.mxu0 0.0
  %647 = vmatpush2.msra.mxu0 0.0
  %648 = vmatprep.subr.mxu0 0.0
  %649 = vmatpush2.msra.mxu0 0.0
  %650 = vmatprep.subr.mxu0 0.0
  %651 = vmatpush2.msra.mxu0 0.0
  %652 = vmatprep.subr.mxu0 0.0
  %653 = vmatpush2.msra.mxu0 0.0
  %654 = vmatprep.subr.mxu0 0.0
  %655 = vmatpush2.msra.mxu0 0.0
  %656 = vmatprep.subr.mxu0 0.0
  %657 = vmatpush2.msra.mxu0 0.0
  %658 = vmatprep.subr.mxu0 0.0
  %659 = vmatpush2.msra.mxu0 0.0
  %660 = vmatprep.subr.mxu0 0.0
  %661 = vmatpush2.msra.mxu0 0.0
  %662 = vmatprep.subr.mxu0 0.0
  %663 = vmatpush2.msra.mxu0 0.0
  %664 = vmatprep.subr.mxu0 0.0
  %665 = vmatpush2.msra.mxu0 0.0
  %666 = vmatprep.mubr.f32.mxu0 0.0
  %667 = vmatmul.mubr.f32.gmra.mxu0 %v106
  %v668 = vpop.f32.mrf.mxu0
  %v669 = vadd.f32 %v97, %v668
  %v670 = vpop.f32.mrf.mxu0
  %v671 = vadd.f32 %v97, %v670
  %672 = vmatprep.mubr.f32.mxu0 0.0
  %673 = vmatmul.mubr.f32.gmra.mxu0 %v109
  %v674 = vpop.f32.mrf.mxu0
  %v675 = vadd.f32 %v102, %v674
  %v676 = vpop.f32.mrf.mxu0
  %v677 = vadd.f32 %v102, %v676
  %678 = vdwg.mxu0
  %v679 = vmax.f32 %v592, 0.0
  %v680 = vmax.f32 %v594, 0.0
  %v681 = vmax.f32 %v669, 0.0
  %v682 = vmax.f32 %v671, 0.0
  %v683 = vmax.f32 %v598, 0.0
  %v684 = vmax.f32 %v600, 0.0
  %v685 = vmax.f32 %v675, 0.0
  %v686 = vmax.f32 %v677, 0.0
  %v687 = vmax.f32 %v476, %v679
  %v688 = vmax.f32 %v477, %v680
  %v689 = vmax.f32 %v478, %v681
  %v690 = vmax.f32 %v479, %v682
  %v691 = vmax.f32 %v480, %v683
  %v692 = vmax.f32 %v481, %v684
  %v693 = vmax.f32 %v482, %v685
  %v694 = vmax.f32 %v483, %v686
  %s695 = scalar_lea.vmem %s0, 960
  %v696 = vld [vmem:[%s695] sm:$0xff]
  %v697 = vld [vmem:[%s695 + $0x8] sm:$0xff]
  %v698 = vld [vmem:[%s695 + $0x10] sm:$0xff]
  %v699 = vld [vmem:[%s695 + $0x18] sm:$0xff]
  %v700 = vld [vmem:[%s695 + $0x20] sm:$0xff]
  %v701 = vld [vmem:[%s695 + $0x28] sm:$0xff]
  %v702 = vld [vmem:[%s695 + $0x30] sm:$0xff]
  %v703 = vld [vmem:[%s695 + $0x38] sm:$0xff]
  %v704 = vld [vmem:[%s695 + $0x40] sm:$0xff]
  %v705 = vld [vmem:[%s695 + $0x48] sm:$0xff]
  %v706 = vld [vmem:[%s695 + $0x50] sm:$0xff]
  %v707 = vld [vmem:[%s695 + $0x58] sm:$0xff]
  %v708 = vld [vmem:[%s695 + $0x60] sm:$0xff]
  %v709 = vld [vmem:[%s695 + $0x68] sm:$0xff]
  %v710 = vld [vmem:[%s695 + $0x70] sm:$0xff]
  %v711 = vld [vmem:[%s695 + $0x78] sm:$0xff]
  %v712 = vld [vmem:[%s695 + $0x80] sm:$0xff]
  %v713 = vld [vmem:[%s695 + $0x88] sm:$0xff]
  %v714 = vld [vmem:[%s695 + $0x90] sm:$0xff]
  %v715 = vld [vmem:[%s695 + $0x98] sm:$0xff]
  %v716 = vld [vmem:[%s695 + $0xa0] sm:$0xff]
  %v717 = vld [vmem:[%s695 + $0xa8] sm:$0xff]
  %v718 = vld [vmem:[%s695 + $0xb0] sm:$0xff]
  %v719 = vld [vmem:[%s695 + $0xb8] sm:$0xff]
  %v720 = vld [vmem:[%s695 + $0xc0] sm:$0xff]
  %v721 = vld [vmem:[%s695 + $0xc8] sm:$0xff]
  %v722 = vld [vmem:[%s695 + $0xd0] sm:$0xff]
  %v723 = vld [vmem:[%s695 + $0xd8] sm:$0xff]
  %v724 = vld [vmem:[%s695 + $0xe0] sm:$0xff]
  %v725 = vld [vmem:[%s695 + $0xe8] sm:$0xff]
  %v726 = vld [vmem:[%s695 + $0xf0] sm:$0xff]
  %v727 = vld [vmem:[%s695 + $0xf8] sm:$0xff]
  %v728 = vld [vmem:[%s695 + $0x100] sm:$0xff]
  %v729 = vld [vmem:[%s695 + $0x108] sm:$0xff]
  %v730 = vld [vmem:[%s695 + $0x110] sm:$0xff]
  %v731 = vld [vmem:[%s695 + $0x118] sm:$0xff]
  %v732 = vld [vmem:[%s695 + $0x120] sm:$0xff]
  %v733 = vld [vmem:[%s695 + $0x128] sm:$0xff]
  %v734 = vld [vmem:[%s695 + $0x130] sm:$0xff]
  %v735 = vld [vmem:[%s695 + $0x138] sm:$0xff]
  %736 = vmatprep.subr.mxu0 0.0
  %737 = vmatpush1.msra.mxu0 0.0
  %738 = vmatprep.subr.mxu0 0.0
  %739 = vmatpush1.msra.mxu0 0.0
  %740 = vmatprep.subr.mxu0 0.0
  %741 = vmatpush1.msra.mxu0 0.0
  %742 = vmatprep.subr.mxu0 0.0
  %743 = vmatpush1.msra.mxu0 0.0
  %744 = vmatprep.subr.mxu0 0.0
  %745 = vmatpush1.msra.mxu0 0.0
  %746 = vmatprep.subr.mxu0 0.0
  %747 = vmatpush1.msra.mxu0 0.0
  %748 = vmatprep.subr.mxu0 %v733
  %749 = vmatpush1.msra.mxu0 %v732
  %750 = vmatprep.subr.mxu0 %v729
  %751 = vmatpush1.msra.mxu0 %v728
  %752 = vmatprep.subr.mxu0 %v725
  %753 = vmatpush1.msra.mxu0 %v724
  %754 = vmatprep.subr.mxu0 %v721
  %755 = vmatpush1.msra.mxu0 %v720
  %756 = vmatprep.subr.mxu0 %v717
  %757 = vmatpush1.msra.mxu0 %v716
  %758 = vmatprep.subr.mxu0 %v713
  %759 = vmatpush1.msra.mxu0 %v712
  %760 = vmatprep.subr.mxu0 %v709
  %761 = vmatpush1.msra.mxu0 %v708
  %762 = vmatprep.subr.mxu0 %v705
  %763 = vmatpush1.msra.mxu0 %v704
  %764 = vmatprep.subr.mxu0 %v701
  %765 = vmatpush1.msra.mxu0 %v700
  %766 = vmatprep.subr.mxu0 %v697
  %767 = vmatpush1.msra.mxu0 %v696
  %768 = vmatprep.subr.mxu0 0.0
  %769 = vmatpush2.msra.mxu0 0.0
  %770 = vmatprep.subr.mxu0 0.0
  %771 = vmatpush2.msra.mxu0 0.0
  %772 = vmatprep.subr.mxu0 0.0
  %773 = vmatpush2.msra.mxu0 0.0
  %774 = vmatprep.subr.mxu0 0.0
  %775 = vmatpush2.msra.mxu0 0.0
  %776 = vmatprep.subr.mxu0 0.0
  %777 = vmatpush2.msra.mxu0 0.0
  %778 = vmatprep.subr.mxu0 0.0
  %779 = vmatpush2.msra.mxu0 0.0
  %780 = vmatprep.subr.mxu0 0.0
  %781 = vmatpush2.msra.mxu0 0.0
  %782 = vmatprep.subr.mxu0 0.0
  %783 = vmatpush2.msra.mxu0 0.0
  %784 = vmatprep.subr.mxu0 0.0
  %785 = vmatpush2.msra.mxu0 0.0
  %786 = vmatprep.subr.mxu0 0.0
  %787 = vmatpush2.msra.mxu0 0.0
  %788 = vmatprep.subr.mxu0 0.0
  %789 = vmatpush2.msra.mxu0 0.0
  %790 = vmatprep.subr.mxu0 0.0
  %791 = vmatpush2.msra.mxu0 0.0
  %792 = vmatprep.subr.mxu0 0.0
  %793 = vmatpush2.msra.mxu0 0.0
  %794 = vmatprep.subr.mxu0 0.0
  %795 = vmatpush2.msra.mxu0 0.0
  %796 = vmatprep.subr.mxu0 0.0
  %797 = vmatpush2.msra.mxu0 0.0
  %798 = vmatprep.subr.mxu0 0.0
  %799 = vmatpush2.msra.mxu0 0.0
  %800 = vmatprep.mubr.f32.mxu0 0.0
  %801 = vmatmul.mubr.f32.gmra.mxu0 %v106
  %v802 = vpop.f32.mrf.mxu0
  %v803 = vadd.f32 %v97, %v802
  %v804 = vpop.f32.mrf.mxu0
  %v805 = vadd.f32 %v97, %v804
  %806 = vmatprep.mubr.f32.mxu0 0.0
  %807 = vmatmul.mubr.f32.gmra.mxu0 %v109
  %v808 = vpop.f32.mrf.mxu0
  %v809 = vadd.f32 %v102, %v808
  %v810 = vpop.f32.mrf.mxu0
  %v811 = vadd.f32 %v102, %v810
  %812 = vdwg.mxu0
  %813 = vmatprep.subr.mxu0 0.0
  %814 = vmatpush1.msra.mxu0 0.0
  %815 = vmatprep.subr.mxu0 0.0
  %816 = vmatpush1.msra.mxu0 0.0
  %817 = vmatprep.subr.mxu0 0.0
  %818 = vmatpush1.msra.mxu0 0.0
  %819 = vmatprep.subr.mxu0 0.0
  %820 = vmatpush1.msra.mxu0 0.0
  %821 = vmatprep.subr.mxu0 0.0
  %822 = vmatpush1.msra.mxu0 0.0
  %823 = vmatprep.subr.mxu0 0.0
  %824 = vmatpush1.msra.mxu0 0.0
  %825 = vmatprep.subr.mxu0 %v735
  %826 = vmatpush1.msra.mxu0 %v734
  %827 = vmatprep.subr.mxu0 %v731
  %828 = vmatpush1.msra.mxu0 %v730
  %829 = vmatprep.subr.mxu0 %v727
  %830 = vmatpush1.msra.mxu0 %v726
  %831 = vmatprep.subr.mxu0 %v723
  %832 = vmatpush1.msra.mxu0 %v722
  %833 = vmatprep.subr.mxu0 %v719
  %834 = vmatpush1.msra.mxu0 %v718
  %835 = vmatprep.subr.mxu0 %v715
  %836 = vmatpush1.msra.mxu0 %v714
  %837 = vmatprep.subr.mxu0 %v711
  %838 = vmatpush1.msra.mxu0 %v710
  %839 = vmatprep.subr.mxu0 %v707
  %840 = vmatpush1.msra.mxu0 %v706
  %841 = vmatprep.subr.mxu0 %v703
  %842 = vmatpush1.msra.mxu0 %v702
  %843 = vmatprep.subr.mxu0 %v699
  %844 = vmatpush1.msra.mxu0 %v698
  %845 = vmatprep.subr.mxu0 0.0
  %846 = vmatpush2.msra.mxu0 0.0
  %847 = vmatprep.subr.mxu0 0.0
  %848 = vmatpush2.msra.mxu0 0.0
  %849 = vmatprep.subr.mxu0 0.0
  %850 = vmatpush2.msra.mxu0 0.0
  %851 = vmatprep.subr.mxu0 0.0
  %852 = vmatpush2.msra.mxu0 0.0
  %853 = vmatprep.subr.mxu0 0.0
  %854 = vmatpush2.msra.mxu0 0.0
  %855 = vmatprep.subr.mxu0 0.0
  %856 = vmatpush2.msra.mxu0 0.0
  %857 = vmatprep.subr.mxu0 0.0
  %858 = vmatpush2.msra.mxu0 0.0
  %859 = vmatprep.subr.mxu0 0.0
  %860 = vmatpush2.msra.mxu0 0.0
  %861 = vmatprep.subr.mxu0 0.0
  %862 = vmatpush2.msra.mxu0 0.0
  %863 = vmatprep.subr.mxu0 0.0
  %864 = vmatpush2.msra.mxu0 0.0
  %865 = vmatprep.subr.mxu0 0.0
  %866 = vmatpush2.msra.mxu0 0.0
  %867 = vmatprep.subr.mxu0 0.0
  %868 = vmatpush2.msra.mxu0 0.0
  %869 = vmatprep.subr.mxu0 0.0
  %870 = vmatpush2.msra.mxu0 0.0
  %871 = vmatprep.subr.mxu0 0.0
  %872 = vmatpush2.msra.mxu0 0.0
  %873 = vmatprep.subr.mxu0 0.0
  %874 = vmatpush2.msra.mxu0 0.0
  %875 = vmatprep.subr.mxu0 0.0
  %876 = vmatpush2.msra.mxu0 0.0
  %877 = vmatprep.mubr.f32.mxu0 0.0
  %878 = vmatmul.mubr.f32.gmra.mxu0 %v106
  %v879 = vpop.f32.mrf.mxu0
  %v880 = vadd.f32 %v97, %v879
  %v881 = vpop.f32.mrf.mxu0
  %v882 = vadd.f32 %v97, %v881
  %883 = vmatprep.mubr.f32.mxu0 0.0
  %884 = vmatmul.mubr.f32.gmra.mxu0 %v109
  %v885 = vpop.f32.mrf.mxu0
  %v886 = vadd.f32 %v102, %v885
  %v887 = vpop.f32.mrf.mxu0
  %v888 = vadd.f32 %v102, %v887
  %889 = vdwg.mxu0
  %v890 = vmax.f32 %v803, 0.0
  %v891 = vmax.f32 %v805, 0.0
  %v892 = vmax.f32 %v880, 0.0
  %v893 = vmax.f32 %v882, 0.0
  %v894 = vmax.f32 %v809, 0.0
  %v895 = vmax.f32 %v811, 0.0
  %v896 = vmax.f32 %v886, 0.0
  %v897 = vmax.f32 %v888, 0.0
  %v898 = vmax.f32 %v687, %v890
  %v899 = vmax.f32 %v688, %v891
  %v900 = vmax.f32 %v689, %v892
  %v901 = vmax.f32 %v690, %v893
  %v902 = vmax.f32 %v691, %v894
  %v903 = vmax.f32 %v692, %v895
  %v904 = vmax.f32 %v693, %v896
  %v905 = vmax.f32 %v694, %v897
  %v906 = vld [vmem:[%s4] sm:$0xff]
  %v907 = vld [vmem:[%s4 + $0x8] sm:$0xff]
  %v908 = vld [vmem:[%s5] sm:$0xff]
  %v909 = vld [vmem:[%s5 + $0x8] sm:$0xff]
  %v910 = vld [vmem:[%s5 + $0x10] sm:$0xff]
  %v911 = vld [vmem:[%s5 + $0x18] sm:$0xff]
  %v912 = vld [vmem:[%s5 + $0x20] sm:$0xff]
  %v913 = vld [vmem:[%s5 + $0x28] sm:$0xff]
  %v914 = vld [vmem:[%s5 + $0x30] sm:$0xff]
  %v915 = vld [vmem:[%s5 + $0x38] sm:$0xff]
  %v916 = vld [vmem:[%s5 + $0x40] sm:$0xff]
  %v917 = vld [vmem:[%s5 + $0x48] sm:$0xff]
  %v918 = vld [vmem:[%s5 + $0x50] sm:$0xff]
  %v919 = vld [vmem:[%s5 + $0x58] sm:$0xff]
  %v920 = vld [vmem:[%s5 + $0x60] sm:$0xff]
  %v921 = vld [vmem:[%s5 + $0x68] sm:$0xff]
  %v922 = vld [vmem:[%s5 + $0x70] sm:$0xff]
  %v923 = vld [vmem:[%s5 + $0x78] sm:$0xff]
  %v924 = vld [vmem:[%s5 + $0x80] sm:$0xff]
  %v925 = vld [vmem:[%s5 + $0x88] sm:$0xff]
  %v926 = vld [vmem:[%s5 + $0x90] sm:$0xff]
  %v927 = vld [vmem:[%s5 + $0x98] sm:$0xff]
  %v928 = vld [vmem:[%s5 + $0xa0] sm:$0xff]
  %v929 = vld [vmem:[%s5 + $0xa8] sm:$0xff]
  %v930 = vld [vmem:[%s5 + $0xb0] sm:$0xff]
  %v931 = vld [vmem:[%s5 + $0xb8] sm:$0xff]
  %v932 = vld [vmem:[%s5 + $0xc0] sm:$0xff]
  %v933 = vld [vmem:[%s5 + $0xc8] sm:$0xff]
  %v934 = vld [vmem:[%s5 + $0xd0] sm:$0xff]
  %v935 = vld [vmem:[%s5 + $0xd8] sm:$0xff]
  %v936 = vld [vmem:[%s5 + $0xe0] sm:$0xff]
  %v937 = vld [vmem:[%s5 + $0xe8] sm:$0xff]
  %v938 = vld [vmem:[%s5 + $0xf0] sm:$0xff]
  %v939 = vld [vmem:[%s5 + $0xf8] sm:$0xff]
  %v940 = vld [vmem:[%s5 + $0x100] sm:$0xff]
  %v941 = vld [vmem:[%s5 + $0x108] sm:$0xff]
  %v942 = vld [vmem:[%s5 + $0x110] sm:$0xff]
  %v943 = vld [vmem:[%s5 + $0x118] sm:$0xff]
  %v944 = vld [vmem:[%s5 + $0x120] sm:$0xff]
  %v945 = vld [vmem:[%s5 + $0x128] sm:$0xff]
  %v946 = vld [vmem:[%s5 + $0x130] sm:$0xff]
  %v947 = vld [vmem:[%s5 + $0x138] sm:$0xff]
  %v948 = vld [vmem:[%s5 + $0x140] sm:$0xff]
  %v949 = vld [vmem:[%s5 + $0x148] sm:$0xff]
  %v950 = vld [vmem:[%s5 + $0x150] sm:$0xff]
  %v951 = vld [vmem:[%s5 + $0x158] sm:$0xff]
  %v952 = vld [vmem:[%s5 + $0x160] sm:$0xff]
  %v953 = vld [vmem:[%s5 + $0x168] sm:$0xff]
  %v954 = vld [vmem:[%s5 + $0x170] sm:$0xff]
  %v955 = vld [vmem:[%s5 + $0x178] sm:$0xff]
  %v956 = vld [vmem:[%s5 + $0x180] sm:$0xff]
  %v957 = vld [vmem:[%s5 + $0x188] sm:$0xff]
  %vm958 = vcmask 130048
  %v960 = vsel %vm958, %v901, 0
  %v963 = vsel %vm958, %v905, 0
  %965 = vmatprep.subr.mxu0 0.0
  %966 = vmatpush1.msra.mxu0 %v923
  %967 = vmatprep.subr.mxu0 0.0
  %968 = vmatpush1.msra.mxu0 %v922
  %969 = vmatprep.subr.mxu0 0.0
  %970 = vmatpush1.msra.mxu0 %v921
  %971 = vmatprep.subr.mxu0 0.0
  %972 = vmatpush1.msra.mxu0 %v920
  %973 = vmatprep.subr.mxu0 0.0
  %974 = vmatpush1.msra.mxu0 %v919
  %975 = vmatprep.subr.mxu0 0.0
  %976 = vmatpush1.msra.mxu0 %v918
  %977 = vmatprep.subr.mxu0 0.0
  %978 = vmatpush1.msra.mxu0 %v917
  %979 = vmatprep.subr.mxu0 0.0
  %980 = vmatpush1.msra.mxu0 %v916
  %981 = vmatprep.subr.mxu0 0.0
  %982 = vmatpush1.msra.mxu0 %v915
  %983 = vmatprep.subr.mxu0 0.0
  %984 = vmatpush1.msra.mxu0 %v914
  %985 = vmatprep.subr.mxu0 0.0
  %986 = vmatpush1.msra.mxu0 %v913
  %987 = vmatprep.subr.mxu0 0.0
  %988 = vmatpush1.msra.mxu0 %v912
  %989 = vmatprep.subr.mxu0 0.0
  %990 = vmatpush1.msra.mxu0 %v911
  %991 = vmatprep.subr.mxu0 0.0
  %992 = vmatpush1.msra.mxu0 %v910
  %993 = vmatprep.subr.mxu0 0.0
  %994 = vmatpush1.msra.mxu0 %v909
  %995 = vmatprep.subr.mxu0 0.0
  %996 = vmatpush1.msra.mxu0 %v908
  %997 = vmatprep.subr.mxu0 0.0
  %998 = vmatpush2.msra.mxu0 %v939
  %999 = vmatprep.subr.mxu0 0.0
  %1000 = vmatpush2.msra.mxu0 %v938
  %1001 = vmatprep.subr.mxu0 0.0
  %1002 = vmatpush2.msra.mxu0 %v937
  %1003 = vmatprep.subr.mxu0 0.0
  %1004 = vmatpush2.msra.mxu0 %v936
  %1005 = vmatprep.subr.mxu0 0.0
  %1006 = vmatpush2.msra.mxu0 %v935
  %1007 = vmatprep.subr.mxu0 0.0
  %1008 = vmatpush2.msra.mxu0 %v934
  %1009 = vmatprep.subr.mxu0 0.0
  %1010 = vmatpush2.msra.mxu0 %v933
  %1011 = vmatprep.subr.mxu0 0.0
  %1012 = vmatpush2.msra.mxu0 %v932
  %1013 = vmatprep.subr.mxu0 0.0
  %1014 = vmatpush2.msra.mxu0 %v931
  %1015 = vmatprep.subr.mxu0 0.0
  %1016 = vmatpush2.msra.mxu0 %v930
  %1017 = vmatprep.subr.mxu0 0.0
  %1018 = vmatpush2.msra.mxu0 %v929
  %1019 = vmatprep.subr.mxu0 0.0
  %1020 = vmatpush2.msra.mxu0 %v928
  %1021 = vmatprep.subr.mxu0 0.0
  %1022 = vmatpush2.msra.mxu0 %v927
  %1023 = vmatprep.subr.mxu0 0.0
  %1024 = vmatpush2.msra.mxu0 %v926
  %1025 = vmatprep.subr.mxu0 0.0
  %1026 = vmatpush2.msra.mxu0 %v925
  %1027 = vmatprep.subr.mxu0 0.0
  %1028 = vmatpush2.msra.mxu0 %v924
  %1029 = vmatprep.mubr.f32.mxu0 %v899
  %1030 = vmatmul.mubr.f32.gmra.mxu0 %v898
  %v1031 = vpop.f32.mrf.mxu0
  %v1032 = vadd.f32 0.0, %v1031
  %v1033 = vpop.f32.mrf.mxu0
  %1034 = vmatprep.mubr.f32.mxu0 %v903
  %1035 = vmatmul.mubr.f32.gmra.mxu0 %v902
  %v1036 = vpop.f32.mrf.mxu0
  %v1037 = vadd.f32 0.0, %v1036
  %v1038 = vpop.f32.mrf.mxu0
  %1039 = vdwg.mxu0
  %1040 = vmatprep.subr.mxu0 0.0
  %1041 = vmatpush1.msra.mxu0 %v955
  %1042 = vmatprep.subr.mxu0 0.0
  %1043 = vmatpush1.msra.mxu0 %v954
  %1044 = vmatprep.subr.mxu0 0.0
  %1045 = vmatpush1.msra.mxu0 %v953
  %1046 = vmatprep.subr.mxu0 0.0
  %1047 = vmatpush1.msra.mxu0 %v952
  %1048 = vmatprep.subr.mxu0 0.0
  %1049 = vmatpush1.msra.mxu0 %v951
  %1050 = vmatprep.subr.mxu0 0.0
  %1051 = vmatpush1.msra.mxu0 %v950
  %1052 = vmatprep.subr.mxu0 0.0
  %1053 = vmatpush1.msra.mxu0 %v949
  %1054 = vmatprep.subr.mxu0 0.0
  %1055 = vmatpush1.msra.mxu0 %v948
  %1056 = vmatprep.subr.mxu0 0.0
  %1057 = vmatpush1.msra.mxu0 %v947
  %1058 = vmatprep.subr.mxu0 0.0
  %1059 = vmatpush1.msra.mxu0 %v946
  %1060 = vmatprep.subr.mxu0 0.0
  %1061 = vmatpush1.msra.mxu0 %v945
  %1062 = vmatprep.subr.mxu0 0.0
  %1063 = vmatpush1.msra.mxu0 %v944
  %1064 = vmatprep.subr.mxu0 0.0
  %1065 = vmatpush1.msra.mxu0 %v943
  %1066 = vmatprep.subr.mxu0 0.0
  %1067 = vmatpush1.msra.mxu0 %v942
  %1068 = vmatprep.subr.mxu0 0.0
  %1069 = vmatpush1.msra.mxu0 %v941
  %1070 = vmatprep.subr.mxu0 0.0
  %1071 = vmatpush1.msra.mxu0 %v940
  %1072 = vmatprep.subr.mxu0 0.0
  %1073 = vmatpush2.msra.mxu0 0.0
  %1074 = vmatprep.subr.mxu0 0.0
  %1075 = vmatpush2.msra.mxu0 0.0
  %1076 = vmatprep.subr.mxu0 0.0
  %1077 = vmatpush2.msra.mxu0 0.0
  %1078 = vmatprep.subr.mxu0 0.0
  %1079 = vmatpush2.msra.mxu0 0.0
  %1080 = vmatprep.subr.mxu0 0.0
  %1081 = vmatpush2.msra.mxu0 0.0
  %1082 = vmatprep.subr.mxu0 0.0
  %1083 = vmatpush2.msra.mxu0 0.0
  %1084 = vmatprep.subr.mxu0 0.0
  %1085 = vmatpush2.msra.mxu0 0.0
  %1086 = vmatprep.subr.mxu0 0.0
  %1087 = vmatpush2.msra.mxu0 0.0
  %1088 = vmatprep.subr.mxu0 0.0
  %1089 = vmatpush2.msra.mxu0 0.0
  %1090 = vmatprep.subr.mxu0 0.0
  %1091 = vmatpush2.msra.mxu0 0.0
  %1092 = vmatprep.subr.mxu0 0.0
  %1093 = vmatpush2.msra.mxu0 0.0
  %1094 = vmatprep.subr.mxu0 0.0
  %1095 = vmatpush2.msra.mxu0 0.0
  %1096 = vmatprep.subr.mxu0 0.0
  %1097 = vmatpush2.msra.mxu0 0.0
  %1098 = vmatprep.subr.mxu0 0.0
  %1099 = vmatpush2.msra.mxu0 0.0
  %1100 = vmatprep.subr.mxu0 0.0
  %1101 = vmatpush2.msra.mxu0 %v957
  %1102 = vmatprep.subr.mxu0 0.0
  %1103 = vmatpush2.msra.mxu0 %v956
  %1104 = vmatprep.mubr.f32.mxu0 %v960
  %1105 = vmatmul.mubr.f32.gmra.mxu0 %v900
  %v1106 = vpop.f32.mrf.mxu0
  %v1107 = vadd.f32 %v1032, %v1106
  %v1108 = vpop.f32.mrf.mxu0
  %1109 = vmatprep.mubr.f32.mxu0 %v963
  %1110 = vmatmul.mubr.f32.gmra.mxu0 %v904
  %v1111 = vpop.f32.mrf.mxu0
  %v1112 = vadd.f32 %v1037, %v1111
  %v1113 = vpop.f32.mrf.mxu0
  %1114 = vdwg.mxu0
  %s1115 = scalar_lea.vmem %s5, 400
  %v1116 = vld [vmem:[%s1115] sm:$0xff]
  %v1117 = vld [vmem:[%s1115 + $0x8] sm:$0xff]
  %v1118 = vld [vmem:[%s1115 + $0x10] sm:$0xff]
  %v1119 = vld [vmem:[%s1115 + $0x18] sm:$0xff]
  %v1120 = vld [vmem:[%s1115 + $0x20] sm:$0xff]
  %v1121 = vld [vmem:[%s1115 + $0x28] sm:$0xff]
  %v1122 = vld [vmem:[%s1115 + $0x30] sm:$0xff]
  %v1123 = vld [vmem:[%s1115 + $0x38] sm:$0xff]
  %v1124 = vld [vmem:[%s1115 + $0x40] sm:$0xff]
  %v1125 = vld [vmem:[%s1115 + $0x48] sm:$0xff]
  %v1126 = vld [vmem:[%s1115 + $0x50] sm:$0xff]
  %v1127 = vld [vmem:[%s1115 + $0x58] sm:$0xff]
  %v1128 = vld [vmem:[%s1115 + $0x60] sm:$0xff]
  %v1129 = vld [vmem:[%s1115 + $0x68] sm:$0xff]
  %v1130 = vld [vmem:[%s1115 + $0x70] sm:$0xff]
  %v1131 = vld [vmem:[%s1115 + $0x78] sm:$0xff]
  %v1132 = vld [vmem:[%s1115 + $0x80] sm:$0xff]
  %v1133 = vld [vmem:[%s1115 + $0x88] sm:$0xff]
  %v1134 = vld [vmem:[%s1115 + $0x90] sm:$0xff]
  %v1135 = vld [vmem:[%s1115 + $0x98] sm:$0xff]
  %v1136 = vld [vmem:[%s1115 + $0xa0] sm:$0xff]
  %v1137 = vld [vmem:[%s1115 + $0xa8] sm:$0xff]
  %v1138 = vld [vmem:[%s1115 + $0xb0] sm:$0xff]
  %v1139 = vld [vmem:[%s1115 + $0xb8] sm:$0xff]
  %v1140 = vld [vmem:[%s1115 + $0xc0] sm:$0xff]
  %v1141 = vld [vmem:[%s1115 + $0xc8] sm:$0xff]
  %v1142 = vld [vmem:[%s1115 + $0xd0] sm:$0xff]
  %v1143 = vld [vmem:[%s1115 + $0xd8] sm:$0xff]
  %v1144 = vld [vmem:[%s1115 + $0xe0] sm:$0xff]
  %v1145 = vld [vmem:[%s1115 + $0xe8] sm:$0xff]
  %v1146 = vld [vmem:[%s1115 + $0xf0] sm:$0xff]
  %v1147 = vld [vmem:[%s1115 + $0xf8] sm:$0xff]
  %v1148 = vld [vmem:[%s1115 + $0x100] sm:$0xff]
  %v1149 = vld [vmem:[%s1115 + $0x108] sm:$0xff]
  %v1150 = vld [vmem:[%s1115 + $0x110] sm:$0xff]
  %v1151 = vld [vmem:[%s1115 + $0x118] sm:$0xff]
  %v1152 = vld [vmem:[%s1115 + $0x120] sm:$0xff]
  %v1153 = vld [vmem:[%s1115 + $0x128] sm:$0xff]
  %v1154 = vld [vmem:[%s1115 + $0x130] sm:$0xff]
  %v1155 = vld [vmem:[%s1115 + $0x138] sm:$0xff]
  %v1156 = vld [vmem:[%s1115 + $0x140] sm:$0xff]
  %v1157 = vld [vmem:[%s1115 + $0x148] sm:$0xff]
  %v1158 = vld [vmem:[%s1115 + $0x150] sm:$0xff]
  %v1159 = vld [vmem:[%s1115 + $0x158] sm:$0xff]
  %v1160 = vld [vmem:[%s1115 + $0x160] sm:$0xff]
  %v1161 = vld [vmem:[%s1115 + $0x168] sm:$0xff]
  %v1162 = vld [vmem:[%s1115 + $0x170] sm:$0xff]
  %v1163 = vld [vmem:[%s1115 + $0x178] sm:$0xff]
  %v1164 = vld [vmem:[%s1115 + $0x180] sm:$0xff]
  %v1165 = vld [vmem:[%s1115 + $0x188] sm:$0xff]
  %1166 = vmatprep.subr.mxu0 0.0
  %1167 = vmatpush1.msra.mxu0 %v1131
  %1168 = vmatprep.subr.mxu0 0.0
  %1169 = vmatpush1.msra.mxu0 %v1130
  %1170 = vmatprep.subr.mxu0 0.0
  %1171 = vmatpush1.msra.mxu0 %v1129
  %1172 = vmatprep.subr.mxu0 0.0
  %1173 = vmatpush1.msra.mxu0 %v1128
  %1174 = vmatprep.subr.mxu0 0.0
  %1175 = vmatpush1.msra.mxu0 %v1127
  %1176 = vmatprep.subr.mxu0 0.0
  %1177 = vmatpush1.msra.mxu0 %v1126
  %1178 = vmatprep.subr.mxu0 0.0
  %1179 = vmatpush1.msra.mxu0 %v1125
  %1180 = vmatprep.subr.mxu0 0.0
  %1181 = vmatpush1.msra.mxu0 %v1124
  %1182 = vmatprep.subr.mxu0 0.0
  %1183 = vmatpush1.msra.mxu0 %v1123
  %1184 = vmatprep.subr.mxu0 0.0
  %1185 = vmatpush1.msra.mxu0 %v1122
  %1186 = vmatprep.subr.mxu0 0.0
  %1187 = vmatpush1.msra.mxu0 %v1121
  %1188 = vmatprep.subr.mxu0 0.0
  %1189 = vmatpush1.msra.mxu0 %v1120
  %1190 = vmatprep.subr.mxu0 0.0
  %1191 = vmatpush1.msra.mxu0 %v1119
  %1192 = vmatprep.subr.mxu0 0.0
  %1193 = vmatpush1.msra.mxu0 %v1118
  %1194 = vmatprep.subr.mxu0 0.0
  %1195 = vmatpush1.msra.mxu0 %v1117
  %1196 = vmatprep.subr.mxu0 0.0
  %1197 = vmatpush1.msra.mxu0 %v1116
  %1198 = vmatprep.subr.mxu0 0.0
  %1199 = vmatpush2.msra.mxu0 %v1147
  %1200 = vmatprep.subr.mxu0 0.0
  %1201 = vmatpush2.msra.mxu0 %v1146
  %1202 = vmatprep.subr.mxu0 0.0
  %1203 = vmatpush2.msra.mxu0 %v1145
  %1204 = vmatprep.subr.mxu0 0.0
  %1205 = vmatpush2.msra.mxu0 %v1144
  %1206 = vmatprep.subr.mxu0 0.0
  %1207 = vmatpush2.msra.mxu0 %v1143
  %1208 = vmatprep.subr.mxu0 0.0
  %1209 = vmatpush2.msra.mxu0 %v1142
  %1210 = vmatprep.subr.mxu0 0.0
  %1211 = vmatpush2.msra.mxu0 %v1141
  %1212 = vmatprep.subr.mxu0 0.0
  %1213 = vmatpush2.msra.mxu0 %v1140
  %1214 = vmatprep.subr.mxu0 0.0
  %1215 = vmatpush2.msra.mxu0 %v1139
  %1216 = vmatprep.subr.mxu0 0.0
  %1217 = vmatpush2.msra.mxu0 %v1138
  %1218 = vmatprep.subr.mxu0 0.0
  %1219 = vmatpush2.msra.mxu0 %v1137
  %1220 = vmatprep.subr.mxu0 0.0
  %1221 = vmatpush2.msra.mxu0 %v1136
  %1222 = vmatprep.subr.mxu0 0.0
  %1223 = vmatpush2.msra.mxu0 %v1135
  %1224 = vmatprep.subr.mxu0 0.0
  %1225 = vmatpush2.msra.mxu0 %v1134
  %1226 = vmatprep.subr.mxu0 0.0
  %1227 = vmatpush2.msra.mxu0 %v1133
  %1228 = vmatprep.subr.mxu0 0.0
  %1229 = vmatpush2.msra.mxu0 %v1132
  %1230 = vmatprep.mubr.f32.mxu0 %v899
  %1231 = vmatmul.mubr.f32.gmra.mxu0 %v898
  %v1232 = vpop.f32.mrf.mxu0
  %v1233 = vadd.f32 0.0, %v1232
  %v1234 = vpop.f32.mrf.mxu0
  %1235 = vmatprep.mubr.f32.mxu0 %v903
  %1236 = vmatmul.mubr.f32.gmra.mxu0 %v902
  %v1237 = vpop.f32.mrf.mxu0
  %v1238 = vadd.f32 0.0, %v1237
  %v1239 = vpop.f32.mrf.mxu0
  %1240 = vdwg.mxu0
  %1241 = vmatprep.subr.mxu0 0.0
  %1242 = vmatpush1.msra.mxu0 %v1163
  %1243 = vmatprep.subr.mxu0 0.0
  %1244 = vmatpush1.msra.mxu0 %v1162
  %1245 = vmatprep.subr.mxu0 0.0
  %1246 = vmatpush1.msra.mxu0 %v1161
  %1247 = vmatprep.subr.mxu0 0.0
  %1248 = vmatpush1.msra.mxu0 %v1160
  %1249 = vmatprep.subr.mxu0 0.0
  %1250 = vmatpush1.msra.mxu0 %v1159
  %1251 = vmatprep.subr.mxu0 0.0
  %1252 = vmatpush1.msra.mxu0 %v1158
  %1253 = vmatprep.subr.mxu0 0.0
  %1254 = vmatpush1.msra.mxu0 %v1157
  %1255 = vmatprep.subr.mxu0 0.0
  %1256 = vmatpush1.msra.mxu0 %v1156
  %1257 = vmatprep.subr.mxu0 0.0
  %1258 = vmatpush1.msra.mxu0 %v1155
  %1259 = vmatprep.subr.mxu0 0.0
  %1260 = vmatpush1.msra.mxu0 %v1154
  %1261 = vmatprep.subr.mxu0 0.0
  %1262 = vmatpush1.msra.mxu0 %v1153
  %1263 = vmatprep.subr.mxu0 0.0
  %1264 = vmatpush1.msra.mxu0 %v1152
  %1265 = vmatprep.subr.mxu0 0.0
  %1266 = vmatpush1.msra.mxu0 %v1151
  %1267 = vmatprep.subr.mxu0 0.0
  %1268 = vmatpush1.msra.mxu0 %v1150
  %1269 = vmatprep.subr.mxu0 0.0
  %1270 = vmatpush1.msra.mxu0 %v1149
  %1271 = vmatprep.subr.mxu0 0.0
  %1272 = vmatpush1.msra.mxu0 %v1148
  %1273 = vmatprep.subr.mxu0 0.0
  %1274 = vmatpush2.msra.mxu0 0.0
  %1275 = vmatprep.subr.mxu0 0.0
  %1276 = vmatpush2.msra.mxu0 0.0
  %1277 = vmatprep.subr.mxu0 0.0
  %1278 = vmatpush2.msra.mxu0 0.0
  %1279 = vmatprep.subr.mxu0 0.0
  %1280 = vmatpush2.msra.mxu0 0.0
  %1281 = vmatprep.subr.mxu0 0.0
  %1282 = vmatpush2.msra.mxu0 0.0
  %1283 = vmatprep.subr.mxu0 0.0
  %1284 = vmatpush2.msra.mxu0 0.0
  %1285 = vmatprep.subr.mxu0 0.0
  %1286 = vmatpush2.msra.mxu0 0.0
  %1287 = vmatprep.subr.mxu0 0.0
  %1288 = vmatpush2.msra.mxu0 0.0
  %1289 = vmatprep.subr.mxu0 0.0
  %1290 = vmatpush2.msra.mxu0 0.0
  %1291 = vmatprep.subr.mxu0 0.0
  %1292 = vmatpush2.msra.mxu0 0.0
  %1293 = vmatprep.subr.mxu0 0.0
  %1294 = vmatpush2.msra.mxu0 0.0
  %1295 = vmatprep.subr.mxu0 0.0
  %1296 = vmatpush2.msra.mxu0 0.0
  %1297 = vmatprep.subr.mxu0 0.0
  %1298 = vmatpush2.msra.mxu0 0.0
  %1299 = vmatprep.subr.mxu0 0.0
  %1300 = vmatpush2.msra.mxu0 0.0
  %1301 = vmatprep.subr.mxu0 0.0
  %1302 = vmatpush2.msra.mxu0 %v1165
  %1303 = vmatprep.subr.mxu0 0.0
  %1304 = vmatpush2.msra.mxu0 %v1164
  %1305 = vmatprep.mubr.f32.mxu0 %v960
  %1306 = vmatmul.mubr.f32.gmra.mxu0 %v900
  %v1307 = vpop.f32.mrf.mxu0
  %v1308 = vadd.f32 %v1233, %v1307
  %v1309 = vpop.f32.mrf.mxu0
  %1310 = vmatprep.mubr.f32.mxu0 %v963
  %1311 = vmatmul.mubr.f32.gmra.mxu0 %v904
  %v1312 = vpop.f32.mrf.mxu0
  %v1313 = vadd.f32 %v1238, %v1312
  %v1314 = vpop.f32.mrf.mxu0
  %1315 = vdwg.mxu0
  %s1316 = scalar_lea.vmem %s5, 800
  %v1317 = vld [vmem:[%s1316] sm:$0xff]
  %v1318 = vld [vmem:[%s1316 + $0x8] sm:$0xff]
  %v1319 = vld [vmem:[%s1316 + $0x10] sm:$0xff]
  %v1320 = vld [vmem:[%s1316 + $0x18] sm:$0xff]
  %v1321 = vld [vmem:[%s1316 + $0x20] sm:$0xff]
  %v1322 = vld [vmem:[%s1316 + $0x28] sm:$0xff]
  %v1323 = vld [vmem:[%s1316 + $0x30] sm:$0xff]
  %v1324 = vld [vmem:[%s1316 + $0x38] sm:$0xff]
  %v1325 = vld [vmem:[%s1316 + $0x40] sm:$0xff]
  %v1326 = vld [vmem:[%s1316 + $0x48] sm:$0xff]
  %v1327 = vld [vmem:[%s1316 + $0x50] sm:$0xff]
  %v1328 = vld [vmem:[%s1316 + $0x58] sm:$0xff]
  %v1329 = vld [vmem:[%s1316 + $0x60] sm:$0xff]
  %v1330 = vld [vmem:[%s1316 + $0x68] sm:$0xff]
  %v1331 = vld [vmem:[%s1316 + $0x70] sm:$0xff]
  %v1332 = vld [vmem:[%s1316 + $0x78] sm:$0xff]
  %v1333 = vld [vmem:[%s1316 + $0x80] sm:$0xff]
  %v1334 = vld [vmem:[%s1316 + $0x88] sm:$0xff]
  %v1335 = vld [vmem:[%s1316 + $0x90] sm:$0xff]
  %v1336 = vld [vmem:[%s1316 + $0x98] sm:$0xff]
  %v1337 = vld [vmem:[%s1316 + $0xa0] sm:$0xff]
  %v1338 = vld [vmem:[%s1316 + $0xa8] sm:$0xff]
  %v1339 = vld [vmem:[%s1316 + $0xb0] sm:$0xff]
  %v1340 = vld [vmem:[%s1316 + $0xb8] sm:$0xff]
  %v1341 = vld [vmem:[%s1316 + $0xc0] sm:$0xff]
  %v1342 = vld [vmem:[%s1316 + $0xc8] sm:$0xff]
  %v1343 = vld [vmem:[%s1316 + $0xd0] sm:$0xff]
  %v1344 = vld [vmem:[%s1316 + $0xd8] sm:$0xff]
  %v1345 = vld [vmem:[%s1316 + $0xe0] sm:$0xff]
  %v1346 = vld [vmem:[%s1316 + $0xe8] sm:$0xff]
  %v1347 = vld [vmem:[%s1316 + $0xf0] sm:$0xff]
  %v1348 = vld [vmem:[%s1316 + $0xf8] sm:$0xff]
  %v1349 = vld [vmem:[%s1316 + $0x100] sm:$0xff]
  %v1350 = vld [vmem:[%s1316 + $0x108] sm:$0xff]
  %v1351 = vld [vmem:[%s1316 + $0x110] sm:$0xff]
  %v1352 = vld [vmem:[%s1316 + $0x118] sm:$0xff]
  %v1353 = vld [vmem:[%s1316 + $0x120] sm:$0xff]
  %v1354 = vld [vmem:[%s1316 + $0x128] sm:$0xff]
  %v1355 = vld [vmem:[%s1316 + $0x130] sm:$0xff]
  %v1356 = vld [vmem:[%s1316 + $0x138] sm:$0xff]
  %v1357 = vld [vmem:[%s1316 + $0x140] sm:$0xff]
  %v1358 = vld [vmem:[%s1316 + $0x148] sm:$0xff]
  %v1359 = vld [vmem:[%s1316 + $0x150] sm:$0xff]
  %v1360 = vld [vmem:[%s1316 + $0x158] sm:$0xff]
  %v1361 = vld [vmem:[%s1316 + $0x160] sm:$0xff]
  %v1362 = vld [vmem:[%s1316 + $0x168] sm:$0xff]
  %v1363 = vld [vmem:[%s1316 + $0x170] sm:$0xff]
  %v1364 = vld [vmem:[%s1316 + $0x178] sm:$0xff]
  %v1365 = vld [vmem:[%s1316 + $0x180] sm:$0xff]
  %v1366 = vld [vmem:[%s1316 + $0x188] sm:$0xff]
  %1367 = vmatprep.subr.mxu0 0.0
  %1368 = vmatpush1.msra.mxu0 %v1332
  %1369 = vmatprep.subr.mxu0 0.0
  %1370 = vmatpush1.msra.mxu0 %v1331
  %1371 = vmatprep.subr.mxu0 0.0
  %1372 = vmatpush1.msra.mxu0 %v1330
  %1373 = vmatprep.subr.mxu0 0.0
  %1374 = vmatpush1.msra.mxu0 %v1329
  %1375 = vmatprep.subr.mxu0 0.0
  %1376 = vmatpush1.msra.mxu0 %v1328
  %1377 = vmatprep.subr.mxu0 0.0
  %1378 = vmatpush1.msra.mxu0 %v1327
  %1379 = vmatprep.subr.mxu0 0.0
  %1380 = vmatpush1.msra.mxu0 %v1326
  %1381 = vmatprep.subr.mxu0 0.0
  %1382 = vmatpush1.msra.mxu0 %v1325
  %1383 = vmatprep.subr.mxu0 0.0
  %1384 = vmatpush1.msra.mxu0 %v1324
  %1385 = vmatprep.subr.mxu0 0.0
  %1386 = vmatpush1.msra.mxu0 %v1323
  %1387 = vmatprep.subr.mxu0 0.0
  %1388 = vmatpush1.msra.mxu0 %v1322
  %1389 = vmatprep.subr.mxu0 0.0
  %1390 = vmatpush1.msra.mxu0 %v1321
  %1391 = vmatprep.subr.mxu0 0.0
  %1392 = vmatpush1.msra.mxu0 %v1320
  %1393 = vmatprep.subr.mxu0 0.0
  %1394 = vmatpush1.msra.mxu0 %v1319
  %1395 = vmatprep.subr.mxu0 0.0
  %1396 = vmatpush1.msra.mxu0 %v1318
  %1397 = vmatprep.subr.mxu0 0.0
  %1398 = vmatpush1.msra.mxu0 %v1317
  %1399 = vmatprep.subr.mxu0 0.0
  %1400 = vmatpush2.msra.mxu0 %v1348
  %1401 = vmatprep.subr.mxu0 0.0
  %1402 = vmatpush2.msra.mxu0 %v1347
  %1403 = vmatprep.subr.mxu0 0.0
  %1404 = vmatpush2.msra.mxu0 %v1346
  %1405 = vmatprep.subr.mxu0 0.0
  %1406 = vmatpush2.msra.mxu0 %v1345
  %1407 = vmatprep.subr.mxu0 0.0
  %1408 = vmatpush2.msra.mxu0 %v1344
  %1409 = vmatprep.subr.mxu0 0.0
  %1410 = vmatpush2.msra.mxu0 %v1343
  %1411 = vmatprep.subr.mxu0 0.0
  %1412 = vmatpush2.msra.mxu0 %v1342
  %1413 = vmatprep.subr.mxu0 0.0
  %1414 = vmatpush2.msra.mxu0 %v1341
  %1415 = vmatprep.subr.mxu0 0.0
  %1416 = vmatpush2.msra.mxu0 %v1340
  %1417 = vmatprep.subr.mxu0 0.0
  %1418 = vmatpush2.msra.mxu0 %v1339
  %1419 = vmatprep.subr.mxu0 0.0
  %1420 = vmatpush2.msra.mxu0 %v1338
  %1421 = vmatprep.subr.mxu0 0.0
  %1422 = vmatpush2.msra.mxu0 %v1337
  %1423 = vmatprep.subr.mxu0 0.0
  %1424 = vmatpush2.msra.mxu0 %v1336
  %1425 = vmatprep.subr.mxu0 0.0
  %1426 = vmatpush2.msra.mxu0 %v1335
  %1427 = vmatprep.subr.mxu0 0.0
  %1428 = vmatpush2.msra.mxu0 %v1334
  %1429 = vmatprep.subr.mxu0 0.0
  %1430 = vmatpush2.msra.mxu0 %v1333
  %1431 = vmatprep.mubr.f32.mxu0 %v899
  %1432 = vmatmul.mubr.f32.gmra.mxu0 %v898
  %v1433 = vpop.f32.mrf.mxu0
  %v1434 = vadd.f32 0.0, %v1433
  %v1435 = vpop.f32.mrf.mxu0
  %1436 = vmatprep.mubr.f32.mxu0 %v903
  %1437 = vmatmul.mubr.f32.gmra.mxu0 %v902
  %v1438 = vpop.f32.mrf.mxu0
  %v1439 = vadd.f32 0.0, %v1438
  %v1440 = vpop.f32.mrf.mxu0
  %1441 = vdwg.mxu0
  %1442 = vmatprep.subr.mxu0 0.0
  %1443 = vmatpush1.msra.mxu0 %v1364
  %1444 = vmatprep.subr.mxu0 0.0
  %1445 = vmatpush1.msra.mxu0 %v1363
  %1446 = vmatprep.subr.mxu0 0.0
  %1447 = vmatpush1.msra.mxu0 %v1362
  %1448 = vmatprep.subr.mxu0 0.0
  %1449 = vmatpush1.msra.mxu0 %v1361
  %1450 = vmatprep.subr.mxu0 0.0
  %1451 = vmatpush1.msra.mxu0 %v1360
  %1452 = vmatprep.subr.mxu0 0.0
  %1453 = vmatpush1.msra.mxu0 %v1359
  %1454 = vmatprep.subr.mxu0 0.0
  %1455 = vmatpush1.msra.mxu0 %v1358
  %1456 = vmatprep.subr.mxu0 0.0
  %1457 = vmatpush1.msra.mxu0 %v1357
  %1458 = vmatprep.subr.mxu0 0.0
  %1459 = vmatpush1.msra.mxu0 %v1356
  %1460 = vmatprep.subr.mxu0 0.0
  %1461 = vmatpush1.msra.mxu0 %v1355
  %1462 = vmatprep.subr.mxu0 0.0
  %1463 = vmatpush1.msra.mxu0 %v1354
  %1464 = vmatprep.subr.mxu0 0.0
  %1465 = vmatpush1.msra.mxu0 %v1353
  %1466 = vmatprep.subr.mxu0 0.0
  %1467 = vmatpush1.msra.mxu0 %v1352
  %1468 = vmatprep.subr.mxu0 0.0
  %1469 = vmatpush1.msra.mxu0 %v1351
  %1470 = vmatprep.subr.mxu0 0.0
  %1471 = vmatpush1.msra.mxu0 %v1350
  %1472 = vmatprep.subr.mxu0 0.0
  %1473 = vmatpush1.msra.mxu0 %v1349
  %1474 = vmatprep.subr.mxu0 0.0
  %1475 = vmatpush2.msra.mxu0 0.0
  %1476 = vmatprep.subr.mxu0 0.0
  %1477 = vmatpush2.msra.mxu0 0.0
  %1478 = vmatprep.subr.mxu0 0.0
  %1479 = vmatpush2.msra.mxu0 0.0
  %1480 = vmatprep.subr.mxu0 0.0
  %1481 = vmatpush2.msra.mxu0 0.0
  %1482 = vmatprep.subr.mxu0 0.0
  %1483 = vmatpush2.msra.mxu0 0.0
  %1484 = vmatprep.subr.mxu0 0.0
  %1485 = vmatpush2.msra.mxu0 0.0
  %1486 = vmatprep.subr.mxu0 0.0
  %1487 = vmatpush2.msra.mxu0 0.0
  %1488 = vmatprep.subr.mxu0 0.0
  %1489 = vmatpush2.msra.mxu0 0.0
  %1490 = vmatprep.subr.mxu0 0.0
  %1491 = vmatpush2.msra.mxu0 0.0
  %1492 = vmatprep.subr.mxu0 0.0
  %1493 = vmatpush2.msra.mxu0 0.0
  %1494 = vmatprep.subr.mxu0 0.0
  %1495 = vmatpush2.msra.mxu0 0.0
  %1496 = vmatprep.subr.mxu0 0.0
  %1497 = vmatpush2.msra.mxu0 0.0
  %1498 = vmatprep.subr.mxu0 0.0
  %1499 = vmatpush2.msra.mxu0 0.0
  %1500 = vmatprep.subr.mxu0 0.0
  %1501 = vmatpush2.msra.mxu0 0.0
  %1502 = vmatprep.subr.mxu0 0.0
  %1503 = vmatpush2.msra.mxu0 %v1366
  %1504 = vmatprep.subr.mxu0 0.0
  %1505 = vmatpush2.msra.mxu0 %v1365
  %1506 = vmatprep.mubr.f32.mxu0 %v960
  %1507 = vmatmul.mubr.f32.gmra.mxu0 %v900
  %v1508 = vpop.f32.mrf.mxu0
  %v1509 = vadd.f32 %v1434, %v1508
  %v1510 = vpop.f32.mrf.mxu0
  %1511 = vmatprep.mubr.f32.mxu0 %v963
  %1512 = vmatmul.mubr.f32.gmra.mxu0 %v904
  %v1513 = vpop.f32.mrf.mxu0
  %v1514 = vadd.f32 %v1439, %v1513
  %v1515 = vpop.f32.mrf.mxu0
  %1516 = vdwg.mxu0
  %s1517 = scalar_lea.vmem %s5, 1200
  %v1518 = vld [vmem:[%s1517] sm:$0xff]
  %v1519 = vld [vmem:[%s1517 + $0x8] sm:$0xff]
  %v1520 = vld [vmem:[%s1517 + $0x10] sm:$0xff]
  %v1521 = vld [vmem:[%s1517 + $0x18] sm:$0xff]
  %v1522 = vld [vmem:[%s1517 + $0x20] sm:$0xff]
  %v1523 = vld [vmem:[%s1517 + $0x28] sm:$0xff]
  %v1524 = vld [vmem:[%s1517 + $0x30] sm:$0xff]
  %v1525 = vld [vmem:[%s1517 + $0x38] sm:$0xff]
  %v1526 = vld [vmem:[%s1517 + $0x40] sm:$0xff]
  %v1527 = vld [vmem:[%s1517 + $0x48] sm:$0xff]
  %v1528 = vld [vmem:[%s1517 + $0x50] sm:$0xff]
  %v1529 = vld [vmem:[%s1517 + $0x58] sm:$0xff]
  %v1530 = vld [vmem:[%s1517 + $0x60] sm:$0xff]
  %v1531 = vld [vmem:[%s1517 + $0x68] sm:$0xff]
  %v1532 = vld [vmem:[%s1517 + $0x70] sm:$0xff]
  %v1533 = vld [vmem:[%s1517 + $0x78] sm:$0xff]
  %v1534 = vld [vmem:[%s1517 + $0x80] sm:$0xff]
  %v1535 = vld [vmem:[%s1517 + $0x88] sm:$0xff]
  %v1536 = vld [vmem:[%s1517 + $0x90] sm:$0xff]
  %v1537 = vld [vmem:[%s1517 + $0x98] sm:$0xff]
  %v1538 = vld [vmem:[%s1517 + $0xa0] sm:$0xff]
  %v1539 = vld [vmem:[%s1517 + $0xa8] sm:$0xff]
  %v1540 = vld [vmem:[%s1517 + $0xb0] sm:$0xff]
  %v1541 = vld [vmem:[%s1517 + $0xb8] sm:$0xff]
  %v1542 = vld [vmem:[%s1517 + $0xc0] sm:$0xff]
  %v1543 = vld [vmem:[%s1517 + $0xc8] sm:$0xff]
  %v1544 = vld [vmem:[%s1517 + $0xd0] sm:$0xff]
  %v1545 = vld [vmem:[%s1517 + $0xd8] sm:$0xff]
  %v1546 = vld [vmem:[%s1517 + $0xe0] sm:$0xff]
  %v1547 = vld [vmem:[%s1517 + $0xe8] sm:$0xff]
  %v1548 = vld [vmem:[%s1517 + $0xf0] sm:$0xff]
  %v1549 = vld [vmem:[%s1517 + $0xf8] sm:$0xff]
  %v1550 = vld [vmem:[%s1517 + $0x100] sm:$0xff]
  %v1551 = vld [vmem:[%s1517 + $0x108] sm:$0xff]
  %v1552 = vld [vmem:[%s1517 + $0x110] sm:$0xff]
  %v1553 = vld [vmem:[%s1517 + $0x118] sm:$0xff]
  %v1554 = vld [vmem:[%s1517 + $0x120] sm:$0xff]
  %v1555 = vld [vmem:[%s1517 + $0x128] sm:$0xff]
  %v1556 = vld [vmem:[%s1517 + $0x130] sm:$0xff]
  %v1557 = vld [vmem:[%s1517 + $0x138] sm:$0xff]
  %v1558 = vld [vmem:[%s1517 + $0x140] sm:$0xff]
  %v1559 = vld [vmem:[%s1517 + $0x148] sm:$0xff]
  %v1560 = vld [vmem:[%s1517 + $0x150] sm:$0xff]
  %v1561 = vld [vmem:[%s1517 + $0x158] sm:$0xff]
  %v1562 = vld [vmem:[%s1517 + $0x160] sm:$0xff]
  %v1563 = vld [vmem:[%s1517 + $0x168] sm:$0xff]
  %v1564 = vld [vmem:[%s1517 + $0x170] sm:$0xff]
  %v1565 = vld [vmem:[%s1517 + $0x178] sm:$0xff]
  %v1566 = vld [vmem:[%s1517 + $0x180] sm:$0xff]
  %v1567 = vld [vmem:[%s1517 + $0x188] sm:$0xff]
  %1568 = vmatprep.subr.mxu0 0.0
  %1569 = vmatpush1.msra.mxu0 %v1533
  %1570 = vmatprep.subr.mxu0 0.0
  %1571 = vmatpush1.msra.mxu0 %v1532
  %1572 = vmatprep.subr.mxu0 0.0
  %1573 = vmatpush1.msra.mxu0 %v1531
  %1574 = vmatprep.subr.mxu0 0.0
  %1575 = vmatpush1.msra.mxu0 %v1530
  %1576 = vmatprep.subr.mxu0 0.0
  %1577 = vmatpush1.msra.mxu0 %v1529
  %1578 = vmatprep.subr.mxu0 0.0
  %1579 = vmatpush1.msra.mxu0 %v1528
  %1580 = vmatprep.subr.mxu0 0.0
  %1581 = vmatpush1.msra.mxu0 %v1527
  %1582 = vmatprep.subr.mxu0 0.0
  %1583 = vmatpush1.msra.mxu0 %v1526
  %1584 = vmatprep.subr.mxu0 0.0
  %1585 = vmatpush1.msra.mxu0 %v1525
  %1586 = vmatprep.subr.mxu0 0.0
  %1587 = vmatpush1.msra.mxu0 %v1524
  %1588 = vmatprep.subr.mxu0 0.0
  %1589 = vmatpush1.msra.mxu0 %v1523
  %1590 = vmatprep.subr.mxu0 0.0
  %1591 = vmatpush1.msra.mxu0 %v1522
  %1592 = vmatprep.subr.mxu0 0.0
  %1593 = vmatpush1.msra.mxu0 %v1521
  %1594 = vmatprep.subr.mxu0 0.0
  %1595 = vmatpush1.msra.mxu0 %v1520
  %1596 = vmatprep.subr.mxu0 0.0
  %1597 = vmatpush1.msra.mxu0 %v1519
  %1598 = vmatprep.subr.mxu0 0.0
  %1599 = vmatpush1.msra.mxu0 %v1518
  %1600 = vmatprep.subr.mxu0 0.0
  %1601 = vmatpush2.msra.mxu0 %v1549
  %1602 = vmatprep.subr.mxu0 0.0
  %1603 = vmatpush2.msra.mxu0 %v1548
  %1604 = vmatprep.subr.mxu0 0.0
  %1605 = vmatpush2.msra.mxu0 %v1547
  %1606 = vmatprep.subr.mxu0 0.0
  %1607 = vmatpush2.msra.mxu0 %v1546
  %1608 = vmatprep.subr.mxu0 0.0
  %1609 = vmatpush2.msra.mxu0 %v1545
  %1610 = vmatprep.subr.mxu0 0.0
  %1611 = vmatpush2.msra.mxu0 %v1544
  %1612 = vmatprep.subr.mxu0 0.0
  %1613 = vmatpush2.msra.mxu0 %v1543
  %1614 = vmatprep.subr.mxu0 0.0
  %1615 = vmatpush2.msra.mxu0 %v1542
  %1616 = vmatprep.subr.mxu0 0.0
  %1617 = vmatpush2.msra.mxu0 %v1541
  %1618 = vmatprep.subr.mxu0 0.0
  %1619 = vmatpush2.msra.mxu0 %v1540
  %1620 = vmatprep.subr.mxu0 0.0
  %1621 = vmatpush2.msra.mxu0 %v1539
  %1622 = vmatprep.subr.mxu0 0.0
  %1623 = vmatpush2.msra.mxu0 %v1538
  %1624 = vmatprep.subr.mxu0 0.0
  %1625 = vmatpush2.msra.mxu0 %v1537
  %1626 = vmatprep.subr.mxu0 0.0
  %1627 = vmatpush2.msra.mxu0 %v1536
  %1628 = vmatprep.subr.mxu0 0.0
  %1629 = vmatpush2.msra.mxu0 %v1535
  %1630 = vmatprep.subr.mxu0 0.0
  %1631 = vmatpush2.msra.mxu0 %v1534
  %1632 = vmatprep.mubr.f32.mxu0 %v899
  %1633 = vmatmul.mubr.f32.gmra.mxu0 %v898
  %v1634 = vpop.f32.mrf.mxu0
  %v1635 = vadd.f32 0.0, %v1634
  %v1636 = vpop.f32.mrf.mxu0
  %1637 = vmatprep.mubr.f32.mxu0 %v903
  %1638 = vmatmul.mubr.f32.gmra.mxu0 %v902
  %v1639 = vpop.f32.mrf.mxu0
  %v1640 = vadd.f32 0.0, %v1639
  %v1641 = vpop.f32.mrf.mxu0
  %1642 = vdwg.mxu0
  %1643 = vmatprep.subr.mxu0 0.0
  %1644 = vmatpush1.msra.mxu0 %v1565
  %1645 = vmatprep.subr.mxu0 0.0
  %1646 = vmatpush1.msra.mxu0 %v1564
  %1647 = vmatprep.subr.mxu0 0.0
  %1648 = vmatpush1.msra.mxu0 %v1563
  %1649 = vmatprep.subr.mxu0 0.0
  %1650 = vmatpush1.msra.mxu0 %v1562
  %1651 = vmatprep.subr.mxu0 0.0
  %1652 = vmatpush1.msra.mxu0 %v1561
  %1653 = vmatprep.subr.mxu0 0.0
  %1654 = vmatpush1.msra.mxu0 %v1560
  %1655 = vmatprep.subr.mxu0 0.0
  %1656 = vmatpush1.msra.mxu0 %v1559
  %1657 = vmatprep.subr.mxu0 0.0
  %1658 = vmatpush1.msra.mxu0 %v1558
  %1659 = vmatprep.subr.mxu0 0.0
  %1660 = vmatpush1.msra.mxu0 %v1557
  %1661 = vmatprep.subr.mxu0 0.0
  %1662 = vmatpush1.msra.mxu0 %v1556
  %1663 = vmatprep.subr.mxu0 0.0
  %1664 = vmatpush1.msra.mxu0 %v1555
  %1665 = vmatprep.subr.mxu0 0.0
  %1666 = vmatpush1.msra.mxu0 %v1554
  %1667 = vmatprep.subr.mxu0 0.0
  %1668 = vmatpush1.msra.mxu0 %v1553
  %1669 = vmatprep.subr.mxu0 0.0
  %1670 = vmatpush1.msra.mxu0 %v1552
  %1671 = vmatprep.subr.mxu0 0.0
  %1672 = vmatpush1.msra.mxu0 %v1551
  %1673 = vmatprep.subr.mxu0 0.0
  %1674 = vmatpush1.msra.mxu0 %v1550
  %1675 = vmatprep.subr.mxu0 0.0
  %1676 = vmatpush2.msra.mxu0 0.0
  %1677 = vmatprep.subr.mxu0 0.0
  %1678 = vmatpush2.msra.mxu0 0.0
  %1679 = vmatprep.subr.mxu0 0.0
  %1680 = vmatpush2.msra.mxu0 0.0
  %1681 = vmatprep.subr.mxu0 0.0
  %1682 = vmatpush2.msra.mxu0 0.0
  %1683 = vmatprep.subr.mxu0 0.0
  %1684 = vmatpush2.msra.mxu0 0.0
  %1685 = vmatprep.subr.mxu0 0.0
  %1686 = vmatpush2.msra.mxu0 0.0
  %1687 = vmatprep.subr.mxu0 0.0
  %1688 = vmatpush2.msra.mxu0 0.0
  %1689 = vmatprep.subr.mxu0 0.0
  %1690 = vmatpush2.msra.mxu0 0.0
  %1691 = vmatprep.subr.mxu0 0.0
  %1692 = vmatpush2.msra.mxu0 0.0
  %1693 = vmatprep.subr.mxu0 0.0
  %1694 = vmatpush2.msra.mxu0 0.0
  %1695 = vmatprep.subr.mxu0 0.0
  %1696 = vmatpush2.msra.mxu0 0.0
  %1697 = vmatprep.subr.mxu0 0.0
  %1698 = vmatpush2.msra.mxu0 0.0
  %1699 = vmatprep.subr.mxu0 0.0
  %1700 = vmatpush2.msra.mxu0 0.0
  %1701 = vmatprep.subr.mxu0 0.0
  %1702 = vmatpush2.msra.mxu0 0.0
  %1703 = vmatprep.subr.mxu0 0.0
  %1704 = vmatpush2.msra.mxu0 %v1567
  %1705 = vmatprep.subr.mxu0 0.0
  %1706 = vmatpush2.msra.mxu0 %v1566
  %1707 = vmatprep.mubr.f32.mxu0 %v960
  %1708 = vmatmul.mubr.f32.gmra.mxu0 %v900
  %v1709 = vpop.f32.mrf.mxu0
  %v1710 = vadd.f32 %v1635, %v1709
  %v1711 = vpop.f32.mrf.mxu0
  %1712 = vmatprep.mubr.f32.mxu0 %v963
  %1713 = vmatmul.mubr.f32.gmra.mxu0 %v904
  %v1714 = vpop.f32.mrf.mxu0
  %v1715 = vadd.f32 %v1640, %v1714
  %v1716 = vpop.f32.mrf.mxu0
  %1717 = vdwg.mxu0
  %s1718 = scalar_lea.vmem %s5, 1600
  %v1719 = vld [vmem:[%s1718] sm:$0xff]
  %v1720 = vld [vmem:[%s1718 + $0x8] sm:$0xff]
  %v1721 = vld [vmem:[%s1718 + $0x10] sm:$0xff]
  %v1722 = vld [vmem:[%s1718 + $0x18] sm:$0xff]
  %v1723 = vld [vmem:[%s1718 + $0x20] sm:$0xff]
  %v1724 = vld [vmem:[%s1718 + $0x28] sm:$0xff]
  %v1725 = vld [vmem:[%s1718 + $0x30] sm:$0xff]
  %v1726 = vld [vmem:[%s1718 + $0x38] sm:$0xff]
  %v1727 = vld [vmem:[%s1718 + $0x40] sm:$0xff]
  %v1728 = vld [vmem:[%s1718 + $0x48] sm:$0xff]
  %v1729 = vld [vmem:[%s1718 + $0x50] sm:$0xff]
  %v1730 = vld [vmem:[%s1718 + $0x58] sm:$0xff]
  %v1731 = vld [vmem:[%s1718 + $0x60] sm:$0xff]
  %v1732 = vld [vmem:[%s1718 + $0x68] sm:$0xff]
  %v1733 = vld [vmem:[%s1718 + $0x70] sm:$0xff]
  %v1734 = vld [vmem:[%s1718 + $0x78] sm:$0xff]
  %v1735 = vld [vmem:[%s1718 + $0x80] sm:$0xff]
  %v1736 = vld [vmem:[%s1718 + $0x88] sm:$0xff]
  %v1737 = vld [vmem:[%s1718 + $0x90] sm:$0xff]
  %v1738 = vld [vmem:[%s1718 + $0x98] sm:$0xff]
  %v1739 = vld [vmem:[%s1718 + $0xa0] sm:$0xff]
  %v1740 = vld [vmem:[%s1718 + $0xa8] sm:$0xff]
  %v1741 = vld [vmem:[%s1718 + $0xb0] sm:$0xff]
  %v1742 = vld [vmem:[%s1718 + $0xb8] sm:$0xff]
  %v1743 = vld [vmem:[%s1718 + $0xc0] sm:$0xff]
  %v1744 = vld [vmem:[%s1718 + $0xc8] sm:$0xff]
  %v1745 = vld [vmem:[%s1718 + $0xd0] sm:$0xff]
  %v1746 = vld [vmem:[%s1718 + $0xd8] sm:$0xff]
  %v1747 = vld [vmem:[%s1718 + $0xe0] sm:$0xff]
  %v1748 = vld [vmem:[%s1718 + $0xe8] sm:$0xff]
  %v1749 = vld [vmem:[%s1718 + $0xf0] sm:$0xff]
  %v1750 = vld [vmem:[%s1718 + $0xf8] sm:$0xff]
  %v1751 = vld [vmem:[%s1718 + $0x100] sm:$0xff]
  %v1752 = vld [vmem:[%s1718 + $0x108] sm:$0xff]
  %v1753 = vld [vmem:[%s1718 + $0x110] sm:$0xff]
  %v1754 = vld [vmem:[%s1718 + $0x118] sm:$0xff]
  %v1755 = vld [vmem:[%s1718 + $0x120] sm:$0xff]
  %v1756 = vld [vmem:[%s1718 + $0x128] sm:$0xff]
  %v1757 = vld [vmem:[%s1718 + $0x130] sm:$0xff]
  %v1758 = vld [vmem:[%s1718 + $0x138] sm:$0xff]
  %v1759 = vld [vmem:[%s1718 + $0x140] sm:$0xff]
  %v1760 = vld [vmem:[%s1718 + $0x148] sm:$0xff]
  %v1761 = vld [vmem:[%s1718 + $0x150] sm:$0xff]
  %v1762 = vld [vmem:[%s1718 + $0x158] sm:$0xff]
  %v1763 = vld [vmem:[%s1718 + $0x160] sm:$0xff]
  %v1764 = vld [vmem:[%s1718 + $0x168] sm:$0xff]
  %v1765 = vld [vmem:[%s1718 + $0x170] sm:$0xff]
  %v1766 = vld [vmem:[%s1718 + $0x178] sm:$0xff]
  %v1767 = vld [vmem:[%s1718 + $0x180] sm:$0xff]
  %v1768 = vld [vmem:[%s1718 + $0x188] sm:$0xff]
  %1769 = vmatprep.subr.mxu0 0.0
  %1770 = vmatpush1.msra.mxu0 %v1734
  %1771 = vmatprep.subr.mxu0 0.0
  %1772 = vmatpush1.msra.mxu0 %v1733
  %1773 = vmatprep.subr.mxu0 0.0
  %1774 = vmatpush1.msra.mxu0 %v1732
  %1775 = vmatprep.subr.mxu0 0.0
  %1776 = vmatpush1.msra.mxu0 %v1731
  %1777 = vmatprep.subr.mxu0 0.0
  %1778 = vmatpush1.msra.mxu0 %v1730
  %1779 = vmatprep.subr.mxu0 0.0
  %1780 = vmatpush1.msra.mxu0 %v1729
  %1781 = vmatprep.subr.mxu0 0.0
  %1782 = vmatpush1.msra.mxu0 %v1728
  %1783 = vmatprep.subr.mxu0 0.0
  %1784 = vmatpush1.msra.mxu0 %v1727
  %1785 = vmatprep.subr.mxu0 0.0
  %1786 = vmatpush1.msra.mxu0 %v1726
  %1787 = vmatprep.subr.mxu0 0.0
  %1788 = vmatpush1.msra.mxu0 %v1725
  %1789 = vmatprep.subr.mxu0 0.0
  %1790 = vmatpush1.msra.mxu0 %v1724
  %1791 = vmatprep.subr.mxu0 0.0
  %1792 = vmatpush1.msra.mxu0 %v1723
  %1793 = vmatprep.subr.mxu0 0.0
  %1794 = vmatpush1.msra.mxu0 %v1722
  %1795 = vmatprep.subr.mxu0 0.0
  %1796 = vmatpush1.msra.mxu0 %v1721
  %1797 = vmatprep.subr.mxu0 0.0
  %1798 = vmatpush1.msra.mxu0 %v1720
  %1799 = vmatprep.subr.mxu0 0.0
  %1800 = vmatpush1.msra.mxu0 %v1719
  %1801 = vmatprep.subr.mxu0 0.0
  %1802 = vmatpush2.msra.mxu0 %v1750
  %1803 = vmatprep.subr.mxu0 0.0
  %1804 = vmatpush2.msra.mxu0 %v1749
  %1805 = vmatprep.subr.mxu0 0.0
  %1806 = vmatpush2.msra.mxu0 %v1748
  %1807 = vmatprep.subr.mxu0 0.0
  %1808 = vmatpush2.msra.mxu0 %v1747
  %1809 = vmatprep.subr.mxu0 0.0
  %1810 = vmatpush2.msra.mxu0 %v1746
  %1811 = vmatprep.subr.mxu0 0.0
  %1812 = vmatpush2.msra.mxu0 %v1745
  %1813 = vmatprep.subr.mxu0 0.0
  %1814 = vmatpush2.msra.mxu0 %v1744
  %1815 = vmatprep.subr.mxu0 0.0
  %1816 = vmatpush2.msra.mxu0 %v1743
  %1817 = vmatprep.subr.mxu0 0.0
  %1818 = vmatpush2.msra.mxu0 %v1742
  %1819 = vmatprep.subr.mxu0 0.0
  %1820 = vmatpush2.msra.mxu0 %v1741
  %1821 = vmatprep.subr.mxu0 0.0
  %1822 = vmatpush2.msra.mxu0 %v1740
  %1823 = vmatprep.subr.mxu0 0.0
  %1824 = vmatpush2.msra.mxu0 %v1739
  %1825 = vmatprep.subr.mxu0 0.0
  %1826 = vmatpush2.msra.mxu0 %v1738
  %1827 = vmatprep.subr.mxu0 0.0
  %1828 = vmatpush2.msra.mxu0 %v1737
  %1829 = vmatprep.subr.mxu0 0.0
  %1830 = vmatpush2.msra.mxu0 %v1736
  %1831 = vmatprep.subr.mxu0 0.0
  %1832 = vmatpush2.msra.mxu0 %v1735
  %1833 = vmatprep.mubr.f32.mxu0 %v899
  %1834 = vmatmul.mubr.f32.gmra.mxu0 %v898
  %v1835 = vpop.f32.mrf.mxu0
  %v1836 = vadd.f32 0.0, %v1835
  %v1837 = vpop.f32.mrf.mxu0
  %1838 = vmatprep.mubr.f32.mxu0 %v903
  %1839 = vmatmul.mubr.f32.gmra.mxu0 %v902
  %v1840 = vpop.f32.mrf.mxu0
  %v1841 = vadd.f32 0.0, %v1840
  %v1842 = vpop.f32.mrf.mxu0
  %1843 = vdwg.mxu0
  %1844 = vmatprep.subr.mxu0 0.0
  %1845 = vmatpush1.msra.mxu0 %v1766
  %1846 = vmatprep.subr.mxu0 0.0
  %1847 = vmatpush1.msra.mxu0 %v1765
  %1848 = vmatprep.subr.mxu0 0.0
  %1849 = vmatpush1.msra.mxu0 %v1764
  %1850 = vmatprep.subr.mxu0 0.0
  %1851 = vmatpush1.msra.mxu0 %v1763
  %1852 = vmatprep.subr.mxu0 0.0
  %1853 = vmatpush1.msra.mxu0 %v1762
  %1854 = vmatprep.subr.mxu0 0.0
  %1855 = vmatpush1.msra.mxu0 %v1761
  %1856 = vmatprep.subr.mxu0 0.0
  %1857 = vmatpush1.msra.mxu0 %v1760
  %1858 = vmatprep.subr.mxu0 0.0
  %1859 = vmatpush1.msra.mxu0 %v1759
  %1860 = vmatprep.subr.mxu0 0.0
  %1861 = vmatpush1.msra.mxu0 %v1758
  %1862 = vmatprep.subr.mxu0 0.0
  %1863 = vmatpush1.msra.mxu0 %v1757
  %1864 = vmatprep.subr.mxu0 0.0
  %1865 = vmatpush1.msra.mxu0 %v1756
  %1866 = vmatprep.subr.mxu0 0.0
  %1867 = vmatpush1.msra.mxu0 %v1755
  %1868 = vmatprep.subr.mxu0 0.0
  %1869 = vmatpush1.msra.mxu0 %v1754
  %1870 = vmatprep.subr.mxu0 0.0
  %1871 = vmatpush1.msra.mxu0 %v1753
  %1872 = vmatprep.subr.mxu0 0.0
  %1873 = vmatpush1.msra.mxu0 %v1752
  %1874 = vmatprep.subr.mxu0 0.0
  %1875 = vmatpush1.msra.mxu0 %v1751
  %1876 = vmatprep.subr.mxu0 0.0
  %1877 = vmatpush2.msra.mxu0 0.0
  %1878 = vmatprep.subr.mxu0 0.0
  %1879 = vmatpush2.msra.mxu0 0.0
  %1880 = vmatprep.subr.mxu0 0.0
  %1881 = vmatpush2.msra.mxu0 0.0
  %1882 = vmatprep.subr.mxu0 0.0
  %1883 = vmatpush2.msra.mxu0 0.0
  %1884 = vmatprep.subr.mxu0 0.0
  %1885 = vmatpush2.msra.mxu0 0.0
  %1886 = vmatprep.subr.mxu0 0.0
  %1887 = vmatpush2.msra.mxu0 0.0
  %1888 = vmatprep.subr.mxu0 0.0
  %1889 = vmatpush2.msra.mxu0 0.0
  %1890 = vmatprep.subr.mxu0 0.0
  %1891 = vmatpush2.msra.mxu0 0.0
  %1892 = vmatprep.subr.mxu0 0.0
  %1893 = vmatpush2.msra.mxu0 0.0
  %1894 = vmatprep.subr.mxu0 0.0
  %1895 = vmatpush2.msra.mxu0 0.0
  %1896 = vmatprep.subr.mxu0 0.0
  %1897 = vmatpush2.msra.mxu0 0.0
  %1898 = vmatprep.subr.mxu0 0.0
  %1899 = vmatpush2.msra.mxu0 0.0
  %1900 = vmatprep.subr.mxu0 0.0
  %1901 = vmatpush2.msra.mxu0 0.0
  %1902 = vmatprep.subr.mxu0 0.0
  %1903 = vmatpush2.msra.mxu0 0.0
  %1904 = vmatprep.subr.mxu0 0.0
  %1905 = vmatpush2.msra.mxu0 %v1768
  %1906 = vmatprep.subr.mxu0 0.0
  %1907 = vmatpush2.msra.mxu0 %v1767
  %1908 = vmatprep.mubr.f32.mxu0 %v960
  %1909 = vmatmul.mubr.f32.gmra.mxu0 %v900
  %v1910 = vpop.f32.mrf.mxu0
  %v1911 = vadd.f32 %v1836, %v1910
  %v1912 = vpop.f32.mrf.mxu0
  %1913 = vmatprep.mubr.f32.mxu0 %v963
  %1914 = vmatmul.mubr.f32.gmra.mxu0 %v904
  %v1915 = vpop.f32.mrf.mxu0
  %v1916 = vadd.f32 %v1841, %v1915
  %v1917 = vpop.f32.mrf.mxu0
  %1918 = vdwg.mxu0
  %s1919 = scalar_lea.vmem %s5, 2000
  %v1920 = vld [vmem:[%s1919] sm:$0xff]
  %v1921 = vld [vmem:[%s1919 + $0x8] sm:$0xff]
  %v1922 = vld [vmem:[%s1919 + $0x10] sm:$0xff]
  %v1923 = vld [vmem:[%s1919 + $0x18] sm:$0xff]
  %v1924 = vld [vmem:[%s1919 + $0x20] sm:$0xff]
  %v1925 = vld [vmem:[%s1919 + $0x28] sm:$0xff]
  %v1926 = vld [vmem:[%s1919 + $0x30] sm:$0xff]
  %v1927 = vld [vmem:[%s1919 + $0x38] sm:$0xff]
  %v1928 = vld [vmem:[%s1919 + $0x40] sm:$0xff]
  %v1929 = vld [vmem:[%s1919 + $0x48] sm:$0xff]
  %v1930 = vld [vmem:[%s1919 + $0x50] sm:$0xff]
  %v1931 = vld [vmem:[%s1919 + $0x58] sm:$0xff]
  %v1932 = vld [vmem:[%s1919 + $0x60] sm:$0xff]
  %v1933 = vld [vmem:[%s1919 + $0x68] sm:$0xff]
  %v1934 = vld [vmem:[%s1919 + $0x70] sm:$0xff]
  %v1935 = vld [vmem:[%s1919 + $0x78] sm:$0xff]
  %v1936 = vld [vmem:[%s1919 + $0x80] sm:$0xff]
  %v1937 = vld [vmem:[%s1919 + $0x88] sm:$0xff]
  %v1938 = vld [vmem:[%s1919 + $0x90] sm:$0xff]
  %v1939 = vld [vmem:[%s1919 + $0x98] sm:$0xff]
  %v1940 = vld [vmem:[%s1919 + $0xa0] sm:$0xff]
  %v1941 = vld [vmem:[%s1919 + $0xa8] sm:$0xff]
  %v1942 = vld [vmem:[%s1919 + $0xb0] sm:$0xff]
  %v1943 = vld [vmem:[%s1919 + $0xb8] sm:$0xff]
  %v1944 = vld [vmem:[%s1919 + $0xc0] sm:$0xff]
  %v1945 = vld [vmem:[%s1919 + $0xc8] sm:$0xff]
  %v1946 = vld [vmem:[%s1919 + $0xd0] sm:$0xff]
  %v1947 = vld [vmem:[%s1919 + $0xd8] sm:$0xff]
  %v1948 = vld [vmem:[%s1919 + $0xe0] sm:$0xff]
  %v1949 = vld [vmem:[%s1919 + $0xe8] sm:$0xff]
  %v1950 = vld [vmem:[%s1919 + $0xf0] sm:$0xff]
  %v1951 = vld [vmem:[%s1919 + $0xf8] sm:$0xff]
  %v1952 = vld [vmem:[%s1919 + $0x100] sm:$0xff]
  %v1953 = vld [vmem:[%s1919 + $0x108] sm:$0xff]
  %v1954 = vld [vmem:[%s1919 + $0x110] sm:$0xff]
  %v1955 = vld [vmem:[%s1919 + $0x118] sm:$0xff]
  %v1956 = vld [vmem:[%s1919 + $0x120] sm:$0xff]
  %v1957 = vld [vmem:[%s1919 + $0x128] sm:$0xff]
  %v1958 = vld [vmem:[%s1919 + $0x130] sm:$0xff]
  %v1959 = vld [vmem:[%s1919 + $0x138] sm:$0xff]
  %v1960 = vld [vmem:[%s1919 + $0x140] sm:$0xff]
  %v1961 = vld [vmem:[%s1919 + $0x148] sm:$0xff]
  %v1962 = vld [vmem:[%s1919 + $0x150] sm:$0xff]
  %v1963 = vld [vmem:[%s1919 + $0x158] sm:$0xff]
  %v1964 = vld [vmem:[%s1919 + $0x160] sm:$0xff]
  %v1965 = vld [vmem:[%s1919 + $0x168] sm:$0xff]
  %v1966 = vld [vmem:[%s1919 + $0x170] sm:$0xff]
  %v1967 = vld [vmem:[%s1919 + $0x178] sm:$0xff]
  %v1968 = vld [vmem:[%s1919 + $0x180] sm:$0xff]
  %v1969 = vld [vmem:[%s1919 + $0x188] sm:$0xff]
  %1970 = vmatprep.subr.mxu0 0.0
  %1971 = vmatpush1.msra.mxu0 %v1935
  %1972 = vmatprep.subr.mxu0 0.0
  %1973 = vmatpush1.msra.mxu0 %v1934
  %1974 = vmatprep.subr.mxu0 0.0
  %1975 = vmatpush1.msra.mxu0 %v1933
  %1976 = vmatprep.subr.mxu0 0.0
  %1977 = vmatpush1.msra.mxu0 %v1932
  %1978 = vmatprep.subr.mxu0 0.0
  %1979 = vmatpush1.msra.mxu0 %v1931
  %1980 = vmatprep.subr.mxu0 0.0
  %1981 = vmatpush1.msra.mxu0 %v1930
  %1982 = vmatprep.subr.mxu0 0.0
  %1983 = vmatpush1.msra.mxu0 %v1929
  %1984 = vmatprep.subr.mxu0 0.0
  %1985 = vmatpush1.msra.mxu0 %v1928
  %1986 = vmatprep.subr.mxu0 0.0
  %1987 = vmatpush1.msra.mxu0 %v1927
  %1988 = vmatprep.subr.mxu0 0.0
  %1989 = vmatpush1.msra.mxu0 %v1926
  %1990 = vmatprep.subr.mxu0 0.0
  %1991 = vmatpush1.msra.mxu0 %v1925
  %1992 = vmatprep.subr.mxu0 0.0
  %1993 = vmatpush1.msra.mxu0 %v1924
  %1994 = vmatprep.subr.mxu0 0.0
  %1995 = vmatpush1.msra.mxu0 %v1923
  %1996 = vmatprep.subr.mxu0 0.0
  %1997 = vmatpush1.msra.mxu0 %v1922
  %1998 = vmatprep.subr.mxu0 0.0
  %1999 = vmatpush1.msra.mxu0 %v1921
  %2000 = vmatprep.subr.mxu0 0.0
  %2001 = vmatpush1.msra.mxu0 %v1920
  %2002 = vmatprep.subr.mxu0 0.0
  %2003 = vmatpush2.msra.mxu0 %v1951
  %2004 = vmatprep.subr.mxu0 0.0
  %2005 = vmatpush2.msra.mxu0 %v1950
  %2006 = vmatprep.subr.mxu0 0.0
  %2007 = vmatpush2.msra.mxu0 %v1949
  %2008 = vmatprep.subr.mxu0 0.0
  %2009 = vmatpush2.msra.mxu0 %v1948
  %2010 = vmatprep.subr.mxu0 0.0
  %2011 = vmatpush2.msra.mxu0 %v1947
  %2012 = vmatprep.subr.mxu0 0.0
  %2013 = vmatpush2.msra.mxu0 %v1946
  %2014 = vmatprep.subr.mxu0 0.0
  %2015 = vmatpush2.msra.mxu0 %v1945
  %2016 = vmatprep.subr.mxu0 0.0
  %2017 = vmatpush2.msra.mxu0 %v1944
  %2018 = vmatprep.subr.mxu0 0.0
  %2019 = vmatpush2.msra.mxu0 %v1943
  %2020 = vmatprep.subr.mxu0 0.0
  %2021 = vmatpush2.msra.mxu0 %v1942
  %2022 = vmatprep.subr.mxu0 0.0
  %2023 = vmatpush2.msra.mxu0 %v1941
  %2024 = vmatprep.subr.mxu0 0.0
  %2025 = vmatpush2.msra.mxu0 %v1940
  %2026 = vmatprep.subr.mxu0 0.0
  %2027 = vmatpush2.msra.mxu0 %v1939
  %2028 = vmatprep.subr.mxu0 0.0
  %2029 = vmatpush2.msra.mxu0 %v1938
  %2030 = vmatprep.subr.mxu0 0.0
  %2031 = vmatpush2.msra.mxu0 %v1937
  %2032 = vmatprep.subr.mxu0 0.0
  %2033 = vmatpush2.msra.mxu0 %v1936
  %2034 = vmatprep.mubr.f32.mxu0 %v899
  %2035 = vmatmul.mubr.f32.gmra.mxu0 %v898
  %v2036 = vpop.f32.mrf.mxu0
  %v2037 = vadd.f32 0.0, %v2036
  %v2038 = vpop.f32.mrf.mxu0
  %2039 = vmatprep.mubr.f32.mxu0 %v903
  %2040 = vmatmul.mubr.f32.gmra.mxu0 %v902
  %v2041 = vpop.f32.mrf.mxu0
  %v2042 = vadd.f32 0.0, %v2041
  %v2043 = vpop.f32.mrf.mxu0
  %2044 = vdwg.mxu0
  %2045 = vmatprep.subr.mxu0 0.0
  %2046 = vmatpush1.msra.mxu0 %v1967
  %2047 = vmatprep.subr.mxu0 0.0
  %2048 = vmatpush1.msra.mxu0 %v1966
  %2049 = vmatprep.subr.mxu0 0.0
  %2050 = vmatpush1.msra.mxu0 %v1965
  %2051 = vmatprep.subr.mxu0 0.0
  %2052 = vmatpush1.msra.mxu0 %v1964
  %2053 = vmatprep.subr.mxu0 0.0
  %2054 = vmatpush1.msra.mxu0 %v1963
  %2055 = vmatprep.subr.mxu0 0.0
  %2056 = vmatpush1.msra.mxu0 %v1962
  %2057 = vmatprep.subr.mxu0 0.0
  %2058 = vmatpush1.msra.mxu0 %v1961
  %2059 = vmatprep.subr.mxu0 0.0
  %2060 = vmatpush1.msra.mxu0 %v1960
  %2061 = vmatprep.subr.mxu0 0.0
  %2062 = vmatpush1.msra.mxu0 %v1959
  %2063 = vmatprep.subr.mxu0 0.0
  %2064 = vmatpush1.msra.mxu0 %v1958
  %2065 = vmatprep.subr.mxu0 0.0
  %2066 = vmatpush1.msra.mxu0 %v1957
  %2067 = vmatprep.subr.mxu0 0.0
  %2068 = vmatpush1.msra.mxu0 %v1956
  %2069 = vmatprep.subr.mxu0 0.0
  %2070 = vmatpush1.msra.mxu0 %v1955
  %2071 = vmatprep.subr.mxu0 0.0
  %2072 = vmatpush1.msra.mxu0 %v1954
  %2073 = vmatprep.subr.mxu0 0.0
  %2074 = vmatpush1.msra.mxu0 %v1953
  %2075 = vmatprep.subr.mxu0 0.0
  %2076 = vmatpush1.msra.mxu0 %v1952
  %2077 = vmatprep.subr.mxu0 0.0
  %2078 = vmatpush2.msra.mxu0 0.0
  %2079 = vmatprep.subr.mxu0 0.0
  %2080 = vmatpush2.msra.mxu0 0.0
  %2081 = vmatprep.subr.mxu0 0.0
  %2082 = vmatpush2.msra.mxu0 0.0
  %2083 = vmatprep.subr.mxu0 0.0
  %2084 = vmatpush2.msra.mxu0 0.0
  %2085 = vmatprep.subr.mxu0 0.0
  %2086 = vmatpush2.msra.mxu0 0.0
  %2087 = vmatprep.subr.mxu0 0.0
  %2088 = vmatpush2.msra.mxu0 0.0
  %2089 = vmatprep.subr.mxu0 0.0
  %2090 = vmatpush2.msra.mxu0 0.0
  %2091 = vmatprep.subr.mxu0 0.0
  %2092 = vmatpush2.msra.mxu0 0.0
  %2093 = vmatprep.subr.mxu0 0.0
  %2094 = vmatpush2.msra.mxu0 0.0
  %2095 = vmatprep.subr.mxu0 0.0
  %2096 = vmatpush2.msra.mxu0 0.0
  %2097 = vmatprep.subr.mxu0 0.0
  %2098 = vmatpush2.msra.mxu0 0.0
  %2099 = vmatprep.subr.mxu0 0.0
  %2100 = vmatpush2.msra.mxu0 0.0
  %2101 = vmatprep.subr.mxu0 0.0
  %2102 = vmatpush2.msra.mxu0 0.0
  %2103 = vmatprep.subr.mxu0 0.0
  %2104 = vmatpush2.msra.mxu0 0.0
  %2105 = vmatprep.subr.mxu0 0.0
  %2106 = vmatpush2.msra.mxu0 %v1969
  %2107 = vmatprep.subr.mxu0 0.0
  %2108 = vmatpush2.msra.mxu0 %v1968
  %2109 = vmatprep.mubr.f32.mxu0 %v960
  %2110 = vmatmul.mubr.f32.gmra.mxu0 %v900
  %v2111 = vpop.f32.mrf.mxu0
  %v2112 = vadd.f32 %v2037, %v2111
  %v2113 = vpop.f32.mrf.mxu0
  %2114 = vmatprep.mubr.f32.mxu0 %v963
  %2115 = vmatmul.mubr.f32.gmra.mxu0 %v904
  %v2116 = vpop.f32.mrf.mxu0
  %v2117 = vadd.f32 %v2042, %v2116
  %v2118 = vpop.f32.mrf.mxu0
  %2119 = vdwg.mxu0
  %v2120 = vld [vmem:[%s3] sm:$0xff]
  %v2121 = vld [vmem:[%s3 + $0x8] sm:$0xff]
  %s2122 = scalar_lea.vmem %s3, 16
  %v2123 = vld [vmem:[%s2122] sm:$0xff]
  %v2124 = vld [vmem:[%s2122 + $0x8] sm:$0xff]
  %v2126 = vsel %vm958, %v2123, 0
  %v2129 = vsel %vm958, %v2124, 0
  %2131 = vmatprep.subr.mxu0 0.0
  %2132 = vmatpush1.msra.mxu0 0.0
  %2133 = vmatprep.subr.mxu0 0.0
  %2134 = vmatpush1.msra.mxu0 0.0
  %2135 = vmatprep.subr.mxu0 0.0
  %2136 = vmatpush1.msra.mxu0 0.0
  %2137 = vmatprep.subr.mxu0 0.0
  %2138 = vmatpush1.msra.mxu0 0.0
  %2139 = vmatprep.subr.mxu0 0.0
  %2140 = vmatpush1.msra.mxu0 0.0
  %2141 = vmatprep.subr.mxu0 0.0
  %2142 = vmatpush1.msra.mxu0 0.0
  %2143 = vmatprep.subr.mxu0 0.0
  %2144 = vmatpush1.msra.mxu0 0.0
  %2145 = vmatprep.subr.mxu0 0.0
  %2146 = vmatpush1.msra.mxu0 0.0
  %2147 = vmatprep.subr.mxu0 0.0
  %2148 = vmatpush1.msra.mxu0 0.0
  %2149 = vmatprep.subr.mxu0 0.0
  %2150 = vmatpush1.msra.mxu0 0.0
  %2151 = vmatprep.subr.mxu0 0.0
  %2152 = vmatpush1.msra.mxu0 0.0
  %2153 = vmatprep.subr.mxu0 0.0
  %2154 = vmatpush1.msra.mxu0 0.0
  %2155 = vmatprep.subr.mxu0 0.0
  %2156 = vmatpush1.msra.mxu0 0.0
  %2157 = vmatprep.subr.mxu0 0.0
  %2158 = vmatpush1.msra.mxu0 0.0
  %2159 = vmatprep.subr.mxu0 0.0
  %2160 = vmatpush1.msra.mxu0 %v1313
  %2161 = vmatprep.subr.mxu0 0.0
  %2162 = vmatpush1.msra.mxu0 %v1308
  %2163 = vmatprep.subr.mxu0 0.0
  %2164 = vmatpush2.msra.mxu0 0.0
  %2165 = vmatprep.subr.mxu0 0.0
  %2166 = vmatpush2.msra.mxu0 0.0
  %2167 = vmatprep.subr.mxu0 0.0
  %2168 = vmatpush2.msra.mxu0 0.0
  %2169 = vmatprep.subr.mxu0 0.0
  %2170 = vmatpush2.msra.mxu0 0.0
  %2171 = vmatprep.subr.mxu0 0.0
  %2172 = vmatpush2.msra.mxu0 0.0
  %2173 = vmatprep.subr.mxu0 0.0
  %2174 = vmatpush2.msra.mxu0 0.0
  %2175 = vmatprep.subr.mxu0 0.0
  %2176 = vmatpush2.msra.mxu0 0.0
  %2177 = vmatprep.subr.mxu0 0.0
  %2178 = vmatpush2.msra.mxu0 0.0
  %2179 = vmatprep.subr.mxu0 0.0
  %2180 = vmatpush2.msra.mxu0 0.0
  %2181 = vmatprep.subr.mxu0 0.0
  %2182 = vmatpush2.msra.mxu0 0.0
  %2183 = vmatprep.subr.mxu0 0.0
  %2184 = vmatpush2.msra.mxu0 0.0
  %2185 = vmatprep.subr.mxu0 0.0
  %2186 = vmatpush2.msra.mxu0 0.0
  %2187 = vmatprep.subr.mxu0 0.0
  %2188 = vmatpush2.msra.mxu0 0.0
  %2189 = vmatprep.subr.mxu0 0.0
  %2190 = vmatpush2.msra.mxu0 0.0
  %2191 = vmatprep.subr.mxu0 0.0
  %2192 = vmatpush2.msra.mxu0 0.0
  %2193 = vmatprep.subr.mxu0 0.0
  %2194 = vmatpush2.msra.mxu0 0.0
  %2195 = vmatprep.mubr.f32.mxu0 0.0
  %2196 = vmatmul.mubr.f32.gmra.mxu0 %v2126
  %v2197 = vpop.f32.mrf.mxu0
  %v2198 = vadd.f32 0.0, %v2197
  %v2199 = vpop.f32.mrf.mxu0
  %2200 = vmatprep.mubr.f32.mxu0 0.0
  %2201 = vmatmul.mubr.f32.gmra.mxu0 %v2129
  %v2202 = vpop.f32.mrf.mxu0
  %v2203 = vadd.f32 0.0, %v2202
  %v2204 = vpop.f32.mrf.mxu0
  %2205 = vdwg.mxu0
  %v2207 = vsel %vm958, %v2120, 0
  %v2210 = vsel %vm958, %v2121, 0
  %2212 = vmatprep.subr.mxu0 0.0
  %2213 = vmatpush1.msra.mxu0 0.0
  %2214 = vmatprep.subr.mxu0 0.0
  %2215 = vmatpush1.msra.mxu0 0.0
  %2216 = vmatprep.subr.mxu0 0.0
  %2217 = vmatpush1.msra.mxu0 0.0
  %2218 = vmatprep.subr.mxu0 0.0
  %2219 = vmatpush1.msra.mxu0 0.0
  %2220 = vmatprep.subr.mxu0 0.0
  %2221 = vmatpush1.msra.mxu0 0.0
  %2222 = vmatprep.subr.mxu0 0.0
  %2223 = vmatpush1.msra.mxu0 0.0
  %2224 = vmatprep.subr.mxu0 0.0
  %2225 = vmatpush1.msra.mxu0 0.0
  %2226 = vmatprep.subr.mxu0 0.0
  %2227 = vmatpush1.msra.mxu0 0.0
  %2228 = vmatprep.subr.mxu0 0.0
  %2229 = vmatpush1.msra.mxu0 0.0
  %2230 = vmatprep.subr.mxu0 0.0
  %2231 = vmatpush1.msra.mxu0 0.0
  %2232 = vmatprep.subr.mxu0 0.0
  %2233 = vmatpush1.msra.mxu0 0.0
  %2234 = vmatprep.subr.mxu0 0.0
  %2235 = vmatpush1.msra.mxu0 0.0
  %2236 = vmatprep.subr.mxu0 0.0
  %2237 = vmatpush1.msra.mxu0 0.0
  %2238 = vmatprep.subr.mxu0 0.0
  %2239 = vmatpush1.msra.mxu0 0.0
  %2240 = vmatprep.subr.mxu0 0.0
  %2241 = vmatpush1.msra.mxu0 %v1112
  %2242 = vmatprep.subr.mxu0 0.0
  %2243 = vmatpush1.msra.mxu0 %v1107
  %2244 = vmatprep.subr.mxu0 0.0
  %2245 = vmatpush2.msra.mxu0 0.0
  %2246 = vmatprep.subr.mxu0 0.0
  %2247 = vmatpush2.msra.mxu0 0.0
  %2248 = vmatprep.subr.mxu0 0.0
  %2249 = vmatpush2.msra.mxu0 0.0
  %2250 = vmatprep.subr.mxu0 0.0
  %2251 = vmatpush2.msra.mxu0 0.0
  %2252 = vmatprep.subr.mxu0 0.0
  %2253 = vmatpush2.msra.mxu0 0.0
  %2254 = vmatprep.subr.mxu0 0.0
  %2255 = vmatpush2.msra.mxu0 0.0
  %2256 = vmatprep.subr.mxu0 0.0
  %2257 = vmatpush2.msra.mxu0 0.0
  %2258 = vmatprep.subr.mxu0 0.0
  %2259 = vmatpush2.msra.mxu0 0.0
  %2260 = vmatprep.subr.mxu0 0.0
  %2261 = vmatpush2.msra.mxu0 0.0
  %2262 = vmatprep.subr.mxu0 0.0
  %2263 = vmatpush2.msra.mxu0 0.0
  %2264 = vmatprep.subr.mxu0 0.0
  %2265 = vmatpush2.msra.mxu0 0.0
  %2266 = vmatprep.subr.mxu0 0.0
  %2267 = vmatpush2.msra.mxu0 0.0
  %2268 = vmatprep.subr.mxu0 0.0
  %2269 = vmatpush2.msra.mxu0 0.0
  %2270 = vmatprep.subr.mxu0 0.0
  %2271 = vmatpush2.msra.mxu0 0.0
  %2272 = vmatprep.subr.mxu0 0.0
  %2273 = vmatpush2.msra.mxu0 0.0
  %2274 = vmatprep.subr.mxu0 0.0
  %2275 = vmatpush2.msra.mxu0 0.0
  %2276 = vmatprep.mubr.f32.mxu0 0.0
  %2277 = vmatmul.mubr.f32.gmra.mxu0 %v2207
  %v2278 = vpop.f32.mrf.mxu0
  %v2279 = vadd.f32 %v2198, %v2278
  %v2280 = vpop.f32.mrf.mxu0
  %2281 = vmatprep.mubr.f32.mxu0 0.0
  %2282 = vmatmul.mubr.f32.gmra.mxu0 %v2210
  %v2283 = vpop.f32.mrf.mxu0
  %v2284 = vadd.f32 %v2203, %v2283
  %v2285 = vpop.f32.mrf.mxu0
  %2286 = vdwg.mxu0
  %s2287 = scalar_lea.vmem %s3, 32
  %v2288 = vld [vmem:[%s2287] sm:$0xff]
  %v2289 = vld [vmem:[%s2287 + $0x8] sm:$0xff]
  %v2291 = vsel %vm958, %v2288, 0
  %v2294 = vsel %vm958, %v2289, 0
  %2296 = vmatprep.subr.mxu0 0.0
  %2297 = vmatpush1.msra.mxu0 0.0
  %2298 = vmatprep.subr.mxu0 0.0
  %2299 = vmatpush1.msra.mxu0 0.0
  %2300 = vmatprep.subr.mxu0 0.0
  %2301 = vmatpush1.msra.mxu0 0.0
  %2302 = vmatprep.subr.mxu0 0.0
  %2303 = vmatpush1.msra.mxu0 0.0
  %2304 = vmatprep.subr.mxu0 0.0
  %2305 = vmatpush1.msra.mxu0 0.0
  %2306 = vmatprep.subr.mxu0 0.0
  %2307 = vmatpush1.msra.mxu0 0.0
  %2308 = vmatprep.subr.mxu0 0.0
  %2309 = vmatpush1.msra.mxu0 0.0
  %2310 = vmatprep.subr.mxu0 0.0
  %2311 = vmatpush1.msra.mxu0 0.0
  %2312 = vmatprep.subr.mxu0 0.0
  %2313 = vmatpush1.msra.mxu0 0.0
  %2314 = vmatprep.subr.mxu0 0.0
  %2315 = vmatpush1.msra.mxu0 0.0
  %2316 = vmatprep.subr.mxu0 0.0
  %2317 = vmatpush1.msra.mxu0 0.0
  %2318 = vmatprep.subr.mxu0 0.0
  %2319 = vmatpush1.msra.mxu0 0.0
  %2320 = vmatprep.subr.mxu0 0.0
  %2321 = vmatpush1.msra.mxu0 0.0
  %2322 = vmatprep.subr.mxu0 0.0
  %2323 = vmatpush1.msra.mxu0 0.0
  %2324 = vmatprep.subr.mxu0 0.0
  %2325 = vmatpush1.msra.mxu0 %v1514
  %2326 = vmatprep.subr.mxu0 0.0
  %2327 = vmatpush1.msra.mxu0 %v1509
  %2328 = vmatprep.subr.mxu0 0.0
  %2329 = vmatpush2.msra.mxu0 0.0
  %2330 = vmatprep.subr.mxu0 0.0
  %2331 = vmatpush2.msra.mxu0 0.0
  %2332 = vmatprep.subr.mxu0 0.0
  %2333 = vmatpush2.msra.mxu0 0.0
  %2334 = vmatprep.subr.mxu0 0.0
  %2335 = vmatpush2.msra.mxu0 0.0
  %2336 = vmatprep.subr.mxu0 0.0
  %2337 = vmatpush2.msra.mxu0 0.0
  %2338 = vmatprep.subr.mxu0 0.0
  %2339 = vmatpush2.msra.mxu0 0.0
  %2340 = vmatprep.subr.mxu0 0.0
  %2341 = vmatpush2.msra.mxu0 0.0
  %2342 = vmatprep.subr.mxu0 0.0
  %2343 = vmatpush2.msra.mxu0 0.0
  %2344 = vmatprep.subr.mxu0 0.0
  %2345 = vmatpush2.msra.mxu0 0.0
  %2346 = vmatprep.subr.mxu0 0.0
  %2347 = vmatpush2.msra.mxu0 0.0
  %2348 = vmatprep.subr.mxu0 0.0
  %2349 = vmatpush2.msra.mxu0 0.0
  %2350 = vmatprep.subr.mxu0 0.0
  %2351 = vmatpush2.msra.mxu0 0.0
  %2352 = vmatprep.subr.mxu0 0.0
  %2353 = vmatpush2.msra.mxu0 0.0
  %2354 = vmatprep.subr.mxu0 0.0
  %2355 = vmatpush2.msra.mxu0 0.0
  %2356 = vmatprep.subr.mxu0 0.0
  %2357 = vmatpush2.msra.mxu0 0.0
  %2358 = vmatprep.subr.mxu0 0.0
  %2359 = vmatpush2.msra.mxu0 0.0
  %2360 = vmatprep.mubr.f32.mxu0 0.0
  %2361 = vmatmul.mubr.f32.gmra.mxu0 %v2291
  %v2362 = vpop.f32.mrf.mxu0
  %v2363 = vadd.f32 0.0, %v2362
  %v2364 = vpop.f32.mrf.mxu0
  %2365 = vmatprep.mubr.f32.mxu0 0.0
  %2366 = vmatmul.mubr.f32.gmra.mxu0 %v2294
  %v2367 = vpop.f32.mrf.mxu0
  %v2368 = vadd.f32 0.0, %v2367
  %v2369 = vpop.f32.mrf.mxu0
  %2370 = vdwg.mxu0
  %v2371 = vadd.f32 %v2279, %v2363
  %v2372 = vadd.f32 %v2284, %v2368
  %2374 = vset.pattern.permute.xlu0 0
  %2375 = vperm.xlu0 %2374, %v906
  %v2376 = vpop.permute.xlu0 %2375
  %2379 = vset.pattern.permute.xlu0 0
  %2380 = vperm.xlu0 %2379, %v907
  %v2381 = vpop.permute.xlu0 %2380
  %v2383 = vadd.f32 %v2371, %v2376
  %v2384 = vadd.f32 %v2372, %v2381
  %v2385 = vmax.f32 %v2383, 0.0
  %v2386 = vmax.f32 %v2384, 0.0
  %2387 = vmatprep.subr.mxu0 0.0
  %2388 = vmatpush1.msra.mxu0 0.0
  %2389 = vmatprep.subr.mxu0 0.0
  %2390 = vmatpush1.msra.mxu0 0.0
  %2391 = vmatprep.subr.mxu0 0.0
  %2392 = vmatpush1.msra.mxu0 0.0
  %2393 = vmatprep.subr.mxu0 0.0
  %2394 = vmatpush1.msra.mxu0 0.0
  %2395 = vmatprep.subr.mxu0 0.0
  %2396 = vmatpush1.msra.mxu0 0.0
  %2397 = vmatprep.subr.mxu0 0.0
  %2398 = vmatpush1.msra.mxu0 0.0
  %2399 = vmatprep.subr.mxu0 0.0
  %2400 = vmatpush1.msra.mxu0 0.0
  %2401 = vmatprep.subr.mxu0 0.0
  %2402 = vmatpush1.msra.mxu0 0.0
  %2403 = vmatprep.subr.mxu0 0.0
  %2404 = vmatpush1.msra.mxu0 0.0
  %2405 = vmatprep.subr.mxu0 0.0
  %2406 = vmatpush1.msra.mxu0 0.0
  %2407 = vmatprep.subr.mxu0 0.0
  %2408 = vmatpush1.msra.mxu0 0.0
  %2409 = vmatprep.subr.mxu0 0.0
  %2410 = vmatpush1.msra.mxu0 0.0
  %2411 = vmatprep.subr.mxu0 0.0
  %2412 = vmatpush1.msra.mxu0 0.0
  %2413 = vmatprep.subr.mxu0 0.0
  %2414 = vmatpush1.msra.mxu0 0.0
  %2415 = vmatprep.subr.mxu0 0.0
  %2416 = vmatpush1.msra.mxu0 %v1514
  %2417 = vmatprep.subr.mxu0 0.0
  %2418 = vmatpush1.msra.mxu0 %v1509
  %2419 = vmatprep.subr.mxu0 0.0
  %2420 = vmatpush2.msra.mxu0 0.0
  %2421 = vmatprep.subr.mxu0 0.0
  %2422 = vmatpush2.msra.mxu0 0.0
  %2423 = vmatprep.subr.mxu0 0.0
  %2424 = vmatpush2.msra.mxu0 0.0
  %2425 = vmatprep.subr.mxu0 0.0
  %2426 = vmatpush2.msra.mxu0 0.0
  %2427 = vmatprep.subr.mxu0 0.0
  %2428 = vmatpush2.msra.mxu0 0.0
  %2429 = vmatprep.subr.mxu0 0.0
  %2430 = vmatpush2.msra.mxu0 0.0
  %2431 = vmatprep.subr.mxu0 0.0
  %2432 = vmatpush2.msra.mxu0 0.0
  %2433 = vmatprep.subr.mxu0 0.0
  %2434 = vmatpush2.msra.mxu0 0.0
  %2435 = vmatprep.subr.mxu0 0.0
  %2436 = vmatpush2.msra.mxu0 0.0
  %2437 = vmatprep.subr.mxu0 0.0
  %2438 = vmatpush2.msra.mxu0 0.0
  %2439 = vmatprep.subr.mxu0 0.0
  %2440 = vmatpush2.msra.mxu0 0.0
  %2441 = vmatprep.subr.mxu0 0.0
  %2442 = vmatpush2.msra.mxu0 0.0
  %2443 = vmatprep.subr.mxu0 0.0
  %2444 = vmatpush2.msra.mxu0 0.0
  %2445 = vmatprep.subr.mxu0 0.0
  %2446 = vmatpush2.msra.mxu0 0.0
  %2447 = vmatprep.subr.mxu0 0.0
  %2448 = vmatpush2.msra.mxu0 0.0
  %2449 = vmatprep.subr.mxu0 0.0
  %2450 = vmatpush2.msra.mxu0 0.0
  %2451 = vmatprep.mubr.f32.mxu0 0.0
  %2452 = vmatmul.mubr.f32.gmra.mxu0 %v2126
  %v2453 = vpop.f32.mrf.mxu0
  %v2454 = vadd.f32 0.0, %v2453
  %v2455 = vpop.f32.mrf.mxu0
  %2456 = vmatprep.mubr.f32.mxu0 0.0
  %2457 = vmatmul.mubr.f32.gmra.mxu0 %v2129
  %v2458 = vpop.f32.mrf.mxu0
  %v2459 = vadd.f32 0.0, %v2458
  %v2460 = vpop.f32.mrf.mxu0
  %2461 = vdwg.mxu0
  %2462 = vmatprep.subr.mxu0 0.0
  %2463 = vmatpush1.msra.mxu0 0.0
  %2464 = vmatprep.subr.mxu0 0.0
  %2465 = vmatpush1.msra.mxu0 0.0
  %2466 = vmatprep.subr.mxu0 0.0
  %2467 = vmatpush1.msra.mxu0 0.0
  %2468 = vmatprep.subr.mxu0 0.0
  %2469 = vmatpush1.msra.mxu0 0.0
  %2470 = vmatprep.subr.mxu0 0.0
  %2471 = vmatpush1.msra.mxu0 0.0
  %2472 = vmatprep.subr.mxu0 0.0
  %2473 = vmatpush1.msra.mxu0 0.0
  %2474 = vmatprep.subr.mxu0 0.0
  %2475 = vmatpush1.msra.mxu0 0.0
  %2476 = vmatprep.subr.mxu0 0.0
  %2477 = vmatpush1.msra.mxu0 0.0
  %2478 = vmatprep.subr.mxu0 0.0
  %2479 = vmatpush1.msra.mxu0 0.0
  %2480 = vmatprep.subr.mxu0 0.0
  %2481 = vmatpush1.msra.mxu0 0.0
  %2482 = vmatprep.subr.mxu0 0.0
  %2483 = vmatpush1.msra.mxu0 0.0
  %2484 = vmatprep.subr.mxu0 0.0
  %2485 = vmatpush1.msra.mxu0 0.0
  %2486 = vmatprep.subr.mxu0 0.0
  %2487 = vmatpush1.msra.mxu0 0.0
  %2488 = vmatprep.subr.mxu0 0.0
  %2489 = vmatpush1.msra.mxu0 0.0
  %2490 = vmatprep.subr.mxu0 0.0
  %2491 = vmatpush1.msra.mxu0 %v1313
  %2492 = vmatprep.subr.mxu0 0.0
  %2493 = vmatpush1.msra.mxu0 %v1308
  %2494 = vmatprep.subr.mxu0 0.0
  %2495 = vmatpush2.msra.mxu0 0.0
  %2496 = vmatprep.subr.mxu0 0.0
  %2497 = vmatpush2.msra.mxu0 0.0
  %2498 = vmatprep.subr.mxu0 0.0
  %2499 = vmatpush2.msra.mxu0 0.0
  %2500 = vmatprep.subr.mxu0 0.0
  %2501 = vmatpush2.msra.mxu0 0.0
  %2502 = vmatprep.subr.mxu0 0.0
  %2503 = vmatpush2.msra.mxu0 0.0
  %2504 = vmatprep.subr.mxu0 0.0
  %2505 = vmatpush2.msra.mxu0 0.0
  %2506 = vmatprep.subr.mxu0 0.0
  %2507 = vmatpush2.msra.mxu0 0.0
  %2508 = vmatprep.subr.mxu0 0.0
  %2509 = vmatpush2.msra.mxu0 0.0
  %2510 = vmatprep.subr.mxu0 0.0
  %2511 = vmatpush2.msra.mxu0 0.0
  %2512 = vmatprep.subr.mxu0 0.0
  %2513 = vmatpush2.msra.mxu0 0.0
  %2514 = vmatprep.subr.mxu0 0.0
  %2515 = vmatpush2.msra.mxu0 0.0
  %2516 = vmatprep.subr.mxu0 0.0
  %2517 = vmatpush2.msra.mxu0 0.0
  %2518 = vmatprep.subr.mxu0 0.0
  %2519 = vmatpush2.msra.mxu0 0.0
  %2520 = vmatprep.subr.mxu0 0.0
  %2521 = vmatpush2.msra.mxu0 0.0
  %2522 = vmatprep.subr.mxu0 0.0
  %2523 = vmatpush2.msra.mxu0 0.0
  %2524 = vmatprep.subr.mxu0 0.0
  %2525 = vmatpush2.msra.mxu0 0.0
  %2526 = vmatprep.mubr.f32.mxu0 0.0
  %2527 = vmatmul.mubr.f32.gmra.mxu0 %v2207
  %v2528 = vpop.f32.mrf.mxu0
  %v2529 = vadd.f32 %v2454, %v2528
  %v2530 = vpop.f32.mrf.mxu0
  %2531 = vmatprep.mubr.f32.mxu0 0.0
  %2532 = vmatmul.mubr.f32.gmra.mxu0 %v2210
  %v2533 = vpop.f32.mrf.mxu0
  %v2534 = vadd.f32 %v2459, %v2533
  %v2535 = vpop.f32.mrf.mxu0
  %2536 = vdwg.mxu0
  %2537 = vmatprep.subr.mxu0 0.0
  %2538 = vmatpush1.msra.mxu0 0.0
  %2539 = vmatprep.subr.mxu0 0.0
  %2540 = vmatpush1.msra.mxu0 0.0
  %2541 = vmatprep.subr.mxu0 0.0
  %2542 = vmatpush1.msra.mxu0 0.0
  %2543 = vmatprep.subr.mxu0 0.0
  %2544 = vmatpush1.msra.mxu0 0.0
  %2545 = vmatprep.subr.mxu0 0.0
  %2546 = vmatpush1.msra.mxu0 0.0
  %2547 = vmatprep.subr.mxu0 0.0
  %2548 = vmatpush1.msra.mxu0 0.0
  %2549 = vmatprep.subr.mxu0 0.0
  %2550 = vmatpush1.msra.mxu0 0.0
  %2551 = vmatprep.subr.mxu0 0.0
  %2552 = vmatpush1.msra.mxu0 0.0
  %2553 = vmatprep.subr.mxu0 0.0
  %2554 = vmatpush1.msra.mxu0 0.0
  %2555 = vmatprep.subr.mxu0 0.0
  %2556 = vmatpush1.msra.mxu0 0.0
  %2557 = vmatprep.subr.mxu0 0.0
  %2558 = vmatpush1.msra.mxu0 0.0
  %2559 = vmatprep.subr.mxu0 0.0
  %2560 = vmatpush1.msra.mxu0 0.0
  %2561 = vmatprep.subr.mxu0 0.0
  %2562 = vmatpush1.msra.mxu0 0.0
  %2563 = vmatprep.subr.mxu0 0.0
  %2564 = vmatpush1.msra.mxu0 0.0
  %2565 = vmatprep.subr.mxu0 0.0
  %2566 = vmatpush1.msra.mxu0 %v1715
  %2567 = vmatprep.subr.mxu0 0.0
  %2568 = vmatpush1.msra.mxu0 %v1710
  %2569 = vmatprep.subr.mxu0 0.0
  %2570 = vmatpush2.msra.mxu0 0.0
  %2571 = vmatprep.subr.mxu0 0.0
  %2572 = vmatpush2.msra.mxu0 0.0
  %2573 = vmatprep.subr.mxu0 0.0
  %2574 = vmatpush2.msra.mxu0 0.0
  %2575 = vmatprep.subr.mxu0 0.0
  %2576 = vmatpush2.msra.mxu0 0.0
  %2577 = vmatprep.subr.mxu0 0.0
  %2578 = vmatpush2.msra.mxu0 0.0
  %2579 = vmatprep.subr.mxu0 0.0
  %2580 = vmatpush2.msra.mxu0 0.0
  %2581 = vmatprep.subr.mxu0 0.0
  %2582 = vmatpush2.msra.mxu0 0.0
  %2583 = vmatprep.subr.mxu0 0.0
  %2584 = vmatpush2.msra.mxu0 0.0
  %2585 = vmatprep.subr.mxu0 0.0
  %2586 = vmatpush2.msra.mxu0 0.0
  %2587 = vmatprep.subr.mxu0 0.0
  %2588 = vmatpush2.msra.mxu0 0.0
  %2589 = vmatprep.subr.mxu0 0.0
  %2590 = vmatpush2.msra.mxu0 0.0
  %2591 = vmatprep.subr.mxu0 0.0
  %2592 = vmatpush2.msra.mxu0 0.0
  %2593 = vmatprep.subr.mxu0 0.0
  %2594 = vmatpush2.msra.mxu0 0.0
  %2595 = vmatprep.subr.mxu0 0.0
  %2596 = vmatpush2.msra.mxu0 0.0
  %2597 = vmatprep.subr.mxu0 0.0
  %2598 = vmatpush2.msra.mxu0 0.0
  %2599 = vmatprep.subr.mxu0 0.0
  %2600 = vmatpush2.msra.mxu0 0.0
  %2601 = vmatprep.mubr.f32.mxu0 0.0
  %2602 = vmatmul.mubr.f32.gmra.mxu0 %v2291
  %v2603 = vpop.f32.mrf.mxu0
  %v2604 = vadd.f32 0.0, %v2603
  %v2605 = vpop.f32.mrf.mxu0
  %2606 = vmatprep.mubr.f32.mxu0 0.0
  %2607 = vmatmul.mubr.f32.gmra.mxu0 %v2294
  %v2608 = vpop.f32.mrf.mxu0
  %v2609 = vadd.f32 0.0, %v2608
  %v2610 = vpop.f32.mrf.mxu0
  %2611 = vdwg.mxu0
  %v2612 = vadd.f32 %v2529, %v2604
  %v2613 = vadd.f32 %v2534, %v2609
  %v2614 = vadd.f32 %v2612, %v2376
  %v2615 = vadd.f32 %v2613, %v2381
  %v2616 = vmax.f32 %v2614, 0.0
  %v2617 = vmax.f32 %v2615, 0.0
  %v2618 = vmax.f32 %v2385, %v2616
  %v2619 = vmax.f32 %v2386, %v2617
  %2620 = vmatprep.subr.mxu0 0.0
  %2621 = vmatpush1.msra.mxu0 0.0
  %2622 = vmatprep.subr.mxu0 0.0
  %2623 = vmatpush1.msra.mxu0 0.0
  %2624 = vmatprep.subr.mxu0 0.0
  %2625 = vmatpush1.msra.mxu0 0.0
  %2626 = vmatprep.subr.mxu0 0.0
  %2627 = vmatpush1.msra.mxu0 0.0
  %2628 = vmatprep.subr.mxu0 0.0
  %2629 = vmatpush1.msra.mxu0 0.0
  %2630 = vmatprep.subr.mxu0 0.0
  %2631 = vmatpush1.msra.mxu0 0.0
  %2632 = vmatprep.subr.mxu0 0.0
  %2633 = vmatpush1.msra.mxu0 0.0
  %2634 = vmatprep.subr.mxu0 0.0
  %2635 = vmatpush1.msra.mxu0 0.0
  %2636 = vmatprep.subr.mxu0 0.0
  %2637 = vmatpush1.msra.mxu0 0.0
  %2638 = vmatprep.subr.mxu0 0.0
  %2639 = vmatpush1.msra.mxu0 0.0
  %2640 = vmatprep.subr.mxu0 0.0
  %2641 = vmatpush1.msra.mxu0 0.0
  %2642 = vmatprep.subr.mxu0 0.0
  %2643 = vmatpush1.msra.mxu0 0.0
  %2644 = vmatprep.subr.mxu0 0.0
  %2645 = vmatpush1.msra.mxu0 0.0
  %2646 = vmatprep.subr.mxu0 0.0
  %2647 = vmatpush1.msra.mxu0 0.0
  %2648 = vmatprep.subr.mxu0 0.0
  %2649 = vmatpush1.msra.mxu0 %v1715
  %2650 = vmatprep.subr.mxu0 0.0
  %2651 = vmatpush1.msra.mxu0 %v1710
  %2652 = vmatprep.subr.mxu0 0.0
  %2653 = vmatpush2.msra.mxu0 0.0
  %2654 = vmatprep.subr.mxu0 0.0
  %2655 = vmatpush2.msra.mxu0 0.0
  %2656 = vmatprep.subr.mxu0 0.0
  %2657 = vmatpush2.msra.mxu0 0.0
  %2658 = vmatprep.subr.mxu0 0.0
  %2659 = vmatpush2.msra.mxu0 0.0
  %2660 = vmatprep.subr.mxu0 0.0
  %2661 = vmatpush2.msra.mxu0 0.0
  %2662 = vmatprep.subr.mxu0 0.0
  %2663 = vmatpush2.msra.mxu0 0.0
  %2664 = vmatprep.subr.mxu0 0.0
  %2665 = vmatpush2.msra.mxu0 0.0
  %2666 = vmatprep.subr.mxu0 0.0
  %2667 = vmatpush2.msra.mxu0 0.0
  %2668 = vmatprep.subr.mxu0 0.0
  %2669 = vmatpush2.msra.mxu0 0.0
  %2670 = vmatprep.subr.mxu0 0.0
  %2671 = vmatpush2.msra.mxu0 0.0
  %2672 = vmatprep.subr.mxu0 0.0
  %2673 = vmatpush2.msra.mxu0 0.0
  %2674 = vmatprep.subr.mxu0 0.0
  %2675 = vmatpush2.msra.mxu0 0.0
  %2676 = vmatprep.subr.mxu0 0.0
  %2677 = vmatpush2.msra.mxu0 0.0
  %2678 = vmatprep.subr.mxu0 0.0
  %2679 = vmatpush2.msra.mxu0 0.0
  %2680 = vmatprep.subr.mxu0 0.0
  %2681 = vmatpush2.msra.mxu0 0.0
  %2682 = vmatprep.subr.mxu0 0.0
  %2683 = vmatpush2.msra.mxu0 0.0
  %2684 = vmatprep.mubr.f32.mxu0 0.0
  %2685 = vmatmul.mubr.f32.gmra.mxu0 %v2126
  %v2686 = vpop.f32.mrf.mxu0
  %v2687 = vadd.f32 0.0, %v2686
  %v2688 = vpop.f32.mrf.mxu0
  %2689 = vmatprep.mubr.f32.mxu0 0.0
  %2690 = vmatmul.mubr.f32.gmra.mxu0 %v2129
  %v2691 = vpop.f32.mrf.mxu0
  %v2692 = vadd.f32 0.0, %v2691
  %v2693 = vpop.f32.mrf.mxu0
  %2694 = vdwg.mxu0
  %2695 = vmatprep.subr.mxu0 0.0
  %2696 = vmatpush1.msra.mxu0 0.0
  %2697 = vmatprep.subr.mxu0 0.0
  %2698 = vmatpush1.msra.mxu0 0.0
  %2699 = vmatprep.subr.mxu0 0.0
  %2700 = vmatpush1.msra.mxu0 0.0
  %2701 = vmatprep.subr.mxu0 0.0
  %2702 = vmatpush1.msra.mxu0 0.0
  %2703 = vmatprep.subr.mxu0 0.0
  %2704 = vmatpush1.msra.mxu0 0.0
  %2705 = vmatprep.subr.mxu0 0.0
  %2706 = vmatpush1.msra.mxu0 0.0
  %2707 = vmatprep.subr.mxu0 0.0
  %2708 = vmatpush1.msra.mxu0 0.0
  %2709 = vmatprep.subr.mxu0 0.0
  %2710 = vmatpush1.msra.mxu0 0.0
  %2711 = vmatprep.subr.mxu0 0.0
  %2712 = vmatpush1.msra.mxu0 0.0
  %2713 = vmatprep.subr.mxu0 0.0
  %2714 = vmatpush1.msra.mxu0 0.0
  %2715 = vmatprep.subr.mxu0 0.0
  %2716 = vmatpush1.msra.mxu0 0.0
  %2717 = vmatprep.subr.mxu0 0.0
  %2718 = vmatpush1.msra.mxu0 0.0
  %2719 = vmatprep.subr.mxu0 0.0
  %2720 = vmatpush1.msra.mxu0 0.0
  %2721 = vmatprep.subr.mxu0 0.0
  %2722 = vmatpush1.msra.mxu0 0.0
  %2723 = vmatprep.subr.mxu0 0.0
  %2724 = vmatpush1.msra.mxu0 %v1514
  %2725 = vmatprep.subr.mxu0 0.0
  %2726 = vmatpush1.msra.mxu0 %v1509
  %2727 = vmatprep.subr.mxu0 0.0
  %2728 = vmatpush2.msra.mxu0 0.0
  %2729 = vmatprep.subr.mxu0 0.0
  %2730 = vmatpush2.msra.mxu0 0.0
  %2731 = vmatprep.subr.mxu0 0.0
  %2732 = vmatpush2.msra.mxu0 0.0
  %2733 = vmatprep.subr.mxu0 0.0
  %2734 = vmatpush2.msra.mxu0 0.0
  %2735 = vmatprep.subr.mxu0 0.0
  %2736 = vmatpush2.msra.mxu0 0.0
  %2737 = vmatprep.subr.mxu0 0.0
  %2738 = vmatpush2.msra.mxu0 0.0
  %2739 = vmatprep.subr.mxu0 0.0
  %2740 = vmatpush2.msra.mxu0 0.0
  %2741 = vmatprep.subr.mxu0 0.0
  %2742 = vmatpush2.msra.mxu0 0.0
  %2743 = vmatprep.subr.mxu0 0.0
  %2744 = vmatpush2.msra.mxu0 0.0
  %2745 = vmatprep.subr.mxu0 0.0
  %2746 = vmatpush2.msra.mxu0 0.0
  %2747 = vmatprep.subr.mxu0 0.0
  %2748 = vmatpush2.msra.mxu0 0.0
  %2749 = vmatprep.subr.mxu0 0.0
  %2750 = vmatpush2.msra.mxu0 0.0
  %2751 = vmatprep.subr.mxu0 0.0
  %2752 = vmatpush2.msra.mxu0 0.0
  %2753 = vmatprep.subr.mxu0 0.0
  %2754 = vmatpush2.msra.mxu0 0.0
  %2755 = vmatprep.subr.mxu0 0.0
  %2756 = vmatpush2.msra.mxu0 0.0
  %2757 = vmatprep.subr.mxu0 0.0
  %2758 = vmatpush2.msra.mxu0 0.0
  %2759 = vmatprep.mubr.f32.mxu0 0.0
  %2760 = vmatmul.mubr.f32.gmra.mxu0 %v2207
  %v2761 = vpop.f32.mrf.mxu0
  %v2762 = vadd.f32 %v2687, %v2761
  %v2763 = vpop.f32.mrf.mxu0
  %2764 = vmatprep.mubr.f32.mxu0 0.0
  %2765 = vmatmul.mubr.f32.gmra.mxu0 %v2210
  %v2766 = vpop.f32.mrf.mxu0
  %v2767 = vadd.f32 %v2692, %v2766
  %v2768 = vpop.f32.mrf.mxu0
  %2769 = vdwg.mxu0
  %2770 = vmatprep.subr.mxu0 0.0
  %2771 = vmatpush1.msra.mxu0 0.0
  %2772 = vmatprep.subr.mxu0 0.0
  %2773 = vmatpush1.msra.mxu0 0.0
  %2774 = vmatprep.subr.mxu0 0.0
  %2775 = vmatpush1.msra.mxu0 0.0
  %2776 = vmatprep.subr.mxu0 0.0
  %2777 = vmatpush1.msra.mxu0 0.0
  %2778 = vmatprep.subr.mxu0 0.0
  %2779 = vmatpush1.msra.mxu0 0.0
  %2780 = vmatprep.subr.mxu0 0.0
  %2781 = vmatpush1.msra.mxu0 0.0
  %2782 = vmatprep.subr.mxu0 0.0
  %2783 = vmatpush1.msra.mxu0 0.0
  %2784 = vmatprep.subr.mxu0 0.0
  %2785 = vmatpush1.msra.mxu0 0.0
  %2786 = vmatprep.subr.mxu0 0.0
  %2787 = vmatpush1.msra.mxu0 0.0
  %2788 = vmatprep.subr.mxu0 0.0
  %2789 = vmatpush1.msra.mxu0 0.0
  %2790 = vmatprep.subr.mxu0 0.0
  %2791 = vmatpush1.msra.mxu0 0.0
  %2792 = vmatprep.subr.mxu0 0.0
  %2793 = vmatpush1.msra.mxu0 0.0
  %2794 = vmatprep.subr.mxu0 0.0
  %2795 = vmatpush1.msra.mxu0 0.0
  %2796 = vmatprep.subr.mxu0 0.0
  %2797 = vmatpush1.msra.mxu0 0.0
  %2798 = vmatprep.subr.mxu0 0.0
  %2799 = vmatpush1.msra.mxu0 %v1916
  %2800 = vmatprep.subr.mxu0 0.0
  %2801 = vmatpush1.msra.mxu0 %v1911
  %2802 = vmatprep.subr.mxu0 0.0
  %2803 = vmatpush2.msra.mxu0 0.0
  %2804 = vmatprep.subr.mxu0 0.0
  %2805 = vmatpush2.msra.mxu0 0.0
  %2806 = vmatprep.subr.mxu0 0.0
  %2807 = vmatpush2.msra.mxu0 0.0
  %2808 = vmatprep.subr.mxu0 0.0
  %2809 = vmatpush2.msra.mxu0 0.0
  %2810 = vmatprep.subr.mxu0 0.0
  %2811 = vmatpush2.msra.mxu0 0.0
  %2812 = vmatprep.subr.mxu0 0.0
  %2813 = vmatpush2.msra.mxu0 0.0
  %2814 = vmatprep.subr.mxu0 0.0
  %2815 = vmatpush2.msra.mxu0 0.0
  %2816 = vmatprep.subr.mxu0 0.0
  %2817 = vmatpush2.msra.mxu0 0.0
  %2818 = vmatprep.subr.mxu0 0.0
  %2819 = vmatpush2.msra.mxu0 0.0
  %2820 = vmatprep.subr.mxu0 0.0
  %2821 = vmatpush2.msra.mxu0 0.0
  %2822 = vmatprep.subr.mxu0 0.0
  %2823 = vmatpush2.msra.mxu0 0.0
  %2824 = vmatprep.subr.mxu0 0.0
  %2825 = vmatpush2.msra.mxu0 0.0
  %2826 = vmatprep.subr.mxu0 0.0
  %2827 = vmatpush2.msra.mxu0 0.0
  %2828 = vmatprep.subr.mxu0 0.0
  %2829 = vmatpush2.msra.mxu0 0.0
  %2830 = vmatprep.subr.mxu0 0.0
  %2831 = vmatpush2.msra.mxu0 0.0
  %2832 = vmatprep.subr.mxu0 0.0
  %2833 = vmatpush2.msra.mxu0 0.0
  %2834 = vmatprep.mubr.f32.mxu0 0.0
  %2835 = vmatmul.mubr.f32.gmra.mxu0 %v2291
  %v2836 = vpop.f32.mrf.mxu0
  %v2837 = vadd.f32 0.0, %v2836
  %v2838 = vpop.f32.mrf.mxu0
  %2839 = vmatprep.mubr.f32.mxu0 0.0
  %2840 = vmatmul.mubr.f32.gmra.mxu0 %v2294
  %v2841 = vpop.f32.mrf.mxu0
  %v2842 = vadd.f32 0.0, %v2841
  %v2843 = vpop.f32.mrf.mxu0
  %2844 = vdwg.mxu0
  %v2845 = vadd.f32 %v2762, %v2837
  %v2846 = vadd.f32 %v2767, %v2842
  %v2847 = vadd.f32 %v2845, %v2376
  %v2848 = vadd.f32 %v2846, %v2381
  %v2849 = vmax.f32 %v2847, 0.0
  %v2850 = vmax.f32 %v2848, 0.0
  %v2851 = vmax.f32 %v2618, %v2849
  %v2852 = vmax.f32 %v2619, %v2850
  %2853 = vmatprep.subr.mxu0 0.0
  %2854 = vmatpush1.msra.mxu0 0.0
  %2855 = vmatprep.subr.mxu0 0.0
  %2856 = vmatpush1.msra.mxu0 0.0
  %2857 = vmatprep.subr.mxu0 0.0
  %2858 = vmatpush1.msra.mxu0 0.0
  %2859 = vmatprep.subr.mxu0 0.0
  %2860 = vmatpush1.msra.mxu0 0.0
  %2861 = vmatprep.subr.mxu0 0.0
  %2862 = vmatpush1.msra.mxu0 0.0
  %2863 = vmatprep.subr.mxu0 0.0
  %2864 = vmatpush1.msra.mxu0 0.0
  %2865 = vmatprep.subr.mxu0 0.0
  %2866 = vmatpush1.msra.mxu0 0.0
  %2867 = vmatprep.subr.mxu0 0.0
  %2868 = vmatpush1.msra.mxu0 0.0
  %2869 = vmatprep.subr.mxu0 0.0
  %2870 = vmatpush1.msra.mxu0 0.0
  %2871 = vmatprep.subr.mxu0 0.0
  %2872 = vmatpush1.msra.mxu0 0.0
  %2873 = vmatprep.subr.mxu0 0.0
  %2874 = vmatpush1.msra.mxu0 0.0
  %2875 = vmatprep.subr.mxu0 0.0
  %2876 = vmatpush1.msra.mxu0 0.0
  %2877 = vmatprep.subr.mxu0 0.0
  %2878 = vmatpush1.msra.mxu0 0.0
  %2879 = vmatprep.subr.mxu0 0.0
  %2880 = vmatpush1.msra.mxu0 0.0
  %2881 = vmatprep.subr.mxu0 0.0
  %2882 = vmatpush1.msra.mxu0 %v1916
  %2883 = vmatprep.subr.mxu0 0.0
  %2884 = vmatpush1.msra.mxu0 %v1911
  %2885 = vmatprep.subr.mxu0 0.0
  %2886 = vmatpush2.msra.mxu0 0.0
  %2887 = vmatprep.subr.mxu0 0.0
  %2888 = vmatpush2.msra.mxu0 0.0
  %2889 = vmatprep.subr.mxu0 0.0
  %2890 = vmatpush2.msra.mxu0 0.0
  %2891 = vmatprep.subr.mxu0 0.0
  %2892 = vmatpush2.msra.mxu0 0.0
  %2893 = vmatprep.subr.mxu0 0.0
  %2894 = vmatpush2.msra.mxu0 0.0
  %2895 = vmatprep.subr.mxu0 0.0
  %2896 = vmatpush2.msra.mxu0 0.0
  %2897 = vmatprep.subr.mxu0 0.0
  %2898 = vmatpush2.msra.mxu0 0.0
  %2899 = vmatprep.subr.mxu0 0.0
  %2900 = vmatpush2.msra.mxu0 0.0
  %2901 = vmatprep.subr.mxu0 0.0
  %2902 = vmatpush2.msra.mxu0 0.0
  %2903 = vmatprep.subr.mxu0 0.0
  %2904 = vmatpush2.msra.mxu0 0.0
  %2905 = vmatprep.subr.mxu0 0.0
  %2906 = vmatpush2.msra.mxu0 0.0
  %2907 = vmatprep.subr.mxu0 0.0
  %2908 = vmatpush2.msra.mxu0 0.0
  %2909 = vmatprep.subr.mxu0 0.0
  %2910 = vmatpush2.msra.mxu0 0.0
  %2911 = vmatprep.subr.mxu0 0.0
  %2912 = vmatpush2.msra.mxu0 0.0
  %2913 = vmatprep.subr.mxu0 0.0
  %2914 = vmatpush2.msra.mxu0 0.0
  %2915 = vmatprep.subr.mxu0 0.0
  %2916 = vmatpush2.msra.mxu0 0.0
  %2917 = vmatprep.mubr.f32.mxu0 0.0
  %2918 = vmatmul.mubr.f32.gmra.mxu0 %v2126
  %v2919 = vpop.f32.mrf.mxu0
  %v2920 = vadd.f32 0.0, %v2919
  %v2921 = vpop.f32.mrf.mxu0
  %2922 = vmatprep.mubr.f32.mxu0 0.0
  %2923 = vmatmul.mubr.f32.gmra.mxu0 %v2129
  %v2924 = vpop.f32.mrf.mxu0
  %v2925 = vadd.f32 0.0, %v2924
  %v2926 = vpop.f32.mrf.mxu0
  %2927 = vdwg.mxu0
  %2928 = vmatprep.subr.mxu0 0.0
  %2929 = vmatpush1.msra.mxu0 0.0
  %2930 = vmatprep.subr.mxu0 0.0
  %2931 = vmatpush1.msra.mxu0 0.0
  %2932 = vmatprep.subr.mxu0 0.0
  %2933 = vmatpush1.msra.mxu0 0.0
  %2934 = vmatprep.subr.mxu0 0.0
  %2935 = vmatpush1.msra.mxu0 0.0
  %2936 = vmatprep.subr.mxu0 0.0
  %2937 = vmatpush1.msra.mxu0 0.0
  %2938 = vmatprep.subr.mxu0 0.0
  %2939 = vmatpush1.msra.mxu0 0.0
  %2940 = vmatprep.subr.mxu0 0.0
  %2941 = vmatpush1.msra.mxu0 0.0
  %2942 = vmatprep.subr.mxu0 0.0
  %2943 = vmatpush1.msra.mxu0 0.0
  %2944 = vmatprep.subr.mxu0 0.0
  %2945 = vmatpush1.msra.mxu0 0.0
  %2946 = vmatprep.subr.mxu0 0.0
  %2947 = vmatpush1.msra.mxu0 0.0
  %2948 = vmatprep.subr.mxu0 0.0
  %2949 = vmatpush1.msra.mxu0 0.0
  %2950 = vmatprep.subr.mxu0 0.0
  %2951 = vmatpush1.msra.mxu0 0.0
  %2952 = vmatprep.subr.mxu0 0.0
  %2953 = vmatpush1.msra.mxu0 0.0
  %2954 = vmatprep.subr.mxu0 0.0
  %2955 = vmatpush1.msra.mxu0 0.0
  %2956 = vmatprep.subr.mxu0 0.0
  %2957 = vmatpush1.msra.mxu0 %v1715
  %2958 = vmatprep.subr.mxu0 0.0
  %2959 = vmatpush1.msra.mxu0 %v1710
  %2960 = vmatprep.subr.mxu0 0.0
  %2961 = vmatpush2.msra.mxu0 0.0
  %2962 = vmatprep.subr.mxu0 0.0
  %2963 = vmatpush2.msra.mxu0 0.0
  %2964 = vmatprep.subr.mxu0 0.0
  %2965 = vmatpush2.msra.mxu0 0.0
  %2966 = vmatprep.subr.mxu0 0.0
  %2967 = vmatpush2.msra.mxu0 0.0
  %2968 = vmatprep.subr.mxu0 0.0
  %2969 = vmatpush2.msra.mxu0 0.0
  %2970 = vmatprep.subr.mxu0 0.0
  %2971 = vmatpush2.msra.mxu0 0.0
  %2972 = vmatprep.subr.mxu0 0.0
  %2973 = vmatpush2.msra.mxu0 0.0
  %2974 = vmatprep.subr.mxu0 0.0
  %2975 = vmatpush2.msra.mxu0 0.0
  %2976 = vmatprep.subr.mxu0 0.0
  %2977 = vmatpush2.msra.mxu0 0.0
  %2978 = vmatprep.subr.mxu0 0.0
  %2979 = vmatpush2.msra.mxu0 0.0
  %2980 = vmatprep.subr.mxu0 0.0
  %2981 = vmatpush2.msra.mxu0 0.0
  %2982 = vmatprep.subr.mxu0 0.0
  %2983 = vmatpush2.msra.mxu0 0.0
  %2984 = vmatprep.subr.mxu0 0.0
  %2985 = vmatpush2.msra.mxu0 0.0
  %2986 = vmatprep.subr.mxu0 0.0
  %2987 = vmatpush2.msra.mxu0 0.0
  %2988 = vmatprep.subr.mxu0 0.0
  %2989 = vmatpush2.msra.mxu0 0.0
  %2990 = vmatprep.subr.mxu0 0.0
  %2991 = vmatpush2.msra.mxu0 0.0
  %2992 = vmatprep.mubr.f32.mxu0 0.0
  %2993 = vmatmul.mubr.f32.gmra.mxu0 %v2207
  %v2994 = vpop.f32.mrf.mxu0
  %v2995 = vadd.f32 %v2920, %v2994
  %v2996 = vpop.f32.mrf.mxu0
  %2997 = vmatprep.mubr.f32.mxu0 0.0
  %2998 = vmatmul.mubr.f32.gmra.mxu0 %v2210
  %v2999 = vpop.f32.mrf.mxu0
  %v3000 = vadd.f32 %v2925, %v2999
  %v3001 = vpop.f32.mrf.mxu0
  %3002 = vdwg.mxu0
  %3003 = vmatprep.subr.mxu0 0.0
  %3004 = vmatpush1.msra.mxu0 0.0
  %3005 = vmatprep.subr.mxu0 0.0
  %3006 = vmatpush1.msra.mxu0 0.0
  %3007 = vmatprep.subr.mxu0 0.0
  %3008 = vmatpush1.msra.mxu0 0.0
  %3009 = vmatprep.subr.mxu0 0.0
  %3010 = vmatpush1.msra.mxu0 0.0
  %3011 = vmatprep.subr.mxu0 0.0
  %3012 = vmatpush1.msra.mxu0 0.0
  %3013 = vmatprep.subr.mxu0 0.0
  %3014 = vmatpush1.msra.mxu0 0.0
  %3015 = vmatprep.subr.mxu0 0.0
  %3016 = vmatpush1.msra.mxu0 0.0
  %3017 = vmatprep.subr.mxu0 0.0
  %3018 = vmatpush1.msra.mxu0 0.0
  %3019 = vmatprep.subr.mxu0 0.0
  %3020 = vmatpush1.msra.mxu0 0.0
  %3021 = vmatprep.subr.mxu0 0.0
  %3022 = vmatpush1.msra.mxu0 0.0
  %3023 = vmatprep.subr.mxu0 0.0
  %3024 = vmatpush1.msra.mxu0 0.0
  %3025 = vmatprep.subr.mxu0 0.0
  %3026 = vmatpush1.msra.mxu0 0.0
  %3027 = vmatprep.subr.mxu0 0.0
  %3028 = vmatpush1.msra.mxu0 0.0
  %3029 = vmatprep.subr.mxu0 0.0
  %3030 = vmatpush1.msra.mxu0 0.0
  %3031 = vmatprep.subr.mxu0 0.0
  %3032 = vmatpush1.msra.mxu0 %v2117
  %3033 = vmatprep.subr.mxu0 0.0
  %3034 = vmatpush1.msra.mxu0 %v2112
  %3035 = vmatprep.subr.mxu0 0.0
  %3036 = vmatpush2.msra.mxu0 0.0
  %3037 = vmatprep.subr.mxu0 0.0
  %3038 = vmatpush2.msra.mxu0 0.0
  %3039 = vmatprep.subr.mxu0 0.0
  %3040 = vmatpush2.msra.mxu0 0.0
  %3041 = vmatprep.subr.mxu0 0.0
  %3042 = vmatpush2.msra.mxu0 0.0
  %3043 = vmatprep.subr.mxu0 0.0
  %3044 = vmatpush2.msra.mxu0 0.0
  %3045 = vmatprep.subr.mxu0 0.0
  %3046 = vmatpush2.msra.mxu0 0.0
  %3047 = vmatprep.subr.mxu0 0.0
  %3048 = vmatpush2.msra.mxu0 0.0
  %3049 = vmatprep.subr.mxu0 0.0
  %3050 = vmatpush2.msra.mxu0 0.0
  %3051 = vmatprep.subr.mxu0 0.0
  %3052 = vmatpush2.msra.mxu0 0.0
  %3053 = vmatprep.subr.mxu0 0.0
  %3054 = vmatpush2.msra.mxu0 0.0
  %3055 = vmatprep.subr.mxu0 0.0
  %3056 = vmatpush2.msra.mxu0 0.0
  %3057 = vmatprep.subr.mxu0 0.0
  %3058 = vmatpush2.msra.mxu0 0.0
  %3059 = vmatprep.subr.mxu0 0.0
  %3060 = vmatpush2.msra.mxu0 0.0
  %3061 = vmatprep.subr.mxu0 0.0
  %3062 = vmatpush2.msra.mxu0 0.0
  %3063 = vmatprep.subr.mxu0 0.0
  %3064 = vmatpush2.msra.mxu0 0.0
  %3065 = vmatprep.subr.mxu0 0.0
  %3066 = vmatpush2.msra.mxu0 0.0
  %3067 = vmatprep.mubr.f32.mxu0 0.0
  %3068 = vmatmul.mubr.f32.gmra.mxu0 %v2291
  %v3069 = vpop.f32.mrf.mxu0
  %v3070 = vadd.f32 0.0, %v3069
  %v3071 = vpop.f32.mrf.mxu0
  %3072 = vmatprep.mubr.f32.mxu0 0.0
  %3073 = vmatmul.mubr.f32.gmra.mxu0 %v2294
  %v3074 = vpop.f32.mrf.mxu0
  %v3075 = vadd.f32 0.0, %v3074
  %v3076 = vpop.f32.mrf.mxu0
  %3077 = vdwg.mxu0
  %v3078 = vadd.f32 %v2995, %v3070
  %v3079 = vadd.f32 %v3000, %v3075
  %v3080 = vadd.f32 %v3078, %v2376
  %v3081 = vadd.f32 %v3079, %v2381
  %v3082 = vmax.f32 %v3080, 0.0
  %v3083 = vmax.f32 %v3081, 0.0
  %v3084 = vmax.f32 %v2851, %v3082
  %v3085 = vmax.f32 %v2852, %v3083
  %v3086 = vld [vmem:[%s7] sm:$0xff]
  %v3087 = vld [vmem:[%s7 + $0x8] sm:$0xff]
  %v3088 = vld [vmem:[%s7 + $0x10] sm:$0xff]
  %v3089 = vld [vmem:[%s7 + $0x18] sm:$0xff]
  %v3090 = vld [vmem:[%s8] sm:$0xff]
  %v3091 = vld [vmem:[%s8 + $0x8] sm:$0xff]
  %v3092 = vld [vmem:[%s8 + $0x10] sm:$0xff]
  %v3093 = vld [vmem:[%s8 + $0x18] sm:$0xff]
  %v3094 = vld [vmem:[%s8 + $0x20] sm:$0xff]
  %v3095 = vld [vmem:[%s8 + $0x28] sm:$0xff]
  %v3096 = vld [vmem:[%s8 + $0x30] sm:$0xff]
  %v3097 = vld [vmem:[%s8 + $0x38] sm:$0xff]
  %v3098 = vld [vmem:[%s8 + $0x40] sm:$0xff]
  %v3099 = vld [vmem:[%s8 + $0x48] sm:$0xff]
  %v3100 = vld [vmem:[%s8 + $0x50] sm:$0xff]
  %v3101 = vld [vmem:[%s8 + $0x58] sm:$0xff]
  %v3102 = vld [vmem:[%s8 + $0x60] sm:$0xf]
  %vm3103 = vcmask 818176
  %v3105 = vsel %vm3103, %v3084, 0
  %v3108 = vsel %vm3103, %v3085, 0
  %vm3110 = vcmask 1043456
  %v3112 = vsel %vm3110, %v3102, 0
  %3114 = vmatprep.subr.mxu0 0.0
  %3115 = vmatpush1.msra.mxu0 0.0
  %3116 = vmatprep.subr.mxu0 0.0
  %3117 = vmatpush1.msra.mxu0 0.0
  %3118 = vmatprep.subr.mxu0 0.0
  %3119 = vmatpush1.msra.mxu0 0.0
  %3120 = vmatprep.subr.mxu0 0.0
  %3121 = vmatpush1.msra.mxu0 %v3112
  %3122 = vmatprep.subr.mxu0 0.0
  %3123 = vmatpush1.msra.mxu0 %v3101
  %3124 = vmatprep.subr.mxu0 0.0
  %3125 = vmatpush1.msra.mxu0 %v3100
  %3126 = vmatprep.subr.mxu0 0.0
  %3127 = vmatpush1.msra.mxu0 %v3099
  %3128 = vmatprep.subr.mxu0 0.0
  %3129 = vmatpush1.msra.mxu0 %v3098
  %3130 = vmatprep.subr.mxu0 0.0
  %3131 = vmatpush1.msra.mxu0 %v3097
  %3132 = vmatprep.subr.mxu0 0.0
  %3133 = vmatpush1.msra.mxu0 %v3096
  %3134 = vmatprep.subr.mxu0 0.0
  %3135 = vmatpush1.msra.mxu0 %v3095
  %3136 = vmatprep.subr.mxu0 0.0
  %3137 = vmatpush1.msra.mxu0 %v3094
  %3138 = vmatprep.subr.mxu0 0.0
  %3139 = vmatpush1.msra.mxu0 %v3093
  %3140 = vmatprep.subr.mxu0 0.0
  %3141 = vmatpush1.msra.mxu0 %v3092
  %3142 = vmatprep.subr.mxu0 0.0
  %3143 = vmatpush1.msra.mxu0 %v3091
  %3144 = vmatprep.subr.mxu0 0.0
  %3145 = vmatpush1.msra.mxu0 %v3090
  %3146 = vmatprep.subr.mxu0 0.0
  %3147 = vmatpush2.msra.mxu0 0.0
  %3148 = vmatprep.subr.mxu0 0.0
  %3149 = vmatpush2.msra.mxu0 0.0
  %3150 = vmatprep.subr.mxu0 0.0
  %3151 = vmatpush2.msra.mxu0 0.0
  %3152 = vmatprep.subr.mxu0 0.0
  %3153 = vmatpush2.msra.mxu0 0.0
  %3154 = vmatprep.subr.mxu0 0.0
  %3155 = vmatpush2.msra.mxu0 0.0
  %3156 = vmatprep.subr.mxu0 0.0
  %3157 = vmatpush2.msra.mxu0 0.0
  %3158 = vmatprep.subr.mxu0 0.0
  %3159 = vmatpush2.msra.mxu0 0.0
  %3160 = vmatprep.subr.mxu0 0.0
  %3161 = vmatpush2.msra.mxu0 0.0
  %3162 = vmatprep.subr.mxu0 0.0
  %3163 = vmatpush2.msra.mxu0 0.0
  %3164 = vmatprep.subr.mxu0 0.0
  %3165 = vmatpush2.msra.mxu0 0.0
  %3166 = vmatprep.subr.mxu0 0.0
  %3167 = vmatpush2.msra.mxu0 0.0
  %3168 = vmatprep.subr.mxu0 0.0
  %3169 = vmatpush2.msra.mxu0 0.0
  %3170 = vmatprep.subr.mxu0 0.0
  %3171 = vmatpush2.msra.mxu0 0.0
  %3172 = vmatprep.subr.mxu0 0.0
  %3173 = vmatpush2.msra.mxu0 0.0
  %3174 = vmatprep.subr.mxu0 0.0
  %3175 = vmatpush2.msra.mxu0 0.0
  %3176 = vmatprep.subr.mxu0 0.0
  %3177 = vmatpush2.msra.mxu0 0.0
  %3178 = vmatprep.mubr.f32.mxu0 0.0
  %3179 = vmatmul.mubr.f32.gmra.mxu0 %v3105
  %v3180 = vpop.f32.mrf.mxu0
  %v3181 = vadd.f32 0.0, %v3180
  %v3182 = vpop.f32.mrf.mxu0
  %3183 = vmatprep.mubr.f32.mxu0 0.0
  %3184 = vmatmul.mubr.f32.gmra.mxu0 %v3108
  %v3185 = vpop.f32.mrf.mxu0
  %v3186 = vadd.f32 0.0, %v3185
  %v3187 = vpop.f32.mrf.mxu0
  %3188 = vdwg.mxu0
  %s3189 = scalar_lea.vmem %s8, 104
  %v3190 = vld [vmem:[%s3189] sm:$0xff]
  %v3191 = vld [vmem:[%s3189 + $0x8] sm:$0xff]
  %v3192 = vld [vmem:[%s3189 + $0x10] sm:$0xff]
  %v3193 = vld [vmem:[%s3189 + $0x18] sm:$0xff]
  %v3194 = vld [vmem:[%s3189 + $0x20] sm:$0xff]
  %v3195 = vld [vmem:[%s3189 + $0x28] sm:$0xff]
  %v3196 = vld [vmem:[%s3189 + $0x30] sm:$0xff]
  %v3197 = vld [vmem:[%s3189 + $0x38] sm:$0xff]
  %v3198 = vld [vmem:[%s3189 + $0x40] sm:$0xff]
  %v3199 = vld [vmem:[%s3189 + $0x48] sm:$0xff]
  %v3200 = vld [vmem:[%s3189 + $0x50] sm:$0xff]
  %v3201 = vld [vmem:[%s3189 + $0x58] sm:$0xff]
  %v3202 = vld [vmem:[%s3189 + $0x60] sm:$0xf]
  %v3204 = vsel %vm3110, %v3202, 0
  %3206 = vmatprep.subr.mxu0 0.0
  %3207 = vmatpush1.msra.mxu0 0.0
  %3208 = vmatprep.subr.mxu0 0.0
  %3209 = vmatpush1.msra.mxu0 0.0
  %3210 = vmatprep.subr.mxu0 0.0
  %3211 = vmatpush1.msra.mxu0 0.0
  %3212 = vmatprep.subr.mxu0 0.0
  %3213 = vmatpush1.msra.mxu0 %v3204
  %3214 = vmatprep.subr.mxu0 0.0
  %3215 = vmatpush1.msra.mxu0 %v3201
  %3216 = vmatprep.subr.mxu0 0.0
  %3217 = vmatpush1.msra.mxu0 %v3200
  %3218 = vmatprep.subr.mxu0 0.0
  %3219 = vmatpush1.msra.mxu0 %v3199
  %3220 = vmatprep.subr.mxu0 0.0
  %3221 = vmatpush1.msra.mxu0 %v3198
  %3222 = vmatprep.subr.mxu0 0.0
  %3223 = vmatpush1.msra.mxu0 %v3197
  %3224 = vmatprep.subr.mxu0 0.0
  %3225 = vmatpush1.msra.mxu0 %v3196
  %3226 = vmatprep.subr.mxu0 0.0
  %3227 = vmatpush1.msra.mxu0 %v3195
  %3228 = vmatprep.subr.mxu0 0.0
  %3229 = vmatpush1.msra.mxu0 %v3194
  %3230 = vmatprep.subr.mxu0 0.0
  %3231 = vmatpush1.msra.mxu0 %v3193
  %3232 = vmatprep.subr.mxu0 0.0
  %3233 = vmatpush1.msra.mxu0 %v3192
  %3234 = vmatprep.subr.mxu0 0.0
  %3235 = vmatpush1.msra.mxu0 %v3191
  %3236 = vmatprep.subr.mxu0 0.0
  %3237 = vmatpush1.msra.mxu0 %v3190
  %3238 = vmatprep.subr.mxu0 0.0
  %3239 = vmatpush2.msra.mxu0 0.0
  %3240 = vmatprep.subr.mxu0 0.0
  %3241 = vmatpush2.msra.mxu0 0.0
  %3242 = vmatprep.subr.mxu0 0.0
  %3243 = vmatpush2.msra.mxu0 0.0
  %3244 = vmatprep.subr.mxu0 0.0
  %3245 = vmatpush2.msra.mxu0 0.0
  %3246 = vmatprep.subr.mxu0 0.0
  %3247 = vmatpush2.msra.mxu0 0.0
  %3248 = vmatprep.subr.mxu0 0.0
  %3249 = vmatpush2.msra.mxu0 0.0
  %3250 = vmatprep.subr.mxu0 0.0
  %3251 = vmatpush2.msra.mxu0 0.0
  %3252 = vmatprep.subr.mxu0 0.0
  %3253 = vmatpush2.msra.mxu0 0.0
  %3254 = vmatprep.subr.mxu0 0.0
  %3255 = vmatpush2.msra.mxu0 0.0
  %3256 = vmatprep.subr.mxu0 0.0
  %3257 = vmatpush2.msra.mxu0 0.0
  %3258 = vmatprep.subr.mxu0 0.0
  %3259 = vmatpush2.msra.mxu0 0.0
  %3260 = vmatprep.subr.mxu0 0.0
  %3261 = vmatpush2.msra.mxu0 0.0
  %3262 = vmatprep.subr.mxu0 0.0
  %3263 = vmatpush2.msra.mxu0 0.0
  %3264 = vmatprep.subr.mxu0 0.0
  %3265 = vmatpush2.msra.mxu0 0.0
  %3266 = vmatprep.subr.mxu0 0.0
  %3267 = vmatpush2.msra.mxu0 0.0
  %3268 = vmatprep.subr.mxu0 0.0
  %3269 = vmatpush2.msra.mxu0 0.0
  %3270 = vmatprep.mubr.f32.mxu0 0.0
  %3271 = vmatmul.mubr.f32.gmra.mxu0 %v3105
  %v3272 = vpop.f32.mrf.mxu0
  %v3273 = vadd.f32 0.0, %v3272
  %v3274 = vpop.f32.mrf.mxu0
  %3275 = vmatprep.mubr.f32.mxu0 0.0
  %3276 = vmatmul.mubr.f32.gmra.mxu0 %v3108
  %v3277 = vpop.f32.mrf.mxu0
  %v3278 = vadd.f32 0.0, %v3277
  %v3279 = vpop.f32.mrf.mxu0
  %3280 = vdwg.mxu0
  %s3281 = scalar_lea.vmem %s8, 208
  %v3282 = vld [vmem:[%s3281] sm:$0xff]
  %v3283 = vld [vmem:[%s3281 + $0x8] sm:$0xff]
  %v3284 = vld [vmem:[%s3281 + $0x10] sm:$0xff]
  %v3285 = vld [vmem:[%s3281 + $0x18] sm:$0xff]
  %v3286 = vld [vmem:[%s3281 + $0x20] sm:$0xff]
  %v3287 = vld [vmem:[%s3281 + $0x28] sm:$0xff]
  %v3288 = vld [vmem:[%s3281 + $0x30] sm:$0xff]
  %v3289 = vld [vmem:[%s3281 + $0x38] sm:$0xff]
  %v3290 = vld [vmem:[%s3281 + $0x40] sm:$0xff]
  %v3291 = vld [vmem:[%s3281 + $0x48] sm:$0xff]
  %v3292 = vld [vmem:[%s3281 + $0x50] sm:$0xff]
  %v3293 = vld [vmem:[%s3281 + $0x58] sm:$0xff]
  %v3294 = vld [vmem:[%s3281 + $0x60] sm:$0xf]
  %v3296 = vsel %vm3110, %v3294, 0
  %3298 = vmatprep.subr.mxu0 0.0
  %3299 = vmatpush1.msra.mxu0 0.0
  %3300 = vmatprep.subr.mxu0 0.0
  %3301 = vmatpush1.msra.mxu0 0.0
  %3302 = vmatprep.subr.mxu0 0.0
  %3303 = vmatpush1.msra.mxu0 0.0
  %3304 = vmatprep.subr.mxu0 0.0
  %3305 = vmatpush1.msra.mxu0 %v3296
  %3306 = vmatprep.subr.mxu0 0.0
  %3307 = vmatpush1.msra.mxu0 %v3293
  %3308 = vmatprep.subr.mxu0 0.0
  %3309 = vmatpush1.msra.mxu0 %v3292
  %3310 = vmatprep.subr.mxu0 0.0
  %3311 = vmatpush1.msra.mxu0 %v3291
  %3312 = vmatprep.subr.mxu0 0.0
  %3313 = vmatpush1.msra.mxu0 %v3290
  %3314 = vmatprep.subr.mxu0 0.0
  %3315 = vmatpush1.msra.mxu0 %v3289
  %3316 = vmatprep.subr.mxu0 0.0
  %3317 = vmatpush1.msra.mxu0 %v3288
  %3318 = vmatprep.subr.mxu0 0.0
  %3319 = vmatpush1.msra.mxu0 %v3287
  %3320 = vmatprep.subr.mxu0 0.0
  %3321 = vmatpush1.msra.mxu0 %v3286
  %3322 = vmatprep.subr.mxu0 0.0
  %3323 = vmatpush1.msra.mxu0 %v3285
  %3324 = vmatprep.subr.mxu0 0.0
  %3325 = vmatpush1.msra.mxu0 %v3284
  %3326 = vmatprep.subr.mxu0 0.0
  %3327 = vmatpush1.msra.mxu0 %v3283
  %3328 = vmatprep.subr.mxu0 0.0
  %3329 = vmatpush1.msra.mxu0 %v3282
  %3330 = vmatprep.subr.mxu0 0.0
  %3331 = vmatpush2.msra.mxu0 0.0
  %3332 = vmatprep.subr.mxu0 0.0
  %3333 = vmatpush2.msra.mxu0 0.0
  %3334 = vmatprep.subr.mxu0 0.0
  %3335 = vmatpush2.msra.mxu0 0.0
  %3336 = vmatprep.subr.mxu0 0.0
  %3337 = vmatpush2.msra.mxu0 0.0
  %3338 = vmatprep.subr.mxu0 0.0
  %3339 = vmatpush2.msra.mxu0 0.0
  %3340 = vmatprep.subr.mxu0 0.0
  %3341 = vmatpush2.msra.mxu0 0.0
  %3342 = vmatprep.subr.mxu0 0.0
  %3343 = vmatpush2.msra.mxu0 0.0
  %3344 = vmatprep.subr.mxu0 0.0
  %3345 = vmatpush2.msra.mxu0 0.0
  %3346 = vmatprep.subr.mxu0 0.0
  %3347 = vmatpush2.msra.mxu0 0.0
  %3348 = vmatprep.subr.mxu0 0.0
  %3349 = vmatpush2.msra.mxu0 0.0
  %3350 = vmatprep.subr.mxu0 0.0
  %3351 = vmatpush2.msra.mxu0 0.0
  %3352 = vmatprep.subr.mxu0 0.0
  %3353 = vmatpush2.msra.mxu0 0.0
  %3354 = vmatprep.subr.mxu0 0.0
  %3355 = vmatpush2.msra.mxu0 0.0
  %3356 = vmatprep.subr.mxu0 0.0
  %3357 = vmatpush2.msra.mxu0 0.0
  %3358 = vmatprep.subr.mxu0 0.0
  %3359 = vmatpush2.msra.mxu0 0.0
  %3360 = vmatprep.subr.mxu0 0.0
  %3361 = vmatpush2.msra.mxu0 0.0
  %3362 = vmatprep.mubr.f32.mxu0 0.0
  %3363 = vmatmul.mubr.f32.gmra.mxu0 %v3105
  %v3364 = vpop.f32.mrf.mxu0
  %v3365 = vadd.f32 0.0, %v3364
  %v3366 = vpop.f32.mrf.mxu0
  %3367 = vmatprep.mubr.f32.mxu0 0.0
  %3368 = vmatmul.mubr.f32.gmra.mxu0 %v3108
  %v3369 = vpop.f32.mrf.mxu0
  %v3370 = vadd.f32 0.0, %v3369
  %v3371 = vpop.f32.mrf.mxu0
  %3372 = vdwg.mxu0
  %s3373 = scalar_lea.vmem %s8, 312
  %v3374 = vld [vmem:[%s3373] sm:$0xff]
  %v3375 = vld [vmem:[%s3373 + $0x8] sm:$0xff]
  %v3376 = vld [vmem:[%s3373 + $0x10] sm:$0xff]
  %v3377 = vld [vmem:[%s3373 + $0x18] sm:$0xff]
  %v3378 = vld [vmem:[%s3373 + $0x20] sm:$0xff]
  %v3379 = vld [vmem:[%s3373 + $0x28] sm:$0xff]
  %v3380 = vld [vmem:[%s3373 + $0x30] sm:$0xff]
  %v3381 = vld [vmem:[%s3373 + $0x38] sm:$0xff]
  %v3382 = vld [vmem:[%s3373 + $0x40] sm:$0xff]
  %v3383 = vld [vmem:[%s3373 + $0x48] sm:$0xff]
  %v3384 = vld [vmem:[%s3373 + $0x50] sm:$0xff]
  %v3385 = vld [vmem:[%s3373 + $0x58] sm:$0xff]
  %v3386 = vld [vmem:[%s3373 + $0x60] sm:$0xf]
  %v3388 = vsel %vm3110, %v3386, 0
  %3390 = vmatprep.subr.mxu0 0.0
  %3391 = vmatpush1.msra.mxu0 0.0
  %3392 = vmatprep.subr.mxu0 0.0
  %3393 = vmatpush1.msra.mxu0 0.0
  %3394 = vmatprep.subr.mxu0 0.0
  %3395 = vmatpush1.msra.mxu0 0.0
  %3396 = vmatprep.subr.mxu0 0.0
  %3397 = vmatpush1.msra.mxu0 %v3388
  %3398 = vmatprep.subr.mxu0 0.0
  %3399 = vmatpush1.msra.mxu0 %v3385
  %3400 = vmatprep.subr.mxu0 0.0
  %3401 = vmatpush1.msra.mxu0 %v3384
  %3402 = vmatprep.subr.mxu0 0.0
  %3403 = vmatpush1.msra.mxu0 %v3383
  %3404 = vmatprep.subr.mxu0 0.0
  %3405 = vmatpush1.msra.mxu0 %v3382
  %3406 = vmatprep.subr.mxu0 0.0
  %3407 = vmatpush1.msra.mxu0 %v3381
  %3408 = vmatprep.subr.mxu0 0.0
  %3409 = vmatpush1.msra.mxu0 %v3380
  %3410 = vmatprep.subr.mxu0 0.0
  %3411 = vmatpush1.msra.mxu0 %v3379
  %3412 = vmatprep.subr.mxu0 0.0
  %3413 = vmatpush1.msra.mxu0 %v3378
  %3414 = vmatprep.subr.mxu0 0.0
  %3415 = vmatpush1.msra.mxu0 %v3377
  %3416 = vmatprep.subr.mxu0 0.0
  %3417 = vmatpush1.msra.mxu0 %v3376
  %3418 = vmatprep.subr.mxu0 0.0
  %3419 = vmatpush1.msra.mxu0 %v3375
  %3420 = vmatprep.subr.mxu0 0.0
  %3421 = vmatpush1.msra.mxu0 %v3374
  %3422 = vmatprep.subr.mxu0 0.0
  %3423 = vmatpush2.msra.mxu0 0.0
  %3424 = vmatprep.subr.mxu0 0.0
  %3425 = vmatpush2.msra.mxu0 0.0
  %3426 = vmatprep.subr.mxu0 0.0
  %3427 = vmatpush2.msra.mxu0 0.0
  %3428 = vmatprep.subr.mxu0 0.0
  %3429 = vmatpush2.msra.mxu0 0.0
  %3430 = vmatprep.subr.mxu0 0.0
  %3431 = vmatpush2.msra.mxu0 0.0
  %3432 = vmatprep.subr.mxu0 0.0
  %3433 = vmatpush2.msra.mxu0 0.0
  %3434 = vmatprep.subr.mxu0 0.0
  %3435 = vmatpush2.msra.mxu0 0.0
  %3436 = vmatprep.subr.mxu0 0.0
  %3437 = vmatpush2.msra.mxu0 0.0
  %3438 = vmatprep.subr.mxu0 0.0
  %3439 = vmatpush2.msra.mxu0 0.0
  %3440 = vmatprep.subr.mxu0 0.0
  %3441 = vmatpush2.msra.mxu0 0.0
  %3442 = vmatprep.subr.mxu0 0.0
  %3443 = vmatpush2.msra.mxu0 0.0
  %3444 = vmatprep.subr.mxu0 0.0
  %3445 = vmatpush2.msra.mxu0 0.0
  %3446 = vmatprep.subr.mxu0 0.0
  %3447 = vmatpush2.msra.mxu0 0.0
  %3448 = vmatprep.subr.mxu0 0.0
  %3449 = vmatpush2.msra.mxu0 0.0
  %3450 = vmatprep.subr.mxu0 0.0
  %3451 = vmatpush2.msra.mxu0 0.0
  %3452 = vmatprep.subr.mxu0 0.0
  %3453 = vmatpush2.msra.mxu0 0.0
  %3454 = vmatprep.mubr.f32.mxu0 0.0
  %3455 = vmatmul.mubr.f32.gmra.mxu0 %v3105
  %v3456 = vpop.f32.mrf.mxu0
  %v3457 = vadd.f32 0.0, %v3456
  %v3458 = vpop.f32.mrf.mxu0
  %3459 = vmatprep.mubr.f32.mxu0 0.0
  %3460 = vmatmul.mubr.f32.gmra.mxu0 %v3108
  %v3461 = vpop.f32.mrf.mxu0
  %v3462 = vadd.f32 0.0, %v3461
  %v3463 = vpop.f32.mrf.mxu0
  %3464 = vdwg.mxu0
  %s3465 = scalar_lea.vmem %s8, 416
  %v3466 = vld [vmem:[%s3465] sm:$0xff]
  %v3467 = vld [vmem:[%s3465 + $0x8] sm:$0xff]
  %v3468 = vld [vmem:[%s3465 + $0x10] sm:$0xff]
  %v3469 = vld [vmem:[%s3465 + $0x18] sm:$0xff]
  %v3470 = vld [vmem:[%s3465 + $0x20] sm:$0xff]
  %v3471 = vld [vmem:[%s3465 + $0x28] sm:$0xff]
  %v3472 = vld [vmem:[%s3465 + $0x30] sm:$0xff]
  %v3473 = vld [vmem:[%s3465 + $0x38] sm:$0xff]
  %v3474 = vld [vmem:[%s3465 + $0x40] sm:$0xff]
  %v3475 = vld [vmem:[%s3465 + $0x48] sm:$0xff]
  %v3476 = vld [vmem:[%s3465 + $0x50] sm:$0xff]
  %v3477 = vld [vmem:[%s3465 + $0x58] sm:$0xff]
  %v3478 = vld [vmem:[%s3465 + $0x60] sm:$0xf]
  %v3480 = vsel %vm3110, %v3478, 0
  %3482 = vmatprep.subr.mxu0 0.0
  %3483 = vmatpush1.msra.mxu0 0.0
  %3484 = vmatprep.subr.mxu0 0.0
  %3485 = vmatpush1.msra.mxu0 0.0
  %3486 = vmatprep.subr.mxu0 0.0
  %3487 = vmatpush1.msra.mxu0 0.0
  %3488 = vmatprep.subr.mxu0 0.0
  %3489 = vmatpush1.msra.mxu0 %v3480
  %3490 = vmatprep.subr.mxu0 0.0
  %3491 = vmatpush1.msra.mxu0 %v3477
  %3492 = vmatprep.subr.mxu0 0.0
  %3493 = vmatpush1.msra.mxu0 %v3476
  %3494 = vmatprep.subr.mxu0 0.0
  %3495 = vmatpush1.msra.mxu0 %v3475
  %3496 = vmatprep.subr.mxu0 0.0
  %3497 = vmatpush1.msra.mxu0 %v3474
  %3498 = vmatprep.subr.mxu0 0.0
  %3499 = vmatpush1.msra.mxu0 %v3473
  %3500 = vmatprep.subr.mxu0 0.0
  %3501 = vmatpush1.msra.mxu0 %v3472
  %3502 = vmatprep.subr.mxu0 0.0
  %3503 = vmatpush1.msra.mxu0 %v3471
  %3504 = vmatprep.subr.mxu0 0.0
  %3505 = vmatpush1.msra.mxu0 %v3470
  %3506 = vmatprep.subr.mxu0 0.0
  %3507 = vmatpush1.msra.mxu0 %v3469
  %3508 = vmatprep.subr.mxu0 0.0
  %3509 = vmatpush1.msra.mxu0 %v3468
  %3510 = vmatprep.subr.mxu0 0.0
  %3511 = vmatpush1.msra.mxu0 %v3467
  %3512 = vmatprep.subr.mxu0 0.0
  %3513 = vmatpush1.msra.mxu0 %v3466
  %3514 = vmatprep.subr.mxu0 0.0
  %3515 = vmatpush2.msra.mxu0 0.0
  %3516 = vmatprep.subr.mxu0 0.0
  %3517 = vmatpush2.msra.mxu0 0.0
  %3518 = vmatprep.subr.mxu0 0.0
  %3519 = vmatpush2.msra.mxu0 0.0
  %3520 = vmatprep.subr.mxu0 0.0
  %3521 = vmatpush2.msra.mxu0 0.0
  %3522 = vmatprep.subr.mxu0 0.0
  %3523 = vmatpush2.msra.mxu0 0.0
  %3524 = vmatprep.subr.mxu0 0.0
  %3525 = vmatpush2.msra.mxu0 0.0
  %3526 = vmatprep.subr.mxu0 0.0
  %3527 = vmatpush2.msra.mxu0 0.0
  %3528 = vmatprep.subr.mxu0 0.0
  %3529 = vmatpush2.msra.mxu0 0.0
  %3530 = vmatprep.subr.mxu0 0.0
  %3531 = vmatpush2.msra.mxu0 0.0
  %3532 = vmatprep.subr.mxu0 0.0
  %3533 = vmatpush2.msra.mxu0 0.0
  %3534 = vmatprep.subr.mxu0 0.0
  %3535 = vmatpush2.msra.mxu0 0.0
  %3536 = vmatprep.subr.mxu0 0.0
  %3537 = vmatpush2.msra.mxu0 0.0
  %3538 = vmatprep.subr.mxu0 0.0
  %3539 = vmatpush2.msra.mxu0 0.0
  %3540 = vmatprep.subr.mxu0 0.0
  %3541 = vmatpush2.msra.mxu0 0.0
  %3542 = vmatprep.subr.mxu0 0.0
  %3543 = vmatpush2.msra.mxu0 0.0
  %3544 = vmatprep.subr.mxu0 0.0
  %3545 = vmatpush2.msra.mxu0 0.0
  %3546 = vmatprep.mubr.f32.mxu0 0.0
  %3547 = vmatmul.mubr.f32.gmra.mxu0 %v3105
  %v3548 = vpop.f32.mrf.mxu0
  %v3549 = vadd.f32 0.0, %v3548
  %v3550 = vpop.f32.mrf.mxu0
  %3551 = vmatprep.mubr.f32.mxu0 0.0
  %3552 = vmatmul.mubr.f32.gmra.mxu0 %v3108
  %v3553 = vpop.f32.mrf.mxu0
  %v3554 = vadd.f32 0.0, %v3553
  %v3555 = vpop.f32.mrf.mxu0
  %3556 = vdwg.mxu0
  %s3557 = scalar_lea.vmem %s8, 520
  %v3558 = vld [vmem:[%s3557] sm:$0xff]
  %v3559 = vld [vmem:[%s3557 + $0x8] sm:$0xff]
  %v3560 = vld [vmem:[%s3557 + $0x10] sm:$0xff]
  %v3561 = vld [vmem:[%s3557 + $0x18] sm:$0xff]
  %v3562 = vld [vmem:[%s3557 + $0x20] sm:$0xff]
  %v3563 = vld [vmem:[%s3557 + $0x28] sm:$0xff]
  %v3564 = vld [vmem:[%s3557 + $0x30] sm:$0xff]
  %v3565 = vld [vmem:[%s3557 + $0x38] sm:$0xff]
  %v3566 = vld [vmem:[%s3557 + $0x40] sm:$0xff]
  %v3567 = vld [vmem:[%s3557 + $0x48] sm:$0xff]
  %v3568 = vld [vmem:[%s3557 + $0x50] sm:$0xff]
  %v3569 = vld [vmem:[%s3557 + $0x58] sm:$0xff]
  %v3570 = vld [vmem:[%s3557 + $0x60] sm:$0xf]
  %v3572 = vsel %vm3110, %v3570, 0
  %3574 = vmatprep.subr.mxu0 0.0
  %3575 = vmatpush1.msra.mxu0 0.0
  %3576 = vmatprep.subr.mxu0 0.0
  %3577 = vmatpush1.msra.mxu0 0.0
  %3578 = vmatprep.subr.mxu0 0.0
  %3579 = vmatpush1.msra.mxu0 0.0
  %3580 = vmatprep.subr.mxu0 0.0
  %3581 = vmatpush1.msra.mxu0 %v3572
  %3582 = vmatprep.subr.mxu0 0.0
  %3583 = vmatpush1.msra.mxu0 %v3569
  %3584 = vmatprep.subr.mxu0 0.0
  %3585 = vmatpush1.msra.mxu0 %v3568
  %3586 = vmatprep.subr.mxu0 0.0
  %3587 = vmatpush1.msra.mxu0 %v3567
  %3588 = vmatprep.subr.mxu0 0.0
  %3589 = vmatpush1.msra.mxu0 %v3566
  %3590 = vmatprep.subr.mxu0 0.0
  %3591 = vmatpush1.msra.mxu0 %v3565
  %3592 = vmatprep.subr.mxu0 0.0
  %3593 = vmatpush1.msra.mxu0 %v3564
  %3594 = vmatprep.subr.mxu0 0.0
  %3595 = vmatpush1.msra.mxu0 %v3563
  %3596 = vmatprep.subr.mxu0 0.0
  %3597 = vmatpush1.msra.mxu0 %v3562
  %3598 = vmatprep.subr.mxu0 0.0
  %3599 = vmatpush1.msra.mxu0 %v3561
  %3600 = vmatprep.subr.mxu0 0.0
  %3601 = vmatpush1.msra.mxu0 %v3560
  %3602 = vmatprep.subr.mxu0 0.0
  %3603 = vmatpush1.msra.mxu0 %v3559
  %3604 = vmatprep.subr.mxu0 0.0
  %3605 = vmatpush1.msra.mxu0 %v3558
  %3606 = vmatprep.subr.mxu0 0.0
  %3607 = vmatpush2.msra.mxu0 0.0
  %3608 = vmatprep.subr.mxu0 0.0
  %3609 = vmatpush2.msra.mxu0 0.0
  %3610 = vmatprep.subr.mxu0 0.0
  %3611 = vmatpush2.msra.mxu0 0.0
  %3612 = vmatprep.subr.mxu0 0.0
  %3613 = vmatpush2.msra.mxu0 0.0
  %3614 = vmatprep.subr.mxu0 0.0
  %3615 = vmatpush2.msra.mxu0 0.0
  %3616 = vmatprep.subr.mxu0 0.0
  %3617 = vmatpush2.msra.mxu0 0.0
  %3618 = vmatprep.subr.mxu0 0.0
  %3619 = vmatpush2.msra.mxu0 0.0
  %3620 = vmatprep.subr.mxu0 0.0
  %3621 = vmatpush2.msra.mxu0 0.0
  %3622 = vmatprep.subr.mxu0 0.0
  %3623 = vmatpush2.msra.mxu0 0.0
  %3624 = vmatprep.subr.mxu0 0.0
  %3625 = vmatpush2.msra.mxu0 0.0
  %3626 = vmatprep.subr.mxu0 0.0
  %3627 = vmatpush2.msra.mxu0 0.0
  %3628 = vmatprep.subr.mxu0 0.0
  %3629 = vmatpush2.msra.mxu0 0.0
  %3630 = vmatprep.subr.mxu0 0.0
  %3631 = vmatpush2.msra.mxu0 0.0
  %3632 = vmatprep.subr.mxu0 0.0
  %3633 = vmatpush2.msra.mxu0 0.0
  %3634 = vmatprep.subr.mxu0 0.0
  %3635 = vmatpush2.msra.mxu0 0.0
  %3636 = vmatprep.subr.mxu0 0.0
  %3637 = vmatpush2.msra.mxu0 0.0
  %3638 = vmatprep.mubr.f32.mxu0 0.0
  %3639 = vmatmul.mubr.f32.gmra.mxu0 %v3105
  %v3640 = vpop.f32.mrf.mxu0
  %v3641 = vadd.f32 0.0, %v3640
  %v3642 = vpop.f32.mrf.mxu0
  %3643 = vmatprep.mubr.f32.mxu0 0.0
  %3644 = vmatmul.mubr.f32.gmra.mxu0 %v3108
  %v3645 = vpop.f32.mrf.mxu0
  %v3646 = vadd.f32 0.0, %v3645
  %v3647 = vpop.f32.mrf.mxu0
  %3648 = vdwg.mxu0
  %v3649 = vld [vmem:[%s6] sm:$0xff]
  %v3650 = vld [vmem:[%s6 + $0x8] sm:$0xff]
  %v3651 = vld [vmem:[%s6 + $0x10] sm:$0xff]
  %v3652 = vld [vmem:[%s6 + $0x18] sm:$0xff]
  %s3653 = scalar_lea.vmem %s6, 32
  %v3654 = vld [vmem:[%s3653] sm:$0xff]
  %v3655 = vld [vmem:[%s3653 + $0x8] sm:$0xff]
  %v3656 = vld [vmem:[%s3653 + $0x10] sm:$0xff]
  %v3657 = vld [vmem:[%s3653 + $0x18] sm:$0xff]
  %v3659 = vsel %vm958, %v3654, 0
  %v3662 = vsel %vm958, %v3655, 0
  %v3665 = vsel %vm958, %v3656, 0
  %v3668 = vsel %vm958, %v3657, 0
  %3670 = vmatprep.subr.mxu0 0.0
  %3671 = vmatpush1.msra.mxu0 0.0
  %3672 = vmatprep.subr.mxu0 0.0
  %3673 = vmatpush1.msra.mxu0 0.0
  %3674 = vmatprep.subr.mxu0 0.0
  %3675 = vmatpush1.msra.mxu0 0.0
  %3676 = vmatprep.subr.mxu0 0.0
  %3677 = vmatpush1.msra.mxu0 0.0
  %3678 = vmatprep.subr.mxu0 0.0
  %3679 = vmatpush1.msra.mxu0 0.0
  %3680 = vmatprep.subr.mxu0 0.0
  %3681 = vmatpush1.msra.mxu0 0.0
  %3682 = vmatprep.subr.mxu0 0.0
  %3683 = vmatpush1.msra.mxu0 0.0
  %3684 = vmatprep.subr.mxu0 0.0
  %3685 = vmatpush1.msra.mxu0 0.0
  %3686 = vmatprep.subr.mxu0 0.0
  %3687 = vmatpush1.msra.mxu0 0.0
  %3688 = vmatprep.subr.mxu0 0.0
  %3689 = vmatpush1.msra.mxu0 0.0
  %3690 = vmatprep.subr.mxu0 0.0
  %3691 = vmatpush1.msra.mxu0 0.0
  %3692 = vmatprep.subr.mxu0 0.0
  %3693 = vmatpush1.msra.mxu0 0.0
  %3694 = vmatprep.subr.mxu0 0.0
  %3695 = vmatpush1.msra.mxu0 0.0
  %3696 = vmatprep.subr.mxu0 0.0
  %3697 = vmatpush1.msra.mxu0 0.0
  %3698 = vmatprep.subr.mxu0 0.0
  %3699 = vmatpush1.msra.mxu0 %v3278
  %3700 = vmatprep.subr.mxu0 0.0
  %3701 = vmatpush1.msra.mxu0 %v3273
  %3702 = vmatprep.subr.mxu0 0.0
  %3703 = vmatpush2.msra.mxu0 0.0
  %3704 = vmatprep.subr.mxu0 0.0
  %3705 = vmatpush2.msra.mxu0 0.0
  %3706 = vmatprep.subr.mxu0 0.0
  %3707 = vmatpush2.msra.mxu0 0.0
  %3708 = vmatprep.subr.mxu0 0.0
  %3709 = vmatpush2.msra.mxu0 0.0
  %3710 = vmatprep.subr.mxu0 0.0
  %3711 = vmatpush2.msra.mxu0 0.0
  %3712 = vmatprep.subr.mxu0 0.0
  %3713 = vmatpush2.msra.mxu0 0.0
  %3714 = vmatprep.subr.mxu0 0.0
  %3715 = vmatpush2.msra.mxu0 0.0
  %3716 = vmatprep.subr.mxu0 0.0
  %3717 = vmatpush2.msra.mxu0 0.0
  %3718 = vmatprep.subr.mxu0 0.0
  %3719 = vmatpush2.msra.mxu0 0.0
  %3720 = vmatprep.subr.mxu0 0.0
  %3721 = vmatpush2.msra.mxu0 0.0
  %3722 = vmatprep.subr.mxu0 0.0
  %3723 = vmatpush2.msra.mxu0 0.0
  %3724 = vmatprep.subr.mxu0 0.0
  %3725 = vmatpush2.msra.mxu0 0.0
  %3726 = vmatprep.subr.mxu0 0.0
  %3727 = vmatpush2.msra.mxu0 0.0
  %3728 = vmatprep.subr.mxu0 0.0
  %3729 = vmatpush2.msra.mxu0 0.0
  %3730 = vmatprep.subr.mxu0 0.0
  %3731 = vmatpush2.msra.mxu0 0.0
  %3732 = vmatprep.subr.mxu0 0.0
  %3733 = vmatpush2.msra.mxu0 0.0
  %3734 = vmatprep.mubr.f32.mxu0 0.0
  %3735 = vmatmul.mubr.f32.gmra.mxu0 %v3659
  %v3736 = vpop.f32.mrf.mxu0
  %v3737 = vadd.f32 0.0, %v3736
  %v3738 = vpop.f32.mrf.mxu0
  %3739 = vmatprep.mubr.f32.mxu0 0.0
  %3740 = vmatmul.mubr.f32.gmra.mxu0 %v3662
  %v3741 = vpop.f32.mrf.mxu0
  %v3742 = vadd.f32 0.0, %v3741
  %v3743 = vpop.f32.mrf.mxu0
  %3744 = vmatprep.mubr.f32.mxu0 0.0
  %3745 = vmatmul.mubr.f32.gmra.mxu0 %v3665
  %v3746 = vpop.f32.mrf.mxu0
  %v3747 = vadd.f32 0.0, %v3746
  %v3748 = vpop.f32.mrf.mxu0
  %3749 = vmatprep.mubr.f32.mxu0 0.0
  %3750 = vmatmul.mubr.f32.gmra.mxu0 %v3668
  %v3751 = vpop.f32.mrf.mxu0
  %v3752 = vadd.f32 0.0, %v3751
  %v3753 = vpop.f32.mrf.mxu0
  %3754 = vdwg.mxu0
  %v3756 = vsel %vm958, %v3649, 0
  %v3759 = vsel %vm958, %v3650, 0
  %v3762 = vsel %vm958, %v3651, 0
  %v3765 = vsel %vm958, %v3652, 0
  %3767 = vmatprep.subr.mxu0 0.0
  %3768 = vmatpush1.msra.mxu0 0.0
  %3769 = vmatprep.subr.mxu0 0.0
  %3770 = vmatpush1.msra.mxu0 0.0
  %3771 = vmatprep.subr.mxu0 0.0
  %3772 = vmatpush1.msra.mxu0 0.0
  %3773 = vmatprep.subr.mxu0 0.0
  %3774 = vmatpush1.msra.mxu0 0.0
  %3775 = vmatprep.subr.mxu0 0.0
  %3776 = vmatpush1.msra.mxu0 0.0
  %3777 = vmatprep.subr.mxu0 0.0
  %3778 = vmatpush1.msra.mxu0 0.0
  %3779 = vmatprep.subr.mxu0 0.0
  %3780 = vmatpush1.msra.mxu0 0.0
  %3781 = vmatprep.subr.mxu0 0.0
  %3782 = vmatpush1.msra.mxu0 0.0
  %3783 = vmatprep.subr.mxu0 0.0
  %3784 = vmatpush1.msra.mxu0 0.0
  %3785 = vmatprep.subr.mxu0 0.0
  %3786 = vmatpush1.msra.mxu0 0.0
  %3787 = vmatprep.subr.mxu0 0.0
  %3788 = vmatpush1.msra.mxu0 0.0
  %3789 = vmatprep.subr.mxu0 0.0
  %3790 = vmatpush1.msra.mxu0 0.0
  %3791 = vmatprep.subr.mxu0 0.0
  %3792 = vmatpush1.msra.mxu0 0.0
  %3793 = vmatprep.subr.mxu0 0.0
  %3794 = vmatpush1.msra.mxu0 0.0
  %3795 = vmatprep.subr.mxu0 0.0
  %3796 = vmatpush1.msra.mxu0 %v3186
  %3797 = vmatprep.subr.mxu0 0.0
  %3798 = vmatpush1.msra.mxu0 %v3181
  %3799 = vmatprep.subr.mxu0 0.0
  %3800 = vmatpush2.msra.mxu0 0.0
  %3801 = vmatprep.subr.mxu0 0.0
  %3802 = vmatpush2.msra.mxu0 0.0
  %3803 = vmatprep.subr.mxu0 0.0
  %3804 = vmatpush2.msra.mxu0 0.0
  %3805 = vmatprep.subr.mxu0 0.0
  %3806 = vmatpush2.msra.mxu0 0.0
  %3807 = vmatprep.subr.mxu0 0.0
  %3808 = vmatpush2.msra.mxu0 0.0
  %3809 = vmatprep.subr.mxu0 0.0
  %3810 = vmatpush2.msra.mxu0 0.0
  %3811 = vmatprep.subr.mxu0 0.0
  %3812 = vmatpush2.msra.mxu0 0.0
  %3813 = vmatprep.subr.mxu0 0.0
  %3814 = vmatpush2.msra.mxu0 0.0
  %3815 = vmatprep.subr.mxu0 0.0
  %3816 = vmatpush2.msra.mxu0 0.0
  %3817 = vmatprep.subr.mxu0 0.0
  %3818 = vmatpush2.msra.mxu0 0.0
  %3819 = vmatprep.subr.mxu0 0.0
  %3820 = vmatpush2.msra.mxu0 0.0
  %3821 = vmatprep.subr.mxu0 0.0
  %3822 = vmatpush2.msra.mxu0 0.0
  %3823 = vmatprep.subr.mxu0 0.0
  %3824 = vmatpush2.msra.mxu0 0.0
  %3825 = vmatprep.subr.mxu0 0.0
  %3826 = vmatpush2.msra.mxu0 0.0
  %3827 = vmatprep.subr.mxu0 0.0
  %3828 = vmatpush2.msra.mxu0 0.0
  %3829 = vmatprep.subr.mxu0 0.0
  %3830 = vmatpush2.msra.mxu0 0.0
  %3831 = vmatprep.mubr.f32.mxu0 0.0
  %3832 = vmatmul.mubr.f32.gmra.mxu0 %v3756
  %v3833 = vpop.f32.mrf.mxu0
  %v3834 = vadd.f32 %v3737, %v3833
  %v3835 = vpop.f32.mrf.mxu0
  %3836 = vmatprep.mubr.f32.mxu0 0.0
  %3837 = vmatmul.mubr.f32.gmra.mxu0 %v3759
  %v3838 = vpop.f32.mrf.mxu0
  %v3839 = vadd.f32 %v3742, %v3838
  %v3840 = vpop.f32.mrf.mxu0
  %3841 = vmatprep.mubr.f32.mxu0 0.0
  %3842 = vmatmul.mubr.f32.gmra.mxu0 %v3762
  %v3843 = vpop.f32.mrf.mxu0
  %v3844 = vadd.f32 %v3747, %v3843
  %v3845 = vpop.f32.mrf.mxu0
  %3846 = vmatprep.mubr.f32.mxu0 0.0
  %3847 = vmatmul.mubr.f32.gmra.mxu0 %v3765
  %v3848 = vpop.f32.mrf.mxu0
  %v3849 = vadd.f32 %v3752, %v3848
  %v3850 = vpop.f32.mrf.mxu0
  %3851 = vdwg.mxu0
  %s3852 = scalar_lea.vmem %s6, 64
  %v3853 = vld [vmem:[%s3852] sm:$0xff]
  %v3854 = vld [vmem:[%s3852 + $0x8] sm:$0xff]
  %v3855 = vld [vmem:[%s3852 + $0x10] sm:$0xff]
  %v3856 = vld [vmem:[%s3852 + $0x18] sm:$0xff]
  %v3858 = vsel %vm958, %v3853, 0
  %v3861 = vsel %vm958, %v3854, 0
  %v3864 = vsel %vm958, %v3855, 0
  %v3867 = vsel %vm958, %v3856, 0
  %3869 = vmatprep.subr.mxu0 0.0
  %3870 = vmatpush1.msra.mxu0 0.0
  %3871 = vmatprep.subr.mxu0 0.0
  %3872 = vmatpush1.msra.mxu0 0.0
  %3873 = vmatprep.subr.mxu0 0.0
  %3874 = vmatpush1.msra.mxu0 0.0
  %3875 = vmatprep.subr.mxu0 0.0
  %3876 = vmatpush1.msra.mxu0 0.0
  %3877 = vmatprep.subr.mxu0 0.0
  %3878 = vmatpush1.msra.mxu0 0.0
  %3879 = vmatprep.subr.mxu0 0.0
  %3880 = vmatpush1.msra.mxu0 0.0
  %3881 = vmatprep.subr.mxu0 0.0
  %3882 = vmatpush1.msra.mxu0 0.0
  %3883 = vmatprep.subr.mxu0 0.0
  %3884 = vmatpush1.msra.mxu0 0.0
  %3885 = vmatprep.subr.mxu0 0.0
  %3886 = vmatpush1.msra.mxu0 0.0
  %3887 = vmatprep.subr.mxu0 0.0
  %3888 = vmatpush1.msra.mxu0 0.0
  %3889 = vmatprep.subr.mxu0 0.0
  %3890 = vmatpush1.msra.mxu0 0.0
  %3891 = vmatprep.subr.mxu0 0.0
  %3892 = vmatpush1.msra.mxu0 0.0
  %3893 = vmatprep.subr.mxu0 0.0
  %3894 = vmatpush1.msra.mxu0 0.0
  %3895 = vmatprep.subr.mxu0 0.0
  %3896 = vmatpush1.msra.mxu0 0.0
  %3897 = vmatprep.subr.mxu0 0.0
  %3898 = vmatpush1.msra.mxu0 %v3370
  %3899 = vmatprep.subr.mxu0 0.0
  %3900 = vmatpush1.msra.mxu0 %v3365
  %3901 = vmatprep.subr.mxu0 0.0
  %3902 = vmatpush2.msra.mxu0 0.0
  %3903 = vmatprep.subr.mxu0 0.0
  %3904 = vmatpush2.msra.mxu0 0.0
  %3905 = vmatprep.subr.mxu0 0.0
  %3906 = vmatpush2.msra.mxu0 0.0
  %3907 = vmatprep.subr.mxu0 0.0
  %3908 = vmatpush2.msra.mxu0 0.0
  %3909 = vmatprep.subr.mxu0 0.0
  %3910 = vmatpush2.msra.mxu0 0.0
  %3911 = vmatprep.subr.mxu0 0.0
  %3912 = vmatpush2.msra.mxu0 0.0
  %3913 = vmatprep.subr.mxu0 0.0
  %3914 = vmatpush2.msra.mxu0 0.0
  %3915 = vmatprep.subr.mxu0 0.0
  %3916 = vmatpush2.msra.mxu0 0.0
  %3917 = vmatprep.subr.mxu0 0.0
  %3918 = vmatpush2.msra.mxu0 0.0
  %3919 = vmatprep.subr.mxu0 0.0
  %3920 = vmatpush2.msra.mxu0 0.0
  %3921 = vmatprep.subr.mxu0 0.0
  %3922 = vmatpush2.msra.mxu0 0.0
  %3923 = vmatprep.subr.mxu0 0.0
  %3924 = vmatpush2.msra.mxu0 0.0
  %3925 = vmatprep.subr.mxu0 0.0
  %3926 = vmatpush2.msra.mxu0 0.0
  %3927 = vmatprep.subr.mxu0 0.0
  %3928 = vmatpush2.msra.mxu0 0.0
  %3929 = vmatprep.subr.mxu0 0.0
  %3930 = vmatpush2.msra.mxu0 0.0
  %3931 = vmatprep.subr.mxu0 0.0
  %3932 = vmatpush2.msra.mxu0 0.0
  %3933 = vmatprep.mubr.f32.mxu0 0.0
  %3934 = vmatmul.mubr.f32.gmra.mxu0 %v3858
  %v3935 = vpop.f32.mrf.mxu0
  %v3936 = vadd.f32 0.0, %v3935
  %v3937 = vpop.f32.mrf.mxu0
  %3938 = vmatprep.mubr.f32.mxu0 0.0
  %3939 = vmatmul.mubr.f32.gmra.mxu0 %v3861
  %v3940 = vpop.f32.mrf.mxu0
  %v3941 = vadd.f32 0.0, %v3940
  %v3942 = vpop.f32.mrf.mxu0
  %3943 = vmatprep.mubr.f32.mxu0 0.0
  %3944 = vmatmul.mubr.f32.gmra.mxu0 %v3864
  %v3945 = vpop.f32.mrf.mxu0
  %v3946 = vadd.f32 0.0, %v3945
  %v3947 = vpop.f32.mrf.mxu0
  %3948 = vmatprep.mubr.f32.mxu0 0.0
  %3949 = vmatmul.mubr.f32.gmra.mxu0 %v3867
  %v3950 = vpop.f32.mrf.mxu0
  %v3951 = vadd.f32 0.0, %v3950
  %v3952 = vpop.f32.mrf.mxu0
  %3953 = vdwg.mxu0
  %v3954 = vadd.f32 %v3834, %v3936
  %v3955 = vadd.f32 %v3839, %v3941
  %v3956 = vadd.f32 %v3844, %v3946
  %v3957 = vadd.f32 %v3849, %v3951
  %3959 = vset.pattern.permute.xlu0 0
  %3960 = vperm.xlu0 %3959, %v3086
  %v3961 = vpop.permute.xlu0 %3960
  %3964 = vset.pattern.permute.xlu0 0
  %3965 = vperm.xlu0 %3964, %v3087
  %v3966 = vpop.permute.xlu0 %3965
  %3969 = vset.pattern.permute.xlu0 0
  %3970 = vperm.xlu0 %3969, %v3088
  %v3971 = vpop.permute.xlu0 %3970
  %3974 = vset.pattern.permute.xlu0 0
  %3975 = vperm.xlu0 %3974, %v3089
  %v3976 = vpop.permute.xlu0 %3975
  %v3978 = vadd.f32 %v3954, %v3961
  %v3979 = vadd.f32 %v3955, %v3966
  %v3980 = vadd.f32 %v3956, %v3971
  %v3981 = vadd.f32 %v3957, %v3976
  %v3982 = vmax.f32 %v3978, 0.0
  %v3983 = vmax.f32 %v3979, 0.0
  %v3984 = vmax.f32 %v3980, 0.0
  %v3985 = vmax.f32 %v3981, 0.0
  %3986 = vmatprep.subr.mxu0 0.0
  %3987 = vmatpush1.msra.mxu0 0.0
  %3988 = vmatprep.subr.mxu0 0.0
  %3989 = vmatpush1.msra.mxu0 0.0
  %3990 = vmatprep.subr.mxu0 0.0
  %3991 = vmatpush1.msra.mxu0 0.0
  %3992 = vmatprep.subr.mxu0 0.0
  %3993 = vmatpush1.msra.mxu0 0.0
  %3994 = vmatprep.subr.mxu0 0.0
  %3995 = vmatpush1.msra.mxu0 0.0
  %3996 = vmatprep.subr.mxu0 0.0
  %3997 = vmatpush1.msra.mxu0 0.0
  %3998 = vmatprep.subr.mxu0 0.0
  %3999 = vmatpush1.msra.mxu0 0.0
  %4000 = vmatprep.subr.mxu0 0.0
  %4001 = vmatpush1.msra.mxu0 0.0
  %4002 = vmatprep.subr.mxu0 0.0
  %4003 = vmatpush1.msra.mxu0 0.0
  %4004 = vmatprep.subr.mxu0 0.0
  %4005 = vmatpush1.msra.mxu0 0.0
  %4006 = vmatprep.subr.mxu0 0.0
  %4007 = vmatpush1.msra.mxu0 0.0
  %4008 = vmatprep.subr.mxu0 0.0
  %4009 = vmatpush1.msra.mxu0 0.0
  %4010 = vmatprep.subr.mxu0 0.0
  %4011 = vmatpush1.msra.mxu0 0.0
  %4012 = vmatprep.subr.mxu0 0.0
  %4013 = vmatpush1.msra.mxu0 0.0
  %4014 = vmatprep.subr.mxu0 0.0
  %4015 = vmatpush1.msra.mxu0 %v3370
  %4016 = vmatprep.subr.mxu0 0.0
  %4017 = vmatpush1.msra.mxu0 %v3365
  %4018 = vmatprep.subr.mxu0 0.0
  %4019 = vmatpush2.msra.mxu0 0.0
  %4020 = vmatprep.subr.mxu0 0.0
  %4021 = vmatpush2.msra.mxu0 0.0
  %4022 = vmatprep.subr.mxu0 0.0
  %4023 = vmatpush2.msra.mxu0 0.0
  %4024 = vmatprep.subr.mxu0 0.0
  %4025 = vmatpush2.msra.mxu0 0.0
  %4026 = vmatprep.subr.mxu0 0.0
  %4027 = vmatpush2.msra.mxu0 0.0
  %4028 = vmatprep.subr.mxu0 0.0
  %4029 = vmatpush2.msra.mxu0 0.0
  %4030 = vmatprep.subr.mxu0 0.0
  %4031 = vmatpush2.msra.mxu0 0.0
  %4032 = vmatprep.subr.mxu0 0.0
  %4033 = vmatpush2.msra.mxu0 0.0
  %4034 = vmatprep.subr.mxu0 0.0
  %4035 = vmatpush2.msra.mxu0 0.0
  %4036 = vmatprep.subr.mxu0 0.0
  %4037 = vmatpush2.msra.mxu0 0.0
  %4038 = vmatprep.subr.mxu0 0.0
  %4039 = vmatpush2.msra.mxu0 0.0
  %4040 = vmatprep.subr.mxu0 0.0
  %4041 = vmatpush2.msra.mxu0 0.0
  %4042 = vmatprep.subr.mxu0 0.0
  %4043 = vmatpush2.msra.mxu0 0.0
  %4044 = vmatprep.subr.mxu0 0.0
  %4045 = vmatpush2.msra.mxu0 0.0
  %4046 = vmatprep.subr.mxu0 0.0
  %4047 = vmatpush2.msra.mxu0 0.0
  %4048 = vmatprep.subr.mxu0 0.0
  %4049 = vmatpush2.msra.mxu0 0.0
  %4050 = vmatprep.mubr.f32.mxu0 0.0
  %4051 = vmatmul.mubr.f32.gmra.mxu0 %v3659
  %v4052 = vpop.f32.mrf.mxu0
  %v4053 = vadd.f32 0.0, %v4052
  %v4054 = vpop.f32.mrf.mxu0
  %4055 = vmatprep.mubr.f32.mxu0 0.0
  %4056 = vmatmul.mubr.f32.gmra.mxu0 %v3662
  %v4057 = vpop.f32.mrf.mxu0
  %v4058 = vadd.f32 0.0, %v4057
  %v4059 = vpop.f32.mrf.mxu0
  %4060 = vmatprep.mubr.f32.mxu0 0.0
  %4061 = vmatmul.mubr.f32.gmra.mxu0 %v3665
  %v4062 = vpop.f32.mrf.mxu0
  %v4063 = vadd.f32 0.0, %v4062
  %v4064 = vpop.f32.mrf.mxu0
  %4065 = vmatprep.mubr.f32.mxu0 0.0
  %4066 = vmatmul.mubr.f32.gmra.mxu0 %v3668
  %v4067 = vpop.f32.mrf.mxu0
  %v4068 = vadd.f32 0.0, %v4067
  %v4069 = vpop.f32.mrf.mxu0
  %4070 = vdwg.mxu0
  %4071 = vmatprep.subr.mxu0 0.0
  %4072 = vmatpush1.msra.mxu0 0.0
  %4073 = vmatprep.subr.mxu0 0.0
  %4074 = vmatpush1.msra.mxu0 0.0
  %4075 = vmatprep.subr.mxu0 0.0
  %4076 = vmatpush1.msra.mxu0 0.0
  %4077 = vmatprep.subr.mxu0 0.0
  %4078 = vmatpush1.msra.mxu0 0.0
  %4079 = vmatprep.subr.mxu0 0.0
  %4080 = vmatpush1.msra.mxu0 0.0
  %4081 = vmatprep.subr.mxu0 0.0
  %4082 = vmatpush1.msra.mxu0 0.0
  %4083 = vmatprep.subr.mxu0 0.0
  %4084 = vmatpush1.msra.mxu0 0.0
  %4085 = vmatprep.subr.mxu0 0.0
  %4086 = vmatpush1.msra.mxu0 0.0
  %4087 = vmatprep.subr.mxu0 0.0
  %4088 = vmatpush1.msra.mxu0 0.0
  %4089 = vmatprep.subr.mxu0 0.0
  %4090 = vmatpush1.msra.mxu0 0.0
  %4091 = vmatprep.subr.mxu0 0.0
  %4092 = vmatpush1.msra.mxu0 0.0
  %4093 = vmatprep.subr.mxu0 0.0
  %4094 = vmatpush1.msra.mxu0 0.0
  %4095 = vmatprep.subr.mxu0 0.0
  %4096 = vmatpush1.msra.mxu0 0.0
  %4097 = vmatprep.subr.mxu0 0.0
  %4098 = vmatpush1.msra.mxu0 0.0
  %4099 = vmatprep.subr.mxu0 0.0
  %4100 = vmatpush1.msra.mxu0 %v3278
  %4101 = vmatprep.subr.mxu0 0.0
  %4102 = vmatpush1.msra.mxu0 %v3273
  %4103 = vmatprep.subr.mxu0 0.0
  %4104 = vmatpush2.msra.mxu0 0.0
  %4105 = vmatprep.subr.mxu0 0.0
  %4106 = vmatpush2.msra.mxu0 0.0
  %4107 = vmatprep.subr.mxu0 0.0
  %4108 = vmatpush2.msra.mxu0 0.0
  %4109 = vmatprep.subr.mxu0 0.0
  %4110 = vmatpush2.msra.mxu0 0.0
  %4111 = vmatprep.subr.mxu0 0.0
  %4112 = vmatpush2.msra.mxu0 0.0
  %4113 = vmatprep.subr.mxu0 0.0
  %4114 = vmatpush2.msra.mxu0 0.0
  %4115 = vmatprep.subr.mxu0 0.0
  %4116 = vmatpush2.msra.mxu0 0.0
  %4117 = vmatprep.subr.mxu0 0.0
  %4118 = vmatpush2.msra.mxu0 0.0
  %4119 = vmatprep.subr.mxu0 0.0
  %4120 = vmatpush2.msra.mxu0 0.0
  %4121 = vmatprep.subr.mxu0 0.0
  %4122 = vmatpush2.msra.mxu0 0.0
  %4123 = vmatprep.subr.mxu0 0.0
  %4124 = vmatpush2.msra.mxu0 0.0
  %4125 = vmatprep.subr.mxu0 0.0
  %4126 = vmatpush2.msra.mxu0 0.0
  %4127 = vmatprep.subr.mxu0 0.0
  %4128 = vmatpush2.msra.mxu0 0.0
  %4129 = vmatprep.subr.mxu0 0.0
  %4130 = vmatpush2.msra.mxu0 0.0
  %4131 = vmatprep.subr.mxu0 0.0
  %4132 = vmatpush2.msra.mxu0 0.0
  %4133 = vmatprep.subr.mxu0 0.0
  %4134 = vmatpush2.msra.mxu0 0.0
  %4135 = vmatprep.mubr.f32.mxu0 0.0
  %4136 = vmatmul.mubr.f32.gmra.mxu0 %v3756
  %v4137 = vpop.f32.mrf.mxu0
  %v4138 = vadd.f32 %v4053, %v4137
  %v4139 = vpop.f32.mrf.mxu0
  %4140 = vmatprep.mubr.f32.mxu0 0.0
  %4141 = vmatmul.mubr.f32.gmra.mxu0 %v3759
  %v4142 = vpop.f32.mrf.mxu0
  %v4143 = vadd.f32 %v4058, %v4142
  %v4144 = vpop.f32.mrf.mxu0
  %4145 = vmatprep.mubr.f32.mxu0 0.0
  %4146 = vmatmul.mubr.f32.gmra.mxu0 %v3762
  %v4147 = vpop.f32.mrf.mxu0
  %v4148 = vadd.f32 %v4063, %v4147
  %v4149 = vpop.f32.mrf.mxu0
  %4150 = vmatprep.mubr.f32.mxu0 0.0
  %4151 = vmatmul.mubr.f32.gmra.mxu0 %v3765
  %v4152 = vpop.f32.mrf.mxu0
  %v4153 = vadd.f32 %v4068, %v4152
  %v4154 = vpop.f32.mrf.mxu0
  %4155 = vdwg.mxu0
  %4156 = vmatprep.subr.mxu0 0.0
  %4157 = vmatpush1.msra.mxu0 0.0
  %4158 = vmatprep.subr.mxu0 0.0
  %4159 = vmatpush1.msra.mxu0 0.0
  %4160 = vmatprep.subr.mxu0 0.0
  %4161 = vmatpush1.msra.mxu0 0.0
  %4162 = vmatprep.subr.mxu0 0.0
  %4163 = vmatpush1.msra.mxu0 0.0
  %4164 = vmatprep.subr.mxu0 0.0
  %4165 = vmatpush1.msra.mxu0 0.0
  %4166 = vmatprep.subr.mxu0 0.0
  %4167 = vmatpush1.msra.mxu0 0.0
  %4168 = vmatprep.subr.mxu0 0.0
  %4169 = vmatpush1.msra.mxu0 0.0
  %4170 = vmatprep.subr.mxu0 0.0
  %4171 = vmatpush1.msra.mxu0 0.0
  %4172 = vmatprep.subr.mxu0 0.0
  %4173 = vmatpush1.msra.mxu0 0.0
  %4174 = vmatprep.subr.mxu0 0.0
  %4175 = vmatpush1.msra.mxu0 0.0
  %4176 = vmatprep.subr.mxu0 0.0
  %4177 = vmatpush1.msra.mxu0 0.0
  %4178 = vmatprep.subr.mxu0 0.0
  %4179 = vmatpush1.msra.mxu0 0.0
  %4180 = vmatprep.subr.mxu0 0.0
  %4181 = vmatpush1.msra.mxu0 0.0
  %4182 = vmatprep.subr.mxu0 0.0
  %4183 = vmatpush1.msra.mxu0 0.0
  %4184 = vmatprep.subr.mxu0 0.0
  %4185 = vmatpush1.msra.mxu0 %v3462
  %4186 = vmatprep.subr.mxu0 0.0
  %4187 = vmatpush1.msra.mxu0 %v3457
  %4188 = vmatprep.subr.mxu0 0.0
  %4189 = vmatpush2.msra.mxu0 0.0
  %4190 = vmatprep.subr.mxu0 0.0
  %4191 = vmatpush2.msra.mxu0 0.0
  %4192 = vmatprep.subr.mxu0 0.0
  %4193 = vmatpush2.msra.mxu0 0.0
  %4194 = vmatprep.subr.mxu0 0.0
  %4195 = vmatpush2.msra.mxu0 0.0
  %4196 = vmatprep.subr.mxu0 0.0
  %4197 = vmatpush2.msra.mxu0 0.0
  %4198 = vmatprep.subr.mxu0 0.0
  %4199 = vmatpush2.msra.mxu0 0.0
  %4200 = vmatprep.subr.mxu0 0.0
  %4201 = vmatpush2.msra.mxu0 0.0
  %4202 = vmatprep.subr.mxu0 0.0
  %4203 = vmatpush2.msra.mxu0 0.0
  %4204 = vmatprep.subr.mxu0 0.0
  %4205 = vmatpush2.msra.mxu0 0.0
  %4206 = vmatprep.subr.mxu0 0.0
  %4207 = vmatpush2.msra.mxu0 0.0
  %4208 = vmatprep.subr.mxu0 0.0
  %4209 = vmatpush2.msra.mxu0 0.0
  %4210 = vmatprep.subr.mxu0 0.0
  %4211 = vmatpush2.msra.mxu0 0.0
  %4212 = vmatprep.subr.mxu0 0.0
  %4213 = vmatpush2.msra.mxu0 0.0
  %4214 = vmatprep.subr.mxu0 0.0
  %4215 = vmatpush2.msra.mxu0 0.0
  %4216 = vmatprep.subr.mxu0 0.0
  %4217 = vmatpush2.msra.mxu0 0.0
  %4218 = vmatprep.subr.mxu0 0.0
  %4219 = vmatpush2.msra.mxu0 0.0
  %4220 = vmatprep.mubr.f32.mxu0 0.0
  %4221 = vmatmul.mubr.f32.gmra.mxu0 %v3858
  %v4222 = vpop.f32.mrf.mxu0
  %v4223 = vadd.f32 0.0, %v4222
  %v4224 = vpop.f32.mrf.mxu0
  %4225 = vmatprep.mubr.f32.mxu0 0.0
  %4226 = vmatmul.mubr.f32.gmra.mxu0 %v3861
  %v4227 = vpop.f32.mrf.mxu0
  %v4228 = vadd.f32 0.0, %v4227
  %v4229 = vpop.f32.mrf.mxu0
  %4230 = vmatprep.mubr.f32.mxu0 0.0
  %4231 = vmatmul.mubr.f32.gmra.mxu0 %v3864
  %v4232 = vpop.f32.mrf.mxu0
  %v4233 = vadd.f32 0.0, %v4232
  %v4234 = vpop.f32.mrf.mxu0
  %4235 = vmatprep.mubr.f32.mxu0 0.0
  %4236 = vmatmul.mubr.f32.gmra.mxu0 %v3867
  %v4237 = vpop.f32.mrf.mxu0
  %v4238 = vadd.f32 0.0, %v4237
  %v4239 = vpop.f32.mrf.mxu0
  %4240 = vdwg.mxu0
  %v4241 = vadd.f32 %v4138, %v4223
  %v4242 = vadd.f32 %v4143, %v4228
  %v4243 = vadd.f32 %v4148, %v4233
  %v4244 = vadd.f32 %v4153, %v4238
  %v4245 = vadd.f32 %v4241, %v3961
  %v4246 = vadd.f32 %v4242, %v3966
  %v4247 = vadd.f32 %v4243, %v3971
  %v4248 = vadd.f32 %v4244, %v3976
  %v4249 = vmax.f32 %v4245, 0.0
  %v4250 = vmax.f32 %v4246, 0.0
  %v4251 = vmax.f32 %v4247, 0.0
  %v4252 = vmax.f32 %v4248, 0.0
  %v4253 = vmax.f32 %v3982, %v4249
  %v4254 = vmax.f32 %v3983, %v4250
  %v4255 = vmax.f32 %v3984, %v4251
  %v4256 = vmax.f32 %v3985, %v4252
  %4257 = vmatprep.subr.mxu0 0.0
  %4258 = vmatpush1.msra.mxu0 0.0
  %4259 = vmatprep.subr.mxu0 0.0
  %4260 = vmatpush1.msra.mxu0 0.0
  %4261 = vmatprep.subr.mxu0 0.0
  %4262 = vmatpush1.msra.mxu0 0.0
  %4263 = vmatprep.subr.mxu0 0.0
  %4264 = vmatpush1.msra.mxu0 0.0
  %4265 = vmatprep.subr.mxu0 0.0
  %4266 = vmatpush1.msra.mxu0 0.0
  %4267 = vmatprep.subr.mxu0 0.0
  %4268 = vmatpush1.msra.mxu0 0.0
  %4269 = vmatprep.subr.mxu0 0.0
  %4270 = vmatpush1.msra.mxu0 0.0
  %4271 = vmatprep.subr.mxu0 0.0
  %4272 = vmatpush1.msra.mxu0 0.0
  %4273 = vmatprep.subr.mxu0 0.0
  %4274 = vmatpush1.msra.mxu0 0.0
  %4275 = vmatprep.subr.mxu0 0.0
  %4276 = vmatpush1.msra.mxu0 0.0
  %4277 = vmatprep.subr.mxu0 0.0
  %4278 = vmatpush1.msra.mxu0 0.0
  %4279 = vmatprep.subr.mxu0 0.0
  %4280 = vmatpush1.msra.mxu0 0.0
  %4281 = vmatprep.subr.mxu0 0.0
  %4282 = vmatpush1.msra.mxu0 0.0
  %4283 = vmatprep.subr.mxu0 0.0
  %4284 = vmatpush1.msra.mxu0 0.0
  %4285 = vmatprep.subr.mxu0 0.0
  %4286 = vmatpush1.msra.mxu0 %v3462
  %4287 = vmatprep.subr.mxu0 0.0
  %4288 = vmatpush1.msra.mxu0 %v3457
  %4289 = vmatprep.subr.mxu0 0.0
  %4290 = vmatpush2.msra.mxu0 0.0
  %4291 = vmatprep.subr.mxu0 0.0
  %4292 = vmatpush2.msra.mxu0 0.0
  %4293 = vmatprep.subr.mxu0 0.0
  %4294 = vmatpush2.msra.mxu0 0.0
  %4295 = vmatprep.subr.mxu0 0.0
  %4296 = vmatpush2.msra.mxu0 0.0
  %4297 = vmatprep.subr.mxu0 0.0
  %4298 = vmatpush2.msra.mxu0 0.0
  %4299 = vmatprep.subr.mxu0 0.0
  %4300 = vmatpush2.msra.mxu0 0.0
  %4301 = vmatprep.subr.mxu0 0.0
  %4302 = vmatpush2.msra.mxu0 0.0
  %4303 = vmatprep.subr.mxu0 0.0
  %4304 = vmatpush2.msra.mxu0 0.0
  %4305 = vmatprep.subr.mxu0 0.0
  %4306 = vmatpush2.msra.mxu0 0.0
  %4307 = vmatprep.subr.mxu0 0.0
  %4308 = vmatpush2.msra.mxu0 0.0
  %4309 = vmatprep.subr.mxu0 0.0
  %4310 = vmatpush2.msra.mxu0 0.0
  %4311 = vmatprep.subr.mxu0 0.0
  %4312 = vmatpush2.msra.mxu0 0.0
  %4313 = vmatprep.subr.mxu0 0.0
  %4314 = vmatpush2.msra.mxu0 0.0
  %4315 = vmatprep.subr.mxu0 0.0
  %4316 = vmatpush2.msra.mxu0 0.0
  %4317 = vmatprep.subr.mxu0 0.0
  %4318 = vmatpush2.msra.mxu0 0.0
  %4319 = vmatprep.subr.mxu0 0.0
  %4320 = vmatpush2.msra.mxu0 0.0
  %4321 = vmatprep.mubr.f32.mxu0 0.0
  %4322 = vmatmul.mubr.f32.gmra.mxu0 %v3659
  %v4323 = vpop.f32.mrf.mxu0
  %v4324 = vadd.f32 0.0, %v4323
  %v4325 = vpop.f32.mrf.mxu0
  %4326 = vmatprep.mubr.f32.mxu0 0.0
  %4327 = vmatmul.mubr.f32.gmra.mxu0 %v3662
  %v4328 = vpop.f32.mrf.mxu0
  %v4329 = vadd.f32 0.0, %v4328
  %v4330 = vpop.f32.mrf.mxu0
  %4331 = vmatprep.mubr.f32.mxu0 0.0
  %4332 = vmatmul.mubr.f32.gmra.mxu0 %v3665
  %v4333 = vpop.f32.mrf.mxu0
  %v4334 = vadd.f32 0.0, %v4333
  %v4335 = vpop.f32.mrf.mxu0
  %4336 = vmatprep.mubr.f32.mxu0 0.0
  %4337 = vmatmul.mubr.f32.gmra.mxu0 %v3668
  %v4338 = vpop.f32.mrf.mxu0
  %v4339 = vadd.f32 0.0, %v4338
  %v4340 = vpop.f32.mrf.mxu0
  %4341 = vdwg.mxu0
  %4342 = vmatprep.subr.mxu0 0.0
  %4343 = vmatpush1.msra.mxu0 0.0
  %4344 = vmatprep.subr.mxu0 0.0
  %4345 = vmatpush1.msra.mxu0 0.0
  %4346 = vmatprep.subr.mxu0 0.0
  %4347 = vmatpush1.msra.mxu0 0.0
  %4348 = vmatprep.subr.mxu0 0.0
  %4349 = vmatpush1.msra.mxu0 0.0
  %4350 = vmatprep.subr.mxu0 0.0
  %4351 = vmatpush1.msra.mxu0 0.0
  %4352 = vmatprep.subr.mxu0 0.0
  %4353 = vmatpush1.msra.mxu0 0.0
  %4354 = vmatprep.subr.mxu0 0.0
  %4355 = vmatpush1.msra.mxu0 0.0
  %4356 = vmatprep.subr.mxu0 0.0
  %4357 = vmatpush1.msra.mxu0 0.0
  %4358 = vmatprep.subr.mxu0 0.0
  %4359 = vmatpush1.msra.mxu0 0.0
  %4360 = vmatprep.subr.mxu0 0.0
  %4361 = vmatpush1.msra.mxu0 0.0
  %4362 = vmatprep.subr.mxu0 0.0
  %4363 = vmatpush1.msra.mxu0 0.0
  %4364 = vmatprep.subr.mxu0 0.0
  %4365 = vmatpush1.msra.mxu0 0.0
  %4366 = vmatprep.subr.mxu0 0.0
  %4367 = vmatpush1.msra.mxu0 0.0
  %4368 = vmatprep.subr.mxu0 0.0
  %4369 = vmatpush1.msra.mxu0 0.0
  %4370 = vmatprep.subr.mxu0 0.0
  %4371 = vmatpush1.msra.mxu0 %v3370
  %4372 = vmatprep.subr.mxu0 0.0
  %4373 = vmatpush1.msra.mxu0 %v3365
  %4374 = vmatprep.subr.mxu0 0.0
  %4375 = vmatpush2.msra.mxu0 0.0
  %4376 = vmatprep.subr.mxu0 0.0
  %4377 = vmatpush2.msra.mxu0 0.0
  %4378 = vmatprep.subr.mxu0 0.0
  %4379 = vmatpush2.msra.mxu0 0.0
  %4380 = vmatprep.subr.mxu0 0.0
  %4381 = vmatpush2.msra.mxu0 0.0
  %4382 = vmatprep.subr.mxu0 0.0
  %4383 = vmatpush2.msra.mxu0 0.0
  %4384 = vmatprep.subr.mxu0 0.0
  %4385 = vmatpush2.msra.mxu0 0.0
  %4386 = vmatprep.subr.mxu0 0.0
  %4387 = vmatpush2.msra.mxu0 0.0
  %4388 = vmatprep.subr.mxu0 0.0
  %4389 = vmatpush2.msra.mxu0 0.0
  %4390 = vmatprep.subr.mxu0 0.0
  %4391 = vmatpush2.msra.mxu0 0.0
  %4392 = vmatprep.subr.mxu0 0.0
  %4393 = vmatpush2.msra.mxu0 0.0
  %4394 = vmatprep.subr.mxu0 0.0
  %4395 = vmatpush2.msra.mxu0 0.0
  %4396 = vmatprep.subr.mxu0 0.0
  %4397 = vmatpush2.msra.mxu0 0.0
  %4398 = vmatprep.subr.mxu0 0.0
  %4399 = vmatpush2.msra.mxu0 0.0
  %4400 = vmatprep.subr.mxu0 0.0
  %4401 = vmatpush2.msra.mxu0 0.0
  %4402 = vmatprep.subr.mxu0 0.0
  %4403 = vmatpush2.msra.mxu0 0.0
  %4404 = vmatprep.subr.mxu0 0.0
  %4405 = vmatpush2.msra.mxu0 0.0
  %4406 = vmatprep.mubr.f32.mxu0 0.0
  %4407 = vmatmul.mubr.f32.gmra.mxu0 %v3756
  %v4408 = vpop.f32.mrf.mxu0
  %v4409 = vadd.f32 %v4324, %v4408
  %v4410 = vpop.f32.mrf.mxu0
  %4411 = vmatprep.mubr.f32.mxu0 0.0
  %4412 = vmatmul.mubr.f32.gmra.mxu0 %v3759
  %v4413 = vpop.f32.mrf.mxu0
  %v4414 = vadd.f32 %v4329, %v4413
  %v4415 = vpop.f32.mrf.mxu0
  %4416 = vmatprep.mubr.f32.mxu0 0.0
  %4417 = vmatmul.mubr.f32.gmra.mxu0 %v3762
  %v4418 = vpop.f32.mrf.mxu0
  %v4419 = vadd.f32 %v4334, %v4418
  %v4420 = vpop.f32.mrf.mxu0
  %4421 = vmatprep.mubr.f32.mxu0 0.0
  %4422 = vmatmul.mubr.f32.gmra.mxu0 %v3765
  %v4423 = vpop.f32.mrf.mxu0
  %v4424 = vadd.f32 %v4339, %v4423
  %v4425 = vpop.f32.mrf.mxu0
  %4426 = vdwg.mxu0
  %4427 = vmatprep.subr.mxu0 0.0
  %4428 = vmatpush1.msra.mxu0 0.0
  %4429 = vmatprep.subr.mxu0 0.0
  %4430 = vmatpush1.msra.mxu0 0.0
  %4431 = vmatprep.subr.mxu0 0.0
  %4432 = vmatpush1.msra.mxu0 0.0
  %4433 = vmatprep.subr.mxu0 0.0
  %4434 = vmatpush1.msra.mxu0 0.0
  %4435 = vmatprep.subr.mxu0 0.0
  %4436 = vmatpush1.msra.mxu0 0.0
  %4437 = vmatprep.subr.mxu0 0.0
  %4438 = vmatpush1.msra.mxu0 0.0
  %4439 = vmatprep.subr.mxu0 0.0
  %4440 = vmatpush1.msra.mxu0 0.0
  %4441 = vmatprep.subr.mxu0 0.0
  %4442 = vmatpush1.msra.mxu0 0.0
  %4443 = vmatprep.subr.mxu0 0.0
  %4444 = vmatpush1.msra.mxu0 0.0
  %4445 = vmatprep.subr.mxu0 0.0
  %4446 = vmatpush1.msra.mxu0 0.0
  %4447 = vmatprep.subr.mxu0 0.0
  %4448 = vmatpush1.msra.mxu0 0.0
  %4449 = vmatprep.subr.mxu0 0.0
  %4450 = vmatpush1.msra.mxu0 0.0
  %4451 = vmatprep.subr.mxu0 0.0
  %4452 = vmatpush1.msra.mxu0 0.0
  %4453 = vmatprep.subr.mxu0 0.0
  %4454 = vmatpush1.msra.mxu0 0.0
  %4455 = vmatprep.subr.mxu0 0.0
  %4456 = vmatpush1.msra.mxu0 %v3554
  %4457 = vmatprep.subr.mxu0 0.0
  %4458 = vmatpush1.msra.mxu0 %v3549
  %4459 = vmatprep.subr.mxu0 0.0
  %4460 = vmatpush2.msra.mxu0 0.0
  %4461 = vmatprep.subr.mxu0 0.0
  %4462 = vmatpush2.msra.mxu0 0.0
  %4463 = vmatprep.subr.mxu0 0.0
  %4464 = vmatpush2.msra.mxu0 0.0
  %4465 = vmatprep.subr.mxu0 0.0
  %4466 = vmatpush2.msra.mxu0 0.0
  %4467 = vmatprep.subr.mxu0 0.0
  %4468 = vmatpush2.msra.mxu0 0.0
  %4469 = vmatprep.subr.mxu0 0.0
  %4470 = vmatpush2.msra.mxu0 0.0
  %4471 = vmatprep.subr.mxu0 0.0
  %4472 = vmatpush2.msra.mxu0 0.0
  %4473 = vmatprep.subr.mxu0 0.0
  %4474 = vmatpush2.msra.mxu0 0.0
  %4475 = vmatprep.subr.mxu0 0.0
  %4476 = vmatpush2.msra.mxu0 0.0
  %4477 = vmatprep.subr.mxu0 0.0
  %4478 = vmatpush2.msra.mxu0 0.0
  %4479 = vmatprep.subr.mxu0 0.0
  %4480 = vmatpush2.msra.mxu0 0.0
  %4481 = vmatprep.subr.mxu0 0.0
  %4482 = vmatpush2.msra.mxu0 0.0
  %4483 = vmatprep.subr.mxu0 0.0
  %4484 = vmatpush2.msra.mxu0 0.0
  %4485 = vmatprep.subr.mxu0 0.0
  %4486 = vmatpush2.msra.mxu0 0.0
  %4487 = vmatprep.subr.mxu0 0.0
  %4488 = vmatpush2.msra.mxu0 0.0
  %4489 = vmatprep.subr.mxu0 0.0
  %4490 = vmatpush2.msra.mxu0 0.0
  %4491 = vmatprep.mubr.f32.mxu0 0.0
  %4492 = vmatmul.mubr.f32.gmra.mxu0 %v3858
  %v4493 = vpop.f32.mrf.mxu0
  %v4494 = vadd.f32 0.0, %v4493
  %v4495 = vpop.f32.mrf.mxu0
  %4496 = vmatprep.mubr.f32.mxu0 0.0
  %4497 = vmatmul.mubr.f32.gmra.mxu0 %v3861
  %v4498 = vpop.f32.mrf.mxu0
  %v4499 = vadd.f32 0.0, %v4498
  %v4500 = vpop.f32.mrf.mxu0
  %4501 = vmatprep.mubr.f32.mxu0 0.0
  %4502 = vmatmul.mubr.f32.gmra.mxu0 %v3864
  %v4503 = vpop.f32.mrf.mxu0
  %v4504 = vadd.f32 0.0, %v4503
  %v4505 = vpop.f32.mrf.mxu0
  %4506 = vmatprep.mubr.f32.mxu0 0.0
  %4507 = vmatmul.mubr.f32.gmra.mxu0 %v3867
  %v4508 = vpop.f32.mrf.mxu0
  %v4509 = vadd.f32 0.0, %v4508
  %v4510 = vpop.f32.mrf.mxu0
  %4511 = vdwg.mxu0
  %v4512 = vadd.f32 %v4409, %v4494
  %v4513 = vadd.f32 %v4414, %v4499
  %v4514 = vadd.f32 %v4419, %v4504
  %v4515 = vadd.f32 %v4424, %v4509
  %v4516 = vadd.f32 %v4512, %v3961
  %v4517 = vadd.f32 %v4513, %v3966
  %v4518 = vadd.f32 %v4514, %v3971
  %v4519 = vadd.f32 %v4515, %v3976
  %v4520 = vmax.f32 %v4516, 0.0
  %v4521 = vmax.f32 %v4517, 0.0
  %v4522 = vmax.f32 %v4518, 0.0
  %v4523 = vmax.f32 %v4519, 0.0
  %v4524 = vmax.f32 %v4253, %v4520
  %v4525 = vmax.f32 %v4254, %v4521
  %v4526 = vmax.f32 %v4255, %v4522
  %v4527 = vmax.f32 %v4256, %v4523
  %4528 = vmatprep.subr.mxu0 0.0
  %4529 = vmatpush1.msra.mxu0 0.0
  %4530 = vmatprep.subr.mxu0 0.0
  %4531 = vmatpush1.msra.mxu0 0.0
  %4532 = vmatprep.subr.mxu0 0.0
  %4533 = vmatpush1.msra.mxu0 0.0
  %4534 = vmatprep.subr.mxu0 0.0
  %4535 = vmatpush1.msra.mxu0 0.0
  %4536 = vmatprep.subr.mxu0 0.0
  %4537 = vmatpush1.msra.mxu0 0.0
  %4538 = vmatprep.subr.mxu0 0.0
  %4539 = vmatpush1.msra.mxu0 0.0
  %4540 = vmatprep.subr.mxu0 0.0
  %4541 = vmatpush1.msra.mxu0 0.0
  %4542 = vmatprep.subr.mxu0 0.0
  %4543 = vmatpush1.msra.mxu0 0.0
  %4544 = vmatprep.subr.mxu0 0.0
  %4545 = vmatpush1.msra.mxu0 0.0
  %4546 = vmatprep.subr.mxu0 0.0
  %4547 = vmatpush1.msra.mxu0 0.0
  %4548 = vmatprep.subr.mxu0 0.0
  %4549 = vmatpush1.msra.mxu0 0.0
  %4550 = vmatprep.subr.mxu0 0.0
  %4551 = vmatpush1.msra.mxu0 0.0
  %4552 = vmatprep.subr.mxu0 0.0
  %4553 = vmatpush1.msra.mxu0 0.0
  %4554 = vmatprep.subr.mxu0 0.0
  %4555 = vmatpush1.msra.mxu0 0.0
  %4556 = vmatprep.subr.mxu0 0.0
  %4557 = vmatpush1.msra.mxu0 %v3554
  %4558 = vmatprep.subr.mxu0 0.0
  %4559 = vmatpush1.msra.mxu0 %v3549
  %4560 = vmatprep.subr.mxu0 0.0
  %4561 = vmatpush2.msra.mxu0 0.0
  %4562 = vmatprep.subr.mxu0 0.0
  %4563 = vmatpush2.msra.mxu0 0.0
  %4564 = vmatprep.subr.mxu0 0.0
  %4565 = vmatpush2.msra.mxu0 0.0
  %4566 = vmatprep.subr.mxu0 0.0
  %4567 = vmatpush2.msra.mxu0 0.0
  %4568 = vmatprep.subr.mxu0 0.0
  %4569 = vmatpush2.msra.mxu0 0.0
  %4570 = vmatprep.subr.mxu0 0.0
  %4571 = vmatpush2.msra.mxu0 0.0
  %4572 = vmatprep.subr.mxu0 0.0
  %4573 = vmatpush2.msra.mxu0 0.0
  %4574 = vmatprep.subr.mxu0 0.0
  %4575 = vmatpush2.msra.mxu0 0.0
  %4576 = vmatprep.subr.mxu0 0.0
  %4577 = vmatpush2.msra.mxu0 0.0
  %4578 = vmatprep.subr.mxu0 0.0
  %4579 = vmatpush2.msra.mxu0 0.0
  %4580 = vmatprep.subr.mxu0 0.0
  %4581 = vmatpush2.msra.mxu0 0.0
  %4582 = vmatprep.subr.mxu0 0.0
  %4583 = vmatpush2.msra.mxu0 0.0
  %4584 = vmatprep.subr.mxu0 0.0
  %4585 = vmatpush2.msra.mxu0 0.0
  %4586 = vmatprep.subr.mxu0 0.0
  %4587 = vmatpush2.msra.mxu0 0.0
  %4588 = vmatprep.subr.mxu0 0.0
  %4589 = vmatpush2.msra.mxu0 0.0
  %4590 = vmatprep.subr.mxu0 0.0
  %4591 = vmatpush2.msra.mxu0 0.0
  %4592 = vmatprep.mubr.f32.mxu0 0.0
  %4593 = vmatmul.mubr.f32.gmra.mxu0 %v3659
  %v4594 = vpop.f32.mrf.mxu0
  %v4595 = vadd.f32 0.0, %v4594
  %v4596 = vpop.f32.mrf.mxu0
  %4597 = vmatprep.mubr.f32.mxu0 0.0
  %4598 = vmatmul.mubr.f32.gmra.mxu0 %v3662
  %v4599 = vpop.f32.mrf.mxu0
  %v4600 = vadd.f32 0.0, %v4599
  %v4601 = vpop.f32.mrf.mxu0
  %4602 = vmatprep.mubr.f32.mxu0 0.0
  %4603 = vmatmul.mubr.f32.gmra.mxu0 %v3665
  %v4604 = vpop.f32.mrf.mxu0
  %v4605 = vadd.f32 0.0, %v4604
  %v4606 = vpop.f32.mrf.mxu0
  %4607 = vmatprep.mubr.f32.mxu0 0.0
  %4608 = vmatmul.mubr.f32.gmra.mxu0 %v3668
  %v4609 = vpop.f32.mrf.mxu0
  %v4610 = vadd.f32 0.0, %v4609
  %v4611 = vpop.f32.mrf.mxu0
  %4612 = vdwg.mxu0
  %4613 = vmatprep.subr.mxu0 0.0
  %4614 = vmatpush1.msra.mxu0 0.0
  %4615 = vmatprep.subr.mxu0 0.0
  %4616 = vmatpush1.msra.mxu0 0.0
  %4617 = vmatprep.subr.mxu0 0.0
  %4618 = vmatpush1.msra.mxu0 0.0
  %4619 = vmatprep.subr.mxu0 0.0
  %4620 = vmatpush1.msra.mxu0 0.0
  %4621 = vmatprep.subr.mxu0 0.0
  %4622 = vmatpush1.msra.mxu0 0.0
  %4623 = vmatprep.subr.mxu0 0.0
  %4624 = vmatpush1.msra.mxu0 0.0
  %4625 = vmatprep.subr.mxu0 0.0
  %4626 = vmatpush1.msra.mxu0 0.0
  %4627 = vmatprep.subr.mxu0 0.0
  %4628 = vmatpush1.msra.mxu0 0.0
  %4629 = vmatprep.subr.mxu0 0.0
  %4630 = vmatpush1.msra.mxu0 0.0
  %4631 = vmatprep.subr.mxu0 0.0
  %4632 = vmatpush1.msra.mxu0 0.0
  %4633 = vmatprep.subr.mxu0 0.0
  %4634 = vmatpush1.msra.mxu0 0.0
  %4635 = vmatprep.subr.mxu0 0.0
  %4636 = vmatpush1.msra.mxu0 0.0
  %4637 = vmatprep.subr.mxu0 0.0
  %4638 = vmatpush1.msra.mxu0 0.0
  %4639 = vmatprep.subr.mxu0 0.0
  %4640 = vmatpush1.msra.mxu0 0.0
  %4641 = vmatprep.subr.mxu0 0.0
  %4642 = vmatpush1.msra.mxu0 %v3462
  %4643 = vmatprep.subr.mxu0 0.0
  %4644 = vmatpush1.msra.mxu0 %v3457
  %4645 = vmatprep.subr.mxu0 0.0
  %4646 = vmatpush2.msra.mxu0 0.0
  %4647 = vmatprep.subr.mxu0 0.0
  %4648 = vmatpush2.msra.mxu0 0.0
  %4649 = vmatprep.subr.mxu0 0.0
  %4650 = vmatpush2.msra.mxu0 0.0
  %4651 = vmatprep.subr.mxu0 0.0
  %4652 = vmatpush2.msra.mxu0 0.0
  %4653 = vmatprep.subr.mxu0 0.0
  %4654 = vmatpush2.msra.mxu0 0.0
  %4655 = vmatprep.subr.mxu0 0.0
  %4656 = vmatpush2.msra.mxu0 0.0
  %4657 = vmatprep.subr.mxu0 0.0
  %4658 = vmatpush2.msra.mxu0 0.0
  %4659 = vmatprep.subr.mxu0 0.0
  %4660 = vmatpush2.msra.mxu0 0.0
  %4661 = vmatprep.subr.mxu0 0.0
  %4662 = vmatpush2.msra.mxu0 0.0
  %4663 = vmatprep.subr.mxu0 0.0
  %4664 = vmatpush2.msra.mxu0 0.0
  %4665 = vmatprep.subr.mxu0 0.0
  %4666 = vmatpush2.msra.mxu0 0.0
  %4667 = vmatprep.subr.mxu0 0.0
  %4668 = vmatpush2.msra.mxu0 0.0
  %4669 = vmatprep.subr.mxu0 0.0
  %4670 = vmatpush2.msra.mxu0 0.0
  %4671 = vmatprep.subr.mxu0 0.0
  %4672 = vmatpush2.msra.mxu0 0.0
  %4673 = vmatprep.subr.mxu0 0.0
  %4674 = vmatpush2.msra.mxu0 0.0
  %4675 = vmatprep.subr.mxu0 0.0
  %4676 = vmatpush2.msra.mxu0 0.0
  %4677 = vmatprep.mubr.f32.mxu0 0.0
  %4678 = vmatmul.mubr.f32.gmra.mxu0 %v3756
  %v4679 = vpop.f32.mrf.mxu0
  %v4680 = vadd.f32 %v4595, %v4679
  %v4681 = vpop.f32.mrf.mxu0
  %4682 = vmatprep.mubr.f32.mxu0 0.0
  %4683 = vmatmul.mubr.f32.gmra.mxu0 %v3759
  %v4684 = vpop.f32.mrf.mxu0
  %v4685 = vadd.f32 %v4600, %v4684
  %v4686 = vpop.f32.mrf.mxu0
  %4687 = vmatprep.mubr.f32.mxu0 0.0
  %4688 = vmatmul.mubr.f32.gmra.mxu0 %v3762
  %v4689 = vpop.f32.mrf.mxu0
  %v4690 = vadd.f32 %v4605, %v4689
  %v4691 = vpop.f32.mrf.mxu0
  %4692 = vmatprep.mubr.f32.mxu0 0.0
  %4693 = vmatmul.mubr.f32.gmra.mxu0 %v3765
  %v4694 = vpop.f32.mrf.mxu0
  %v4695 = vadd.f32 %v4610, %v4694
  %v4696 = vpop.f32.mrf.mxu0
  %4697 = vdwg.mxu0
  %4698 = vmatprep.subr.mxu0 0.0
  %4699 = vmatpush1.msra.mxu0 0.0
  %4700 = vmatprep.subr.mxu0 0.0
  %4701 = vmatpush1.msra.mxu0 0.0
  %4702 = vmatprep.subr.mxu0 0.0
  %4703 = vmatpush1.msra.mxu0 0.0
  %4704 = vmatprep.subr.mxu0 0.0
  %4705 = vmatpush1.msra.mxu0 0.0
  %4706 = vmatprep.subr.mxu0 0.0
  %4707 = vmatpush1.msra.mxu0 0.0
  %4708 = vmatprep.subr.mxu0 0.0
  %4709 = vmatpush1.msra.mxu0 0.0
  %4710 = vmatprep.subr.mxu0 0.0
  %4711 = vmatpush1.msra.mxu0 0.0
  %4712 = vmatprep.subr.mxu0 0.0
  %4713 = vmatpush1.msra.mxu0 0.0
  %4714 = vmatprep.subr.mxu0 0.0
  %4715 = vmatpush1.msra.mxu0 0.0
  %4716 = vmatprep.subr.mxu0 0.0
  %4717 = vmatpush1.msra.mxu0 0.0
  %4718 = vmatprep.subr.mxu0 0.0
  %4719 = vmatpush1.msra.mxu0 0.0
  %4720 = vmatprep.subr.mxu0 0.0
  %4721 = vmatpush1.msra.mxu0 0.0
  %4722 = vmatprep.subr.mxu0 0.0
  %4723 = vmatpush1.msra.mxu0 0.0
  %4724 = vmatprep.subr.mxu0 0.0
  %4725 = vmatpush1.msra.mxu0 0.0
  %4726 = vmatprep.subr.mxu0 0.0
  %4727 = vmatpush1.msra.mxu0 %v3646
  %4728 = vmatprep.subr.mxu0 0.0
  %4729 = vmatpush1.msra.mxu0 %v3641
  %4730 = vmatprep.subr.mxu0 0.0
  %4731 = vmatpush2.msra.mxu0 0.0
  %4732 = vmatprep.subr.mxu0 0.0
  %4733 = vmatpush2.msra.mxu0 0.0
  %4734 = vmatprep.subr.mxu0 0.0
  %4735 = vmatpush2.msra.mxu0 0.0
  %4736 = vmatprep.subr.mxu0 0.0
  %4737 = vmatpush2.msra.mxu0 0.0
  %4738 = vmatprep.subr.mxu0 0.0
  %4739 = vmatpush2.msra.mxu0 0.0
  %4740 = vmatprep.subr.mxu0 0.0
  %4741 = vmatpush2.msra.mxu0 0.0
  %4742 = vmatprep.subr.mxu0 0.0
  %4743 = vmatpush2.msra.mxu0 0.0
  %4744 = vmatprep.subr.mxu0 0.0
  %4745 = vmatpush2.msra.mxu0 0.0
  %4746 = vmatprep.subr.mxu0 0.0
  %4747 = vmatpush2.msra.mxu0 0.0
  %4748 = vmatprep.subr.mxu0 0.0
  %4749 = vmatpush2.msra.mxu0 0.0
  %4750 = vmatprep.subr.mxu0 0.0
  %4751 = vmatpush2.msra.mxu0 0.0
  %4752 = vmatprep.subr.mxu0 0.0
  %4753 = vmatpush2.msra.mxu0 0.0
  %4754 = vmatprep.subr.mxu0 0.0
  %4755 = vmatpush2.msra.mxu0 0.0
  %4756 = vmatprep.subr.mxu0 0.0
  %4757 = vmatpush2.msra.mxu0 0.0
  %4758 = vmatprep.subr.mxu0 0.0
  %4759 = vmatpush2.msra.mxu0 0.0
  %4760 = vmatprep.subr.mxu0 0.0
  %4761 = vmatpush2.msra.mxu0 0.0
  %4762 = vmatprep.mubr.f32.mxu0 0.0
  %4763 = vmatmul.mubr.f32.gmra.mxu0 %v3858
  %v4764 = vpop.f32.mrf.mxu0
  %v4765 = vadd.f32 0.0, %v4764
  %v4766 = vpop.f32.mrf.mxu0
  %4767 = vmatprep.mubr.f32.mxu0 0.0
  %4768 = vmatmul.mubr.f32.gmra.mxu0 %v3861
  %v4769 = vpop.f32.mrf.mxu0
  %v4770 = vadd.f32 0.0, %v4769
  %v4771 = vpop.f32.mrf.mxu0
  %4772 = vmatprep.mubr.f32.mxu0 0.0
  %4773 = vmatmul.mubr.f32.gmra.mxu0 %v3864
  %v4774 = vpop.f32.mrf.mxu0
  %v4775 = vadd.f32 0.0, %v4774
  %v4776 = vpop.f32.mrf.mxu0
  %4777 = vmatprep.mubr.f32.mxu0 0.0
  %4778 = vmatmul.mubr.f32.gmra.mxu0 %v3867
  %v4779 = vpop.f32.mrf.mxu0
  %v4780 = vadd.f32 0.0, %v4779
  %v4781 = vpop.f32.mrf.mxu0
  %4782 = vdwg.mxu0
  %v4783 = vadd.f32 %v4680, %v4765
  %v4784 = vadd.f32 %v4685, %v4770
  %v4785 = vadd.f32 %v4690, %v4775
  %v4786 = vadd.f32 %v4695, %v4780
  %v4787 = vadd.f32 %v4783, %v3961
  %v4788 = vadd.f32 %v4784, %v3966
  %v4789 = vadd.f32 %v4785, %v3971
  %v4790 = vadd.f32 %v4786, %v3976
  %v4791 = vmax.f32 %v4787, 0.0
  %v4792 = vmax.f32 %v4788, 0.0
  %v4793 = vmax.f32 %v4789, 0.0
  %v4794 = vmax.f32 %v4790, 0.0
  %v4795 = vmax.f32 %v4524, %v4791
  %v4796 = vmax.f32 %v4525, %v4792
  %v4797 = vmax.f32 %v4526, %v4793
  %v4798 = vmax.f32 %v4527, %v4794
  %v4799 = vld [vmem:[%s10] sm:$0xff]
  %v4800 = vld [vmem:[%s10 + $0x8] sm:$0xff]
  %v4801 = vld [vmem:[%s10 + $0x10] sm:$0xff]
  %v4802 = vld [vmem:[%s10 + $0x18] sm:$0xff]
  %v4803 = vld [vmem:[%s10 + $0x20] sm:$0xff]
  %v4804 = vld [vmem:[%s10 + $0x28] sm:$0xff]
  %v4805 = vld [vmem:[%s10 + $0x30] sm:$0xff]
  %v4806 = vld [vmem:[%s10 + $0x38] sm:$0xff]
  %v4807 = vld [vmem:[%s11] sm:$0xff]
  %v4808 = vld [vmem:[%s11 + $0x8] sm:$0xff]
  %v4809 = vld [vmem:[%s11 + $0x10] sm:$0xff]
  %vm4810 = vcmask 195584
  %v4812 = vsel %vm4810, %v4795, 0
  %v4815 = vsel %vm4810, %v4796, 0
  %v4818 = vsel %vm4810, %v4797, 0
  %v4821 = vsel %vm4810, %v4798, 0
  %4823 = vmatprep.subr.mxu0 0.0
  %4824 = vmatpush1.msra.mxu0 0.0
  %4825 = vmatprep.subr.mxu0 0.0
  %4826 = vmatpush1.msra.mxu0 0.0
  %4827 = vmatprep.subr.mxu0 0.0
  %4828 = vmatpush1.msra.mxu0 0.0
  %4829 = vmatprep.subr.mxu0 0.0
  %4830 = vmatpush1.msra.mxu0 0.0
  %4831 = vmatprep.subr.mxu0 0.0
  %4832 = vmatpush1.msra.mxu0 0.0
  %4833 = vmatprep.subr.mxu0 0.0
  %4834 = vmatpush1.msra.mxu0 0.0
  %4835 = vmatprep.subr.mxu0 0.0
  %4836 = vmatpush1.msra.mxu0 0.0
  %4837 = vmatprep.subr.mxu0 0.0
  %4838 = vmatpush1.msra.mxu0 0.0
  %4839 = vmatprep.subr.mxu0 0.0
  %4840 = vmatpush1.msra.mxu0 0.0
  %4841 = vmatprep.subr.mxu0 0.0
  %4842 = vmatpush1.msra.mxu0 0.0
  %4843 = vmatprep.subr.mxu0 0.0
  %4844 = vmatpush1.msra.mxu0 0.0
  %4845 = vmatprep.subr.mxu0 0.0
  %4846 = vmatpush1.msra.mxu0 0.0
  %4847 = vmatprep.subr.mxu0 0.0
  %4848 = vmatpush1.msra.mxu0 0.0
  %4849 = vmatprep.subr.mxu0 0.0
  %4850 = vmatpush1.msra.mxu0 %v4809
  %4851 = vmatprep.subr.mxu0 0.0
  %4852 = vmatpush1.msra.mxu0 %v4808
  %4853 = vmatprep.subr.mxu0 0.0
  %4854 = vmatpush1.msra.mxu0 %v4807
  %4855 = vmatprep.subr.mxu0 0.0
  %4856 = vmatpush2.msra.mxu0 0.0
  %4857 = vmatprep.subr.mxu0 0.0
  %4858 = vmatpush2.msra.mxu0 0.0
  %4859 = vmatprep.subr.mxu0 0.0
  %4860 = vmatpush2.msra.mxu0 0.0
  %4861 = vmatprep.subr.mxu0 0.0
  %4862 = vmatpush2.msra.mxu0 0.0
  %4863 = vmatprep.subr.mxu0 0.0
  %4864 = vmatpush2.msra.mxu0 0.0
  %4865 = vmatprep.subr.mxu0 0.0
  %4866 = vmatpush2.msra.mxu0 0.0
  %4867 = vmatprep.subr.mxu0 0.0
  %4868 = vmatpush2.msra.mxu0 0.0
  %4869 = vmatprep.subr.mxu0 0.0
  %4870 = vmatpush2.msra.mxu0 0.0
  %4871 = vmatprep.subr.mxu0 0.0
  %4872 = vmatpush2.msra.mxu0 0.0
  %4873 = vmatprep.subr.mxu0 0.0
  %4874 = vmatpush2.msra.mxu0 0.0
  %4875 = vmatprep.subr.mxu0 0.0
  %4876 = vmatpush2.msra.mxu0 0.0
  %4877 = vmatprep.subr.mxu0 0.0
  %4878 = vmatpush2.msra.mxu0 0.0
  %4879 = vmatprep.subr.mxu0 0.0
  %4880 = vmatpush2.msra.mxu0 0.0
  %4881 = vmatprep.subr.mxu0 0.0
  %4882 = vmatpush2.msra.mxu0 0.0
  %4883 = vmatprep.subr.mxu0 0.0
  %4884 = vmatpush2.msra.mxu0 0.0
  %4885 = vmatprep.subr.mxu0 0.0
  %4886 = vmatpush2.msra.mxu0 0.0
  %4887 = vmatprep.mubr.f32.mxu0 0.0
  %4888 = vmatmul.mubr.f32.gmra.mxu0 %v4812
  %v4889 = vpop.f32.mrf.mxu0
  %v4890 = vadd.f32 0.0, %v4889
  %v4891 = vpop.f32.mrf.mxu0
  %4892 = vmatprep.mubr.f32.mxu0 0.0
  %4893 = vmatmul.mubr.f32.gmra.mxu0 %v4815
  %v4894 = vpop.f32.mrf.mxu0
  %v4895 = vadd.f32 0.0, %v4894
  %v4896 = vpop.f32.mrf.mxu0
  %4897 = vmatprep.mubr.f32.mxu0 0.0
  %4898 = vmatmul.mubr.f32.gmra.mxu0 %v4818
  %v4899 = vpop.f32.mrf.mxu0
  %v4900 = vadd.f32 0.0, %v4899
  %v4901 = vpop.f32.mrf.mxu0
  %4902 = vmatprep.mubr.f32.mxu0 0.0
  %4903 = vmatmul.mubr.f32.gmra.mxu0 %v4821
  %v4904 = vpop.f32.mrf.mxu0
  %v4905 = vadd.f32 0.0, %v4904
  %v4906 = vpop.f32.mrf.mxu0
  %4907 = vdwg.mxu0
  %s4908 = scalar_lea.vmem %s11, 24
  %v4909 = vld [vmem:[%s4908] sm:$0xff]
  %v4910 = vld [vmem:[%s4908 + $0x8] sm:$0xff]
  %v4911 = vld [vmem:[%s4908 + $0x10] sm:$0xff]
  %4912 = vmatprep.subr.mxu0 0.0
  %4913 = vmatpush1.msra.mxu0 0.0
  %4914 = vmatprep.subr.mxu0 0.0
  %4915 = vmatpush1.msra.mxu0 0.0
  %4916 = vmatprep.subr.mxu0 0.0
  %4917 = vmatpush1.msra.mxu0 0.0
  %4918 = vmatprep.subr.mxu0 0.0
  %4919 = vmatpush1.msra.mxu0 0.0
  %4920 = vmatprep.subr.mxu0 0.0
  %4921 = vmatpush1.msra.mxu0 0.0
  %4922 = vmatprep.subr.mxu0 0.0
  %4923 = vmatpush1.msra.mxu0 0.0
  %4924 = vmatprep.subr.mxu0 0.0
  %4925 = vmatpush1.msra.mxu0 0.0
  %4926 = vmatprep.subr.mxu0 0.0
  %4927 = vmatpush1.msra.mxu0 0.0
  %4928 = vmatprep.subr.mxu0 0.0
  %4929 = vmatpush1.msra.mxu0 0.0
  %4930 = vmatprep.subr.mxu0 0.0
  %4931 = vmatpush1.msra.mxu0 0.0
  %4932 = vmatprep.subr.mxu0 0.0
  %4933 = vmatpush1.msra.mxu0 0.0
  %4934 = vmatprep.subr.mxu0 0.0
  %4935 = vmatpush1.msra.mxu0 0.0
  %4936 = vmatprep.subr.mxu0 0.0
  %4937 = vmatpush1.msra.mxu0 0.0
  %4938 = vmatprep.subr.mxu0 0.0
  %4939 = vmatpush1.msra.mxu0 %v4911
  %4940 = vmatprep.subr.mxu0 0.0
  %4941 = vmatpush1.msra.mxu0 %v4910
  %4942 = vmatprep.subr.mxu0 0.0
  %4943 = vmatpush1.msra.mxu0 %v4909
  %4944 = vmatprep.subr.mxu0 0.0
  %4945 = vmatpush2.msra.mxu0 0.0
  %4946 = vmatprep.subr.mxu0 0.0
  %4947 = vmatpush2.msra.mxu0 0.0
  %4948 = vmatprep.subr.mxu0 0.0
  %4949 = vmatpush2.msra.mxu0 0.0
  %4950 = vmatprep.subr.mxu0 0.0
  %4951 = vmatpush2.msra.mxu0 0.0
  %4952 = vmatprep.subr.mxu0 0.0
  %4953 = vmatpush2.msra.mxu0 0.0
  %4954 = vmatprep.subr.mxu0 0.0
  %4955 = vmatpush2.msra.mxu0 0.0
  %4956 = vmatprep.subr.mxu0 0.0
  %4957 = vmatpush2.msra.mxu0 0.0
  %4958 = vmatprep.subr.mxu0 0.0
  %4959 = vmatpush2.msra.mxu0 0.0
  %4960 = vmatprep.subr.mxu0 0.0
  %4961 = vmatpush2.msra.mxu0 0.0
  %4962 = vmatprep.subr.mxu0 0.0
  %4963 = vmatpush2.msra.mxu0 0.0
  %4964 = vmatprep.subr.mxu0 0.0
  %4965 = vmatpush2.msra.mxu0 0.0
  %4966 = vmatprep.subr.mxu0 0.0
  %4967 = vmatpush2.msra.mxu0 0.0
  %4968 = vmatprep.subr.mxu0 0.0
  %4969 = vmatpush2.msra.mxu0 0.0
  %4970 = vmatprep.subr.mxu0 0.0
  %4971 = vmatpush2.msra.mxu0 0.0
  %4972 = vmatprep.subr.mxu0 0.0
  %4973 = vmatpush2.msra.mxu0 0.0
  %4974 = vmatprep.subr.mxu0 0.0
  %4975 = vmatpush2.msra.mxu0 0.0
  %4976 = vmatprep.mubr.f32.mxu0 0.0
  %4977 = vmatmul.mubr.f32.gmra.mxu0 %v4812
  %v4978 = vpop.f32.mrf.mxu0
  %v4979 = vadd.f32 0.0, %v4978
  %v4980 = vpop.f32.mrf.mxu0
  %4981 = vmatprep.mubr.f32.mxu0 0.0
  %4982 = vmatmul.mubr.f32.gmra.mxu0 %v4815
  %v4983 = vpop.f32.mrf.mxu0
  %v4984 = vadd.f32 0.0, %v4983
  %v4985 = vpop.f32.mrf.mxu0
  %4986 = vmatprep.mubr.f32.mxu0 0.0
  %4987 = vmatmul.mubr.f32.gmra.mxu0 %v4818
  %v4988 = vpop.f32.mrf.mxu0
  %v4989 = vadd.f32 0.0, %v4988
  %v4990 = vpop.f32.mrf.mxu0
  %4991 = vmatprep.mubr.f32.mxu0 0.0
  %4992 = vmatmul.mubr.f32.gmra.mxu0 %v4821
  %v4993 = vpop.f32.mrf.mxu0
  %v4994 = vadd.f32 0.0, %v4993
  %v4995 = vpop.f32.mrf.mxu0
  %4996 = vdwg.mxu0
  %s4997 = scalar_lea.vmem %s11, 48
  %v4998 = vld [vmem:[%s4997] sm:$0xff]
  %v4999 = vld [vmem:[%s4997 + $0x8] sm:$0xff]
  %v5000 = vld [vmem:[%s4997 + $0x10] sm:$0xff]
  %5001 = vmatprep.subr.mxu0 0.0
  %5002 = vmatpush1.msra.mxu0 0.0
  %5003 = vmatprep.subr.mxu0 0.0
  %5004 = vmatpush1.msra.mxu0 0.0
  %5005 = vmatprep.subr.mxu0 0.0
  %5006 = vmatpush1.msra.mxu0 0.0
  %5007 = vmatprep.subr.mxu0 0.0
  %5008 = vmatpush1.msra.mxu0 0.0
  %5009 = vmatprep.subr.mxu0 0.0
  %5010 = vmatpush1.msra.mxu0 0.0
  %5011 = vmatprep.subr.mxu0 0.0
  %5012 = vmatpush1.msra.mxu0 0.0
  %5013 = vmatprep.subr.mxu0 0.0
  %5014 = vmatpush1.msra.mxu0 0.0
  %5015 = vmatprep.subr.mxu0 0.0
  %5016 = vmatpush1.msra.mxu0 0.0
  %5017 = vmatprep.subr.mxu0 0.0
  %5018 = vmatpush1.msra.mxu0 0.0
  %5019 = vmatprep.subr.mxu0 0.0
  %5020 = vmatpush1.msra.mxu0 0.0
  %5021 = vmatprep.subr.mxu0 0.0
  %5022 = vmatpush1.msra.mxu0 0.0
  %5023 = vmatprep.subr.mxu0 0.0
  %5024 = vmatpush1.msra.mxu0 0.0
  %5025 = vmatprep.subr.mxu0 0.0
  %5026 = vmatpush1.msra.mxu0 0.0
  %5027 = vmatprep.subr.mxu0 0.0
  %5028 = vmatpush1.msra.mxu0 %v5000
  %5029 = vmatprep.subr.mxu0 0.0
  %5030 = vmatpush1.msra.mxu0 %v4999
  %5031 = vmatprep.subr.mxu0 0.0
  %5032 = vmatpush1.msra.mxu0 %v4998
  %5033 = vmatprep.subr.mxu0 0.0
  %5034 = vmatpush2.msra.mxu0 0.0
  %5035 = vmatprep.subr.mxu0 0.0
  %5036 = vmatpush2.msra.mxu0 0.0
  %5037 = vmatprep.subr.mxu0 0.0
  %5038 = vmatpush2.msra.mxu0 0.0
  %5039 = vmatprep.subr.mxu0 0.0
  %5040 = vmatpush2.msra.mxu0 0.0
  %5041 = vmatprep.subr.mxu0 0.0
  %5042 = vmatpush2.msra.mxu0 0.0
  %5043 = vmatprep.subr.mxu0 0.0
  %5044 = vmatpush2.msra.mxu0 0.0
  %5045 = vmatprep.subr.mxu0 0.0
  %5046 = vmatpush2.msra.mxu0 0.0
  %5047 = vmatprep.subr.mxu0 0.0
  %5048 = vmatpush2.msra.mxu0 0.0
  %5049 = vmatprep.subr.mxu0 0.0
  %5050 = vmatpush2.msra.mxu0 0.0
  %5051 = vmatprep.subr.mxu0 0.0
  %5052 = vmatpush2.msra.mxu0 0.0
  %5053 = vmatprep.subr.mxu0 0.0
  %5054 = vmatpush2.msra.mxu0 0.0
  %5055 = vmatprep.subr.mxu0 0.0
  %5056 = vmatpush2.msra.mxu0 0.0
  %5057 = vmatprep.subr.mxu0 0.0
  %5058 = vmatpush2.msra.mxu0 0.0
  %5059 = vmatprep.subr.mxu0 0.0
  %5060 = vmatpush2.msra.mxu0 0.0
  %5061 = vmatprep.subr.mxu0 0.0
  %5062 = vmatpush2.msra.mxu0 0.0
  %5063 = vmatprep.subr.mxu0 0.0
  %5064 = vmatpush2.msra.mxu0 0.0
  %5065 = vmatprep.mubr.f32.mxu0 0.0
  %5066 = vmatmul.mubr.f32.gmra.mxu0 %v4812
  %v5067 = vpop.f32.mrf.mxu0
  %v5068 = vadd.f32 0.0, %v5067
  %v5069 = vpop.f32.mrf.mxu0
  %5070 = vmatprep.mubr.f32.mxu0 0.0
  %5071 = vmatmul.mubr.f32.gmra.mxu0 %v4815
  %v5072 = vpop.f32.mrf.mxu0
  %v5073 = vadd.f32 0.0, %v5072
  %v5074 = vpop.f32.mrf.mxu0
  %5075 = vmatprep.mubr.f32.mxu0 0.0
  %5076 = vmatmul.mubr.f32.gmra.mxu0 %v4818
  %v5077 = vpop.f32.mrf.mxu0
  %v5078 = vadd.f32 0.0, %v5077
  %v5079 = vpop.f32.mrf.mxu0
  %5080 = vmatprep.mubr.f32.mxu0 0.0
  %5081 = vmatmul.mubr.f32.gmra.mxu0 %v4821
  %v5082 = vpop.f32.mrf.mxu0
  %v5083 = vadd.f32 0.0, %v5082
  %v5084 = vpop.f32.mrf.mxu0
  %5085 = vdwg.mxu0
  %s5086 = scalar_lea.vmem %s11, 72
  %v5087 = vld [vmem:[%s5086] sm:$0xff]
  %v5088 = vld [vmem:[%s5086 + $0x8] sm:$0xff]
  %v5089 = vld [vmem:[%s5086 + $0x10] sm:$0xff]
  %5090 = vmatprep.subr.mxu0 0.0
  %5091 = vmatpush1.msra.mxu0 0.0
  %5092 = vmatprep.subr.mxu0 0.0
  %5093 = vmatpush1.msra.mxu0 0.0
  %5094 = vmatprep.subr.mxu0 0.0
  %5095 = vmatpush1.msra.mxu0 0.0
  %5096 = vmatprep.subr.mxu0 0.0
  %5097 = vmatpush1.msra.mxu0 0.0
  %5098 = vmatprep.subr.mxu0 0.0
  %5099 = vmatpush1.msra.mxu0 0.0
  %5100 = vmatprep.subr.mxu0 0.0
  %5101 = vmatpush1.msra.mxu0 0.0
  %5102 = vmatprep.subr.mxu0 0.0
  %5103 = vmatpush1.msra.mxu0 0.0
  %5104 = vmatprep.subr.mxu0 0.0
  %5105 = vmatpush1.msra.mxu0 0.0
  %5106 = vmatprep.subr.mxu0 0.0
  %5107 = vmatpush1.msra.mxu0 0.0
  %5108 = vmatprep.subr.mxu0 0.0
  %5109 = vmatpush1.msra.mxu0 0.0
  %5110 = vmatprep.subr.mxu0 0.0
  %5111 = vmatpush1.msra.mxu0 0.0
  %5112 = vmatprep.subr.mxu0 0.0
  %5113 = vmatpush1.msra.mxu0 0.0
  %5114 = vmatprep.subr.mxu0 0.0
  %5115 = vmatpush1.msra.mxu0 0.0
  %5116 = vmatprep.subr.mxu0 0.0
  %5117 = vmatpush1.msra.mxu0 %v5089
  %5118 = vmatprep.subr.mxu0 0.0
  %5119 = vmatpush1.msra.mxu0 %v5088
  %5120 = vmatprep.subr.mxu0 0.0
  %5121 = vmatpush1.msra.mxu0 %v5087
  %5122 = vmatprep.subr.mxu0 0.0
  %5123 = vmatpush2.msra.mxu0 0.0
  %5124 = vmatprep.subr.mxu0 0.0
  %5125 = vmatpush2.msra.mxu0 0.0
  %5126 = vmatprep.subr.mxu0 0.0
  %5127 = vmatpush2.msra.mxu0 0.0
  %5128 = vmatprep.subr.mxu0 0.0
  %5129 = vmatpush2.msra.mxu0 0.0
  %5130 = vmatprep.subr.mxu0 0.0
  %5131 = vmatpush2.msra.mxu0 0.0
  %5132 = vmatprep.subr.mxu0 0.0
  %5133 = vmatpush2.msra.mxu0 0.0
  %5134 = vmatprep.subr.mxu0 0.0
  %5135 = vmatpush2.msra.mxu0 0.0
  %5136 = vmatprep.subr.mxu0 0.0
  %5137 = vmatpush2.msra.mxu0 0.0
  %5138 = vmatprep.subr.mxu0 0.0
  %5139 = vmatpush2.msra.mxu0 0.0
  %5140 = vmatprep.subr.mxu0 0.0
  %5141 = vmatpush2.msra.mxu0 0.0
  %5142 = vmatprep.subr.mxu0 0.0
  %5143 = vmatpush2.msra.mxu0 0.0
  %5144 = vmatprep.subr.mxu0 0.0
  %5145 = vmatpush2.msra.mxu0 0.0
  %5146 = vmatprep.subr.mxu0 0.0
  %5147 = vmatpush2.msra.mxu0 0.0
  %5148 = vmatprep.subr.mxu0 0.0
  %5149 = vmatpush2.msra.mxu0 0.0
  %5150 = vmatprep.subr.mxu0 0.0
  %5151 = vmatpush2.msra.mxu0 0.0
  %5152 = vmatprep.subr.mxu0 0.0
  %5153 = vmatpush2.msra.mxu0 0.0
  %5154 = vmatprep.mubr.f32.mxu0 0.0
  %5155 = vmatmul.mubr.f32.gmra.mxu0 %v4812
  %v5156 = vpop.f32.mrf.mxu0
  %v5157 = vadd.f32 0.0, %v5156
  %v5158 = vpop.f32.mrf.mxu0
  %5159 = vmatprep.mubr.f32.mxu0 0.0
  %5160 = vmatmul.mubr.f32.gmra.mxu0 %v4815
  %v5161 = vpop.f32.mrf.mxu0
  %v5162 = vadd.f32 0.0, %v5161
  %v5163 = vpop.f32.mrf.mxu0
  %5164 = vmatprep.mubr.f32.mxu0 0.0
  %5165 = vmatmul.mubr.f32.gmra.mxu0 %v4818
  %v5166 = vpop.f32.mrf.mxu0
  %v5167 = vadd.f32 0.0, %v5166
  %v5168 = vpop.f32.mrf.mxu0
  %5169 = vmatprep.mubr.f32.mxu0 0.0
  %5170 = vmatmul.mubr.f32.gmra.mxu0 %v4821
  %v5171 = vpop.f32.mrf.mxu0
  %v5172 = vadd.f32 0.0, %v5171
  %v5173 = vpop.f32.mrf.mxu0
  %5174 = vdwg.mxu0
  %s5175 = scalar_lea.vmem %s11, 96
  %v5176 = vld [vmem:[%s5175] sm:$0xff]
  %v5177 = vld [vmem:[%s5175 + $0x8] sm:$0xff]
  %v5178 = vld [vmem:[%s5175 + $0x10] sm:$0xff]
  %5179 = vmatprep.subr.mxu0 0.0
  %5180 = vmatpush1.msra.mxu0 0.0
  %5181 = vmatprep.subr.mxu0 0.0
  %5182 = vmatpush1.msra.mxu0 0.0
  %5183 = vmatprep.subr.mxu0 0.0
  %5184 = vmatpush1.msra.mxu0 0.0
  %5185 = vmatprep.subr.mxu0 0.0
  %5186 = vmatpush1.msra.mxu0 0.0
  %5187 = vmatprep.subr.mxu0 0.0
  %5188 = vmatpush1.msra.mxu0 0.0
  %5189 = vmatprep.subr.mxu0 0.0
  %5190 = vmatpush1.msra.mxu0 0.0
  %5191 = vmatprep.subr.mxu0 0.0
  %5192 = vmatpush1.msra.mxu0 0.0
  %5193 = vmatprep.subr.mxu0 0.0
  %5194 = vmatpush1.msra.mxu0 0.0
  %5195 = vmatprep.subr.mxu0 0.0
  %5196 = vmatpush1.msra.mxu0 0.0
  %5197 = vmatprep.subr.mxu0 0.0
  %5198 = vmatpush1.msra.mxu0 0.0
  %5199 = vmatprep.subr.mxu0 0.0
  %5200 = vmatpush1.msra.mxu0 0.0
  %5201 = vmatprep.subr.mxu0 0.0
  %5202 = vmatpush1.msra.mxu0 0.0
  %5203 = vmatprep.subr.mxu0 0.0
  %5204 = vmatpush1.msra.mxu0 0.0
  %5205 = vmatprep.subr.mxu0 0.0
  %5206 = vmatpush1.msra.mxu0 %v5178
  %5207 = vmatprep.subr.mxu0 0.0
  %5208 = vmatpush1.msra.mxu0 %v5177
  %5209 = vmatprep.subr.mxu0 0.0
  %5210 = vmatpush1.msra.mxu0 %v5176
  %5211 = vmatprep.subr.mxu0 0.0
  %5212 = vmatpush2.msra.mxu0 0.0
  %5213 = vmatprep.subr.mxu0 0.0
  %5214 = vmatpush2.msra.mxu0 0.0
  %5215 = vmatprep.subr.mxu0 0.0
  %5216 = vmatpush2.msra.mxu0 0.0
  %5217 = vmatprep.subr.mxu0 0.0
  %5218 = vmatpush2.msra.mxu0 0.0
  %5219 = vmatprep.subr.mxu0 0.0
  %5220 = vmatpush2.msra.mxu0 0.0
  %5221 = vmatprep.subr.mxu0 0.0
  %5222 = vmatpush2.msra.mxu0 0.0
  %5223 = vmatprep.subr.mxu0 0.0
  %5224 = vmatpush2.msra.mxu0 0.0
  %5225 = vmatprep.subr.mxu0 0.0
  %5226 = vmatpush2.msra.mxu0 0.0
  %5227 = vmatprep.subr.mxu0 0.0
  %5228 = vmatpush2.msra.mxu0 0.0
  %5229 = vmatprep.subr.mxu0 0.0
  %5230 = vmatpush2.msra.mxu0 0.0
  %5231 = vmatprep.subr.mxu0 0.0
  %5232 = vmatpush2.msra.mxu0 0.0
  %5233 = vmatprep.subr.mxu0 0.0
  %5234 = vmatpush2.msra.mxu0 0.0
  %5235 = vmatprep.subr.mxu0 0.0
  %5236 = vmatpush2.msra.mxu0 0.0
  %5237 = vmatprep.subr.mxu0 0.0
  %5238 = vmatpush2.msra.mxu0 0.0
  %5239 = vmatprep.subr.mxu0 0.0
  %5240 = vmatpush2.msra.mxu0 0.0
  %5241 = vmatprep.subr.mxu0 0.0
  %5242 = vmatpush2.msra.mxu0 0.0
  %5243 = vmatprep.mubr.f32.mxu0 0.0
  %5244 = vmatmul.mubr.f32.gmra.mxu0 %v4812
  %v5245 = vpop.f32.mrf.mxu0
  %v5246 = vadd.f32 0.0, %v5245
  %v5247 = vpop.f32.mrf.mxu0
  %5248 = vmatprep.mubr.f32.mxu0 0.0
  %5249 = vmatmul.mubr.f32.gmra.mxu0 %v4815
  %v5250 = vpop.f32.mrf.mxu0
  %v5251 = vadd.f32 0.0, %v5250
  %v5252 = vpop.f32.mrf.mxu0
  %5253 = vmatprep.mubr.f32.mxu0 0.0
  %5254 = vmatmul.mubr.f32.gmra.mxu0 %v4818
  %v5255 = vpop.f32.mrf.mxu0
  %v5256 = vadd.f32 0.0, %v5255
  %v5257 = vpop.f32.mrf.mxu0
  %5258 = vmatprep.mubr.f32.mxu0 0.0
  %5259 = vmatmul.mubr.f32.gmra.mxu0 %v4821
  %v5260 = vpop.f32.mrf.mxu0
  %v5261 = vadd.f32 0.0, %v5260
  %v5262 = vpop.f32.mrf.mxu0
  %5263 = vdwg.mxu0
  %s5264 = scalar_lea.vmem %s11, 120
  %v5265 = vld [vmem:[%s5264] sm:$0xff]
  %v5266 = vld [vmem:[%s5264 + $0x8] sm:$0xff]
  %v5267 = vld [vmem:[%s5264 + $0x10] sm:$0xff]
  %5268 = vmatprep.subr.mxu0 0.0
  %5269 = vmatpush1.msra.mxu0 0.0
  %5270 = vmatprep.subr.mxu0 0.0
  %5271 = vmatpush1.msra.mxu0 0.0
  %5272 = vmatprep.subr.mxu0 0.0
  %5273 = vmatpush1.msra.mxu0 0.0
  %5274 = vmatprep.subr.mxu0 0.0
  %5275 = vmatpush1.msra.mxu0 0.0
  %5276 = vmatprep.subr.mxu0 0.0
  %5277 = vmatpush1.msra.mxu0 0.0
  %5278 = vmatprep.subr.mxu0 0.0
  %5279 = vmatpush1.msra.mxu0 0.0
  %5280 = vmatprep.subr.mxu0 0.0
  %5281 = vmatpush1.msra.mxu0 0.0
  %5282 = vmatprep.subr.mxu0 0.0
  %5283 = vmatpush1.msra.mxu0 0.0
  %5284 = vmatprep.subr.mxu0 0.0
  %5285 = vmatpush1.msra.mxu0 0.0
  %5286 = vmatprep.subr.mxu0 0.0
  %5287 = vmatpush1.msra.mxu0 0.0
  %5288 = vmatprep.subr.mxu0 0.0
  %5289 = vmatpush1.msra.mxu0 0.0
  %5290 = vmatprep.subr.mxu0 0.0
  %5291 = vmatpush1.msra.mxu0 0.0
  %5292 = vmatprep.subr.mxu0 0.0
  %5293 = vmatpush1.msra.mxu0 0.0
  %5294 = vmatprep.subr.mxu0 0.0
  %5295 = vmatpush1.msra.mxu0 %v5267
  %5296 = vmatprep.subr.mxu0 0.0
  %5297 = vmatpush1.msra.mxu0 %v5266
  %5298 = vmatprep.subr.mxu0 0.0
  %5299 = vmatpush1.msra.mxu0 %v5265
  %5300 = vmatprep.subr.mxu0 0.0
  %5301 = vmatpush2.msra.mxu0 0.0
  %5302 = vmatprep.subr.mxu0 0.0
  %5303 = vmatpush2.msra.mxu0 0.0
  %5304 = vmatprep.subr.mxu0 0.0
  %5305 = vmatpush2.msra.mxu0 0.0
  %5306 = vmatprep.subr.mxu0 0.0
  %5307 = vmatpush2.msra.mxu0 0.0
  %5308 = vmatprep.subr.mxu0 0.0
  %5309 = vmatpush2.msra.mxu0 0.0
  %5310 = vmatprep.subr.mxu0 0.0
  %5311 = vmatpush2.msra.mxu0 0.0
  %5312 = vmatprep.subr.mxu0 0.0
  %5313 = vmatpush2.msra.mxu0 0.0
  %5314 = vmatprep.subr.mxu0 0.0
  %5315 = vmatpush2.msra.mxu0 0.0
  %5316 = vmatprep.subr.mxu0 0.0
  %5317 = vmatpush2.msra.mxu0 0.0
  %5318 = vmatprep.subr.mxu0 0.0
  %5319 = vmatpush2.msra.mxu0 0.0
  %5320 = vmatprep.subr.mxu0 0.0
  %5321 = vmatpush2.msra.mxu0 0.0
  %5322 = vmatprep.subr.mxu0 0.0
  %5323 = vmatpush2.msra.mxu0 0.0
  %5324 = vmatprep.subr.mxu0 0.0
  %5325 = vmatpush2.msra.mxu0 0.0
  %5326 = vmatprep.subr.mxu0 0.0
  %5327 = vmatpush2.msra.mxu0 0.0
  %5328 = vmatprep.subr.mxu0 0.0
  %5329 = vmatpush2.msra.mxu0 0.0
  %5330 = vmatprep.subr.mxu0 0.0
  %5331 = vmatpush2.msra.mxu0 0.0
  %5332 = vmatprep.mubr.f32.mxu0 0.0
  %5333 = vmatmul.mubr.f32.gmra.mxu0 %v4812
  %v5334 = vpop.f32.mrf.mxu0
  %v5335 = vadd.f32 0.0, %v5334
  %v5336 = vpop.f32.mrf.mxu0
  %5337 = vmatprep.mubr.f32.mxu0 0.0
  %5338 = vmatmul.mubr.f32.gmra.mxu0 %v4815
  %v5339 = vpop.f32.mrf.mxu0
  %v5340 = vadd.f32 0.0, %v5339
  %v5341 = vpop.f32.mrf.mxu0
  %5342 = vmatprep.mubr.f32.mxu0 0.0
  %5343 = vmatmul.mubr.f32.gmra.mxu0 %v4818
  %v5344 = vpop.f32.mrf.mxu0
  %v5345 = vadd.f32 0.0, %v5344
  %v5346 = vpop.f32.mrf.mxu0
  %5347 = vmatprep.mubr.f32.mxu0 0.0
  %5348 = vmatmul.mubr.f32.gmra.mxu0 %v4821
  %v5349 = vpop.f32.mrf.mxu0
  %v5350 = vadd.f32 0.0, %v5349
  %v5351 = vpop.f32.mrf.mxu0
  %5352 = vdwg.mxu0
  %v5353 = vld [vmem:[%s9] sm:$0xff]
  %v5354 = vld [vmem:[%s9 + $0x8] sm:$0xff]
  %v5355 = vld [vmem:[%s9 + $0x10] sm:$0xff]
  %v5356 = vld [vmem:[%s9 + $0x18] sm:$0xff]
  %v5357 = vld [vmem:[%s9 + $0x20] sm:$0xff]
  %v5358 = vld [vmem:[%s9 + $0x28] sm:$0xff]
  %v5359 = vld [vmem:[%s9 + $0x30] sm:$0xff]
  %v5360 = vld [vmem:[%s9 + $0x38] sm:$0xff]
  %s5361 = scalar_lea.vmem %s9, 64
  %v5362 = vld [vmem:[%s5361] sm:$0xff]
  %v5363 = vld [vmem:[%s5361 + $0x8] sm:$0xff]
  %v5364 = vld [vmem:[%s5361 + $0x10] sm:$0xff]
  %v5365 = vld [vmem:[%s5361 + $0x18] sm:$0xff]
  %v5366 = vld [vmem:[%s5361 + $0x20] sm:$0xff]
  %v5367 = vld [vmem:[%s5361 + $0x28] sm:$0xff]
  %v5368 = vld [vmem:[%s5361 + $0x30] sm:$0xff]
  %v5369 = vld [vmem:[%s5361 + $0x38] sm:$0xff]
  %vm5370 = vcmask 261120
  %v5372 = vsel %vm5370, %v5362, 0
  %v5375 = vsel %vm5370, %v5363, 0
  %v5378 = vsel %vm5370, %v5364, 0
  %v5381 = vsel %vm5370, %v5365, 0
  %v5384 = vsel %vm5370, %v5366, 0
  %v5387 = vsel %vm5370, %v5367, 0
  %v5390 = vsel %vm5370, %v5368, 0
  %v5393 = vsel %vm5370, %v5369, 0
  %5395 = vmatprep.subr.mxu0 0.0
  %5396 = vmatpush1.msra.mxu0 0.0
  %5397 = vmatprep.subr.mxu0 0.0
  %5398 = vmatpush1.msra.mxu0 0.0
  %5399 = vmatprep.subr.mxu0 0.0
  %5400 = vmatpush1.msra.mxu0 0.0
  %5401 = vmatprep.subr.mxu0 0.0
  %5402 = vmatpush1.msra.mxu0 0.0
  %5403 = vmatprep.subr.mxu0 0.0
  %5404 = vmatpush1.msra.mxu0 0.0
  %5405 = vmatprep.subr.mxu0 0.0
  %5406 = vmatpush1.msra.mxu0 0.0
  %5407 = vmatprep.subr.mxu0 0.0
  %5408 = vmatpush1.msra.mxu0 0.0
  %5409 = vmatprep.subr.mxu0 0.0
  %5410 = vmatpush1.msra.mxu0 0.0
  %5411 = vmatprep.subr.mxu0 0.0
  %5412 = vmatpush1.msra.mxu0 0.0
  %5413 = vmatprep.subr.mxu0 0.0
  %5414 = vmatpush1.msra.mxu0 0.0
  %5415 = vmatprep.subr.mxu0 0.0
  %5416 = vmatpush1.msra.mxu0 0.0
  %5417 = vmatprep.subr.mxu0 0.0
  %5418 = vmatpush1.msra.mxu0 0.0
  %5419 = vmatprep.subr.mxu0 0.0
  %5420 = vmatpush1.msra.mxu0 %v4994
  %5421 = vmatprep.subr.mxu0 0.0
  %5422 = vmatpush1.msra.mxu0 %v4989
  %5423 = vmatprep.subr.mxu0 0.0
  %5424 = vmatpush1.msra.mxu0 %v4984
  %5425 = vmatprep.subr.mxu0 0.0
  %5426 = vmatpush1.msra.mxu0 %v4979
  %5427 = vmatprep.subr.mxu0 0.0
  %5428 = vmatpush2.msra.mxu0 0.0
  %5429 = vmatprep.subr.mxu0 0.0
  %5430 = vmatpush2.msra.mxu0 0.0
  %5431 = vmatprep.subr.mxu0 0.0
  %5432 = vmatpush2.msra.mxu0 0.0
  %5433 = vmatprep.subr.mxu0 0.0
  %5434 = vmatpush2.msra.mxu0 0.0
  %5435 = vmatprep.subr.mxu0 0.0
  %5436 = vmatpush2.msra.mxu0 0.0
  %5437 = vmatprep.subr.mxu0 0.0
  %5438 = vmatpush2.msra.mxu0 0.0
  %5439 = vmatprep.subr.mxu0 0.0
  %5440 = vmatpush2.msra.mxu0 0.0
  %5441 = vmatprep.subr.mxu0 0.0
  %5442 = vmatpush2.msra.mxu0 0.0
  %5443 = vmatprep.subr.mxu0 0.0
  %5444 = vmatpush2.msra.mxu0 0.0
  %5445 = vmatprep.subr.mxu0 0.0
  %5446 = vmatpush2.msra.mxu0 0.0
  %5447 = vmatprep.subr.mxu0 0.0
  %5448 = vmatpush2.msra.mxu0 0.0
  %5449 = vmatprep.subr.mxu0 0.0
  %5450 = vmatpush2.msra.mxu0 0.0
  %5451 = vmatprep.subr.mxu0 0.0
  %5452 = vmatpush2.msra.mxu0 0.0
  %5453 = vmatprep.subr.mxu0 0.0
  %5454 = vmatpush2.msra.mxu0 0.0
  %5455 = vmatprep.subr.mxu0 0.0
  %5456 = vmatpush2.msra.mxu0 0.0
  %5457 = vmatprep.subr.mxu0 0.0
  %5458 = vmatpush2.msra.mxu0 0.0
  %5459 = vmatprep.mubr.f32.mxu0 0.0
  %5460 = vmatmul.mubr.f32.gmra.mxu0 %v5372
  %v5461 = vpop.f32.mrf.mxu0
  %v5462 = vadd.f32 0.0, %v5461
  %v5463 = vpop.f32.mrf.mxu0
  %5464 = vmatprep.mubr.f32.mxu0 0.0
  %5465 = vmatmul.mubr.f32.gmra.mxu0 %v5375
  %v5466 = vpop.f32.mrf.mxu0
  %v5467 = vadd.f32 0.0, %v5466
  %v5468 = vpop.f32.mrf.mxu0
  %5469 = vmatprep.mubr.f32.mxu0 0.0
  %5470 = vmatmul.mubr.f32.gmra.mxu0 %v5378
  %v5471 = vpop.f32.mrf.mxu0
  %v5472 = vadd.f32 0.0, %v5471
  %v5473 = vpop.f32.mrf.mxu0
  %5474 = vmatprep.mubr.f32.mxu0 0.0
  %5475 = vmatmul.mubr.f32.gmra.mxu0 %v5381
  %v5476 = vpop.f32.mrf.mxu0
  %v5477 = vadd.f32 0.0, %v5476
  %v5478 = vpop.f32.mrf.mxu0
  %5479 = vmatprep.mubr.f32.mxu0 0.0
  %5480 = vmatmul.mubr.f32.gmra.mxu0 %v5384
  %v5481 = vpop.f32.mrf.mxu0
  %v5482 = vadd.f32 0.0, %v5481
  %v5483 = vpop.f32.mrf.mxu0
  %5484 = vmatprep.mubr.f32.mxu0 0.0
  %5485 = vmatmul.mubr.f32.gmra.mxu0 %v5387
  %v5486 = vpop.f32.mrf.mxu0
  %v5487 = vadd.f32 0.0, %v5486
  %v5488 = vpop.f32.mrf.mxu0
  %5489 = vmatprep.mubr.f32.mxu0 0.0
  %5490 = vmatmul.mubr.f32.gmra.mxu0 %v5390
  %v5491 = vpop.f32.mrf.mxu0
  %v5492 = vadd.f32 0.0, %v5491
  %v5493 = vpop.f32.mrf.mxu0
  %5494 = vmatprep.mubr.f32.mxu0 0.0
  %5495 = vmatmul.mubr.f32.gmra.mxu0 %v5393
  %v5496 = vpop.f32.mrf.mxu0
  %v5497 = vadd.f32 0.0, %v5496
  %v5498 = vpop.f32.mrf.mxu0
  %5499 = vdwg.mxu0
  %v5501 = vsel %vm5370, %v5353, 0
  %v5504 = vsel %vm5370, %v5354, 0
  %v5507 = vsel %vm5370, %v5355, 0
  %v5510 = vsel %vm5370, %v5356, 0
  %v5513 = vsel %vm5370, %v5357, 0
  %v5516 = vsel %vm5370, %v5358, 0
  %v5519 = vsel %vm5370, %v5359, 0
  %v5522 = vsel %vm5370, %v5360, 0
  %5524 = vmatprep.subr.mxu0 0.0
  %5525 = vmatpush1.msra.mxu0 0.0
  %5526 = vmatprep.subr.mxu0 0.0
  %5527 = vmatpush1.msra.mxu0 0.0
  %5528 = vmatprep.subr.mxu0 0.0
  %5529 = vmatpush1.msra.mxu0 0.0
  %5530 = vmatprep.subr.mxu0 0.0
  %5531 = vmatpush1.msra.mxu0 0.0
  %5532 = vmatprep.subr.mxu0 0.0
  %5533 = vmatpush1.msra.mxu0 0.0
  %5534 = vmatprep.subr.mxu0 0.0
  %5535 = vmatpush1.msra.mxu0 0.0
  %5536 = vmatprep.subr.mxu0 0.0
  %5537 = vmatpush1.msra.mxu0 0.0
  %5538 = vmatprep.subr.mxu0 0.0
  %5539 = vmatpush1.msra.mxu0 0.0
  %5540 = vmatprep.subr.mxu0 0.0
  %5541 = vmatpush1.msra.mxu0 0.0
  %5542 = vmatprep.subr.mxu0 0.0
  %5543 = vmatpush1.msra.mxu0 0.0
  %5544 = vmatprep.subr.mxu0 0.0
  %5545 = vmatpush1.msra.mxu0 0.0
  %5546 = vmatprep.subr.mxu0 0.0
  %5547 = vmatpush1.msra.mxu0 0.0
  %5548 = vmatprep.subr.mxu0 0.0
  %5549 = vmatpush1.msra.mxu0 %v4905
  %5550 = vmatprep.subr.mxu0 0.0
  %5551 = vmatpush1.msra.mxu0 %v4900
  %5552 = vmatprep.subr.mxu0 0.0
  %5553 = vmatpush1.msra.mxu0 %v4895
  %5554 = vmatprep.subr.mxu0 0.0
  %5555 = vmatpush1.msra.mxu0 %v4890
  %5556 = vmatprep.subr.mxu0 0.0
  %5557 = vmatpush2.msra.mxu0 0.0
  %5558 = vmatprep.subr.mxu0 0.0
  %5559 = vmatpush2.msra.mxu0 0.0
  %5560 = vmatprep.subr.mxu0 0.0
  %5561 = vmatpush2.msra.mxu0 0.0
  %5562 = vmatprep.subr.mxu0 0.0
  %5563 = vmatpush2.msra.mxu0 0.0
  %5564 = vmatprep.subr.mxu0 0.0
  %5565 = vmatpush2.msra.mxu0 0.0
  %5566 = vmatprep.subr.mxu0 0.0
  %5567 = vmatpush2.msra.mxu0 0.0
  %5568 = vmatprep.subr.mxu0 0.0
  %5569 = vmatpush2.msra.mxu0 0.0
  %5570 = vmatprep.subr.mxu0 0.0
  %5571 = vmatpush2.msra.mxu0 0.0
  %5572 = vmatprep.subr.mxu0 0.0
  %5573 = vmatpush2.msra.mxu0 0.0
  %5574 = vmatprep.subr.mxu0 0.0
  %5575 = vmatpush2.msra.mxu0 0.0
  %5576 = vmatprep.subr.mxu0 0.0
  %5577 = vmatpush2.msra.mxu0 0.0
  %5578 = vmatprep.subr.mxu0 0.0
  %5579 = vmatpush2.msra.mxu0 0.0
  %5580 = vmatprep.subr.mxu0 0.0
  %5581 = vmatpush2.msra.mxu0 0.0
  %5582 = vmatprep.subr.mxu0 0.0
  %5583 = vmatpush2.msra.mxu0 0.0
  %5584 = vmatprep.subr.mxu0 0.0
  %5585 = vmatpush2.msra.mxu0 0.0
  %5586 = vmatprep.subr.mxu0 0.0
  %5587 = vmatpush2.msra.mxu0 0.0
  %5588 = vmatprep.mubr.f32.mxu0 0.0
  %5589 = vmatmul.mubr.f32.gmra.mxu0 %v5501
  %v5590 = vpop.f32.mrf.mxu0
  %v5591 = vadd.f32 %v5462, %v5590
  %v5592 = vpop.f32.mrf.mxu0
  %5593 = vmatprep.mubr.f32.mxu0 0.0
  %5594 = vmatmul.mubr.f32.gmra.mxu0 %v5504
  %v5595 = vpop.f32.mrf.mxu0
  %v5596 = vadd.f32 %v5467, %v5595
  %v5597 = vpop.f32.mrf.mxu0
  %5598 = vmatprep.mubr.f32.mxu0 0.0
  %5599 = vmatmul.mubr.f32.gmra.mxu0 %v5507
  %v5600 = vpop.f32.mrf.mxu0
  %v5601 = vadd.f32 %v5472, %v5600
  %v5602 = vpop.f32.mrf.mxu0
  %5603 = vmatprep.mubr.f32.mxu0 0.0
  %5604 = vmatmul.mubr.f32.gmra.mxu0 %v5510
  %v5605 = vpop.f32.mrf.mxu0
  %v5606 = vadd.f32 %v5477, %v5605
  %v5607 = vpop.f32.mrf.mxu0
  %5608 = vmatprep.mubr.f32.mxu0 0.0
  %5609 = vmatmul.mubr.f32.gmra.mxu0 %v5513
  %v5610 = vpop.f32.mrf.mxu0
  %v5611 = vadd.f32 %v5482, %v5610
  %v5612 = vpop.f32.mrf.mxu0
  %5613 = vmatprep.mubr.f32.mxu0 0.0
  %5614 = vmatmul.mubr.f32.gmra.mxu0 %v5516
  %v5615 = vpop.f32.mrf.mxu0
  %v5616 = vadd.f32 %v5487, %v5615
  %v5617 = vpop.f32.mrf.mxu0
  %5618 = vmatprep.mubr.f32.mxu0 0.0
  %5619 = vmatmul.mubr.f32.gmra.mxu0 %v5519
  %v5620 = vpop.f32.mrf.mxu0
  %v5621 = vadd.f32 %v5492, %v5620
  %v5622 = vpop.f32.mrf.mxu0
  %5623 = vmatprep.mubr.f32.mxu0 0.0
  %5624 = vmatmul.mubr.f32.gmra.mxu0 %v5522
  %v5625 = vpop.f32.mrf.mxu0
  %v5626 = vadd.f32 %v5497, %v5625
  %v5627 = vpop.f32.mrf.mxu0
  %5628 = vdwg.mxu0
  %s5629 = scalar_lea.vmem %s9, 128
  %v5630 = vld [vmem:[%s5629] sm:$0xff]
  %v5631 = vld [vmem:[%s5629 + $0x8] sm:$0xff]
  %v5632 = vld [vmem:[%s5629 + $0x10] sm:$0xff]
  %v5633 = vld [vmem:[%s5629 + $0x18] sm:$0xff]
  %v5634 = vld [vmem:[%s5629 + $0x20] sm:$0xff]
  %v5635 = vld [vmem:[%s5629 + $0x28] sm:$0xff]
  %v5636 = vld [vmem:[%s5629 + $0x30] sm:$0xff]
  %v5637 = vld [vmem:[%s5629 + $0x38] sm:$0xff]
  %v5639 = vsel %vm5370, %v5630, 0
  %v5642 = vsel %vm5370, %v5631, 0
  %v5645 = vsel %vm5370, %v5632, 0
  %v5648 = vsel %vm5370, %v5633, 0
  %v5651 = vsel %vm5370, %v5634, 0
  %v5654 = vsel %vm5370, %v5635, 0
  %v5657 = vsel %vm5370, %v5636, 0
  %v5660 = vsel %vm5370, %v5637, 0
  %5662 = vmatprep.subr.mxu0 0.0
  %5663 = vmatpush1.msra.mxu0 0.0
  %5664 = vmatprep.subr.mxu0 0.0
  %5665 = vmatpush1.msra.mxu0 0.0
  %5666 = vmatprep.subr.mxu0 0.0
  %5667 = vmatpush1.msra.mxu0 0.0
  %5668 = vmatprep.subr.mxu0 0.0
  %5669 = vmatpush1.msra.mxu0 0.0
  %5670 = vmatprep.subr.mxu0 0.0
  %5671 = vmatpush1.msra.mxu0 0.0
  %5672 = vmatprep.subr.mxu0 0.0
  %5673 = vmatpush1.msra.mxu0 0.0
  %5674 = vmatprep.subr.mxu0 0.0
  %5675 = vmatpush1.msra.mxu0 0.0
  %5676 = vmatprep.subr.mxu0 0.0
  %5677 = vmatpush1.msra.mxu0 0.0
  %5678 = vmatprep.subr.mxu0 0.0
  %5679 = vmatpush1.msra.mxu0 0.0
  %5680 = vmatprep.subr.mxu0 0.0
  %5681 = vmatpush1.msra.mxu0 0.0
  %5682 = vmatprep.subr.mxu0 0.0
  %5683 = vmatpush1.msra.mxu0 0.0
  %5684 = vmatprep.subr.mxu0 0.0
  %5685 = vmatpush1.msra.mxu0 0.0
  %5686 = vmatprep.subr.mxu0 0.0
  %5687 = vmatpush1.msra.mxu0 %v5083
  %5688 = vmatprep.subr.mxu0 0.0
  %5689 = vmatpush1.msra.mxu0 %v5078
  %5690 = vmatprep.subr.mxu0 0.0
  %5691 = vmatpush1.msra.mxu0 %v5073
  %5692 = vmatprep.subr.mxu0 0.0
  %5693 = vmatpush1.msra.mxu0 %v5068
  %5694 = vmatprep.subr.mxu0 0.0
  %5695 = vmatpush2.msra.mxu0 0.0
  %5696 = vmatprep.subr.mxu0 0.0
  %5697 = vmatpush2.msra.mxu0 0.0
  %5698 = vmatprep.subr.mxu0 0.0
  %5699 = vmatpush2.msra.mxu0 0.0
  %5700 = vmatprep.subr.mxu0 0.0
  %5701 = vmatpush2.msra.mxu0 0.0
  %5702 = vmatprep.subr.mxu0 0.0
  %5703 = vmatpush2.msra.mxu0 0.0
  %5704 = vmatprep.subr.mxu0 0.0
  %5705 = vmatpush2.msra.mxu0 0.0
  %5706 = vmatprep.subr.mxu0 0.0
  %5707 = vmatpush2.msra.mxu0 0.0
  %5708 = vmatprep.subr.mxu0 0.0
  %5709 = vmatpush2.msra.mxu0 0.0
  %5710 = vmatprep.subr.mxu0 0.0
  %5711 = vmatpush2.msra.mxu0 0.0
  %5712 = vmatprep.subr.mxu0 0.0
  %5713 = vmatpush2.msra.mxu0 0.0
  %5714 = vmatprep.subr.mxu0 0.0
  %5715 = vmatpush2.msra.mxu0 0.0
  %5716 = vmatprep.subr.mxu0 0.0
  %5717 = vmatpush2.msra.mxu0 0.0
  %5718 = vmatprep.subr.mxu0 0.0
  %5719 = vmatpush2.msra.mxu0 0.0
  %5720 = vmatprep.subr.mxu0 0.0
  %5721 = vmatpush2.msra.mxu0 0.0
  %5722 = vmatprep.subr.mxu0 0.0
  %5723 = vmatpush2.msra.mxu0 0.0
  %5724 = vmatprep.subr.mxu0 0.0
  %5725 = vmatpush2.msra.mxu0 0.0
  %5726 = vmatprep.mubr.f32.mxu0 0.0
  %5727 = vmatmul.mubr.f32.gmra.mxu0 %v5639
  %v5728 = vpop.f32.mrf.mxu0
  %v5729 = vadd.f32 0.0, %v5728
  %v5730 = vpop.f32.mrf.mxu0
  %5731 = vmatprep.mubr.f32.mxu0 0.0
  %5732 = vmatmul.mubr.f32.gmra.mxu0 %v5642
  %v5733 = vpop.f32.mrf.mxu0
  %v5734 = vadd.f32 0.0, %v5733
  %v5735 = vpop.f32.mrf.mxu0
  %5736 = vmatprep.mubr.f32.mxu0 0.0
  %5737 = vmatmul.mubr.f32.gmra.mxu0 %v5645
  %v5738 = vpop.f32.mrf.mxu0
  %v5739 = vadd.f32 0.0, %v5738
  %v5740 = vpop.f32.mrf.mxu0
  %5741 = vmatprep.mubr.f32.mxu0 0.0
  %5742 = vmatmul.mubr.f32.gmra.mxu0 %v5648
  %v5743 = vpop.f32.mrf.mxu0
  %v5744 = vadd.f32 0.0, %v5743
  %v5745 = vpop.f32.mrf.mxu0
  %5746 = vmatprep.mubr.f32.mxu0 0.0
  %5747 = vmatmul.mubr.f32.gmra.mxu0 %v5651
  %v5748 = vpop.f32.mrf.mxu0
  %v5749 = vadd.f32 0.0, %v5748
  %v5750 = vpop.f32.mrf.mxu0
  %5751 = vmatprep.mubr.f32.mxu0 0.0
  %5752 = vmatmul.mubr.f32.gmra.mxu0 %v5654
  %v5753 = vpop.f32.mrf.mxu0
  %v5754 = vadd.f32 0.0, %v5753
  %v5755 = vpop.f32.mrf.mxu0
  %5756 = vmatprep.mubr.f32.mxu0 0.0
  %5757 = vmatmul.mubr.f32.gmra.mxu0 %v5657
  %v5758 = vpop.f32.mrf.mxu0
  %v5759 = vadd.f32 0.0, %v5758
  %v5760 = vpop.f32.mrf.mxu0
  %5761 = vmatprep.mubr.f32.mxu0 0.0
  %5762 = vmatmul.mubr.f32.gmra.mxu0 %v5660
  %v5763 = vpop.f32.mrf.mxu0
  %v5764 = vadd.f32 0.0, %v5763
  %v5765 = vpop.f32.mrf.mxu0
  %5766 = vdwg.mxu0
  %v5767 = vadd.f32 %v5591, %v5729
  %v5768 = vadd.f32 %v5596, %v5734
  %v5769 = vadd.f32 %v5601, %v5739
  %v5770 = vadd.f32 %v5606, %v5744
  %v5771 = vadd.f32 %v5611, %v5749
  %v5772 = vadd.f32 %v5616, %v5754
  %v5773 = vadd.f32 %v5621, %v5759
  %v5774 = vadd.f32 %v5626, %v5764
  %5776 = vset.pattern.permute.xlu0 0
  %5777 = vperm.xlu0 %5776, %v4799
  %v5778 = vpop.permute.xlu0 %5777
  %5781 = vset.pattern.permute.xlu0 0
  %5782 = vperm.xlu0 %5781, %v4800
  %v5783 = vpop.permute.xlu0 %5782
  %5786 = vset.pattern.permute.xlu0 0
  %5787 = vperm.xlu0 %5786, %v4801
  %v5788 = vpop.permute.xlu0 %5787
  %5791 = vset.pattern.permute.xlu0 0
  %5792 = vperm.xlu0 %5791, %v4802
  %v5793 = vpop.permute.xlu0 %5792
  %5796 = vset.pattern.permute.xlu0 0
  %5797 = vperm.xlu0 %5796, %v4803
  %v5798 = vpop.permute.xlu0 %5797
  %5801 = vset.pattern.permute.xlu0 0
  %5802 = vperm.xlu0 %5801, %v4804
  %v5803 = vpop.permute.xlu0 %5802
  %5806 = vset.pattern.permute.xlu0 0
  %5807 = vperm.xlu0 %5806, %v4805
  %v5808 = vpop.permute.xlu0 %5807
  %5811 = vset.pattern.permute.xlu0 0
  %5812 = vperm.xlu0 %5811, %v4806
  %v5813 = vpop.permute.xlu0 %5812
  %v5815 = vadd.f32 %v5767, %v5778
  %v5816 = vadd.f32 %v5768, %v5783
  %v5817 = vadd.f32 %v5769, %v5788
  %v5818 = vadd.f32 %v5770, %v5793
  %v5819 = vadd.f32 %v5771, %v5798
  %v5820 = vadd.f32 %v5772, %v5803
  %v5821 = vadd.f32 %v5773, %v5808
  %v5822 = vadd.f32 %v5774, %v5813
  %v5823 = vmax.f32 %v5815, 0.0
  %v5824 = vmax.f32 %v5816, 0.0
  %v5825 = vmax.f32 %v5817, 0.0
  %v5826 = vmax.f32 %v5818, 0.0
  %v5827 = vmax.f32 %v5819, 0.0
  %v5828 = vmax.f32 %v5820, 0.0
  %v5829 = vmax.f32 %v5821, 0.0
  %v5830 = vmax.f32 %v5822, 0.0
  %5831 = vmatprep.subr.mxu0 0.0
  %5832 = vmatpush1.msra.mxu0 0.0
  %5833 = vmatprep.subr.mxu0 0.0
  %5834 = vmatpush1.msra.mxu0 0.0
  %5835 = vmatprep.subr.mxu0 0.0
  %5836 = vmatpush1.msra.mxu0 0.0
  %5837 = vmatprep.subr.mxu0 0.0
  %5838 = vmatpush1.msra.mxu0 0.0
  %5839 = vmatprep.subr.mxu0 0.0
  %5840 = vmatpush1.msra.mxu0 0.0
  %5841 = vmatprep.subr.mxu0 0.0
  %5842 = vmatpush1.msra.mxu0 0.0
  %5843 = vmatprep.subr.mxu0 0.0
  %5844 = vmatpush1.msra.mxu0 0.0
  %5845 = vmatprep.subr.mxu0 0.0
  %5846 = vmatpush1.msra.mxu0 0.0
  %5847 = vmatprep.subr.mxu0 0.0
  %5848 = vmatpush1.msra.mxu0 0.0
  %5849 = vmatprep.subr.mxu0 0.0
  %5850 = vmatpush1.msra.mxu0 0.0
  %5851 = vmatprep.subr.mxu0 0.0
  %5852 = vmatpush1.msra.mxu0 0.0
  %5853 = vmatprep.subr.mxu0 0.0
  %5854 = vmatpush1.msra.mxu0 0.0
  %5855 = vmatprep.subr.mxu0 0.0
  %5856 = vmatpush1.msra.mxu0 %v5083
  %5857 = vmatprep.subr.mxu0 0.0
  %5858 = vmatpush1.msra.mxu0 %v5078
  %5859 = vmatprep.subr.mxu0 0.0
  %5860 = vmatpush1.msra.mxu0 %v5073
  %5861 = vmatprep.subr.mxu0 0.0
  %5862 = vmatpush1.msra.mxu0 %v5068
  %5863 = vmatprep.subr.mxu0 0.0
  %5864 = vmatpush2.msra.mxu0 0.0
  %5865 = vmatprep.subr.mxu0 0.0
  %5866 = vmatpush2.msra.mxu0 0.0
  %5867 = vmatprep.subr.mxu0 0.0
  %5868 = vmatpush2.msra.mxu0 0.0
  %5869 = vmatprep.subr.mxu0 0.0
  %5870 = vmatpush2.msra.mxu0 0.0
  %5871 = vmatprep.subr.mxu0 0.0
  %5872 = vmatpush2.msra.mxu0 0.0
  %5873 = vmatprep.subr.mxu0 0.0
  %5874 = vmatpush2.msra.mxu0 0.0
  %5875 = vmatprep.subr.mxu0 0.0
  %5876 = vmatpush2.msra.mxu0 0.0
  %5877 = vmatprep.subr.mxu0 0.0
  %5878 = vmatpush2.msra.mxu0 0.0
  %5879 = vmatprep.subr.mxu0 0.0
  %5880 = vmatpush2.msra.mxu0 0.0
  %5881 = vmatprep.subr.mxu0 0.0
  %5882 = vmatpush2.msra.mxu0 0.0
  %5883 = vmatprep.subr.mxu0 0.0
  %5884 = vmatpush2.msra.mxu0 0.0
  %5885 = vmatprep.subr.mxu0 0.0
  %5886 = vmatpush2.msra.mxu0 0.0
  %5887 = vmatprep.subr.mxu0 0.0
  %5888 = vmatpush2.msra.mxu0 0.0
  %5889 = vmatprep.subr.mxu0 0.0
  %5890 = vmatpush2.msra.mxu0 0.0
  %5891 = vmatprep.subr.mxu0 0.0
  %5892 = vmatpush2.msra.mxu0 0.0
  %5893 = vmatprep.subr.mxu0 0.0
  %5894 = vmatpush2.msra.mxu0 0.0
  %5895 = vmatprep.mubr.f32.mxu0 0.0
  %5896 = vmatmul.mubr.f32.gmra.mxu0 %v5372
  %v5897 = vpop.f32.mrf.mxu0
  %v5898 = vadd.f32 0.0, %v5897
  %v5899 = vpop.f32.mrf.mxu0
  %5900 = vmatprep.mubr.f32.mxu0 0.0
  %5901 = vmatmul.mubr.f32.gmra.mxu0 %v5375
  %v5902 = vpop.f32.mrf.mxu0
  %v5903 = vadd.f32 0.0, %v5902
  %v5904 = vpop.f32.mrf.mxu0
  %5905 = vmatprep.mubr.f32.mxu0 0.0
  %5906 = vmatmul.mubr.f32.gmra.mxu0 %v5378
  %v5907 = vpop.f32.mrf.mxu0
  %v5908 = vadd.f32 0.0, %v5907
  %v5909 = vpop.f32.mrf.mxu0
  %5910 = vmatprep.mubr.f32.mxu0 0.0
  %5911 = vmatmul.mubr.f32.gmra.mxu0 %v5381
  %v5912 = vpop.f32.mrf.mxu0
  %v5913 = vadd.f32 0.0, %v5912
  %v5914 = vpop.f32.mrf.mxu0
  %5915 = vmatprep.mubr.f32.mxu0 0.0
  %5916 = vmatmul.mubr.f32.gmra.mxu0 %v5384
  %v5917 = vpop.f32.mrf.mxu0
  %v5918 = vadd.f32 0.0, %v5917
  %v5919 = vpop.f32.mrf.mxu0
  %5920 = vmatprep.mubr.f32.mxu0 0.0
  %5921 = vmatmul.mubr.f32.gmra.mxu0 %v5387
  %v5922 = vpop.f32.mrf.mxu0
  %v5923 = vadd.f32 0.0, %v5922
  %v5924 = vpop.f32.mrf.mxu0
  %5925 = vmatprep.mubr.f32.mxu0 0.0
  %5926 = vmatmul.mubr.f32.gmra.mxu0 %v5390
  %v5927 = vpop.f32.mrf.mxu0
  %v5928 = vadd.f32 0.0, %v5927
  %v5929 = vpop.f32.mrf.mxu0
  %5930 = vmatprep.mubr.f32.mxu0 0.0
  %5931 = vmatmul.mubr.f32.gmra.mxu0 %v5393
  %v5932 = vpop.f32.mrf.mxu0
  %v5933 = vadd.f32 0.0, %v5932
  %v5934 = vpop.f32.mrf.mxu0
  %5935 = vdwg.mxu0
  %5936 = vmatprep.subr.mxu0 0.0
  %5937 = vmatpush1.msra.mxu0 0.0
  %5938 = vmatprep.subr.mxu0 0.0
  %5939 = vmatpush1.msra.mxu0 0.0
  %5940 = vmatprep.subr.mxu0 0.0
  %5941 = vmatpush1.msra.mxu0 0.0
  %5942 = vmatprep.subr.mxu0 0.0
  %5943 = vmatpush1.msra.mxu0 0.0
  %5944 = vmatprep.subr.mxu0 0.0
  %5945 = vmatpush1.msra.mxu0 0.0
  %5946 = vmatprep.subr.mxu0 0.0
  %5947 = vmatpush1.msra.mxu0 0.0
  %5948 = vmatprep.subr.mxu0 0.0
  %5949 = vmatpush1.msra.mxu0 0.0
  %5950 = vmatprep.subr.mxu0 0.0
  %5951 = vmatpush1.msra.mxu0 0.0
  %5952 = vmatprep.subr.mxu0 0.0
  %5953 = vmatpush1.msra.mxu0 0.0
  %5954 = vmatprep.subr.mxu0 0.0
  %5955 = vmatpush1.msra.mxu0 0.0
  %5956 = vmatprep.subr.mxu0 0.0
  %5957 = vmatpush1.msra.mxu0 0.0
  %5958 = vmatprep.subr.mxu0 0.0
  %5959 = vmatpush1.msra.mxu0 0.0
  %5960 = vmatprep.subr.mxu0 0.0
  %5961 = vmatpush1.msra.mxu0 %v4994
  %5962 = vmatprep.subr.mxu0 0.0
  %5963 = vmatpush1.msra.mxu0 %v4989
  %5964 = vmatprep.subr.mxu0 0.0
  %5965 = vmatpush1.msra.mxu0 %v4984
  %5966 = vmatprep.subr.mxu0 0.0
  %5967 = vmatpush1.msra.mxu0 %v4979
  %5968 = vmatprep.subr.mxu0 0.0
  %5969 = vmatpush2.msra.mxu0 0.0
  %5970 = vmatprep.subr.mxu0 0.0
  %5971 = vmatpush2.msra.mxu0 0.0
  %5972 = vmatprep.subr.mxu0 0.0
  %5973 = vmatpush2.msra.mxu0 0.0
  %5974 = vmatprep.subr.mxu0 0.0
  %5975 = vmatpush2.msra.mxu0 0.0
  %5976 = vmatprep.subr.mxu0 0.0
  %5977 = vmatpush2.msra.mxu0 0.0
  %5978 = vmatprep.subr.mxu0 0.0
  %5979 = vmatpush2.msra.mxu0 0.0
  %5980 = vmatprep.subr.mxu0 0.0
  %5981 = vmatpush2.msra.mxu0 0.0
  %5982 = vmatprep.subr.mxu0 0.0
  %5983 = vmatpush2.msra.mxu0 0.0
  %5984 = vmatprep.subr.mxu0 0.0
  %5985 = vmatpush2.msra.mxu0 0.0
  %5986 = vmatprep.subr.mxu0 0.0
  %5987 = vmatpush2.msra.mxu0 0.0
  %5988 = vmatprep.subr.mxu0 0.0
  %5989 = vmatpush2.msra.mxu0 0.0
  %5990 = vmatprep.subr.mxu0 0.0
  %5991 = vmatpush2.msra.mxu0 0.0
  %5992 = vmatprep.subr.mxu0 0.0
  %5993 = vmatpush2.msra.mxu0 0.0
  %5994 = vmatprep.subr.mxu0 0.0
  %5995 = vmatpush2.msra.mxu0 0.0
  %5996 = vmatprep.subr.mxu0 0.0
  %5997 = vmatpush2.msra.mxu0 0.0
  %5998 = vmatprep.subr.mxu0 0.0
  %5999 = vmatpush2.msra.mxu0 0.0
  %6000 = vmatprep.mubr.f32.mxu0 0.0
  %6001 = vmatmul.mubr.f32.gmra.mxu0 %v5501
  %v6002 = vpop.f32.mrf.mxu0
  %v6003 = vadd.f32 %v5898, %v6002
  %v6004 = vpop.f32.mrf.mxu0
  %6005 = vmatprep.mubr.f32.mxu0 0.0
  %6006 = vmatmul.mubr.f32.gmra.mxu0 %v5504
  %v6007 = vpop.f32.mrf.mxu0
  %v6008 = vadd.f32 %v5903, %v6007
  %v6009 = vpop.f32.mrf.mxu0
  %6010 = vmatprep.mubr.f32.mxu0 0.0
  %6011 = vmatmul.mubr.f32.gmra.mxu0 %v5507
  %v6012 = vpop.f32.mrf.mxu0
  %v6013 = vadd.f32 %v5908, %v6012
  %v6014 = vpop.f32.mrf.mxu0
  %6015 = vmatprep.mubr.f32.mxu0 0.0
  %6016 = vmatmul.mubr.f32.gmra.mxu0 %v5510
  %v6017 = vpop.f32.mrf.mxu0
  %v6018 = vadd.f32 %v5913, %v6017
  %v6019 = vpop.f32.mrf.mxu0
  %6020 = vmatprep.mubr.f32.mxu0 0.0
  %6021 = vmatmul.mubr.f32.gmra.mxu0 %v5513
  %v6022 = vpop.f32.mrf.mxu0
  %v6023 = vadd.f32 %v5918, %v6022
  %v6024 = vpop.f32.mrf.mxu0
  %6025 = vmatprep.mubr.f32.mxu0 0.0
  %6026 = vmatmul.mubr.f32.gmra.mxu0 %v5516
  %v6027 = vpop.f32.mrf.mxu0
  %v6028 = vadd.f32 %v5923, %v6027
  %v6029 = vpop.f32.mrf.mxu0
  %6030 = vmatprep.mubr.f32.mxu0 0.0
  %6031 = vmatmul.mubr.f32.gmra.mxu0 %v5519
  %v6032 = vpop.f32.mrf.mxu0
  %v6033 = vadd.f32 %v5928, %v6032
  %v6034 = vpop.f32.mrf.mxu0
  %6035 = vmatprep.mubr.f32.mxu0 0.0
  %6036 = vmatmul.mubr.f32.gmra.mxu0 %v5522
  %v6037 = vpop.f32.mrf.mxu0
  %v6038 = vadd.f32 %v5933, %v6037
  %v6039 = vpop.f32.mrf.mxu0
  %6040 = vdwg.mxu0
  %6041 = vmatprep.subr.mxu0 0.0
  %6042 = vmatpush1.msra.mxu0 0.0
  %6043 = vmatprep.subr.mxu0 0.0
  %6044 = vmatpush1.msra.mxu0 0.0
  %6045 = vmatprep.subr.mxu0 0.0
  %6046 = vmatpush1.msra.mxu0 0.0
  %6047 = vmatprep.subr.mxu0 0.0
  %6048 = vmatpush1.msra.mxu0 0.0
  %6049 = vmatprep.subr.mxu0 0.0
  %6050 = vmatpush1.msra.mxu0 0.0
  %6051 = vmatprep.subr.mxu0 0.0
  %6052 = vmatpush1.msra.mxu0 0.0
  %6053 = vmatprep.subr.mxu0 0.0
  %6054 = vmatpush1.msra.mxu0 0.0
  %6055 = vmatprep.subr.mxu0 0.0
  %6056 = vmatpush1.msra.mxu0 0.0
  %6057 = vmatprep.subr.mxu0 0.0
  %6058 = vmatpush1.msra.mxu0 0.0
  %6059 = vmatprep.subr.mxu0 0.0
  %6060 = vmatpush1.msra.mxu0 0.0
  %6061 = vmatprep.subr.mxu0 0.0
  %6062 = vmatpush1.msra.mxu0 0.0
  %6063 = vmatprep.subr.mxu0 0.0
  %6064 = vmatpush1.msra.mxu0 0.0
  %6065 = vmatprep.subr.mxu0 0.0
  %6066 = vmatpush1.msra.mxu0 %v5172
  %6067 = vmatprep.subr.mxu0 0.0
  %6068 = vmatpush1.msra.mxu0 %v5167
  %6069 = vmatprep.subr.mxu0 0.0
  %6070 = vmatpush1.msra.mxu0 %v5162
  %6071 = vmatprep.subr.mxu0 0.0
  %6072 = vmatpush1.msra.mxu0 %v5157
  %6073 = vmatprep.subr.mxu0 0.0
  %6074 = vmatpush2.msra.mxu0 0.0
  %6075 = vmatprep.subr.mxu0 0.0
  %6076 = vmatpush2.msra.mxu0 0.0
  %6077 = vmatprep.subr.mxu0 0.0
  %6078 = vmatpush2.msra.mxu0 0.0
  %6079 = vmatprep.subr.mxu0 0.0
  %6080 = vmatpush2.msra.mxu0 0.0
  %6081 = vmatprep.subr.mxu0 0.0
  %6082 = vmatpush2.msra.mxu0 0.0
  %6083 = vmatprep.subr.mxu0 0.0
  %6084 = vmatpush2.msra.mxu0 0.0
  %6085 = vmatprep.subr.mxu0 0.0
  %6086 = vmatpush2.msra.mxu0 0.0
  %6087 = vmatprep.subr.mxu0 0.0
  %6088 = vmatpush2.msra.mxu0 0.0
  %6089 = vmatprep.subr.mxu0 0.0
  %6090 = vmatpush2.msra.mxu0 0.0
  %6091 = vmatprep.subr.mxu0 0.0
  %6092 = vmatpush2.msra.mxu0 0.0
  %6093 = vmatprep.subr.mxu0 0.0
  %6094 = vmatpush2.msra.mxu0 0.0
  %6095 = vmatprep.subr.mxu0 0.0
  %6096 = vmatpush2.msra.mxu0 0.0
  %6097 = vmatprep.subr.mxu0 0.0
  %6098 = vmatpush2.msra.mxu0 0.0
  %6099 = vmatprep.subr.mxu0 0.0
  %6100 = vmatpush2.msra.mxu0 0.0
  %6101 = vmatprep.subr.mxu0 0.0
  %6102 = vmatpush2.msra.mxu0 0.0
  %6103 = vmatprep.subr.mxu0 0.0
  %6104 = vmatpush2.msra.mxu0 0.0
  %6105 = vmatprep.mubr.f32.mxu0 0.0
  %6106 = vmatmul.mubr.f32.gmra.mxu0 %v5639
  %v6107 = vpop.f32.mrf.mxu0
  %v6108 = vadd.f32 0.0, %v6107
  %v6109 = vpop.f32.mrf.mxu0
  %6110 = vmatprep.mubr.f32.mxu0 0.0
  %6111 = vmatmul.mubr.f32.gmra.mxu0 %v5642
  %v6112 = vpop.f32.mrf.mxu0
  %v6113 = vadd.f32 0.0, %v6112
  %v6114 = vpop.f32.mrf.mxu0
  %6115 = vmatprep.mubr.f32.mxu0 0.0
  %6116 = vmatmul.mubr.f32.gmra.mxu0 %v5645
  %v6117 = vpop.f32.mrf.mxu0
  %v6118 = vadd.f32 0.0, %v6117
  %v6119 = vpop.f32.mrf.mxu0
  %6120 = vmatprep.mubr.f32.mxu0 0.0
  %6121 = vmatmul.mubr.f32.gmra.mxu0 %v5648
  %v6122 = vpop.f32.mrf.mxu0
  %v6123 = vadd.f32 0.0, %v6122
  %v6124 = vpop.f32.mrf.mxu0
  %6125 = vmatprep.mubr.f32.mxu0 0.0
  %6126 = vmatmul.mubr.f32.gmra.mxu0 %v5651
  %v6127 = vpop.f32.mrf.mxu0
  %v6128 = vadd.f32 0.0, %v6127
  %v6129 = vpop.f32.mrf.mxu0
  %6130 = vmatprep.mubr.f32.mxu0 0.0
  %6131 = vmatmul.mubr.f32.gmra.mxu0 %v5654
  %v6132 = vpop.f32.mrf.mxu0
  %v6133 = vadd.f32 0.0, %v6132
  %v6134 = vpop.f32.mrf.mxu0
  %6135 = vmatprep.mubr.f32.mxu0 0.0
  %6136 = vmatmul.mubr.f32.gmra.mxu0 %v5657
  %v6137 = vpop.f32.mrf.mxu0
  %v6138 = vadd.f32 0.0, %v6137
  %v6139 = vpop.f32.mrf.mxu0
  %6140 = vmatprep.mubr.f32.mxu0 0.0
  %6141 = vmatmul.mubr.f32.gmra.mxu0 %v5660
  %v6142 = vpop.f32.mrf.mxu0
  %v6143 = vadd.f32 0.0, %v6142
  %v6144 = vpop.f32.mrf.mxu0
  %6145 = vdwg.mxu0
  %v6146 = vadd.f32 %v6003, %v6108
  %v6147 = vadd.f32 %v6008, %v6113
  %v6148 = vadd.f32 %v6013, %v6118
  %v6149 = vadd.f32 %v6018, %v6123
  %v6150 = vadd.f32 %v6023, %v6128
  %v6151 = vadd.f32 %v6028, %v6133
  %v6152 = vadd.f32 %v6033, %v6138
  %v6153 = vadd.f32 %v6038, %v6143
  %v6154 = vadd.f32 %v6146, %v5778
  %v6155 = vadd.f32 %v6147, %v5783
  %v6156 = vadd.f32 %v6148, %v5788
  %v6157 = vadd.f32 %v6149, %v5793
  %v6158 = vadd.f32 %v6150, %v5798
  %v6159 = vadd.f32 %v6151, %v5803
  %v6160 = vadd.f32 %v6152, %v5808
  %v6161 = vadd.f32 %v6153, %v5813
  %v6162 = vmax.f32 %v6154, 0.0
  %v6163 = vmax.f32 %v6155, 0.0
  %v6164 = vmax.f32 %v6156, 0.0
  %v6165 = vmax.f32 %v6157, 0.0
  %v6166 = vmax.f32 %v6158, 0.0
  %v6167 = vmax.f32 %v6159, 0.0
  %v6168 = vmax.f32 %v6160, 0.0
  %v6169 = vmax.f32 %v6161, 0.0
  %v6170 = vmax.f32 %v5823, %v6162
  %v6171 = vmax.f32 %v5824, %v6163
  %v6172 = vmax.f32 %v5825, %v6164
  %v6173 = vmax.f32 %v5826, %v6165
  %v6174 = vmax.f32 %v5827, %v6166
  %v6175 = vmax.f32 %v5828, %v6167
  %v6176 = vmax.f32 %v5829, %v6168
  %v6177 = vmax.f32 %v5830, %v6169
  %6178 = vmatprep.subr.mxu0 0.0
  %6179 = vmatpush1.msra.mxu0 0.0
  %6180 = vmatprep.subr.mxu0 0.0
  %6181 = vmatpush1.msra.mxu0 0.0
  %6182 = vmatprep.subr.mxu0 0.0
  %6183 = vmatpush1.msra.mxu0 0.0
  %6184 = vmatprep.subr.mxu0 0.0
  %6185 = vmatpush1.msra.mxu0 0.0
  %6186 = vmatprep.subr.mxu0 0.0
  %6187 = vmatpush1.msra.mxu0 0.0
  %6188 = vmatprep.subr.mxu0 0.0
  %6189 = vmatpush1.msra.mxu0 0.0
  %6190 = vmatprep.subr.mxu0 0.0
  %6191 = vmatpush1.msra.mxu0 0.0
  %6192 = vmatprep.subr.mxu0 0.0
  %6193 = vmatpush1.msra.mxu0 0.0
  %6194 = vmatprep.subr.mxu0 0.0
  %6195 = vmatpush1.msra.mxu0 0.0
  %6196 = vmatprep.subr.mxu0 0.0
  %6197 = vmatpush1.msra.mxu0 0.0
  %6198 = vmatprep.subr.mxu0 0.0
  %6199 = vmatpush1.msra.mxu0 0.0
  %6200 = vmatprep.subr.mxu0 0.0
  %6201 = vmatpush1.msra.mxu0 0.0
  %6202 = vmatprep.subr.mxu0 0.0
  %6203 = vmatpush1.msra.mxu0 %v5172
  %6204 = vmatprep.subr.mxu0 0.0
  %6205 = vmatpush1.msra.mxu0 %v5167
  %6206 = vmatprep.subr.mxu0 0.0
  %6207 = vmatpush1.msra.mxu0 %v5162
  %6208 = vmatprep.subr.mxu0 0.0
  %6209 = vmatpush1.msra.mxu0 %v5157
  %6210 = vmatprep.subr.mxu0 0.0
  %6211 = vmatpush2.msra.mxu0 0.0
  %6212 = vmatprep.subr.mxu0 0.0
  %6213 = vmatpush2.msra.mxu0 0.0
  %6214 = vmatprep.subr.mxu0 0.0
  %6215 = vmatpush2.msra.mxu0 0.0
  %6216 = vmatprep.subr.mxu0 0.0
  %6217 = vmatpush2.msra.mxu0 0.0
  %6218 = vmatprep.subr.mxu0 0.0
  %6219 = vmatpush2.msra.mxu0 0.0
  %6220 = vmatprep.subr.mxu0 0.0
  %6221 = vmatpush2.msra.mxu0 0.0
  %6222 = vmatprep.subr.mxu0 0.0
  %6223 = vmatpush2.msra.mxu0 0.0
  %6224 = vmatprep.subr.mxu0 0.0
  %6225 = vmatpush2.msra.mxu0 0.0
  %6226 = vmatprep.subr.mxu0 0.0
  %6227 = vmatpush2.msra.mxu0 0.0
  %6228 = vmatprep.subr.mxu0 0.0
  %6229 = vmatpush2.msra.mxu0 0.0
  %6230 = vmatprep.subr.mxu0 0.0
  %6231 = vmatpush2.msra.mxu0 0.0
  %6232 = vmatprep.subr.mxu0 0.0
  %6233 = vmatpush2.msra.mxu0 0.0
  %6234 = vmatprep.subr.mxu0 0.0
  %6235 = vmatpush2.msra.mxu0 0.0
  %6236 = vmatprep.subr.mxu0 0.0
  %6237 = vmatpush2.msra.mxu0 0.0
  %6238 = vmatprep.subr.mxu0 0.0
  %6239 = vmatpush2.msra.mxu0 0.0
  %6240 = vmatprep.subr.mxu0 0.0
  %6241 = vmatpush2.msra.mxu0 0.0
  %6242 = vmatprep.mubr.f32.mxu0 0.0
  %6243 = vmatmul.mubr.f32.gmra.mxu0 %v5372
  %v6244 = vpop.f32.mrf.mxu0
  %v6245 = vadd.f32 0.0, %v6244
  %v6246 = vpop.f32.mrf.mxu0
  %6247 = vmatprep.mubr.f32.mxu0 0.0
  %6248 = vmatmul.mubr.f32.gmra.mxu0 %v5375
  %v6249 = vpop.f32.mrf.mxu0
  %v6250 = vadd.f32 0.0, %v6249
  %v6251 = vpop.f32.mrf.mxu0
  %6252 = vmatprep.mubr.f32.mxu0 0.0
  %6253 = vmatmul.mubr.f32.gmra.mxu0 %v5378
  %v6254 = vpop.f32.mrf.mxu0
  %v6255 = vadd.f32 0.0, %v6254
  %v6256 = vpop.f32.mrf.mxu0
  %6257 = vmatprep.mubr.f32.mxu0 0.0
  %6258 = vmatmul.mubr.f32.gmra.mxu0 %v5381
  %v6259 = vpop.f32.mrf.mxu0
  %v6260 = vadd.f32 0.0, %v6259
  %v6261 = vpop.f32.mrf.mxu0
  %6262 = vmatprep.mubr.f32.mxu0 0.0
  %6263 = vmatmul.mubr.f32.gmra.mxu0 %v5384
  %v6264 = vpop.f32.mrf.mxu0
  %v6265 = vadd.f32 0.0, %v6264
  %v6266 = vpop.f32.mrf.mxu0
  %6267 = vmatprep.mubr.f32.mxu0 0.0
  %6268 = vmatmul.mubr.f32.gmra.mxu0 %v5387
  %v6269 = vpop.f32.mrf.mxu0
  %v6270 = vadd.f32 0.0, %v6269
  %v6271 = vpop.f32.mrf.mxu0
  %6272 = vmatprep.mubr.f32.mxu0 0.0
  %6273 = vmatmul.mubr.f32.gmra.mxu0 %v5390
  %v6274 = vpop.f32.mrf.mxu0
  %v6275 = vadd.f32 0.0, %v6274
  %v6276 = vpop.f32.mrf.mxu0
  %6277 = vmatprep.mubr.f32.mxu0 0.0
  %6278 = vmatmul.mubr.f32.gmra.mxu0 %v5393
  %v6279 = vpop.f32.mrf.mxu0
  %v6280 = vadd.f32 0.0, %v6279
  %v6281 = vpop.f32.mrf.mxu0
  %6282 = vdwg.mxu0
  %6283 = vmatprep.subr.mxu0 0.0
  %6284 = vmatpush1.msra.mxu0 0.0
  %6285 = vmatprep.subr.mxu0 0.0
  %6286 = vmatpush1.msra.mxu0 0.0
  %6287 = vmatprep.subr.mxu0 0.0
  %6288 = vmatpush1.msra.mxu0 0.0
  %6289 = vmatprep.subr.mxu0 0.0
  %6290 = vmatpush1.msra.mxu0 0.0
  %6291 = vmatprep.subr.mxu0 0.0
  %6292 = vmatpush1.msra.mxu0 0.0
  %6293 = vmatprep.subr.mxu0 0.0
  %6294 = vmatpush1.msra.mxu0 0.0
  %6295 = vmatprep.subr.mxu0 0.0
  %6296 = vmatpush1.msra.mxu0 0.0
  %6297 = vmatprep.subr.mxu0 0.0
  %6298 = vmatpush1.msra.mxu0 0.0
  %6299 = vmatprep.subr.mxu0 0.0
  %6300 = vmatpush1.msra.mxu0 0.0
  %6301 = vmatprep.subr.mxu0 0.0
  %6302 = vmatpush1.msra.mxu0 0.0
  %6303 = vmatprep.subr.mxu0 0.0
  %6304 = vmatpush1.msra.mxu0 0.0
  %6305 = vmatprep.subr.mxu0 0.0
  %6306 = vmatpush1.msra.mxu0 0.0
  %6307 = vmatprep.subr.mxu0 0.0
  %6308 = vmatpush1.msra.mxu0 %v5083
  %6309 = vmatprep.subr.mxu0 0.0
  %6310 = vmatpush1.msra.mxu0 %v5078
  %6311 = vmatprep.subr.mxu0 0.0
  %6312 = vmatpush1.msra.mxu0 %v5073
  %6313 = vmatprep.subr.mxu0 0.0
  %6314 = vmatpush1.msra.mxu0 %v5068
  %6315 = vmatprep.subr.mxu0 0.0
  %6316 = vmatpush2.msra.mxu0 0.0
  %6317 = vmatprep.subr.mxu0 0.0
  %6318 = vmatpush2.msra.mxu0 0.0
  %6319 = vmatprep.subr.mxu0 0.0
  %6320 = vmatpush2.msra.mxu0 0.0
  %6321 = vmatprep.subr.mxu0 0.0
  %6322 = vmatpush2.msra.mxu0 0.0
  %6323 = vmatprep.subr.mxu0 0.0
  %6324 = vmatpush2.msra.mxu0 0.0
  %6325 = vmatprep.subr.mxu0 0.0
  %6326 = vmatpush2.msra.mxu0 0.0
  %6327 = vmatprep.subr.mxu0 0.0
  %6328 = vmatpush2.msra.mxu0 0.0
  %6329 = vmatprep.subr.mxu0 0.0
  %6330 = vmatpush2.msra.mxu0 0.0
  %6331 = vmatprep.subr.mxu0 0.0
  %6332 = vmatpush2.msra.mxu0 0.0
  %6333 = vmatprep.subr.mxu0 0.0
  %6334 = vmatpush2.msra.mxu0 0.0
  %6335 = vmatprep.subr.mxu0 0.0
  %6336 = vmatpush2.msra.mxu0 0.0
  %6337 = vmatprep.subr.mxu0 0.0
  %6338 = vmatpush2.msra.mxu0 0.0
  %6339 = vmatprep.subr.mxu0 0.0
  %6340 = vmatpush2.msra.mxu0 0.0
  %6341 = vmatprep.subr.mxu0 0.0
  %6342 = vmatpush2.msra.mxu0 0.0
  %6343 = vmatprep.subr.mxu0 0.0
  %6344 = vmatpush2.msra.mxu0 0.0
  %6345 = vmatprep.subr.mxu0 0.0
  %6346 = vmatpush2.msra.mxu0 0.0
  %6347 = vmatprep.mubr.f32.mxu0 0.0
  %6348 = vmatmul.mubr.f32.gmra.mxu0 %v5501
  %v6349 = vpop.f32.mrf.mxu0
  %v6350 = vadd.f32 %v6245, %v6349
  %v6351 = vpop.f32.mrf.mxu0
  %6352 = vmatprep.mubr.f32.mxu0 0.0
  %6353 = vmatmul.mubr.f32.gmra.mxu0 %v5504
  %v6354 = vpop.f32.mrf.mxu0
  %v6355 = vadd.f32 %v6250, %v6354
  %v6356 = vpop.f32.mrf.mxu0
  %6357 = vmatprep.mubr.f32.mxu0 0.0
  %6358 = vmatmul.mubr.f32.gmra.mxu0 %v5507
  %v6359 = vpop.f32.mrf.mxu0
  %v6360 = vadd.f32 %v6255, %v6359
  %v6361 = vpop.f32.mrf.mxu0
  %6362 = vmatprep.mubr.f32.mxu0 0.0
  %6363 = vmatmul.mubr.f32.gmra.mxu0 %v5510
  %v6364 = vpop.f32.mrf.mxu0
  %v6365 = vadd.f32 %v6260, %v6364
  %v6366 = vpop.f32.mrf.mxu0
  %6367 = vmatprep.mubr.f32.mxu0 0.0
  %6368 = vmatmul.mubr.f32.gmra.mxu0 %v5513
  %v6369 = vpop.f32.mrf.mxu0
  %v6370 = vadd.f32 %v6265, %v6369
  %v6371 = vpop.f32.mrf.mxu0
  %6372 = vmatprep.mubr.f32.mxu0 0.0
  %6373 = vmatmul.mubr.f32.gmra.mxu0 %v5516
  %v6374 = vpop.f32.mrf.mxu0
  %v6375 = vadd.f32 %v6270, %v6374
  %v6376 = vpop.f32.mrf.mxu0
  %6377 = vmatprep.mubr.f32.mxu0 0.0
  %6378 = vmatmul.mubr.f32.gmra.mxu0 %v5519
  %v6379 = vpop.f32.mrf.mxu0
  %v6380 = vadd.f32 %v6275, %v6379
  %v6381 = vpop.f32.mrf.mxu0
  %6382 = vmatprep.mubr.f32.mxu0 0.0
  %6383 = vmatmul.mubr.f32.gmra.mxu0 %v5522
  %v6384 = vpop.f32.mrf.mxu0
  %v6385 = vadd.f32 %v6280, %v6384
  %v6386 = vpop.f32.mrf.mxu0
  %6387 = vdwg.mxu0
  %6388 = vmatprep.subr.mxu0 0.0
  %6389 = vmatpush1.msra.mxu0 0.0
  %6390 = vmatprep.subr.mxu0 0.0
  %6391 = vmatpush1.msra.mxu0 0.0
  %6392 = vmatprep.subr.mxu0 0.0
  %6393 = vmatpush1.msra.mxu0 0.0
  %6394 = vmatprep.subr.mxu0 0.0
  %6395 = vmatpush1.msra.mxu0 0.0
  %6396 = vmatprep.subr.mxu0 0.0
  %6397 = vmatpush1.msra.mxu0 0.0
  %6398 = vmatprep.subr.mxu0 0.0
  %6399 = vmatpush1.msra.mxu0 0.0
  %6400 = vmatprep.subr.mxu0 0.0
  %6401 = vmatpush1.msra.mxu0 0.0
  %6402 = vmatprep.subr.mxu0 0.0
  %6403 = vmatpush1.msra.mxu0 0.0
  %6404 = vmatprep.subr.mxu0 0.0
  %6405 = vmatpush1.msra.mxu0 0.0
  %6406 = vmatprep.subr.mxu0 0.0
  %6407 = vmatpush1.msra.mxu0 0.0
  %6408 = vmatprep.subr.mxu0 0.0
  %6409 = vmatpush1.msra.mxu0 0.0
  %6410 = vmatprep.subr.mxu0 0.0
  %6411 = vmatpush1.msra.mxu0 0.0
  %6412 = vmatprep.subr.mxu0 0.0
  %6413 = vmatpush1.msra.mxu0 %v5261
  %6414 = vmatprep.subr.mxu0 0.0
  %6415 = vmatpush1.msra.mxu0 %v5256
  %6416 = vmatprep.subr.mxu0 0.0
  %6417 = vmatpush1.msra.mxu0 %v5251
  %6418 = vmatprep.subr.mxu0 0.0
  %6419 = vmatpush1.msra.mxu0 %v5246
  %6420 = vmatprep.subr.mxu0 0.0
  %6421 = vmatpush2.msra.mxu0 0.0
  %6422 = vmatprep.subr.mxu0 0.0
  %6423 = vmatpush2.msra.mxu0 0.0
  %6424 = vmatprep.subr.mxu0 0.0
  %6425 = vmatpush2.msra.mxu0 0.0
  %6426 = vmatprep.subr.mxu0 0.0
  %6427 = vmatpush2.msra.mxu0 0.0
  %6428 = vmatprep.subr.mxu0 0.0
  %6429 = vmatpush2.msra.mxu0 0.0
  %6430 = vmatprep.subr.mxu0 0.0
  %6431 = vmatpush2.msra.mxu0 0.0
  %6432 = vmatprep.subr.mxu0 0.0
  %6433 = vmatpush2.msra.mxu0 0.0
  %6434 = vmatprep.subr.mxu0 0.0
  %6435 = vmatpush2.msra.mxu0 0.0
  %6436 = vmatprep.subr.mxu0 0.0
  %6437 = vmatpush2.msra.mxu0 0.0
  %6438 = vmatprep.subr.mxu0 0.0
  %6439 = vmatpush2.msra.mxu0 0.0
  %6440 = vmatprep.subr.mxu0 0.0
  %6441 = vmatpush2.msra.mxu0 0.0
  %6442 = vmatprep.subr.mxu0 0.0
  %6443 = vmatpush2.msra.mxu0 0.0
  %6444 = vmatprep.subr.mxu0 0.0
  %6445 = vmatpush2.msra.mxu0 0.0
  %6446 = vmatprep.subr.mxu0 0.0
  %6447 = vmatpush2.msra.mxu0 0.0
  %6448 = vmatprep.subr.mxu0 0.0
  %6449 = vmatpush2.msra.mxu0 0.0
  %6450 = vmatprep.subr.mxu0 0.0
  %6451 = vmatpush2.msra.mxu0 0.0
  %6452 = vmatprep.mubr.f32.mxu0 0.0
  %6453 = vmatmul.mubr.f32.gmra.mxu0 %v5639
  %v6454 = vpop.f32.mrf.mxu0
  %v6455 = vadd.f32 0.0, %v6454
  %v6456 = vpop.f32.mrf.mxu0
  %6457 = vmatprep.mubr.f32.mxu0 0.0
  %6458 = vmatmul.mubr.f32.gmra.mxu0 %v5642
  %v6459 = vpop.f32.mrf.mxu0
  %v6460 = vadd.f32 0.0, %v6459
  %v6461 = vpop.f32.mrf.mxu0
  %6462 = vmatprep.mubr.f32.mxu0 0.0
  %6463 = vmatmul.mubr.f32.gmra.mxu0 %v5645
  %v6464 = vpop.f32.mrf.mxu0
  %v6465 = vadd.f32 0.0, %v6464
  %v6466 = vpop.f32.mrf.mxu0
  %6467 = vmatprep.mubr.f32.mxu0 0.0
  %6468 = vmatmul.mubr.f32.gmra.mxu0 %v5648
  %v6469 = vpop.f32.mrf.mxu0
  %v6470 = vadd.f32 0.0, %v6469
  %v6471 = vpop.f32.mrf.mxu0
  %6472 = vmatprep.mubr.f32.mxu0 0.0
  %6473 = vmatmul.mubr.f32.gmra.mxu0 %v5651
  %v6474 = vpop.f32.mrf.mxu0
  %v6475 = vadd.f32 0.0, %v6474
  %v6476 = vpop.f32.mrf.mxu0
  %6477 = vmatprep.mubr.f32.mxu0 0.0
  %6478 = vmatmul.mubr.f32.gmra.mxu0 %v5654
  %v6479 = vpop.f32.mrf.mxu0
  %v6480 = vadd.f32 0.0, %v6479
  %v6481 = vpop.f32.mrf.mxu0
  %6482 = vmatprep.mubr.f32.mxu0 0.0
  %6483 = vmatmul.mubr.f32.gmra.mxu0 %v5657
  %v6484 = vpop.f32.mrf.mxu0
  %v6485 = vadd.f32 0.0, %v6484
  %v6486 = vpop.f32.mrf.mxu0
  %6487 = vmatprep.mubr.f32.mxu0 0.0
  %6488 = vmatmul.mubr.f32.gmra.mxu0 %v5660
  %v6489 = vpop.f32.mrf.mxu0
  %v6490 = vadd.f32 0.0, %v6489
  %v6491 = vpop.f32.mrf.mxu0
  %6492 = vdwg.mxu0
  %v6493 = vadd.f32 %v6350, %v6455
  %v6494 = vadd.f32 %v6355, %v6460
  %v6495 = vadd.f32 %v6360, %v6465
  %v6496 = vadd.f32 %v6365, %v6470
  %v6497 = vadd.f32 %v6370, %v6475
  %v6498 = vadd.f32 %v6375, %v6480
  %v6499 = vadd.f32 %v6380, %v6485
  %v6500 = vadd.f32 %v6385, %v6490
  %v6501 = vadd.f32 %v6493, %v5778
  %v6502 = vadd.f32 %v6494, %v5783
  %v6503 = vadd.f32 %v6495, %v5788
  %v6504 = vadd.f32 %v6496, %v5793
  %v6505 = vadd.f32 %v6497, %v5798
  %v6506 = vadd.f32 %v6498, %v5803
  %v6507 = vadd.f32 %v6499, %v5808
  %v6508 = vadd.f32 %v6500, %v5813
  %v6509 = vmax.f32 %v6501, 0.0
  %v6510 = vmax.f32 %v6502, 0.0
  %v6511 = vmax.f32 %v6503, 0.0
  %v6512 = vmax.f32 %v6504, 0.0
  %v6513 = vmax.f32 %v6505, 0.0
  %v6514 = vmax.f32 %v6506, 0.0
  %v6515 = vmax.f32 %v6507, 0.0
  %v6516 = vmax.f32 %v6508, 0.0
  %v6517 = vmax.f32 %v6170, %v6509
  %v6518 = vmax.f32 %v6171, %v6510
  %v6519 = vmax.f32 %v6172, %v6511
  %v6520 = vmax.f32 %v6173, %v6512
  %v6521 = vmax.f32 %v6174, %v6513
  %v6522 = vmax.f32 %v6175, %v6514
  %v6523 = vmax.f32 %v6176, %v6515
  %v6524 = vmax.f32 %v6177, %v6516
  %6525 = vmatprep.subr.mxu0 0.0
  %6526 = vmatpush1.msra.mxu0 0.0
  %6527 = vmatprep.subr.mxu0 0.0
  %6528 = vmatpush1.msra.mxu0 0.0
  %6529 = vmatprep.subr.mxu0 0.0
  %6530 = vmatpush1.msra.mxu0 0.0
  %6531 = vmatprep.subr.mxu0 0.0
  %6532 = vmatpush1.msra.mxu0 0.0
  %6533 = vmatprep.subr.mxu0 0.0
  %6534 = vmatpush1.msra.mxu0 0.0
  %6535 = vmatprep.subr.mxu0 0.0
  %6536 = vmatpush1.msra.mxu0 0.0
  %6537 = vmatprep.subr.mxu0 0.0
  %6538 = vmatpush1.msra.mxu0 0.0
  %6539 = vmatprep.subr.mxu0 0.0
  %6540 = vmatpush1.msra.mxu0 0.0
  %6541 = vmatprep.subr.mxu0 0.0
  %6542 = vmatpush1.msra.mxu0 0.0
  %6543 = vmatprep.subr.mxu0 0.0
  %6544 = vmatpush1.msra.mxu0 0.0
  %6545 = vmatprep.subr.mxu0 0.0
  %6546 = vmatpush1.msra.mxu0 0.0
  %6547 = vmatprep.subr.mxu0 0.0
  %6548 = vmatpush1.msra.mxu0 0.0
  %6549 = vmatprep.subr.mxu0 0.0
  %6550 = vmatpush1.msra.mxu0 %v5261
  %6551 = vmatprep.subr.mxu0 0.0
  %6552 = vmatpush1.msra.mxu0 %v5256
  %6553 = vmatprep.subr.mxu0 0.0
  %6554 = vmatpush1.msra.mxu0 %v5251
  %6555 = vmatprep.subr.mxu0 0.0
  %6556 = vmatpush1.msra.mxu0 %v5246
  %6557 = vmatprep.subr.mxu0 0.0
  %6558 = vmatpush2.msra.mxu0 0.0
  %6559 = vmatprep.subr.mxu0 0.0
  %6560 = vmatpush2.msra.mxu0 0.0
  %6561 = vmatprep.subr.mxu0 0.0
  %6562 = vmatpush2.msra.mxu0 0.0
  %6563 = vmatprep.subr.mxu0 0.0
  %6564 = vmatpush2.msra.mxu0 0.0
  %6565 = vmatprep.subr.mxu0 0.0
  %6566 = vmatpush2.msra.mxu0 0.0
  %6567 = vmatprep.subr.mxu0 0.0
  %6568 = vmatpush2.msra.mxu0 0.0
  %6569 = vmatprep.subr.mxu0 0.0
  %6570 = vmatpush2.msra.mxu0 0.0
  %6571 = vmatprep.subr.mxu0 0.0
  %6572 = vmatpush2.msra.mxu0 0.0
  %6573 = vmatprep.subr.mxu0 0.0
  %6574 = vmatpush2.msra.mxu0 0.0
  %6575 = vmatprep.subr.mxu0 0.0
  %6576 = vmatpush2.msra.mxu0 0.0
  %6577 = vmatprep.subr.mxu0 0.0
  %6578 = vmatpush2.msra.mxu0 0.0
  %6579 = vmatprep.subr.mxu0 0.0
  %6580 = vmatpush2.msra.mxu0 0.0
  %6581 = vmatprep.subr.mxu0 0.0
  %6582 = vmatpush2.msra.mxu0 0.0
  %6583 = vmatprep.subr.mxu0 0.0
  %6584 = vmatpush2.msra.mxu0 0.0
  %6585 = vmatprep.subr.mxu0 0.0
  %6586 = vmatpush2.msra.mxu0 0.0
  %6587 = vmatprep.subr.mxu0 0.0
  %6588 = vmatpush2.msra.mxu0 0.0
  %6589 = vmatprep.mubr.f32.mxu0 0.0
  %6590 = vmatmul.mubr.f32.gmra.mxu0 %v5372
  %v6591 = vpop.f32.mrf.mxu0
  %v6592 = vadd.f32 0.0, %v6591
  %v6593 = vpop.f32.mrf.mxu0
  %6594 = vmatprep.mubr.f32.mxu0 0.0
  %6595 = vmatmul.mubr.f32.gmra.mxu0 %v5375
  %v6596 = vpop.f32.mrf.mxu0
  %v6597 = vadd.f32 0.0, %v6596
  %v6598 = vpop.f32.mrf.mxu0
  %6599 = vmatprep.mubr.f32.mxu0 0.0
  %6600 = vmatmul.mubr.f32.gmra.mxu0 %v5378
  %v6601 = vpop.f32.mrf.mxu0
  %v6602 = vadd.f32 0.0, %v6601
  %v6603 = vpop.f32.mrf.mxu0
  %6604 = vmatprep.mubr.f32.mxu0 0.0
  %6605 = vmatmul.mubr.f32.gmra.mxu0 %v5381
  %v6606 = vpop.f32.mrf.mxu0
  %v6607 = vadd.f32 0.0, %v6606
  %v6608 = vpop.f32.mrf.mxu0
  %6609 = vmatprep.mubr.f32.mxu0 0.0
  %6610 = vmatmul.mubr.f32.gmra.mxu0 %v5384
  %v6611 = vpop.f32.mrf.mxu0
  %v6612 = vadd.f32 0.0, %v6611
  %v6613 = vpop.f32.mrf.mxu0
  %6614 = vmatprep.mubr.f32.mxu0 0.0
  %6615 = vmatmul.mubr.f32.gmra.mxu0 %v5387
  %v6616 = vpop.f32.mrf.mxu0
  %v6617 = vadd.f32 0.0, %v6616
  %v6618 = vpop.f32.mrf.mxu0
  %6619 = vmatprep.mubr.f32.mxu0 0.0
  %6620 = vmatmul.mubr.f32.gmra.mxu0 %v5390
  %v6621 = vpop.f32.mrf.mxu0
  %v6622 = vadd.f32 0.0, %v6621
  %v6623 = vpop.f32.mrf.mxu0
  %6624 = vmatprep.mubr.f32.mxu0 0.0
  %6625 = vmatmul.mubr.f32.gmra.mxu0 %v5393
  %v6626 = vpop.f32.mrf.mxu0
  %v6627 = vadd.f32 0.0, %v6626
  %v6628 = vpop.f32.mrf.mxu0
  %6629 = vdwg.mxu0
  %6630 = vmatprep.subr.mxu0 0.0
  %6631 = vmatpush1.msra.mxu0 0.0
  %6632 = vmatprep.subr.mxu0 0.0
  %6633 = vmatpush1.msra.mxu0 0.0
  %6634 = vmatprep.subr.mxu0 0.0
  %6635 = vmatpush1.msra.mxu0 0.0
  %6636 = vmatprep.subr.mxu0 0.0
  %6637 = vmatpush1.msra.mxu0 0.0
  %6638 = vmatprep.subr.mxu0 0.0
  %6639 = vmatpush1.msra.mxu0 0.0
  %6640 = vmatprep.subr.mxu0 0.0
  %6641 = vmatpush1.msra.mxu0 0.0
  %6642 = vmatprep.subr.mxu0 0.0
  %6643 = vmatpush1.msra.mxu0 0.0
  %6644 = vmatprep.subr.mxu0 0.0
  %6645 = vmatpush1.msra.mxu0 0.0
  %6646 = vmatprep.subr.mxu0 0.0
  %6647 = vmatpush1.msra.mxu0 0.0
  %6648 = vmatprep.subr.mxu0 0.0
  %6649 = vmatpush1.msra.mxu0 0.0
  %6650 = vmatprep.subr.mxu0 0.0
  %6651 = vmatpush1.msra.mxu0 0.0
  %6652 = vmatprep.subr.mxu0 0.0
  %6653 = vmatpush1.msra.mxu0 0.0
  %6654 = vmatprep.subr.mxu0 0.0
  %6655 = vmatpush1.msra.mxu0 %v5172
  %6656 = vmatprep.subr.mxu0 0.0
  %6657 = vmatpush1.msra.mxu0 %v5167
  %6658 = vmatprep.subr.mxu0 0.0
  %6659 = vmatpush1.msra.mxu0 %v5162
  %6660 = vmatprep.subr.mxu0 0.0
  %6661 = vmatpush1.msra.mxu0 %v5157
  %6662 = vmatprep.subr.mxu0 0.0
  %6663 = vmatpush2.msra.mxu0 0.0
  %6664 = vmatprep.subr.mxu0 0.0
  %6665 = vmatpush2.msra.mxu0 0.0
  %6666 = vmatprep.subr.mxu0 0.0
  %6667 = vmatpush2.msra.mxu0 0.0
  %6668 = vmatprep.subr.mxu0 0.0
  %6669 = vmatpush2.msra.mxu0 0.0
  %6670 = vmatprep.subr.mxu0 0.0
  %6671 = vmatpush2.msra.mxu0 0.0
  %6672 = vmatprep.subr.mxu0 0.0
  %6673 = vmatpush2.msra.mxu0 0.0
  %6674 = vmatprep.subr.mxu0 0.0
  %6675 = vmatpush2.msra.mxu0 0.0
  %6676 = vmatprep.subr.mxu0 0.0
  %6677 = vmatpush2.msra.mxu0 0.0
  %6678 = vmatprep.subr.mxu0 0.0
  %6679 = vmatpush2.msra.mxu0 0.0
  %6680 = vmatprep.subr.mxu0 0.0
  %6681 = vmatpush2.msra.mxu0 0.0
  %6682 = vmatprep.subr.mxu0 0.0
  %6683 = vmatpush2.msra.mxu0 0.0
  %6684 = vmatprep.subr.mxu0 0.0
  %6685 = vmatpush2.msra.mxu0 0.0
  %6686 = vmatprep.subr.mxu0 0.0
  %6687 = vmatpush2.msra.mxu0 0.0
  %6688 = vmatprep.subr.mxu0 0.0
  %6689 = vmatpush2.msra.mxu0 0.0
  %6690 = vmatprep.subr.mxu0 0.0
  %6691 = vmatpush2.msra.mxu0 0.0
  %6692 = vmatprep.subr.mxu0 0.0
  %6693 = vmatpush2.msra.mxu0 0.0
  %6694 = vmatprep.mubr.f32.mxu0 0.0
  %6695 = vmatmul.mubr.f32.gmra.mxu0 %v5501
  %v6696 = vpop.f32.mrf.mxu0
  %v6697 = vadd.f32 %v6592, %v6696
  %v6698 = vpop.f32.mrf.mxu0
  %6699 = vmatprep.mubr.f32.mxu0 0.0
  %6700 = vmatmul.mubr.f32.gmra.mxu0 %v5504
  %v6701 = vpop.f32.mrf.mxu0
  %v6702 = vadd.f32 %v6597, %v6701
  %v6703 = vpop.f32.mrf.mxu0
  %6704 = vmatprep.mubr.f32.mxu0 0.0
  %6705 = vmatmul.mubr.f32.gmra.mxu0 %v5507
  %v6706 = vpop.f32.mrf.mxu0
  %v6707 = vadd.f32 %v6602, %v6706
  %v6708 = vpop.f32.mrf.mxu0
  %6709 = vmatprep.mubr.f32.mxu0 0.0
  %6710 = vmatmul.mubr.f32.gmra.mxu0 %v5510
  %v6711 = vpop.f32.mrf.mxu0
  %v6712 = vadd.f32 %v6607, %v6711
  %v6713 = vpop.f32.mrf.mxu0
  %6714 = vmatprep.mubr.f32.mxu0 0.0
  %6715 = vmatmul.mubr.f32.gmra.mxu0 %v5513
  %v6716 = vpop.f32.mrf.mxu0
  %v6717 = vadd.f32 %v6612, %v6716
  %v6718 = vpop.f32.mrf.mxu0
  %6719 = vmatprep.mubr.f32.mxu0 0.0
  %6720 = vmatmul.mubr.f32.gmra.mxu0 %v5516
  %v6721 = vpop.f32.mrf.mxu0
  %v6722 = vadd.f32 %v6617, %v6721
  %v6723 = vpop.f32.mrf.mxu0
  %6724 = vmatprep.mubr.f32.mxu0 0.0
  %6725 = vmatmul.mubr.f32.gmra.mxu0 %v5519
  %v6726 = vpop.f32.mrf.mxu0
  %v6727 = vadd.f32 %v6622, %v6726
  %v6728 = vpop.f32.mrf.mxu0
  %6729 = vmatprep.mubr.f32.mxu0 0.0
  %6730 = vmatmul.mubr.f32.gmra.mxu0 %v5522
  %v6731 = vpop.f32.mrf.mxu0
  %v6732 = vadd.f32 %v6627, %v6731
  %v6733 = vpop.f32.mrf.mxu0
  %6734 = vdwg.mxu0
  %6735 = vmatprep.subr.mxu0 0.0
  %6736 = vmatpush1.msra.mxu0 0.0
  %6737 = vmatprep.subr.mxu0 0.0
  %6738 = vmatpush1.msra.mxu0 0.0
  %6739 = vmatprep.subr.mxu0 0.0
  %6740 = vmatpush1.msra.mxu0 0.0
  %6741 = vmatprep.subr.mxu0 0.0
  %6742 = vmatpush1.msra.mxu0 0.0
  %6743 = vmatprep.subr.mxu0 0.0
  %6744 = vmatpush1.msra.mxu0 0.0
  %6745 = vmatprep.subr.mxu0 0.0
  %6746 = vmatpush1.msra.mxu0 0.0
  %6747 = vmatprep.subr.mxu0 0.0
  %6748 = vmatpush1.msra.mxu0 0.0
  %6749 = vmatprep.subr.mxu0 0.0
  %6750 = vmatpush1.msra.mxu0 0.0
  %6751 = vmatprep.subr.mxu0 0.0
  %6752 = vmatpush1.msra.mxu0 0.0
  %6753 = vmatprep.subr.mxu0 0.0
  %6754 = vmatpush1.msra.mxu0 0.0
  %6755 = vmatprep.subr.mxu0 0.0
  %6756 = vmatpush1.msra.mxu0 0.0
  %6757 = vmatprep.subr.mxu0 0.0
  %6758 = vmatpush1.msra.mxu0 0.0
  %6759 = vmatprep.subr.mxu0 0.0
  %6760 = vmatpush1.msra.mxu0 %v5350
  %6761 = vmatprep.subr.mxu0 0.0
  %6762 = vmatpush1.msra.mxu0 %v5345
  %6763 = vmatprep.subr.mxu0 0.0
  %6764 = vmatpush1.msra.mxu0 %v5340
  %6765 = vmatprep.subr.mxu0 0.0
  %6766 = vmatpush1.msra.mxu0 %v5335
  %6767 = vmatprep.subr.mxu0 0.0
  %6768 = vmatpush2.msra.mxu0 0.0
  %6769 = vmatprep.subr.mxu0 0.0
  %6770 = vmatpush2.msra.mxu0 0.0
  %6771 = vmatprep.subr.mxu0 0.0
  %6772 = vmatpush2.msra.mxu0 0.0
  %6773 = vmatprep.subr.mxu0 0.0
  %6774 = vmatpush2.msra.mxu0 0.0
  %6775 = vmatprep.subr.mxu0 0.0
  %6776 = vmatpush2.msra.mxu0 0.0
  %6777 = vmatprep.subr.mxu0 0.0
  %6778 = vmatpush2.msra.mxu0 0.0
  %6779 = vmatprep.subr.mxu0 0.0
  %6780 = vmatpush2.msra.mxu0 0.0
  %6781 = vmatprep.subr.mxu0 0.0
  %6782 = vmatpush2.msra.mxu0 0.0
  %6783 = vmatprep.subr.mxu0 0.0
  %6784 = vmatpush2.msra.mxu0 0.0
  %6785 = vmatprep.subr.mxu0 0.0
  %6786 = vmatpush2.msra.mxu0 0.0
  %6787 = vmatprep.subr.mxu0 0.0
  %6788 = vmatpush2.msra.mxu0 0.0
  %6789 = vmatprep.subr.mxu0 0.0
  %6790 = vmatpush2.msra.mxu0 0.0
  %6791 = vmatprep.subr.mxu0 0.0
  %6792 = vmatpush2.msra.mxu0 0.0
  %6793 = vmatprep.subr.mxu0 0.0
  %6794 = vmatpush2.msra.mxu0 0.0
  %6795 = vmatprep.subr.mxu0 0.0
  %6796 = vmatpush2.msra.mxu0 0.0
  %6797 = vmatprep.subr.mxu0 0.0
  %6798 = vmatpush2.msra.mxu0 0.0
  %6799 = vmatprep.mubr.f32.mxu0 0.0
  %6800 = vmatmul.mubr.f32.gmra.mxu0 %v5639
  %v6801 = vpop.f32.mrf.mxu0
  %v6802 = vadd.f32 0.0, %v6801
  %v6803 = vpop.f32.mrf.mxu0
  %6804 = vmatprep.mubr.f32.mxu0 0.0
  %6805 = vmatmul.mubr.f32.gmra.mxu0 %v5642
  %v6806 = vpop.f32.mrf.mxu0
  %v6807 = vadd.f32 0.0, %v6806
  %v6808 = vpop.f32.mrf.mxu0
  %6809 = vmatprep.mubr.f32.mxu0 0.0
  %6810 = vmatmul.mubr.f32.gmra.mxu0 %v5645
  %v6811 = vpop.f32.mrf.mxu0
  %v6812 = vadd.f32 0.0, %v6811
  %v6813 = vpop.f32.mrf.mxu0
  %6814 = vmatprep.mubr.f32.mxu0 0.0
  %6815 = vmatmul.mubr.f32.gmra.mxu0 %v5648
  %v6816 = vpop.f32.mrf.mxu0
  %v6817 = vadd.f32 0.0, %v6816
  %v6818 = vpop.f32.mrf.mxu0
  %6819 = vmatprep.mubr.f32.mxu0 0.0
  %6820 = vmatmul.mubr.f32.gmra.mxu0 %v5651
  %v6821 = vpop.f32.mrf.mxu0
  %v6822 = vadd.f32 0.0, %v6821
  %v6823 = vpop.f32.mrf.mxu0
  %6824 = vmatprep.mubr.f32.mxu0 0.0
  %6825 = vmatmul.mubr.f32.gmra.mxu0 %v5654
  %v6826 = vpop.f32.mrf.mxu0
  %v6827 = vadd.f32 0.0, %v6826
  %v6828 = vpop.f32.mrf.mxu0
  %6829 = vmatprep.mubr.f32.mxu0 0.0
  %6830 = vmatmul.mubr.f32.gmra.mxu0 %v5657
  %v6831 = vpop.f32.mrf.mxu0
  %v6832 = vadd.f32 0.0, %v6831
  %v6833 = vpop.f32.mrf.mxu0
  %6834 = vmatprep.mubr.f32.mxu0 0.0
  %6835 = vmatmul.mubr.f32.gmra.mxu0 %v5660
  %v6836 = vpop.f32.mrf.mxu0
  %v6837 = vadd.f32 0.0, %v6836
  %v6838 = vpop.f32.mrf.mxu0
  %6839 = vdwg.mxu0
  %v6840 = vadd.f32 %v6697, %v6802
  %v6841 = vadd.f32 %v6702, %v6807
  %v6842 = vadd.f32 %v6707, %v6812
  %v6843 = vadd.f32 %v6712, %v6817
  %v6844 = vadd.f32 %v6717, %v6822
  %v6845 = vadd.f32 %v6722, %v6827
  %v6846 = vadd.f32 %v6727, %v6832
  %v6847 = vadd.f32 %v6732, %v6837
  %v6848 = vadd.f32 %v6840, %v5778
  %v6849 = vadd.f32 %v6841, %v5783
  %v6850 = vadd.f32 %v6842, %v5788
  %v6851 = vadd.f32 %v6843, %v5793
  %v6852 = vadd.f32 %v6844, %v5798
  %v6853 = vadd.f32 %v6845, %v5803
  %v6854 = vadd.f32 %v6846, %v5808
  %v6855 = vadd.f32 %v6847, %v5813
  %v6856 = vmax.f32 %v6848, 0.0
  %v6857 = vmax.f32 %v6849, 0.0
  %v6858 = vmax.f32 %v6850, 0.0
  %v6859 = vmax.f32 %v6851, 0.0
  %v6860 = vmax.f32 %v6852, 0.0
  %v6861 = vmax.f32 %v6853, 0.0
  %v6862 = vmax.f32 %v6854, 0.0
  %v6863 = vmax.f32 %v6855, 0.0
  %v6864 = vmax.f32 %v6517, %v6856
  %v6865 = vmax.f32 %v6518, %v6857
  %v6866 = vmax.f32 %v6519, %v6858
  %v6867 = vmax.f32 %v6520, %v6859
  %v6868 = vmax.f32 %v6521, %v6860
  %v6869 = vmax.f32 %v6522, %v6861
  %v6870 = vmax.f32 %v6523, %v6862
  %v6871 = vmax.f32 %v6524, %v6863
  %v6872 = vld [vmem:[%s12] sm:$0x3f]
  %vm6873 = vcmask 48128
  %v6875 = vsel %vm6873, %v6864, 0
  %v6878 = vsel %vm6873, %v6865, 0
  %v6881 = vsel %vm6873, %v6866, 0
  %v6884 = vsel %vm6873, %v6867, 0
  %v6887 = vsel %vm6873, %v6868, 0
  %v6890 = vsel %vm6873, %v6869, 0
  %v6893 = vsel %vm6873, %v6870, 0
  %v6896 = vsel %vm6873, %v6871, 0
  %vm6898 = vcmask 1045504
  %v6900 = vsel %vm6898, %v6872, 0
  %6902 = vmatprep.subr.mxu0 0.0
  %6903 = vmatpush1.msra.mxu0 0.0
  %6904 = vmatprep.subr.mxu0 0.0
  %6905 = vmatpush1.msra.mxu0 0.0
  %6906 = vmatprep.subr.mxu0 0.0
  %6907 = vmatpush1.msra.mxu0 0.0
  %6908 = vmatprep.subr.mxu0 0.0
  %6909 = vmatpush1.msra.mxu0 0.0
  %6910 = vmatprep.subr.mxu0 0.0
  %6911 = vmatpush1.msra.mxu0 0.0
  %6912 = vmatprep.subr.mxu0 0.0
  %6913 = vmatpush1.msra.mxu0 0.0
  %6914 = vmatprep.subr.mxu0 0.0
  %6915 = vmatpush1.msra.mxu0 0.0
  %6916 = vmatprep.subr.mxu0 0.0
  %6917 = vmatpush1.msra.mxu0 0.0
  %6918 = vmatprep.subr.mxu0 0.0
  %6919 = vmatpush1.msra.mxu0 0.0
  %6920 = vmatprep.subr.mxu0 0.0
  %6921 = vmatpush1.msra.mxu0 0.0
  %6922 = vmatprep.subr.mxu0 0.0
  %6923 = vmatpush1.msra.mxu0 0.0
  %6924 = vmatprep.subr.mxu0 0.0
  %6925 = vmatpush1.msra.mxu0 0.0
  %6926 = vmatprep.subr.mxu0 0.0
  %6927 = vmatpush1.msra.mxu0 0.0
  %6928 = vmatprep.subr.mxu0 0.0
  %6929 = vmatpush1.msra.mxu0 0.0
  %6930 = vmatprep.subr.mxu0 0.0
  %6931 = vmatpush1.msra.mxu0 0.0
  %6932 = vmatprep.subr.mxu0 0.0
  %6933 = vmatpush1.msra.mxu0 %v6900
  %6934 = vmatprep.subr.mxu0 0.0
  %6935 = vmatpush2.msra.mxu0 0.0
  %6936 = vmatprep.subr.mxu0 0.0
  %6937 = vmatpush2.msra.mxu0 0.0
  %6938 = vmatprep.subr.mxu0 0.0
  %6939 = vmatpush2.msra.mxu0 0.0
  %6940 = vmatprep.subr.mxu0 0.0
  %6941 = vmatpush2.msra.mxu0 0.0
  %6942 = vmatprep.subr.mxu0 0.0
  %6943 = vmatpush2.msra.mxu0 0.0
  %6944 = vmatprep.subr.mxu0 0.0
  %6945 = vmatpush2.msra.mxu0 0.0
  %6946 = vmatprep.subr.mxu0 0.0
  %6947 = vmatpush2.msra.mxu0 0.0
  %6948 = vmatprep.subr.mxu0 0.0
  %6949 = vmatpush2.msra.mxu0 0.0
  %6950 = vmatprep.subr.mxu0 0.0
  %6951 = vmatpush2.msra.mxu0 0.0
  %6952 = vmatprep.subr.mxu0 0.0
  %6953 = vmatpush2.msra.mxu0 0.0
  %6954 = vmatprep.subr.mxu0 0.0
  %6955 = vmatpush2.msra.mxu0 0.0
  %6956 = vmatprep.subr.mxu0 0.0
  %6957 = vmatpush2.msra.mxu0 0.0
  %6958 = vmatprep.subr.mxu0 0.0
  %6959 = vmatpush2.msra.mxu0 0.0
  %6960 = vmatprep.subr.mxu0 0.0
  %6961 = vmatpush2.msra.mxu0 0.0
  %6962 = vmatprep.subr.mxu0 0.0
  %6963 = vmatpush2.msra.mxu0 0.0
  %6964 = vmatprep.subr.mxu0 0.0
  %6965 = vmatpush2.msra.mxu0 0.0
  %6966 = vmatprep.mubr.f32.mxu0 0.0
  %6967 = vmatmul.mubr.f32.gmra.mxu0 %v6875
  %v6968 = vpop.f32.mrf.mxu0
  %v6969 = vadd.f32 0.0, %v6968
  %v6970 = vpop.f32.mrf.mxu0
  %6971 = vmatprep.mubr.f32.mxu0 0.0
  %6972 = vmatmul.mubr.f32.gmra.mxu0 %v6878
  %v6973 = vpop.f32.mrf.mxu0
  %v6974 = vadd.f32 0.0, %v6973
  %v6975 = vpop.f32.mrf.mxu0
  %6976 = vmatprep.mubr.f32.mxu0 0.0
  %6977 = vmatmul.mubr.f32.gmra.mxu0 %v6881
  %v6978 = vpop.f32.mrf.mxu0
  %v6979 = vadd.f32 0.0, %v6978
  %v6980 = vpop.f32.mrf.mxu0
  %6981 = vmatprep.mubr.f32.mxu0 0.0
  %6982 = vmatmul.mubr.f32.gmra.mxu0 %v6884
  %v6983 = vpop.f32.mrf.mxu0
  %v6984 = vadd.f32 0.0, %v6983
  %v6985 = vpop.f32.mrf.mxu0
  %6986 = vmatprep.mubr.f32.mxu0 0.0
  %6987 = vmatmul.mubr.f32.gmra.mxu0 %v6887
  %v6988 = vpop.f32.mrf.mxu0
  %v6989 = vadd.f32 0.0, %v6988
  %v6990 = vpop.f32.mrf.mxu0
  %6991 = vmatprep.mubr.f32.mxu0 0.0
  %6992 = vmatmul.mubr.f32.gmra.mxu0 %v6890
  %v6993 = vpop.f32.mrf.mxu0
  %v6994 = vadd.f32 0.0, %v6993
  %v6995 = vpop.f32.mrf.mxu0
  %6996 = vmatprep.mubr.f32.mxu0 0.0
  %6997 = vmatmul.mubr.f32.gmra.mxu0 %v6893
  %v6998 = vpop.f32.mrf.mxu0
  %v6999 = vadd.f32 0.0, %v6998
  %v7000 = vpop.f32.mrf.mxu0
  %7001 = vmatprep.mubr.f32.mxu0 0.0
  %7002 = vmatmul.mubr.f32.gmra.mxu0 %v6896
  %v7003 = vpop.f32.mrf.mxu0
  %v7004 = vadd.f32 0.0, %v7003
  %v7005 = vpop.f32.mrf.mxu0
  %7006 = vdwg.mxu0
  %v7007 = vld [vmem:[%s13] sm:$0x3f]
  %v7008 = vld [vmem:[%s14] sm:$0x3f]
  %7010 = vset.pattern.permute.xlu0 0
  %7011 = vperm.xlu0 %7010, %v7008
  %v7012 = vpop.permute.xlu0 %7011
  %vm7014 = vcmask 523264
  %v7016 = vsel %vm7014, %v7007, 0
  %7018 = vmatprep.subr.mxu0 0.0
  %7019 = vmatpush1.msra.mxu0 0.0
  %7020 = vmatprep.subr.mxu0 0.0
  %7021 = vmatpush1.msra.mxu0 0.0
  %7022 = vmatprep.subr.mxu0 0.0
  %7023 = vmatpush1.msra.mxu0 0.0
  %7024 = vmatprep.subr.mxu0 0.0
  %7025 = vmatpush1.msra.mxu0 0.0
  %7026 = vmatprep.subr.mxu0 0.0
  %7027 = vmatpush1.msra.mxu0 0.0
  %7028 = vmatprep.subr.mxu0 0.0
  %7029 = vmatpush1.msra.mxu0 0.0
  %7030 = vmatprep.subr.mxu0 0.0
  %7031 = vmatpush1.msra.mxu0 0.0
  %7032 = vmatprep.subr.mxu0 0.0
  %7033 = vmatpush1.msra.mxu0 0.0
  %7034 = vmatprep.subr.mxu0 0.0
  %7035 = vmatpush1.msra.mxu0 %v7004
  %7036 = vmatprep.subr.mxu0 0.0
  %7037 = vmatpush1.msra.mxu0 %v6999
  %7038 = vmatprep.subr.mxu0 0.0
  %7039 = vmatpush1.msra.mxu0 %v6994
  %7040 = vmatprep.subr.mxu0 0.0
  %7041 = vmatpush1.msra.mxu0 %v6989
  %7042 = vmatprep.subr.mxu0 0.0
  %7043 = vmatpush1.msra.mxu0 %v6984
  %7044 = vmatprep.subr.mxu0 0.0
  %7045 = vmatpush1.msra.mxu0 %v6979
  %7046 = vmatprep.subr.mxu0 0.0
  %7047 = vmatpush1.msra.mxu0 %v6974
  %7048 = vmatprep.subr.mxu0 0.0
  %7049 = vmatpush1.msra.mxu0 %v6969
  %7050 = vmatprep.subr.mxu0 0.0
  %7051 = vmatpush2.msra.mxu0 0.0
  %7052 = vmatprep.subr.mxu0 0.0
  %7053 = vmatpush2.msra.mxu0 0.0
  %7054 = vmatprep.subr.mxu0 0.0
  %7055 = vmatpush2.msra.mxu0 0.0
  %7056 = vmatprep.subr.mxu0 0.0
  %7057 = vmatpush2.msra.mxu0 0.0
  %7058 = vmatprep.subr.mxu0 0.0
  %7059 = vmatpush2.msra.mxu0 0.0
  %7060 = vmatprep.subr.mxu0 0.0
  %7061 = vmatpush2.msra.mxu0 0.0
  %7062 = vmatprep.subr.mxu0 0.0
  %7063 = vmatpush2.msra.mxu0 0.0
  %7064 = vmatprep.subr.mxu0 0.0
  %7065 = vmatpush2.msra.mxu0 0.0
  %7066 = vmatprep.subr.mxu0 0.0
  %7067 = vmatpush2.msra.mxu0 0.0
  %7068 = vmatprep.subr.mxu0 0.0
  %7069 = vmatpush2.msra.mxu0 0.0
  %7070 = vmatprep.subr.mxu0 0.0
  %7071 = vmatpush2.msra.mxu0 0.0
  %7072 = vmatprep.subr.mxu0 0.0
  %7073 = vmatpush2.msra.mxu0 0.0
  %7074 = vmatprep.subr.mxu0 0.0
  %7075 = vmatpush2.msra.mxu0 0.0
  %7076 = vmatprep.subr.mxu0 0.0
  %7077 = vmatpush2.msra.mxu0 0.0
  %7078 = vmatprep.subr.mxu0 0.0
  %7079 = vmatpush2.msra.mxu0 0.0
  %7080 = vmatprep.subr.mxu0 0.0
  %7081 = vmatpush2.msra.mxu0 0.0
  %7082 = vmatprep.mubr.f32.mxu0 0.0
  %7083 = vmatmul.mubr.f32.gmra.mxu0 %v7016
  %v7084 = vpop.f32.mrf.mxu0
  %v7085 = vadd.f32 %v7012, %v7084
  %v7086 = vpop.f32.mrf.mxu0
  %7087 = vdwg.mxu0
  %vm7088 = vcmask 13312
  %7089 = vst.msk [vmem:[%s15] sm:$0x3f] %vm7088, %v7085
  // Predicated region
  $region62: #{net_forward.1} parent=0 // pred_check
    _
  $region63: #{net_forward.1} parent=0 // pred_check_branch
    %7091 = sbr.rel (0) target = $region65
  $region64: #{net_forward.1} parent=0 // pred_region
    _
  $region65: #{net_forward.1} parent=0 // pred_fallthru
    _
  // Predicated region
  $region66: #{net_forward.1} parent=0 // pred_check
    _
  $region67: #{net_forward.1} parent=0 // pred_check_branch
    %7093 = sbr.rel (0) target = $region69
  $region68: #{net_forward.1} parent=0 // pred_region
    _
  $region69: #{net_forward.1} parent=0 // pred_fallthru
    _

</llo_original>
